<compile_context>
chip_gen: v7x
topology: tpu7x:2x2x1
jax: 0.10.0
libtpu: 0.0.40
codegen_flags: <defaults>
</compile_context>

<pallas_src>
import functools

import numpy as np
import jax
import jax.numpy as jnp
from jax import lax
from jax.experimental import pallas as pl
from jax.experimental.pallas import tpu as pltpu


# VGG16 feature config (real: [64,64,M,128,128,M,256,256,256,M,512,512,512,M,512,512,512,M]);
# channel counts scaled down 16x for a small runnable demo.
VGG16_CFG = [4, 4, "M", 8, 8, "M", 16, 16, 16, "M", 32, 32, 32, "M", 32, 32, 32, "M"]


# ----------------------------------------------------------------------------
# Parameter init (PyTorch layouts: conv w (Cout, Cin, 3, 3), linear w (in, out))
# ----------------------------------------------------------------------------
def init_params(key, cfg, in_ch, flat_dim, hidden, num_classes):
    params = {"features": [], "classifier": []}
    c = in_ch
    for v in cfg:
        if v == "M":
            continue
        key, k1, k2 = jax.random.split(key, 3)
        w = jax.random.normal(k1, (v, c, 3, 3), jnp.float32) * (2.0 / (9.0 * c)) ** 0.5
        b = jax.random.normal(k2, (v,), jnp.float32) * 0.01
        params["features"].append((w, b))
        c = v
    dims = [flat_dim, hidden, hidden, num_classes]
    for i in range(3):
        key, k1, k2 = jax.random.split(key, 3)
        w = jax.random.normal(k1, (dims[i], dims[i + 1]), jnp.float32) / (dims[i] ** 0.5)
        b = jax.random.normal(k2, (dims[i + 1],), jnp.float32) * 0.01
        params["classifier"].append((w, b))
    return params


# ----------------------------------------------------------------------------
# The fused Pallas kernel: one grid step = `nb` images through the whole network
# ----------------------------------------------------------------------------
def _fused_vgg16_kernel(x_ref, *refs, plan, num_conv, nb):
    conv_refs = refs[:2 * num_conv]                 # (B_stack, bias_row) x 13
    fc_refs = refs[2 * num_conv:2 * num_conv + 6]   # w1,b1,w2,b2,w3,b3
    out_ref = refs[2 * num_conv + 6]                # (1, nb, num_classes)
    pbuf = refs[2 * num_conv + 7]                   # f32 VMEM scratch (pools only)

    x = x_ref[0]                                    # (nb*(H0+2), W0*C0) f32, haloed rows
    ci = 0
    for step in plan:
        if step[0] == "conv":
            _, Hb, Lin, Lout = step                 # Hb = H + 2 rows per image (with halos)
            R = nb * Hb
            B_ref = conv_refs[2 * ci]               # (3, Lin, Lout) bf16 banded taps
            b_ref = conv_refs[2 * ci + 1]           # (1, Lout) f32
            ci += 1
            # Re-zero the per-image halo rows (junk when x comes from a previous conv),
            # then build ONE bf16 MXU operand shared by the three vertical-tap matmuls.
            rows = lax.broadcasted_iota(jnp.int32, (R, Lin), 0)
            is_halo = functools.reduce(
                jnp.logical_or,
                [rows == (n * Hb + r) for n in range(nb) for r in (0, Hb - 1)])
            s = jnp.where(is_halo, 0.0, x).astype(jnp.bfloat16)
            z0 = jnp.dot(s, B_ref[0], preferred_element_type=jnp.float32)
            z1 = jnp.dot(s, B_ref[1], preferred_element_type=jnp.float32)
            z2 = jnp.dot(s, B_ref[2], preferred_element_type=jnp.float32)
            # out[o] = z0[o-1] + z1[o] + z2[o+1]; the shifted-in edge rows only land on
            # per-image halo (junk) rows which are never consumed downstream.
            zr = jnp.zeros((1, Lout), jnp.float32)
            acc = (z1
                   + jnp.concatenate([zr, z0[:R - 1]], axis=0)
                   + jnp.concatenate([z2[1:], zr], axis=0))
            x = jnp.maximum(acc + b_ref[...], 0.0)  # bias + ReLU epilogue (f32)
        else:  # 2x2/2 maxpool, exact f32 max on the VPU/XLU (no MXU work)
            _, Hb, H, L, C, last = step
            R = nb * Hb
            Hr = H // 2
            pbuf[0:R, 0:L] = x                      # aligned f32 staging store
            zrow = jnp.zeros((1, L), jnp.float32)
            pieces = []
            for n in range(nb):
                a = pbuf[pl.ds(n * Hb + 1, Hr, 2), 0:L]   # image-n rows y = 0,2,4,...
                b = pbuf[pl.ds(n * Hb + 2, Hr, 2), 0:L]   # image-n rows y = 1,3,5,...
                v = jnp.maximum(a, b)                     # vertical 2->1 max
                if last:
                    # final pool (W == 2): contiguous lane-slice max, decimated output
                    pieces.append(jnp.maximum(v[:, 0:C], v[:, C:2 * C]))
                else:
                    # horizontal max vs a one-group lane rotation (XLU); column decimation
                    # is folded into the next conv's banded weights on the host.
                    h = jnp.maximum(v, pltpu.roll(v, shift=L - C, axis=1))
                    pieces += [zrow, h, zrow]             # rebuild per-image halo rows
            x = jnp.concatenate(pieces, axis=0)

    # classifier: Dropout (identity at inference), Linear, ReLU, Dropout, Linear, ReLU, Linear
    # x is (nb, C_last) == flattened (C,1,1) per image, matching PyTorch's x.view(N, -1).
    w1_ref, b1_ref, w2_ref, b2_ref, w3_ref, b3_ref = fc_refs
    h = jnp.dot(x.astype(jnp.bfloat16), w1_ref[...],
                preferred_element_type=jnp.float32) + b1_ref[...]
    h = jnp.maximum(h, 0.0)
    h = jnp.dot(h.astype(jnp.bfloat16), w2_ref[...],
                preferred_element_type=jnp.float32) + b2_ref[...]
    h = jnp.maximum(h, 0.0)
    logits = jnp.dot(h.astype(jnp.bfloat16), w3_ref[...],
                     preferred_element_type=jnp.float32) + b3_ref[...]
    out_ref[0] = logits.astype(out_ref.dtype)


# ----------------------------------------------------------------------------
# Host-side weight preparation: banded conv matrices + static layer plan
# ----------------------------------------------------------------------------
def _build_plan_and_weights(params, in_ch, h0, w0):
    """Conv weights are rewritten as 3 banded matrices B_dy (one per vertical tap):
         B_dy[(xin*gs)*Cin + c, xo*Cout + o] = w[o, c, dy, xin - xo + 1]
    which folds the horizontal taps, the x zero-padding AND (gs == 2) the previous pool's
    stride-2 column decimation into the weights, so the kernel only shifts rows.
    """
    plan, prepared = [], []
    H, W, C = h0, w0, in_ch
    gs, groups = 1, w0     # carried lane layout: `groups` column groups of C lanes,
    ci = 0                 # logical x-position xin lives in group xin*gs
    n_pools = VGG16_CFG.count("M")
    pools_seen = 0
    for v in VGG16_CFG:
        if v == "M":
            pools_seen += 1
            last = pools_seen == n_pools
            assert gs == 1 and groups == W and H % 2 == 0 and W % 2 == 0
            L = W * C
            plan.append(("pool", H + 2, H, L, C, last))
            H, W = H // 2, W // 2
            if last:
                assert W == 1, "last-pool lane-slice path assumes the final 2->1 width"
                gs, groups = 1, 1
            else:
                gs = 2     # decimation deferred into the next conv's banded weights
        else:
            w, b = params["features"][ci]
            ci += 1
            w_np = np.asarray(w, np.float32)              # (Cout, Cin, 3, 3)
            Lin, Lout = groups * C, W * v
            B = np.zeros((3, Lin, Lout), np.float32)
            for dy in range(3):
                for dx in range(3):
                    tap = w_np[:, :, dy, dx].T            # (Cin, Cout)
                    for xo in range(W):
                        xin = xo + dx - 1
                        if 0 <= xin < W:
                            r0 = xin * gs * C
                            B[dy, r0:r0 + C, xo * v:(xo + 1) * v] = tap
            brow = np.tile(np.asarray(b, np.float32), W).reshape(1, Lout)
            prepared.append(jnp.asarray(B, jnp.bfloat16))
            prepared.append(jnp.asarray(brow, jnp.float32))
            plan.append(("conv", H + 2, Lin, Lout))
            C, gs, groups = v, 1, W
    assert H == 1 and W == 1, "demo spatial size must reduce to 1x1 after the 5 pools"
    for (w, b) in params["classifier"]:
        prepared.append(jnp.asarray(w, jnp.bfloat16))
        prepared.append(jnp.asarray(np.asarray(b, np.float32).reshape(1, -1), jnp.float32))
    return plan, prepared, ci


def make_forward(params, *, in_ch, h0, w0, num_classes, images_per_step=2):
    nb = images_per_step
    plan, prepared, num_conv = _build_plan_and_weights(params, in_ch, h0, w0)
    lin0 = w0 * in_ch
    r0 = nb * (h0 + 2)
    max_pool_rows = max(nb * s[1] for s in plan if s[0] == "pool")
    max_pool_lanes = max(s[3] for s in plan if s[0] == "pool")

    kernel = functools.partial(_fused_vgg16_kernel, plan=plan, num_conv=num_conv, nb=nb)

    # Constant weights: full-array blocks, same block every grid step.
    weight_specs = [
        pl.BlockSpec(arr.shape, lambda i, nd=arr.ndim: (0,) * nd) for arr in prepared
    ]

    # Advisory cost estimate: 3 banded matmuls per conv layer + the 3 FC matmuls, per step.
    step_flops = sum(6 * nb * s[1] * s[2] * s[3] for s in plan if s[0] == "conv")
    step_flops += sum(2 * nb * w.shape[0] * w.shape[1] for (w, _) in params["classifier"])
    weight_bytes = sum(int(np.prod(a.shape)) * a.dtype.itemsize for a in prepared)

    def forward(x_nchw):
        n = x_nchw.shape[0]
        assert n % nb == 0, "batch must be a multiple of images_per_step"
        g = n // nb
        # layout glue on the network input only: NCHW -> channels-interleaved rows with
        # per-image zero halo rows, grouped `nb` images per grid step.
        x = jnp.transpose(x_nchw, (0, 2, 3, 1)).reshape(n, h0, lin0).astype(jnp.float32)
        x = jnp.pad(x, ((0, 0), (1, 1), (0, 0)))
        x = x.reshape(g, r0, lin0)
        cost = pl.CostEstimate(
            flops=int(g * step_flops),
            transcendentals=0,
            bytes_accessed=int(x.size * 4 + weight_bytes + n * num_classes * 4))
        out = pl.pallas_call(
            kernel,
            out_shape=jax.ShapeDtypeStruct((g, nb, num_classes), jnp.float32),
            grid=(g,),
            in_specs=[pl.BlockSpec((1, r0, lin0), lambda i: (i, 0, 0))] + weight_specs,
            out_specs=pl.BlockSpec((1, nb, num_classes), lambda i: (i, 0, 0)),
            scratch_shapes=[pltpu.VMEM((max_pool_rows, max_pool_lanes), jnp.float32)],
            compiler_params=pltpu.CompilerParams(
                dimension_semantics=("parallel",),
                vmem_limit_bytes=32 * 1024 * 1024),
            cost_estimate=cost,
        )(x, *prepared)
        return out.reshape(n, num_classes)

    return jax.jit(forward)


# ----------------------------------------------------------------------------
# Pure-JAX reference (mirrors the kernel's bf16 operand rounding; no Pallas)
# ----------------------------------------------------------------------------
def _reference_forward(params, x_nchw):
    x = jnp.transpose(x_nchw, (0, 2, 3, 1)).astype(jnp.float32)
    ci = 0
    for v in VGG16_CFG:
        if v == "M":
            x = jnp.maximum(jnp.maximum(x[:, 0::2, 0::2, :], x[:, 0::2, 1::2, :]),
                            jnp.maximum(x[:, 1::2, 0::2, :], x[:, 1::2, 1::2, :]))
        else:
            w, b = params["features"][ci]
            ci += 1
            n, h, wd, c = x.shape
            xp = jnp.pad(x, ((0, 0), (1, 1), (1, 1), (0, 0)))
            patches = jnp.concatenate(
                [xp[:, dy:dy + h, dx:dx + wd, :] for dy in range(3) for dx in range(3)],
                axis=-1)
            w2d = jnp.transpose(w, (2, 3, 1, 0)).reshape(9 * c, v)
            y = jnp.dot(patches.reshape(n * h * wd, 9 * c).astype(jnp.bfloat16),
                        w2d.astype(jnp.bfloat16), preferred_element_type=jnp.float32)
            y = jnp.maximum(y + b[None, :], 0.0)
            x = y.reshape(n, h, wd, v)
    n = x.shape[0]
    x = jnp.transpose(x, (0, 3, 1, 2)).reshape(n, -1)
    (w1, b1), (w2, b2), (w3, b3) = params["classifier"]

    def lin(h, w, b, relu):
        y = jnp.dot(h.astype(jnp.bfloat16), w.astype(jnp.bfloat16),
                    preferred_element_type=jnp.float32) + b[None, :]
        return jnp.maximum(y, 0.0) if relu else y

    x = lin(x, w1, b1, True)
    x = lin(x, w2, b2, True)
    return lin(x, w3, b3, False)


if __name__ == "__main__":
    key = jax.random.PRNGKey(0)
    key, pkey, xkey = jax.random.split(key, 3)

    N, C, H, W = 4, 3, 32, 32          # 5 pools: 32 -> 1 spatial
    hidden, num_classes = 64, 2
    flat_dim = 32 * 1 * 1              # last conv width * 1 * 1
    params = init_params(pkey, VGG16_CFG, in_ch=C, flat_dim=flat_dim,
                         hidden=hidden, num_classes=num_classes)
    x = jax.random.normal(xkey, (N, C, H, W), jnp.float32)

    fwd = make_forward(params, in_ch=C, h0=H, w0=W, num_classes=num_classes,
                       images_per_step=2)
    out = jax.block_until_ready(fwd(x))
    assert out.shape == (N, num_classes) and out.dtype == jnp.float32

    ref = jax.block_until_ready(jax.jit(functools.partial(_reference_forward, params))(x))
    err = float(jnp.max(jnp.abs(out - ref)))
    scale = float(jnp.max(jnp.abs(ref))) + 1e-6
    assert err <= 0.05 * scale + 1e-3, f"kernel/reference mismatch: {err} vs scale {scale}"

    print("KERNEL_OK")
</pallas_src>

<mosaic_0001>
module attributes {stable_mosaic.version = 11 : i64} {
  func.func @_fused_vgg16_kernel(%arg0: i32, %arg1: memref<1x68x96xf32, #tpu.memory_space<vmem>>, %arg2: memref<3x96x128xbf16, #tpu.memory_space<vmem>>, %arg3: memref<1x128xf32, #tpu.memory_space<vmem>>, %arg4: memref<3x128x128xbf16, #tpu.memory_space<vmem>>, %arg5: memref<1x128xf32, #tpu.memory_space<vmem>>, %arg6: memref<3x128x128xbf16, #tpu.memory_space<vmem>>, %arg7: memref<1x128xf32, #tpu.memory_space<vmem>>, %arg8: memref<3x128x128xbf16, #tpu.memory_space<vmem>>, %arg9: memref<1x128xf32, #tpu.memory_space<vmem>>, %arg10: memref<3x128x128xbf16, #tpu.memory_space<vmem>>, %arg11: memref<1x128xf32, #tpu.memory_space<vmem>>, %arg12: memref<3x128x128xbf16, #tpu.memory_space<vmem>>, %arg13: memref<1x128xf32, #tpu.memory_space<vmem>>, %arg14: memref<3x128x128xbf16, #tpu.memory_space<vmem>>, %arg15: memref<1x128xf32, #tpu.memory_space<vmem>>, %arg16: memref<3x128x128xbf16, #tpu.memory_space<vmem>>, %arg17: memref<1x128xf32, #tpu.memory_space<vmem>>, %arg18: memref<3x128x128xbf16, #tpu.memory_space<vmem>>, %arg19: memref<1x128xf32, #tpu.memory_space<vmem>>, %arg20: memref<3x128x128xbf16, #tpu.memory_space<vmem>>, %arg21: memref<1x128xf32, #tpu.memory_space<vmem>>, %arg22: memref<3x128x64xbf16, #tpu.memory_space<vmem>>, %arg23: memref<1x64xf32, #tpu.memory_space<vmem>>, %arg24: memref<3x64x64xbf16, #tpu.memory_space<vmem>>, %arg25: memref<1x64xf32, #tpu.memory_space<vmem>>, %arg26: memref<3x64x64xbf16, #tpu.memory_space<vmem>>, %arg27: memref<1x64xf32, #tpu.memory_space<vmem>>, %arg28: memref<32x64xbf16, #tpu.memory_space<vmem>>, %arg29: memref<1x64xf32, #tpu.memory_space<vmem>>, %arg30: memref<64x64xbf16, #tpu.memory_space<vmem>>, %arg31: memref<1x64xf32, #tpu.memory_space<vmem>>, %arg32: memref<64x2xbf16, #tpu.memory_space<vmem>>, %arg33: memref<1x2xf32, #tpu.memory_space<vmem>>, %arg34: memref<1x2x2xf32, #tpu.memory_space<vmem>>, %arg35: memref<68x128xf32, #tpu.memory_space<vmem>>) attributes {dimension_semantics = [#tpu.dimension_semantics<parallel>], iteration_bounds = array<i64: 2>, scalar_prefetch = 0 : i64, scratch_operands = 1 : i64, tpu.core_type = #tpu.core_type<tc>, window_params = [{transform_indices = @transform_0, window_bounds = array<i64: 1, 68, 96>}, {pipeline_mode = #tpu.pipeline_mode<synchronous>, transform_indices = @transform_1, window_bounds = array<i64: 3, 96, 128>}, {pipeline_mode = #tpu.pipeline_mode<synchronous>, transform_indices = @transform_2, window_bounds = array<i64: 1, 128>}, {pipeline_mode = #tpu.pipeline_mode<synchronous>, transform_indices = @transform_3, window_bounds = array<i64: 3, 128, 128>}, {pipeline_mode = #tpu.pipeline_mode<synchronous>, transform_indices = @transform_4, window_bounds = array<i64: 1, 128>}, {pipeline_mode = #tpu.pipeline_mode<synchronous>, transform_indices = @transform_5, window_bounds = array<i64: 3, 128, 128>}, {pipeline_mode = #tpu.pipeline_mode<synchronous>, transform_indices = @transform_6, window_bounds = array<i64: 1, 128>}, {pipeline_mode = #tpu.pipeline_mode<synchronous>, transform_indices = @transform_7, window_bounds = array<i64: 3, 128, 128>}, {pipeline_mode = #tpu.pipeline_mode<synchronous>, transform_indices = @transform_8, window_bounds = array<i64: 1, 128>}, {pipeline_mode = #tpu.pipeline_mode<synchronous>, transform_indices = @transform_9, window_bounds = array<i64: 3, 128, 128>}, {pipeline_mode = #tpu.pipeline_mode<synchronous>, transform_indices = @transform_10, window_bounds = array<i64: 1, 128>}, {pipeline_mode = #tpu.pipeline_mode<synchronous>, transform_indices = @transform_11, window_bounds = array<i64: 3, 128, 128>}, {pipeline_mode = #tpu.pipeline_mode<synchronous>, transform_indices = @transform_12, window_bounds = array<i64: 1, 128>}, {pipeline_mode = #tpu.pipeline_mode<synchronous>, transform_indices = @transform_13, window_bounds = array<i64: 3, 128, 128>}, {pipeline_mode = #tpu.pipeline_mode<synchronous>, transform_indices = @transform_14, window_bounds = array<i64: 1, 128>}, {pipeline_mode = #tpu.pipeline_mode<synchronous>, transform_indices = @transform_15, window_bounds = array<i64: 3, 128, 128>}, {pipeline_mode = #tpu.pipeline_mode<synchronous>, transform_indices = @transform_16, window_bounds = array<i64: 1, 128>}, {pipeline_mode = #tpu.pipeline_mode<synchronous>, transform_indices = @transform_17, window_bounds = array<i64: 3, 128, 128>}, {pipeline_mode = #tpu.pipeline_mode<synchronous>, transform_indices = @transform_18, window_bounds = array<i64: 1, 128>}, {pipeline_mode = #tpu.pipeline_mode<synchronous>, transform_indices = @transform_19, window_bounds = array<i64: 3, 128, 128>}, {pipeline_mode = #tpu.pipeline_mode<synchronous>, transform_indices = @transform_20, window_bounds = array<i64: 1, 128>}, {pipeline_mode = #tpu.pipeline_mode<synchronous>, transform_indices = @transform_21, window_bounds = array<i64: 3, 128, 64>}, {pipeline_mode = #tpu.pipeline_mode<synchronous>, transform_indices = @transform_22, window_bounds = array<i64: 1, 64>}, {pipeline_mode = #tpu.pipeline_mode<synchronous>, transform_indices = @transform_23, window_bounds = array<i64: 3, 64, 64>}, {pipeline_mode = #tpu.pipeline_mode<synchronous>, transform_indices = @transform_24, window_bounds = array<i64: 1, 64>}, {pipeline_mode = #tpu.pipeline_mode<synchronous>, transform_indices = @transform_25, window_bounds = array<i64: 3, 64, 64>}, {pipeline_mode = #tpu.pipeline_mode<synchronous>, transform_indices = @transform_26, window_bounds = array<i64: 1, 64>}, {pipeline_mode = #tpu.pipeline_mode<synchronous>, transform_indices = @transform_27, window_bounds = array<i64: 32, 64>}, {pipeline_mode = #tpu.pipeline_mode<synchronous>, transform_indices = @transform_28, window_bounds = array<i64: 1, 64>}, {pipeline_mode = #tpu.pipeline_mode<synchronous>, transform_indices = @transform_29, window_bounds = array<i64: 64, 64>}, {pipeline_mode = #tpu.pipeline_mode<synchronous>, transform_indices = @transform_30, window_bounds = array<i64: 1, 64>}, {pipeline_mode = #tpu.pipeline_mode<synchronous>, transform_indices = @transform_31, window_bounds = array<i64: 64, 2>}, {pipeline_mode = #tpu.pipeline_mode<synchronous>, transform_indices = @transform_32, window_bounds = array<i64: 1, 2>}, {transform_indices = @transform_33, window_bounds = array<i64: 1, 2, 2>}]} {
    %c0 = arith.constant 0 : index
    %c0_0 = arith.constant 0 : index
    %c0_1 = arith.constant 0 : index
    %0 = vector.load %arg1[%c0, %c0_0, %c0_1] : memref<1x68x96xf32, #tpu.memory_space<vmem>>, vector<1x68x96xf32>
    %1 = vector.shape_cast %0 : vector<1x68x96xf32> to vector<68x96xf32>
    %2 = tpu.iota {dimensions = array<i32: 0>} : vector<68x96xi32>
    %c0_i32 = arith.constant 0 : i32
    %3 = vector.broadcast %c0_i32 : i32 to vector<68x96xi32>
    %4 = arith.cmpi eq, %2, %3 : vector<68x96xi32>
    %c33_i32 = arith.constant 33 : i32
    %5 = vector.broadcast %c33_i32 : i32 to vector<68x96xi32>
    %6 = arith.cmpi eq, %2, %5 : vector<68x96xi32>
    %c34_i32 = arith.constant 34 : i32
    %7 = vector.broadcast %c34_i32 : i32 to vector<68x96xi32>
    %8 = arith.cmpi eq, %2, %7 : vector<68x96xi32>
    %c67_i32 = arith.constant 67 : i32
    %9 = vector.broadcast %c67_i32 : i32 to vector<68x96xi32>
    %10 = arith.cmpi eq, %2, %9 : vector<68x96xi32>
    %11 = arith.ori %4, %6 : vector<68x96xi1>
    %12 = arith.ori %11, %8 : vector<68x96xi1>
    %13 = arith.ori %12, %10 : vector<68x96xi1>
    %cst = arith.constant 0.000000e+00 : f32
    %14 = vector.broadcast %cst : f32 to vector<68x96xf32>
    %15 = arith.select %13, %14, %1 : vector<68x96xi1>, vector<68x96xf32>
    %16 = arith.truncf %15 : vector<68x96xf32> to vector<68x96xbf16>
    %c0_2 = arith.constant 0 : index
    %c0_3 = arith.constant 0 : index
    %c0_4 = arith.constant 0 : index
    %17 = vector.load %arg2[%c0_2, %c0_3, %c0_4] : memref<3x96x128xbf16, #tpu.memory_space<vmem>>, vector<1x96x128xbf16>
    %18 = vector.shape_cast %17 : vector<1x96x128xbf16> to vector<96x128xbf16>
    %cst_5 = arith.constant dense<0.000000e+00> : vector<68x128xf32>
    %19 = tpu.matmul %16, %18, %cst_5 {dimension_numbers = #tpu.dot_dimension_numbers<[1], [0], [0], [1], [0, 0, 1, 1], [], []>} : vector<68x96xbf16>, vector<96x128xbf16>, vector<68x128xf32> -> vector<68x128xf32>
    %c1 = arith.constant 1 : index
    %c0_6 = arith.constant 0 : index
    %c0_7 = arith.constant 0 : index
    %20 = vector.load %arg2[%c1, %c0_6, %c0_7] : memref<3x96x128xbf16, #tpu.memory_space<vmem>>, vector<1x96x128xbf16>
    %21 = vector.shape_cast %20 : vector<1x96x128xbf16> to vector<96x128xbf16>
    %cst_8 = arith.constant dense<0.000000e+00> : vector<68x128xf32>
    %22 = tpu.matmul %16, %21, %cst_8 {dimension_numbers = #tpu.dot_dimension_numbers<[1], [0], [0], [1], [0, 0, 1, 1], [], []>} : vector<68x96xbf16>, vector<96x128xbf16>, vector<68x128xf32> -> vector<68x128xf32>
    %c2 = arith.constant 2 : index
    %c0_9 = arith.constant 0 : index
    %c0_10 = arith.constant 0 : index
    %23 = vector.load %arg2[%c2, %c0_9, %c0_10] : memref<3x96x128xbf16, #tpu.memory_space<vmem>>, vector<1x96x128xbf16>
    %24 = vector.shape_cast %23 : vector<1x96x128xbf16> to vector<96x128xbf16>
    %cst_11 = arith.constant dense<0.000000e+00> : vector<68x128xf32>
    %25 = tpu.matmul %16, %24, %cst_11 {dimension_numbers = #tpu.dot_dimension_numbers<[1], [0], [0], [1], [0, 0, 1, 1], [], []>} : vector<68x96xbf16>, vector<96x128xbf16>, vector<68x128xf32> -> vector<68x128xf32>
    %cst_12 = arith.constant 0.000000e+00 : f32
    %26 = vector.broadcast %cst_12 : f32 to vector<1x128xf32>
    %27 = vector.extract_strided_slice %19 {offsets = [0, 0], sizes = [67, 128], strides = [1, 1]} : vector<68x128xf32> to vector<67x128xf32>
    %28 = tpu.concatenate %26, %27 in 0 : vector<1x128xf32>, vector<67x128xf32> -> vector<68x128xf32>
    %29 = arith.addf %22, %28 : vector<68x128xf32>
    %30 = vector.extract_strided_slice %25 {offsets = [1, 0], sizes = [67, 128], strides = [1, 1]} : vector<68x128xf32> to vector<67x128xf32>
    %31 = tpu.concatenate %30, %26 in 0 : vector<67x128xf32>, vector<1x128xf32> -> vector<68x128xf32>
    %32 = arith.addf %29, %31 : vector<68x128xf32>
    %c0_13 = arith.constant 0 : index
    %c0_14 = arith.constant 0 : index
    %33 = vector.load %arg3[%c0_13, %c0_14] : memref<1x128xf32, #tpu.memory_space<vmem>>, vector<1x128xf32>
    %34 = vector.broadcast %33 : vector<1x128xf32> to vector<68x128xf32>
    %35 = arith.addf %32, %34 : vector<68x128xf32>
    %cst_15 = arith.constant 0.000000e+00 : f32
    %36 = vector.broadcast %cst_15 : f32 to vector<68x128xf32>
    %37 = arith.maximumf %35, %36 : vector<68x128xf32>
    %38 = tpu.iota {dimensions = array<i32: 0>} : vector<68x128xi32>
    %c0_i32_16 = arith.constant 0 : i32
    %39 = vector.broadcast %c0_i32_16 : i32 to vector<68x128xi32>
    %40 = arith.cmpi eq, %38, %39 : vector<68x128xi32>
    %c33_i32_17 = arith.constant 33 : i32
    %41 = vector.broadcast %c33_i32_17 : i32 to vector<68x128xi32>
    %42 = arith.cmpi eq, %38, %41 : vector<68x128xi32>
    %c34_i32_18 = arith.constant 34 : i32
    %43 = vector.broadcast %c34_i32_18 : i32 to vector<68x128xi32>
    %44 = arith.cmpi eq, %38, %43 : vector<68x128xi32>
    %c67_i32_19 = arith.constant 67 : i32
    %45 = vector.broadcast %c67_i32_19 : i32 to vector<68x128xi32>
    %46 = arith.cmpi eq, %38, %45 : vector<68x128xi32>
    %47 = arith.ori %40, %42 : vector<68x128xi1>
    %48 = arith.ori %47, %44 : vector<68x128xi1>
    %49 = arith.ori %48, %46 : vector<68x128xi1>
    %cst_20 = arith.constant 0.000000e+00 : f32
    %50 = vector.broadcast %cst_20 : f32 to vector<68x128xf32>
    %51 = arith.select %49, %50, %37 : vector<68x128xi1>, vector<68x128xf32>
    %52 = arith.truncf %51 : vector<68x128xf32> to vector<68x128xbf16>
    %c0_21 = arith.constant 0 : index
    %c0_22 = arith.constant 0 : index
    %c0_23 = arith.constant 0 : index
    %53 = vector.load %arg4[%c0_21, %c0_22, %c0_23] : memref<3x128x128xbf16, #tpu.memory_space<vmem>>, vector<1x128x128xbf16>
    %54 = vector.shape_cast %53 : vector<1x128x128xbf16> to vector<128x128xbf16>
    %cst_24 = arith.constant dense<0.000000e+00> : vector<68x128xf32>
    %55 = tpu.matmul %52, %54, %cst_24 {dimension_numbers = #tpu.dot_dimension_numbers<[1], [0], [0], [1], [0, 0, 1, 1], [], []>} : vector<68x128xbf16>, vector<128x128xbf16>, vector<68x128xf32> -> vector<68x128xf32>
    %c1_25 = arith.constant 1 : index
    %c0_26 = arith.constant 0 : index
    %c0_27 = arith.constant 0 : index
    %56 = vector.load %arg4[%c1_25, %c0_26, %c0_27] : memref<3x128x128xbf16, #tpu.memory_space<vmem>>, vector<1x128x128xbf16>
    %57 = vector.shape_cast %56 : vector<1x128x128xbf16> to vector<128x128xbf16>
    %cst_28 = arith.constant dense<0.000000e+00> : vector<68x128xf32>
    %58 = tpu.matmul %52, %57, %cst_28 {dimension_numbers = #tpu.dot_dimension_numbers<[1], [0], [0], [1], [0, 0, 1, 1], [], []>} : vector<68x128xbf16>, vector<128x128xbf16>, vector<68x128xf32> -> vector<68x128xf32>
    %c2_29 = arith.constant 2 : index
    %c0_30 = arith.constant 0 : index
    %c0_31 = arith.constant 0 : index
    %59 = vector.load %arg4[%c2_29, %c0_30, %c0_31] : memref<3x128x128xbf16, #tpu.memory_space<vmem>>, vector<1x128x128xbf16>
    %60 = vector.shape_cast %59 : vector<1x128x128xbf16> to vector<128x128xbf16>
    %cst_32 = arith.constant dense<0.000000e+00> : vector<68x128xf32>
    %61 = tpu.matmul %52, %60, %cst_32 {dimension_numbers = #tpu.dot_dimension_numbers<[1], [0], [0], [1], [0, 0, 1, 1], [], []>} : vector<68x128xbf16>, vector<128x128xbf16>, vector<68x128xf32> -> vector<68x128xf32>
    %cst_33 = arith.constant 0.000000e+00 : f32
    %62 = vector.broadcast %cst_33 : f32 to vector<1x128xf32>
    %63 = vector.extract_strided_slice %55 {offsets = [0, 0], sizes = [67, 128], strides = [1, 1]} : vector<68x128xf32> to vector<67x128xf32>
    %64 = tpu.concatenate %62, %63 in 0 : vector<1x128xf32>, vector<67x128xf32> -> vector<68x128xf32>
    %65 = arith.addf %58, %64 : vector<68x128xf32>
    %66 = vector.extract_strided_slice %61 {offsets = [1, 0], sizes = [67, 128], strides = [1, 1]} : vector<68x128xf32> to vector<67x128xf32>
    %67 = tpu.concatenate %66, %62 in 0 : vector<67x128xf32>, vector<1x128xf32> -> vector<68x128xf32>
    %68 = arith.addf %65, %67 : vector<68x128xf32>
    %c0_34 = arith.constant 0 : index
    %c0_35 = arith.constant 0 : index
    %69 = vector.load %arg5[%c0_34, %c0_35] : memref<1x128xf32, #tpu.memory_space<vmem>>, vector<1x128xf32>
    %70 = vector.broadcast %69 : vector<1x128xf32> to vector<68x128xf32>
    %71 = arith.addf %68, %70 : vector<68x128xf32>
    %cst_36 = arith.constant 0.000000e+00 : f32
    %72 = vector.broadcast %cst_36 : f32 to vector<68x128xf32>
    %73 = arith.maximumf %71, %72 : vector<68x128xf32>
    %c0_37 = arith.constant 0 : index
    %c0_38 = arith.constant 0 : index
    %74 = vector.load %arg35[%c0_37, %c0_38] : memref<68x128xf32, #tpu.memory_space<vmem>>, vector<68x128xf32>
    tpu.vector_store %arg35[%c0_37, %c0_38], %73 {strides = array<i32>} : memref<68x128xf32, #tpu.memory_space<vmem>>, vector<68x128xf32>,
    %cst_39 = arith.constant 0.000000e+00 : f32
    %75 = vector.broadcast %cst_39 : f32 to vector<1x128xf32>
    %c1_40 = arith.constant 1 : index
    %c0_41 = arith.constant 0 : index
    %76 = tpu.strided_load %arg35[%c1_40, %c0_41] {strides = array<i32: 2, 1>} : memref<68x128xf32, #tpu.memory_space<vmem>>, vector<16x128xf32>
    %c2_42 = arith.constant 2 : index
    %c0_43 = arith.constant 0 : index
    %77 = tpu.strided_load %arg35[%c2_42, %c0_43] {strides = array<i32: 2, 1>} : memref<68x128xf32, #tpu.memory_space<vmem>>, vector<16x128xf32>
    %78 = arith.maximumf %76, %77 : vector<16x128xf32>
    %c124_i32 = arith.constant 124 : i32
    %79 = tpu.dynamic_rotate %78 by %c124_i32 dim 1 : vector<16x128xf32>, i32 -> vector<16x128xf32>
    %80 = arith.maximumf %78, %79 : vector<16x128xf32>
    %c35 = arith.constant 35 : index
    %c0_44 = arith.constant 0 : index
    %81 = tpu.strided_load %arg35[%c35, %c0_44] {strides = array<i32: 2, 1>} : memref<68x128xf32, #tpu.memory_space<vmem>>, vector<16x128xf32>
    %c36 = arith.constant 36 : index
    %c0_45 = arith.constant 0 : index
    %82 = tpu.strided_load %arg35[%c36, %c0_45] {strides = array<i32: 2, 1>} : memref<68x128xf32, #tpu.memory_space<vmem>>, vector<16x128xf32>
    %83 = arith.maximumf %81, %82 : vector<16x128xf32>
    %c124_i32_46 = arith.constant 124 : i32
    %84 = tpu.dynamic_rotate %83 by %c124_i32_46 dim 1 : vector<16x128xf32>, i32 -> vector<16x128xf32>
    %85 = arith.maximumf %83, %84 : vector<16x128xf32>
    %86 = tpu.concatenate %75, %80, %75, %75, %85, %75 in 0 : vector<1x128xf32>, vector<16x128xf32>, vector<1x128xf32>, vector<1x128xf32>, vector<16x128xf32>, vector<1x128xf32> -> vector<36x128xf32>
    %87 = tpu.iota {dimensions = array<i32: 0>} : vector<36x128xi32>
    %c0_i32_47 = arith.constant 0 : i32
    %88 = vector.broadcast %c0_i32_47 : i32 to vector<36x128xi32>
    %89 = arith.cmpi eq, %87, %88 : vector<36x128xi32>
    %c17_i32 = arith.constant 17 : i32
    %90 = vector.broadcast %c17_i32 : i32 to vector<36x128xi32>
    %91 = arith.cmpi eq, %87, %90 : vector<36x128xi32>
    %c18_i32 = arith.constant 18 : i32
    %92 = vector.broadcast %c18_i32 : i32 to vector<36x128xi32>
    %93 = arith.cmpi eq, %87, %92 : vector<36x128xi32>
    %c35_i32 = arith.constant 35 : i32
    %94 = vector.broadcast %c35_i32 : i32 to vector<36x128xi32>
    %95 = arith.cmpi eq, %87, %94 : vector<36x128xi32>
    %96 = arith.ori %89, %91 : vector<36x128xi1>
    %97 = arith.ori %96, %93 : vector<36x128xi1>
    %98 = arith.ori %97, %95 : vector<36x128xi1>
    %cst_48 = arith.constant 0.000000e+00 : f32
    %99 = vector.broadcast %cst_48 : f32 to vector<36x128xf32>
    %100 = arith.select %98, %99, %86 : vector<36x128xi1>, vector<36x128xf32>
    %101 = arith.truncf %100 : vector<36x128xf32> to vector<36x128xbf16>
    %c0_49 = arith.constant 0 : index
    %c0_50 = arith.constant 0 : index
    %c0_51 = arith.constant 0 : index
    %102 = vector.load %arg6[%c0_49, %c0_50, %c0_51] : memref<3x128x128xbf16, #tpu.memory_space<vmem>>, vector<1x128x128xbf16>
    %103 = vector.shape_cast %102 : vector<1x128x128xbf16> to vector<128x128xbf16>
    %cst_52 = arith.constant dense<0.000000e+00> : vector<36x128xf32>
    %104 = tpu.matmul %101, %103, %cst_52 {dimension_numbers = #tpu.dot_dimension_numbers<[1], [0], [0], [1], [0, 0, 1, 1], [], []>} : vector<36x128xbf16>, vector<128x128xbf16>, vector<36x128xf32> -> vector<36x128xf32>
    %c1_53 = arith.constant 1 : index
    %c0_54 = arith.constant 0 : index
    %c0_55 = arith.constant 0 : index
    %105 = vector.load %arg6[%c1_53, %c0_54, %c0_55] : memref<3x128x128xbf16, #tpu.memory_space<vmem>>, vector<1x128x128xbf16>
    %106 = vector.shape_cast %105 : vector<1x128x128xbf16> to vector<128x128xbf16>
    %cst_56 = arith.constant dense<0.000000e+00> : vector<36x128xf32>
    %107 = tpu.matmul %101, %106, %cst_56 {dimension_numbers = #tpu.dot_dimension_numbers<[1], [0], [0], [1], [0, 0, 1, 1], [], []>} : vector<36x128xbf16>, vector<128x128xbf16>, vector<36x128xf32> -> vector<36x128xf32>
    %c2_57 = arith.constant 2 : index
    %c0_58 = arith.constant 0 : index
    %c0_59 = arith.constant 0 : index
    %108 = vector.load %arg6[%c2_57, %c0_58, %c0_59] : memref<3x128x128xbf16, #tpu.memory_space<vmem>>, vector<1x128x128xbf16>
    %109 = vector.shape_cast %108 : vector<1x128x128xbf16> to vector<128x128xbf16>
    %cst_60 = arith.constant dense<0.000000e+00> : vector<36x128xf32>
    %110 = tpu.matmul %101, %109, %cst_60 {dimension_numbers = #tpu.dot_dimension_numbers<[1], [0], [0], [1], [0, 0, 1, 1], [], []>} : vector<36x128xbf16>, vector<128x128xbf16>, vector<36x128xf32> -> vector<36x128xf32>
    %cst_61 = arith.constant 0.000000e+00 : f32
    %111 = vector.broadcast %cst_61 : f32 to vector<1x128xf32>
    %112 = vector.extract_strided_slice %104 {offsets = [0, 0], sizes = [35, 128], strides = [1, 1]} : vector<36x128xf32> to vector<35x128xf32>
    %113 = tpu.concatenate %111, %112 in 0 : vector<1x128xf32>, vector<35x128xf32> -> vector<36x128xf32>
    %114 = arith.addf %107, %113 : vector<36x128xf32>
    %115 = vector.extract_strided_slice %110 {offsets = [1, 0], sizes = [35, 128], strides = [1, 1]} : vector<36x128xf32> to vector<35x128xf32>
    %116 = tpu.concatenate %115, %111 in 0 : vector<35x128xf32>, vector<1x128xf32> -> vector<36x128xf32>
    %117 = arith.addf %114, %116 : vector<36x128xf32>
    %c0_62 = arith.constant 0 : index
    %c0_63 = arith.constant 0 : index
    %118 = vector.load %arg7[%c0_62, %c0_63] : memref<1x128xf32, #tpu.memory_space<vmem>>, vector<1x128xf32>
    %119 = vector.broadcast %118 : vector<1x128xf32> to vector<36x128xf32>
    %120 = arith.addf %117, %119 : vector<36x128xf32>
    %cst_64 = arith.constant 0.000000e+00 : f32
    %121 = vector.broadcast %cst_64 : f32 to vector<36x128xf32>
    %122 = arith.maximumf %120, %121 : vector<36x128xf32>
    %123 = tpu.iota {dimensions = array<i32: 0>} : vector<36x128xi32>
    %c0_i32_65 = arith.constant 0 : i32
    %124 = vector.broadcast %c0_i32_65 : i32 to vector<36x128xi32>
    %125 = arith.cmpi eq, %123, %124 : vector<36x128xi32>
    %c17_i32_66 = arith.constant 17 : i32
    %126 = vector.broadcast %c17_i32_66 : i32 to vector<36x128xi32>
    %127 = arith.cmpi eq, %123, %126 : vector<36x128xi32>
    %c18_i32_67 = arith.constant 18 : i32
    %128 = vector.broadcast %c18_i32_67 : i32 to vector<36x128xi32>
    %129 = arith.cmpi eq, %123, %128 : vector<36x128xi32>
    %c35_i32_68 = arith.constant 35 : i32
    %130 = vector.broadcast %c35_i32_68 : i32 to vector<36x128xi32>
    %131 = arith.cmpi eq, %123, %130 : vector<36x128xi32>
    %132 = arith.ori %125, %127 : vector<36x128xi1>
    %133 = arith.ori %132, %129 : vector<36x128xi1>
    %134 = arith.ori %133, %131 : vector<36x128xi1>
    %cst_69 = arith.constant 0.000000e+00 : f32
    %135 = vector.broadcast %cst_69 : f32 to vector<36x128xf32>
    %136 = arith.select %134, %135, %122 : vector<36x128xi1>, vector<36x128xf32>
    %137 = arith.truncf %136 : vector<36x128xf32> to vector<36x128xbf16>
    %c0_70 = arith.constant 0 : index
    %c0_71 = arith.constant 0 : index
    %c0_72 = arith.constant 0 : index
    %138 = vector.load %arg8[%c0_70, %c0_71, %c0_72] : memref<3x128x128xbf16, #tpu.memory_space<vmem>>, vector<1x128x128xbf16>
    %139 = vector.shape_cast %138 : vector<1x128x128xbf16> to vector<128x128xbf16>
    %cst_73 = arith.constant dense<0.000000e+00> : vector<36x128xf32>
    %140 = tpu.matmul %137, %139, %cst_73 {dimension_numbers = #tpu.dot_dimension_numbers<[1], [0], [0], [1], [0, 0, 1, 1], [], []>} : vector<36x128xbf16>, vector<128x128xbf16>, vector<36x128xf32> -> vector<36x128xf32>
    %c1_74 = arith.constant 1 : index
    %c0_75 = arith.constant 0 : index
    %c0_76 = arith.constant 0 : index
    %141 = vector.load %arg8[%c1_74, %c0_75, %c0_76] : memref<3x128x128xbf16, #tpu.memory_space<vmem>>, vector<1x128x128xbf16>
    %142 = vector.shape_cast %141 : vector<1x128x128xbf16> to vector<128x128xbf16>
    %cst_77 = arith.constant dense<0.000000e+00> : vector<36x128xf32>
    %143 = tpu.matmul %137, %142, %cst_77 {dimension_numbers = #tpu.dot_dimension_numbers<[1], [0], [0], [1], [0, 0, 1, 1], [], []>} : vector<36x128xbf16>, vector<128x128xbf16>, vector<36x128xf32> -> vector<36x128xf32>
    %c2_78 = arith.constant 2 : index
    %c0_79 = arith.constant 0 : index
    %c0_80 = arith.constant 0 : index
    %144 = vector.load %arg8[%c2_78, %c0_79, %c0_80] : memref<3x128x128xbf16, #tpu.memory_space<vmem>>, vector<1x128x128xbf16>
    %145 = vector.shape_cast %144 : vector<1x128x128xbf16> to vector<128x128xbf16>
    %cst_81 = arith.constant dense<0.000000e+00> : vector<36x128xf32>
    %146 = tpu.matmul %137, %145, %cst_81 {dimension_numbers = #tpu.dot_dimension_numbers<[1], [0], [0], [1], [0, 0, 1, 1], [], []>} : vector<36x128xbf16>, vector<128x128xbf16>, vector<36x128xf32> -> vector<36x128xf32>
    %cst_82 = arith.constant 0.000000e+00 : f32
    %147 = vector.broadcast %cst_82 : f32 to vector<1x128xf32>
    %148 = vector.extract_strided_slice %140 {offsets = [0, 0], sizes = [35, 128], strides = [1, 1]} : vector<36x128xf32> to vector<35x128xf32>
    %149 = tpu.concatenate %147, %148 in 0 : vector<1x128xf32>, vector<35x128xf32> -> vector<36x128xf32>
    %150 = arith.addf %143, %149 : vector<36x128xf32>
    %151 = vector.extract_strided_slice %146 {offsets = [1, 0], sizes = [35, 128], strides = [1, 1]} : vector<36x128xf32> to vector<35x128xf32>
    %152 = tpu.concatenate %151, %147 in 0 : vector<35x128xf32>, vector<1x128xf32> -> vector<36x128xf32>
    %153 = arith.addf %150, %152 : vector<36x128xf32>
    %c0_83 = arith.constant 0 : index
    %c0_84 = arith.constant 0 : index
    %154 = vector.load %arg9[%c0_83, %c0_84] : memref<1x128xf32, #tpu.memory_space<vmem>>, vector<1x128xf32>
    %155 = vector.broadcast %154 : vector<1x128xf32> to vector<36x128xf32>
    %156 = arith.addf %153, %155 : vector<36x128xf32>
    %cst_85 = arith.constant 0.000000e+00 : f32
    %157 = vector.broadcast %cst_85 : f32 to vector<36x128xf32>
    %158 = arith.maximumf %156, %157 : vector<36x128xf32>
    %c0_86 = arith.constant 0 : index
    %c0_87 = arith.constant 0 : index
    %159 = vector.load %arg35[%c0_86, %c0_87] : memref<68x128xf32, #tpu.memory_space<vmem>>, vector<36x128xf32>
    tpu.vector_store %arg35[%c0_86, %c0_87], %158 {strides = array<i32>} : memref<68x128xf32, #tpu.memory_space<vmem>>, vector<36x128xf32>,
    %cst_88 = arith.constant 0.000000e+00 : f32
    %160 = vector.broadcast %cst_88 : f32 to vector<1x128xf32>
    %c1_89 = arith.constant 1 : index
    %c0_90 = arith.constant 0 : index
    %161 = tpu.strided_load %arg35[%c1_89, %c0_90] {strides = array<i32: 2, 1>} : memref<68x128xf32, #tpu.memory_space<vmem>>, vector<8x128xf32>
    %c2_91 = arith.constant 2 : index
    %c0_92 = arith.constant 0 : index
    %162 = tpu.strided_load %arg35[%c2_91, %c0_92] {strides = array<i32: 2, 1>} : memref<68x128xf32, #tpu.memory_space<vmem>>, vector<8x128xf32>
    %163 = arith.maximumf %161, %162 : vector<8x128xf32>
    %c120_i32 = arith.constant 120 : i32
    %164 = tpu.dynamic_rotate %163 by %c120_i32 dim 1 : vector<8x128xf32>, i32 -> vector<8x128xf32>
    %165 = arith.maximumf %163, %164 : vector<8x128xf32>
    %c19 = arith.constant 19 : index
    %c0_93 = arith.constant 0 : index
    %166 = tpu.strided_load %arg35[%c19, %c0_93] {strides = array<i32: 2, 1>} : memref<68x128xf32, #tpu.memory_space<vmem>>, vector<8x128xf32>
    %c20 = arith.constant 20 : index
    %c0_94 = arith.constant 0 : index
    %167 = tpu.strided_load %arg35[%c20, %c0_94] {strides = array<i32: 2, 1>} : memref<68x128xf32, #tpu.memory_space<vmem>>, vector<8x128xf32>
    %168 = arith.maximumf %166, %167 : vector<8x128xf32>
    %c120_i32_95 = arith.constant 120 : i32
    %169 = tpu.dynamic_rotate %168 by %c120_i32_95 dim 1 : vector<8x128xf32>, i32 -> vector<8x128xf32>
    %170 = arith.maximumf %168, %169 : vector<8x128xf32>
    %171 = tpu.concatenate %160, %165, %160, %160, %170, %160 in 0 : vector<1x128xf32>, vector<8x128xf32>, vector<1x128xf32>, vector<1x128xf32>, vector<8x128xf32>, vector<1x128xf32> -> vector<20x128xf32>
    %172 = tpu.iota {dimensions = array<i32: 0>} : vector<20x128xi32>
    %c0_i32_96 = arith.constant 0 : i32
    %173 = vector.broadcast %c0_i32_96 : i32 to vector<20x128xi32>
    %174 = arith.cmpi eq, %172, %173 : vector<20x128xi32>
    %c9_i32 = arith.constant 9 : i32
    %175 = vector.broadcast %c9_i32 : i32 to vector<20x128xi32>
    %176 = arith.cmpi eq, %172, %175 : vector<20x128xi32>
    %c10_i32 = arith.constant 10 : i32
    %177 = vector.broadcast %c10_i32 : i32 to vector<20x128xi32>
    %178 = arith.cmpi eq, %172, %177 : vector<20x128xi32>
    %c19_i32 = arith.constant 19 : i32
    %179 = vector.broadcast %c19_i32 : i32 to vector<20x128xi32>
    %180 = arith.cmpi eq, %172, %179 : vector<20x128xi32>
    %181 = arith.ori %174, %176 : vector<20x128xi1>
    %182 = arith.ori %181, %178 : vector<20x128xi1>
    %183 = arith.ori %182, %180 : vector<20x128xi1>
    %cst_97 = arith.constant 0.000000e+00 : f32
    %184 = vector.broadcast %cst_97 : f32 to vector<20x128xf32>
    %185 = arith.select %183, %184, %171 : vector<20x128xi1>, vector<20x128xf32>
    %186 = arith.truncf %185 : vector<20x128xf32> to vector<20x128xbf16>
    %c0_98 = arith.constant 0 : index
    %c0_99 = arith.constant 0 : index
    %c0_100 = arith.constant 0 : index
    %187 = vector.load %arg10[%c0_98, %c0_99, %c0_100] : memref<3x128x128xbf16, #tpu.memory_space<vmem>>, vector<1x128x128xbf16>
    %188 = vector.shape_cast %187 : vector<1x128x128xbf16> to vector<128x128xbf16>
    %cst_101 = arith.constant dense<0.000000e+00> : vector<20x128xf32>
    %189 = tpu.matmul %186, %188, %cst_101 {dimension_numbers = #tpu.dot_dimension_numbers<[1], [0], [0], [1], [0, 0, 1, 1], [], []>} : vector<20x128xbf16>, vector<128x128xbf16>, vector<20x128xf32> -> vector<20x128xf32>
    %c1_102 = arith.constant 1 : index
    %c0_103 = arith.constant 0 : index
    %c0_104 = arith.constant 0 : index
    %190 = vector.load %arg10[%c1_102, %c0_103, %c0_104] : memref<3x128x128xbf16, #tpu.memory_space<vmem>>, vector<1x128x128xbf16>
    %191 = vector.shape_cast %190 : vector<1x128x128xbf16> to vector<128x128xbf16>
    %cst_105 = arith.constant dense<0.000000e+00> : vector<20x128xf32>
    %192 = tpu.matmul %186, %191, %cst_105 {dimension_numbers = #tpu.dot_dimension_numbers<[1], [0], [0], [1], [0, 0, 1, 1], [], []>} : vector<20x128xbf16>, vector<128x128xbf16>, vector<20x128xf32> -> vector<20x128xf32>
    %c2_106 = arith.constant 2 : index
    %c0_107 = arith.constant 0 : index
    %c0_108 = arith.constant 0 : index
    %193 = vector.load %arg10[%c2_106, %c0_107, %c0_108] : memref<3x128x128xbf16, #tpu.memory_space<vmem>>, vector<1x128x128xbf16>
    %194 = vector.shape_cast %193 : vector<1x128x128xbf16> to vector<128x128xbf16>
    %cst_109 = arith.constant dense<0.000000e+00> : vector<20x128xf32>
    %195 = tpu.matmul %186, %194, %cst_109 {dimension_numbers = #tpu.dot_dimension_numbers<[1], [0], [0], [1], [0, 0, 1, 1], [], []>} : vector<20x128xbf16>, vector<128x128xbf16>, vector<20x128xf32> -> vector<20x128xf32>
    %cst_110 = arith.constant 0.000000e+00 : f32
    %196 = vector.broadcast %cst_110 : f32 to vector<1x128xf32>
    %197 = vector.extract_strided_slice %189 {offsets = [0, 0], sizes = [19, 128], strides = [1, 1]} : vector<20x128xf32> to vector<19x128xf32>
    %198 = tpu.concatenate %196, %197 in 0 : vector<1x128xf32>, vector<19x128xf32> -> vector<20x128xf32>
    %199 = arith.addf %192, %198 : vector<20x128xf32>
    %200 = vector.extract_strided_slice %195 {offsets = [1, 0], sizes = [19, 128], strides = [1, 1]} : vector<20x128xf32> to vector<19x128xf32>
    %201 = tpu.concatenate %200, %196 in 0 : vector<19x128xf32>, vector<1x128xf32> -> vector<20x128xf32>
    %202 = arith.addf %199, %201 : vector<20x128xf32>
    %c0_111 = arith.constant 0 : index
    %c0_112 = arith.constant 0 : index
    %203 = vector.load %arg11[%c0_111, %c0_112] : memref<1x128xf32, #tpu.memory_space<vmem>>, vector<1x128xf32>
    %204 = vector.broadcast %203 : vector<1x128xf32> to vector<20x128xf32>
    %205 = arith.addf %202, %204 : vector<20x128xf32>
    %cst_113 = arith.constant 0.000000e+00 : f32
    %206 = vector.broadcast %cst_113 : f32 to vector<20x128xf32>
    %207 = arith.maximumf %205, %206 : vector<20x128xf32>
    %208 = tpu.iota {dimensions = array<i32: 0>} : vector<20x128xi32>
    %c0_i32_114 = arith.constant 0 : i32
    %209 = vector.broadcast %c0_i32_114 : i32 to vector<20x128xi32>
    %210 = arith.cmpi eq, %208, %209 : vector<20x128xi32>
    %c9_i32_115 = arith.constant 9 : i32
    %211 = vector.broadcast %c9_i32_115 : i32 to vector<20x128xi32>
    %212 = arith.cmpi eq, %208, %211 : vector<20x128xi32>
    %c10_i32_116 = arith.constant 10 : i32
    %213 = vector.broadcast %c10_i32_116 : i32 to vector<20x128xi32>
    %214 = arith.cmpi eq, %208, %213 : vector<20x128xi32>
    %c19_i32_117 = arith.constant 19 : i32
    %215 = vector.broadcast %c19_i32_117 : i32 to vector<20x128xi32>
    %216 = arith.cmpi eq, %208, %215 : vector<20x128xi32>
    %217 = arith.ori %210, %212 : vector<20x128xi1>
    %218 = arith.ori %217, %214 : vector<20x128xi1>
    %219 = arith.ori %218, %216 : vector<20x128xi1>
    %cst_118 = arith.constant 0.000000e+00 : f32
    %220 = vector.broadcast %cst_118 : f32 to vector<20x128xf32>
    %221 = arith.select %219, %220, %207 : vector<20x128xi1>, vector<20x128xf32>
    %222 = arith.truncf %221 : vector<20x128xf32> to vector<20x128xbf16>
    %c0_119 = arith.constant 0 : index
    %c0_120 = arith.constant 0 : index
    %c0_121 = arith.constant 0 : index
    %223 = vector.load %arg12[%c0_119, %c0_120, %c0_121] : memref<3x128x128xbf16, #tpu.memory_space<vmem>>, vector<1x128x128xbf16>
    %224 = vector.shape_cast %223 : vector<1x128x128xbf16> to vector<128x128xbf16>
    %cst_122 = arith.constant dense<0.000000e+00> : vector<20x128xf32>
    %225 = tpu.matmul %222, %224, %cst_122 {dimension_numbers = #tpu.dot_dimension_numbers<[1], [0], [0], [1], [0, 0, 1, 1], [], []>} : vector<20x128xbf16>, vector<128x128xbf16>, vector<20x128xf32> -> vector<20x128xf32>
    %c1_123 = arith.constant 1 : index
    %c0_124 = arith.constant 0 : index
    %c0_125 = arith.constant 0 : index
    %226 = vector.load %arg12[%c1_123, %c0_124, %c0_125] : memref<3x128x128xbf16, #tpu.memory_space<vmem>>, vector<1x128x128xbf16>
    %227 = vector.shape_cast %226 : vector<1x128x128xbf16> to vector<128x128xbf16>
    %cst_126 = arith.constant dense<0.000000e+00> : vector<20x128xf32>
    %228 = tpu.matmul %222, %227, %cst_126 {dimension_numbers = #tpu.dot_dimension_numbers<[1], [0], [0], [1], [0, 0, 1, 1], [], []>} : vector<20x128xbf16>, vector<128x128xbf16>, vector<20x128xf32> -> vector<20x128xf32>
    %c2_127 = arith.constant 2 : index
    %c0_128 = arith.constant 0 : index
    %c0_129 = arith.constant 0 : index
    %229 = vector.load %arg12[%c2_127, %c0_128, %c0_129] : memref<3x128x128xbf16, #tpu.memory_space<vmem>>, vector<1x128x128xbf16>
    %230 = vector.shape_cast %229 : vector<1x128x128xbf16> to vector<128x128xbf16>
    %cst_130 = arith.constant dense<0.000000e+00> : vector<20x128xf32>
    %231 = tpu.matmul %222, %230, %cst_130 {dimension_numbers = #tpu.dot_dimension_numbers<[1], [0], [0], [1], [0, 0, 1, 1], [], []>} : vector<20x128xbf16>, vector<128x128xbf16>, vector<20x128xf32> -> vector<20x128xf32>
    %cst_131 = arith.constant 0.000000e+00 : f32
    %232 = vector.broadcast %cst_131 : f32 to vector<1x128xf32>
    %233 = vector.extract_strided_slice %225 {offsets = [0, 0], sizes = [19, 128], strides = [1, 1]} : vector<20x128xf32> to vector<19x128xf32>
    %234 = tpu.concatenate %232, %233 in 0 : vector<1x128xf32>, vector<19x128xf32> -> vector<20x128xf32>
    %235 = arith.addf %228, %234 : vector<20x128xf32>
    %236 = vector.extract_strided_slice %231 {offsets = [1, 0], sizes = [19, 128], strides = [1, 1]} : vector<20x128xf32> to vector<19x128xf32>
    %237 = tpu.concatenate %236, %232 in 0 : vector<19x128xf32>, vector<1x128xf32> -> vector<20x128xf32>
    %238 = arith.addf %235, %237 : vector<20x128xf32>
    %c0_132 = arith.constant 0 : index
    %c0_133 = arith.constant 0 : index
    %239 = vector.load %arg13[%c0_132, %c0_133] : memref<1x128xf32, #tpu.memory_space<vmem>>, vector<1x128xf32>
    %240 = vector.broadcast %239 : vector<1x128xf32> to vector<20x128xf32>
    %241 = arith.addf %238, %240 : vector<20x128xf32>
    %cst_134 = arith.constant 0.000000e+00 : f32
    %242 = vector.broadcast %cst_134 : f32 to vector<20x128xf32>
    %243 = arith.maximumf %241, %242 : vector<20x128xf32>
    %244 = tpu.iota {dimensions = array<i32: 0>} : vector<20x128xi32>
    %c0_i32_135 = arith.constant 0 : i32
    %245 = vector.broadcast %c0_i32_135 : i32 to vector<20x128xi32>
    %246 = arith.cmpi eq, %244, %245 : vector<20x128xi32>
    %c9_i32_136 = arith.constant 9 : i32
    %247 = vector.broadcast %c9_i32_136 : i32 to vector<20x128xi32>
    %248 = arith.cmpi eq, %244, %247 : vector<20x128xi32>
    %c10_i32_137 = arith.constant 10 : i32
    %249 = vector.broadcast %c10_i32_137 : i32 to vector<20x128xi32>
    %250 = arith.cmpi eq, %244, %249 : vector<20x128xi32>
    %c19_i32_138 = arith.constant 19 : i32
    %251 = vector.broadcast %c19_i32_138 : i32 to vector<20x128xi32>
    %252 = arith.cmpi eq, %244, %251 : vector<20x128xi32>
    %253 = arith.ori %246, %248 : vector<20x128xi1>
    %254 = arith.ori %253, %250 : vector<20x128xi1>
    %255 = arith.ori %254, %252 : vector<20x128xi1>
    %cst_139 = arith.constant 0.000000e+00 : f32
    %256 = vector.broadcast %cst_139 : f32 to vector<20x128xf32>
    %257 = arith.select %255, %256, %243 : vector<20x128xi1>, vector<20x128xf32>
    %258 = arith.truncf %257 : vector<20x128xf32> to vector<20x128xbf16>
    %c0_140 = arith.constant 0 : index
    %c0_141 = arith.constant 0 : index
    %c0_142 = arith.constant 0 : index
    %259 = vector.load %arg14[%c0_140, %c0_141, %c0_142] : memref<3x128x128xbf16, #tpu.memory_space<vmem>>, vector<1x128x128xbf16>
    %260 = vector.shape_cast %259 : vector<1x128x128xbf16> to vector<128x128xbf16>
    %cst_143 = arith.constant dense<0.000000e+00> : vector<20x128xf32>
    %261 = tpu.matmul %258, %260, %cst_143 {dimension_numbers = #tpu.dot_dimension_numbers<[1], [0], [0], [1], [0, 0, 1, 1], [], []>} : vector<20x128xbf16>, vector<128x128xbf16>, vector<20x128xf32> -> vector<20x128xf32>
    %c1_144 = arith.constant 1 : index
    %c0_145 = arith.constant 0 : index
    %c0_146 = arith.constant 0 : index
    %262 = vector.load %arg14[%c1_144, %c0_145, %c0_146] : memref<3x128x128xbf16, #tpu.memory_space<vmem>>, vector<1x128x128xbf16>
    %263 = vector.shape_cast %262 : vector<1x128x128xbf16> to vector<128x128xbf16>
    %cst_147 = arith.constant dense<0.000000e+00> : vector<20x128xf32>
    %264 = tpu.matmul %258, %263, %cst_147 {dimension_numbers = #tpu.dot_dimension_numbers<[1], [0], [0], [1], [0, 0, 1, 1], [], []>} : vector<20x128xbf16>, vector<128x128xbf16>, vector<20x128xf32> -> vector<20x128xf32>
    %c2_148 = arith.constant 2 : index
    %c0_149 = arith.constant 0 : index
    %c0_150 = arith.constant 0 : index
    %265 = vector.load %arg14[%c2_148, %c0_149, %c0_150] : memref<3x128x128xbf16, #tpu.memory_space<vmem>>, vector<1x128x128xbf16>
    %266 = vector.shape_cast %265 : vector<1x128x128xbf16> to vector<128x128xbf16>
    %cst_151 = arith.constant dense<0.000000e+00> : vector<20x128xf32>
    %267 = tpu.matmul %258, %266, %cst_151 {dimension_numbers = #tpu.dot_dimension_numbers<[1], [0], [0], [1], [0, 0, 1, 1], [], []>} : vector<20x128xbf16>, vector<128x128xbf16>, vector<20x128xf32> -> vector<20x128xf32>
    %cst_152 = arith.constant 0.000000e+00 : f32
    %268 = vector.broadcast %cst_152 : f32 to vector<1x128xf32>
    %269 = vector.extract_strided_slice %261 {offsets = [0, 0], sizes = [19, 128], strides = [1, 1]} : vector<20x128xf32> to vector<19x128xf32>
    %270 = tpu.concatenate %268, %269 in 0 : vector<1x128xf32>, vector<19x128xf32> -> vector<20x128xf32>
    %271 = arith.addf %264, %270 : vector<20x128xf32>
    %272 = vector.extract_strided_slice %267 {offsets = [1, 0], sizes = [19, 128], strides = [1, 1]} : vector<20x128xf32> to vector<19x128xf32>
    %273 = tpu.concatenate %272, %268 in 0 : vector<19x128xf32>, vector<1x128xf32> -> vector<20x128xf32>
    %274 = arith.addf %271, %273 : vector<20x128xf32>
    %c0_153 = arith.constant 0 : index
    %c0_154 = arith.constant 0 : index
    %275 = vector.load %arg15[%c0_153, %c0_154] : memref<1x128xf32, #tpu.memory_space<vmem>>, vector<1x128xf32>
    %276 = vector.broadcast %275 : vector<1x128xf32> to vector<20x128xf32>
    %277 = arith.addf %274, %276 : vector<20x128xf32>
    %cst_155 = arith.constant 0.000000e+00 : f32
    %278 = vector.broadcast %cst_155 : f32 to vector<20x128xf32>
    %279 = arith.maximumf %277, %278 : vector<20x128xf32>
    %c0_156 = arith.constant 0 : index
    %c0_157 = arith.constant 0 : index
    %280 = vector.load %arg35[%c0_156, %c0_157] : memref<68x128xf32, #tpu.memory_space<vmem>>, vector<20x128xf32>
    tpu.vector_store %arg35[%c0_156, %c0_157], %279 {strides = array<i32>} : memref<68x128xf32, #tpu.memory_space<vmem>>, vector<20x128xf32>,
    %cst_158 = arith.constant 0.000000e+00 : f32
    %281 = vector.broadcast %cst_158 : f32 to vector<1x128xf32>
    %c1_159 = arith.constant 1 : index
    %c0_160 = arith.constant 0 : index
    %282 = tpu.strided_load %arg35[%c1_159, %c0_160] {strides = array<i32: 2, 1>} : memref<68x128xf32, #tpu.memory_space<vmem>>, vector<4x128xf32>
    %c2_161 = arith.constant 2 : index
    %c0_162 = arith.constant 0 : index
    %283 = tpu.strided_load %arg35[%c2_161, %c0_162] {strides = array<i32: 2, 1>} : memref<68x128xf32, #tpu.memory_space<vmem>>, vector<4x128xf32>
    %284 = arith.maximumf %282, %283 : vector<4x128xf32>
    %c112_i32 = arith.constant 112 : i32
    %285 = tpu.dynamic_rotate %284 by %c112_i32 dim 1 : vector<4x128xf32>, i32 -> vector<4x128xf32>
    %286 = arith.maximumf %284, %285 : vector<4x128xf32>
    %c11 = arith.constant 11 : index
    %c0_163 = arith.constant 0 : index
    %287 = tpu.strided_load %arg35[%c11, %c0_163] {strides = array<i32: 2, 1>} : memref<68x128xf32, #tpu.memory_space<vmem>>, vector<4x128xf32>
    %c12 = arith.constant 12 : index
    %c0_164 = arith.constant 0 : index
    %288 = tpu.strided_load %arg35[%c12, %c0_164] {strides = array<i32: 2, 1>} : memref<68x128xf32, #tpu.memory_space<vmem>>, vector<4x128xf32>
    %289 = arith.maximumf %287, %288 : vector<4x128xf32>
    %c112_i32_165 = arith.constant 112 : i32
    %290 = tpu.dynamic_rotate %289 by %c112_i32_165 dim 1 : vector<4x128xf32>, i32 -> vector<4x128xf32>
    %291 = arith.maximumf %289, %290 : vector<4x128xf32>
    %292 = tpu.concatenate %281, %286, %281, %281, %291, %281 in 0 : vector<1x128xf32>, vector<4x128xf32>, vector<1x128xf32>, vector<1x128xf32>, vector<4x128xf32>, vector<1x128xf32> -> vector<12x128xf32>
    %293 = tpu.iota {dimensions = array<i32: 0>} : vector<12x128xi32>
    %c0_i32_166 = arith.constant 0 : i32
    %294 = vector.broadcast %c0_i32_166 : i32 to vector<12x128xi32>
    %295 = arith.cmpi eq, %293, %294 : vector<12x128xi32>
    %c5_i32 = arith.constant 5 : i32
    %296 = vector.broadcast %c5_i32 : i32 to vector<12x128xi32>
    %297 = arith.cmpi eq, %293, %296 : vector<12x128xi32>
    %c6_i32 = arith.constant 6 : i32
    %298 = vector.broadcast %c6_i32 : i32 to vector<12x128xi32>
    %299 = arith.cmpi eq, %293, %298 : vector<12x128xi32>
    %c11_i32 = arith.constant 11 : i32
    %300 = vector.broadcast %c11_i32 : i32 to vector<12x128xi32>
    %301 = arith.cmpi eq, %293, %300 : vector<12x128xi32>
    %302 = arith.ori %295, %297 : vector<12x128xi1>
    %303 = arith.ori %302, %299 : vector<12x128xi1>
    %304 = arith.ori %303, %301 : vector<12x128xi1>
    %cst_167 = arith.constant 0.000000e+00 : f32
    %305 = vector.broadcast %cst_167 : f32 to vector<12x128xf32>
    %306 = arith.select %304, %305, %292 : vector<12x128xi1>, vector<12x128xf32>
    %307 = arith.truncf %306 : vector<12x128xf32> to vector<12x128xbf16>
    %c0_168 = arith.constant 0 : index
    %c0_169 = arith.constant 0 : index
    %c0_170 = arith.constant 0 : index
    %308 = vector.load %arg16[%c0_168, %c0_169, %c0_170] : memref<3x128x128xbf16, #tpu.memory_space<vmem>>, vector<1x128x128xbf16>
    %309 = vector.shape_cast %308 : vector<1x128x128xbf16> to vector<128x128xbf16>
    %cst_171 = arith.constant dense<0.000000e+00> : vector<12x128xf32>
    %310 = tpu.matmul %307, %309, %cst_171 {dimension_numbers = #tpu.dot_dimension_numbers<[1], [0], [0], [1], [0, 0, 1, 1], [], []>} : vector<12x128xbf16>, vector<128x128xbf16>, vector<12x128xf32> -> vector<12x128xf32>
    %c1_172 = arith.constant 1 : index
    %c0_173 = arith.constant 0 : index
    %c0_174 = arith.constant 0 : index
    %311 = vector.load %arg16[%c1_172, %c0_173, %c0_174] : memref<3x128x128xbf16, #tpu.memory_space<vmem>>, vector<1x128x128xbf16>
    %312 = vector.shape_cast %311 : vector<1x128x128xbf16> to vector<128x128xbf16>
    %cst_175 = arith.constant dense<0.000000e+00> : vector<12x128xf32>
    %313 = tpu.matmul %307, %312, %cst_175 {dimension_numbers = #tpu.dot_dimension_numbers<[1], [0], [0], [1], [0, 0, 1, 1], [], []>} : vector<12x128xbf16>, vector<128x128xbf16>, vector<12x128xf32> -> vector<12x128xf32>
    %c2_176 = arith.constant 2 : index
    %c0_177 = arith.constant 0 : index
    %c0_178 = arith.constant 0 : index
    %314 = vector.load %arg16[%c2_176, %c0_177, %c0_178] : memref<3x128x128xbf16, #tpu.memory_space<vmem>>, vector<1x128x128xbf16>
    %315 = vector.shape_cast %314 : vector<1x128x128xbf16> to vector<128x128xbf16>
    %cst_179 = arith.constant dense<0.000000e+00> : vector<12x128xf32>
    %316 = tpu.matmul %307, %315, %cst_179 {dimension_numbers = #tpu.dot_dimension_numbers<[1], [0], [0], [1], [0, 0, 1, 1], [], []>} : vector<12x128xbf16>, vector<128x128xbf16>, vector<12x128xf32> -> vector<12x128xf32>
    %cst_180 = arith.constant 0.000000e+00 : f32
    %317 = vector.broadcast %cst_180 : f32 to vector<1x128xf32>
    %318 = vector.extract_strided_slice %310 {offsets = [0, 0], sizes = [11, 128], strides = [1, 1]} : vector<12x128xf32> to vector<11x128xf32>
    %319 = tpu.concatenate %317, %318 in 0 : vector<1x128xf32>, vector<11x128xf32> -> vector<12x128xf32>
    %320 = arith.addf %313, %319 : vector<12x128xf32>
    %321 = vector.extract_strided_slice %316 {offsets = [1, 0], sizes = [11, 128], strides = [1, 1]} : vector<12x128xf32> to vector<11x128xf32>
    %322 = tpu.concatenate %321, %317 in 0 : vector<11x128xf32>, vector<1x128xf32> -> vector<12x128xf32>
    %323 = arith.addf %320, %322 : vector<12x128xf32>
    %c0_181 = arith.constant 0 : index
    %c0_182 = arith.constant 0 : index
    %324 = vector.load %arg17[%c0_181, %c0_182] : memref<1x128xf32, #tpu.memory_space<vmem>>, vector<1x128xf32>
    %325 = vector.broadcast %324 : vector<1x128xf32> to vector<12x128xf32>
    %326 = arith.addf %323, %325 : vector<12x128xf32>
    %cst_183 = arith.constant 0.000000e+00 : f32
    %327 = vector.broadcast %cst_183 : f32 to vector<12x128xf32>
    %328 = arith.maximumf %326, %327 : vector<12x128xf32>
    %329 = tpu.iota {dimensions = array<i32: 0>} : vector<12x128xi32>
    %c0_i32_184 = arith.constant 0 : i32
    %330 = vector.broadcast %c0_i32_184 : i32 to vector<12x128xi32>
    %331 = arith.cmpi eq, %329, %330 : vector<12x128xi32>
    %c5_i32_185 = arith.constant 5 : i32
    %332 = vector.broadcast %c5_i32_185 : i32 to vector<12x128xi32>
    %333 = arith.cmpi eq, %329, %332 : vector<12x128xi32>
    %c6_i32_186 = arith.constant 6 : i32
    %334 = vector.broadcast %c6_i32_186 : i32 to vector<12x128xi32>
    %335 = arith.cmpi eq, %329, %334 : vector<12x128xi32>
    %c11_i32_187 = arith.constant 11 : i32
    %336 = vector.broadcast %c11_i32_187 : i32 to vector<12x128xi32>
    %337 = arith.cmpi eq, %329, %336 : vector<12x128xi32>
    %338 = arith.ori %331, %333 : vector<12x128xi1>
    %339 = arith.ori %338, %335 : vector<12x128xi1>
    %340 = arith.ori %339, %337 : vector<12x128xi1>
    %cst_188 = arith.constant 0.000000e+00 : f32
    %341 = vector.broadcast %cst_188 : f32 to vector<12x128xf32>
    %342 = arith.select %340, %341, %328 : vector<12x128xi1>, vector<12x128xf32>
    %343 = arith.truncf %342 : vector<12x128xf32> to vector<12x128xbf16>
    %c0_189 = arith.constant 0 : index
    %c0_190 = arith.constant 0 : index
    %c0_191 = arith.constant 0 : index
    %344 = vector.load %arg18[%c0_189, %c0_190, %c0_191] : memref<3x128x128xbf16, #tpu.memory_space<vmem>>, vector<1x128x128xbf16>
    %345 = vector.shape_cast %344 : vector<1x128x128xbf16> to vector<128x128xbf16>
    %cst_192 = arith.constant dense<0.000000e+00> : vector<12x128xf32>
    %346 = tpu.matmul %343, %345, %cst_192 {dimension_numbers = #tpu.dot_dimension_numbers<[1], [0], [0], [1], [0, 0, 1, 1], [], []>} : vector<12x128xbf16>, vector<128x128xbf16>, vector<12x128xf32> -> vector<12x128xf32>
    %c1_193 = arith.constant 1 : index
    %c0_194 = arith.constant 0 : index
    %c0_195 = arith.constant 0 : index
    %347 = vector.load %arg18[%c1_193, %c0_194, %c0_195] : memref<3x128x128xbf16, #tpu.memory_space<vmem>>, vector<1x128x128xbf16>
    %348 = vector.shape_cast %347 : vector<1x128x128xbf16> to vector<128x128xbf16>
    %cst_196 = arith.constant dense<0.000000e+00> : vector<12x128xf32>
    %349 = tpu.matmul %343, %348, %cst_196 {dimension_numbers = #tpu.dot_dimension_numbers<[1], [0], [0], [1], [0, 0, 1, 1], [], []>} : vector<12x128xbf16>, vector<128x128xbf16>, vector<12x128xf32> -> vector<12x128xf32>
    %c2_197 = arith.constant 2 : index
    %c0_198 = arith.constant 0 : index
    %c0_199 = arith.constant 0 : index
    %350 = vector.load %arg18[%c2_197, %c0_198, %c0_199] : memref<3x128x128xbf16, #tpu.memory_space<vmem>>, vector<1x128x128xbf16>
    %351 = vector.shape_cast %350 : vector<1x128x128xbf16> to vector<128x128xbf16>
    %cst_200 = arith.constant dense<0.000000e+00> : vector<12x128xf32>
    %352 = tpu.matmul %343, %351, %cst_200 {dimension_numbers = #tpu.dot_dimension_numbers<[1], [0], [0], [1], [0, 0, 1, 1], [], []>} : vector<12x128xbf16>, vector<128x128xbf16>, vector<12x128xf32> -> vector<12x128xf32>
    %cst_201 = arith.constant 0.000000e+00 : f32
    %353 = vector.broadcast %cst_201 : f32 to vector<1x128xf32>
    %354 = vector.extract_strided_slice %346 {offsets = [0, 0], sizes = [11, 128], strides = [1, 1]} : vector<12x128xf32> to vector<11x128xf32>
    %355 = tpu.concatenate %353, %354 in 0 : vector<1x128xf32>, vector<11x128xf32> -> vector<12x128xf32>
    %356 = arith.addf %349, %355 : vector<12x128xf32>
    %357 = vector.extract_strided_slice %352 {offsets = [1, 0], sizes = [11, 128], strides = [1, 1]} : vector<12x128xf32> to vector<11x128xf32>
    %358 = tpu.concatenate %357, %353 in 0 : vector<11x128xf32>, vector<1x128xf32> -> vector<12x128xf32>
    %359 = arith.addf %356, %358 : vector<12x128xf32>
    %c0_202 = arith.constant 0 : index
    %c0_203 = arith.constant 0 : index
    %360 = vector.load %arg19[%c0_202, %c0_203] : memref<1x128xf32, #tpu.memory_space<vmem>>, vector<1x128xf32>
    %361 = vector.broadcast %360 : vector<1x128xf32> to vector<12x128xf32>
    %362 = arith.addf %359, %361 : vector<12x128xf32>
    %cst_204 = arith.constant 0.000000e+00 : f32
    %363 = vector.broadcast %cst_204 : f32 to vector<12x128xf32>
    %364 = arith.maximumf %362, %363 : vector<12x128xf32>
    %365 = tpu.iota {dimensions = array<i32: 0>} : vector<12x128xi32>
    %c0_i32_205 = arith.constant 0 : i32
    %366 = vector.broadcast %c0_i32_205 : i32 to vector<12x128xi32>
    %367 = arith.cmpi eq, %365, %366 : vector<12x128xi32>
    %c5_i32_206 = arith.constant 5 : i32
    %368 = vector.broadcast %c5_i32_206 : i32 to vector<12x128xi32>
    %369 = arith.cmpi eq, %365, %368 : vector<12x128xi32>
    %c6_i32_207 = arith.constant 6 : i32
    %370 = vector.broadcast %c6_i32_207 : i32 to vector<12x128xi32>
    %371 = arith.cmpi eq, %365, %370 : vector<12x128xi32>
    %c11_i32_208 = arith.constant 11 : i32
    %372 = vector.broadcast %c11_i32_208 : i32 to vector<12x128xi32>
    %373 = arith.cmpi eq, %365, %372 : vector<12x128xi32>
    %374 = arith.ori %367, %369 : vector<12x128xi1>
    %375 = arith.ori %374, %371 : vector<12x128xi1>
    %376 = arith.ori %375, %373 : vector<12x128xi1>
    %cst_209 = arith.constant 0.000000e+00 : f32
    %377 = vector.broadcast %cst_209 : f32 to vector<12x128xf32>
    %378 = arith.select %376, %377, %364 : vector<12x128xi1>, vector<12x128xf32>
    %379 = arith.truncf %378 : vector<12x128xf32> to vector<12x128xbf16>
    %c0_210 = arith.constant 0 : index
    %c0_211 = arith.constant 0 : index
    %c0_212 = arith.constant 0 : index
    %380 = vector.load %arg20[%c0_210, %c0_211, %c0_212] : memref<3x128x128xbf16, #tpu.memory_space<vmem>>, vector<1x128x128xbf16>
    %381 = vector.shape_cast %380 : vector<1x128x128xbf16> to vector<128x128xbf16>
    %cst_213 = arith.constant dense<0.000000e+00> : vector<12x128xf32>
    %382 = tpu.matmul %379, %381, %cst_213 {dimension_numbers = #tpu.dot_dimension_numbers<[1], [0], [0], [1], [0, 0, 1, 1], [], []>} : vector<12x128xbf16>, vector<128x128xbf16>, vector<12x128xf32> -> vector<12x128xf32>
    %c1_214 = arith.constant 1 : index
    %c0_215 = arith.constant 0 : index
    %c0_216 = arith.constant 0 : index
    %383 = vector.load %arg20[%c1_214, %c0_215, %c0_216] : memref<3x128x128xbf16, #tpu.memory_space<vmem>>, vector<1x128x128xbf16>
    %384 = vector.shape_cast %383 : vector<1x128x128xbf16> to vector<128x128xbf16>
    %cst_217 = arith.constant dense<0.000000e+00> : vector<12x128xf32>
    %385 = tpu.matmul %379, %384, %cst_217 {dimension_numbers = #tpu.dot_dimension_numbers<[1], [0], [0], [1], [0, 0, 1, 1], [], []>} : vector<12x128xbf16>, vector<128x128xbf16>, vector<12x128xf32> -> vector<12x128xf32>
    %c2_218 = arith.constant 2 : index
    %c0_219 = arith.constant 0 : index
    %c0_220 = arith.constant 0 : index
    %386 = vector.load %arg20[%c2_218, %c0_219, %c0_220] : memref<3x128x128xbf16, #tpu.memory_space<vmem>>, vector<1x128x128xbf16>
    %387 = vector.shape_cast %386 : vector<1x128x128xbf16> to vector<128x128xbf16>
    %cst_221 = arith.constant dense<0.000000e+00> : vector<12x128xf32>
    %388 = tpu.matmul %379, %387, %cst_221 {dimension_numbers = #tpu.dot_dimension_numbers<[1], [0], [0], [1], [0, 0, 1, 1], [], []>} : vector<12x128xbf16>, vector<128x128xbf16>, vector<12x128xf32> -> vector<12x128xf32>
    %cst_222 = arith.constant 0.000000e+00 : f32
    %389 = vector.broadcast %cst_222 : f32 to vector<1x128xf32>
    %390 = vector.extract_strided_slice %382 {offsets = [0, 0], sizes = [11, 128], strides = [1, 1]} : vector<12x128xf32> to vector<11x128xf32>
    %391 = tpu.concatenate %389, %390 in 0 : vector<1x128xf32>, vector<11x128xf32> -> vector<12x128xf32>
    %392 = arith.addf %385, %391 : vector<12x128xf32>
    %393 = vector.extract_strided_slice %388 {offsets = [1, 0], sizes = [11, 128], strides = [1, 1]} : vector<12x128xf32> to vector<11x128xf32>
    %394 = tpu.concatenate %393, %389 in 0 : vector<11x128xf32>, vector<1x128xf32> -> vector<12x128xf32>
    %395 = arith.addf %392, %394 : vector<12x128xf32>
    %c0_223 = arith.constant 0 : index
    %c0_224 = arith.constant 0 : index
    %396 = vector.load %arg21[%c0_223, %c0_224] : memref<1x128xf32, #tpu.memory_space<vmem>>, vector<1x128xf32>
    %397 = vector.broadcast %396 : vector<1x128xf32> to vector<12x128xf32>
    %398 = arith.addf %395, %397 : vector<12x128xf32>
    %cst_225 = arith.constant 0.000000e+00 : f32
    %399 = vector.broadcast %cst_225 : f32 to vector<12x128xf32>
    %400 = arith.maximumf %398, %399 : vector<12x128xf32>
    %c0_226 = arith.constant 0 : index
    %c0_227 = arith.constant 0 : index
    %401 = vector.load %arg35[%c0_226, %c0_227] : memref<68x128xf32, #tpu.memory_space<vmem>>, vector<12x128xf32>
    tpu.vector_store %arg35[%c0_226, %c0_227], %400 {strides = array<i32>} : memref<68x128xf32, #tpu.memory_space<vmem>>, vector<12x128xf32>,
    %cst_228 = arith.constant 0.000000e+00 : f32
    %402 = vector.broadcast %cst_228 : f32 to vector<1x128xf32>
    %c1_229 = arith.constant 1 : index
    %c0_230 = arith.constant 0 : index
    %403 = tpu.strided_load %arg35[%c1_229, %c0_230] {strides = array<i32: 2, 1>} : memref<68x128xf32, #tpu.memory_space<vmem>>, vector<2x128xf32>
    %c2_231 = arith.constant 2 : index
    %c0_232 = arith.constant 0 : index
    %404 = tpu.strided_load %arg35[%c2_231, %c0_232] {strides = array<i32: 2, 1>} : memref<68x128xf32, #tpu.memory_space<vmem>>, vector<2x128xf32>
    %405 = arith.maximumf %403, %404 : vector<2x128xf32>
    %c96_i32 = arith.constant 96 : i32
    %406 = tpu.dynamic_rotate %405 by %c96_i32 dim 1 : vector<2x128xf32>, i32 -> vector<2x128xf32>
    %407 = arith.maximumf %405, %406 : vector<2x128xf32>
    %c7 = arith.constant 7 : index
    %c0_233 = arith.constant 0 : index
    %408 = tpu.strided_load %arg35[%c7, %c0_233] {strides = array<i32: 2, 1>} : memref<68x128xf32, #tpu.memory_space<vmem>>, vector<2x128xf32>
    %c8 = arith.constant 8 : index
    %c0_234 = arith.constant 0 : index
    %409 = tpu.strided_load %arg35[%c8, %c0_234] {strides = array<i32: 2, 1>} : memref<68x128xf32, #tpu.memory_space<vmem>>, vector<2x128xf32>
    %410 = arith.maximumf %408, %409 : vector<2x128xf32>
    %c96_i32_235 = arith.constant 96 : i32
    %411 = tpu.dynamic_rotate %410 by %c96_i32_235 dim 1 : vector<2x128xf32>, i32 -> vector<2x128xf32>
    %412 = arith.maximumf %410, %411 : vector<2x128xf32>
    %413 = tpu.concatenate %402, %407, %402, %402, %412, %402 in 0 : vector<1x128xf32>, vector<2x128xf32>, vector<1x128xf32>, vector<1x128xf32>, vector<2x128xf32>, vector<1x128xf32> -> vector<8x128xf32>
    %414 = tpu.iota {dimensions = array<i32: 0>} : vector<8x128xi32>
    %c0_i32_236 = arith.constant 0 : i32
    %415 = vector.broadcast %c0_i32_236 : i32 to vector<8x128xi32>
    %416 = arith.cmpi eq, %414, %415 : vector<8x128xi32>
    %c3_i32 = arith.constant 3 : i32
    %417 = vector.broadcast %c3_i32 : i32 to vector<8x128xi32>
    %418 = arith.cmpi eq, %414, %417 : vector<8x128xi32>
    %c4_i32 = arith.constant 4 : i32
    %419 = vector.broadcast %c4_i32 : i32 to vector<8x128xi32>
    %420 = arith.cmpi eq, %414, %419 : vector<8x128xi32>
    %c7_i32 = arith.constant 7 : i32
    %421 = vector.broadcast %c7_i32 : i32 to vector<8x128xi32>
    %422 = arith.cmpi eq, %414, %421 : vector<8x128xi32>
    %423 = arith.ori %416, %418 : vector<8x128xi1>
    %424 = arith.ori %423, %420 : vector<8x128xi1>
    %425 = arith.ori %424, %422 : vector<8x128xi1>
    %cst_237 = arith.constant 0.000000e+00 : f32
    %426 = vector.broadcast %cst_237 : f32 to vector<8x128xf32>
    %427 = arith.select %425, %426, %413 : vector<8x128xi1>, vector<8x128xf32>
    %428 = arith.truncf %427 : vector<8x128xf32> to vector<8x128xbf16>
    %c0_238 = arith.constant 0 : index
    %c0_239 = arith.constant 0 : index
    %c0_240 = arith.constant 0 : index
    %429 = vector.load %arg22[%c0_238, %c0_239, %c0_240] : memref<3x128x64xbf16, #tpu.memory_space<vmem>>, vector<1x128x64xbf16>
    %430 = vector.shape_cast %429 : vector<1x128x64xbf16> to vector<128x64xbf16>
    %cst_241 = arith.constant dense<0.000000e+00> : vector<8x64xf32>
    %431 = tpu.matmul %428, %430, %cst_241 {dimension_numbers = #tpu.dot_dimension_numbers<[1], [0], [0], [1], [0, 0, 1, 1], [], []>} : vector<8x128xbf16>, vector<128x64xbf16>, vector<8x64xf32> -> vector<8x64xf32>
    %c1_242 = arith.constant 1 : index
    %c0_243 = arith.constant 0 : index
    %c0_244 = arith.constant 0 : index
    %432 = vector.load %arg22[%c1_242, %c0_243, %c0_244] : memref<3x128x64xbf16, #tpu.memory_space<vmem>>, vector<1x128x64xbf16>
    %433 = vector.shape_cast %432 : vector<1x128x64xbf16> to vector<128x64xbf16>
    %cst_245 = arith.constant dense<0.000000e+00> : vector<8x64xf32>
    %434 = tpu.matmul %428, %433, %cst_245 {dimension_numbers = #tpu.dot_dimension_numbers<[1], [0], [0], [1], [0, 0, 1, 1], [], []>} : vector<8x128xbf16>, vector<128x64xbf16>, vector<8x64xf32> -> vector<8x64xf32>
    %c2_246 = arith.constant 2 : index
    %c0_247 = arith.constant 0 : index
    %c0_248 = arith.constant 0 : index
    %435 = vector.load %arg22[%c2_246, %c0_247, %c0_248] : memref<3x128x64xbf16, #tpu.memory_space<vmem>>, vector<1x128x64xbf16>
    %436 = vector.shape_cast %435 : vector<1x128x64xbf16> to vector<128x64xbf16>
    %cst_249 = arith.constant dense<0.000000e+00> : vector<8x64xf32>
    %437 = tpu.matmul %428, %436, %cst_249 {dimension_numbers = #tpu.dot_dimension_numbers<[1], [0], [0], [1], [0, 0, 1, 1], [], []>} : vector<8x128xbf16>, vector<128x64xbf16>, vector<8x64xf32> -> vector<8x64xf32>
    %cst_250 = arith.constant 0.000000e+00 : f32
    %438 = vector.broadcast %cst_250 : f32 to vector<1x64xf32>
    %439 = vector.extract_strided_slice %431 {offsets = [0, 0], sizes = [7, 64], strides = [1, 1]} : vector<8x64xf32> to vector<7x64xf32>
    %440 = tpu.concatenate %438, %439 in 0 : vector<1x64xf32>, vector<7x64xf32> -> vector<8x64xf32>
    %441 = arith.addf %434, %440 : vector<8x64xf32>
    %442 = vector.extract_strided_slice %437 {offsets = [1, 0], sizes = [7, 64], strides = [1, 1]} : vector<8x64xf32> to vector<7x64xf32>
    %443 = tpu.concatenate %442, %438 in 0 : vector<7x64xf32>, vector<1x64xf32> -> vector<8x64xf32>
    %444 = arith.addf %441, %443 : vector<8x64xf32>
    %c0_251 = arith.constant 0 : index
    %c0_252 = arith.constant 0 : index
    %445 = vector.load %arg23[%c0_251, %c0_252] : memref<1x64xf32, #tpu.memory_space<vmem>>, vector<1x64xf32>
    %446 = vector.broadcast %445 : vector<1x64xf32> to vector<8x64xf32>
    %447 = arith.addf %444, %446 : vector<8x64xf32>
    %cst_253 = arith.constant 0.000000e+00 : f32
    %448 = vector.broadcast %cst_253 : f32 to vector<8x64xf32>
    %449 = arith.maximumf %447, %448 : vector<8x64xf32>
    %450 = tpu.iota {dimensions = array<i32: 0>} : vector<8x64xi32>
    %c0_i32_254 = arith.constant 0 : i32
    %451 = vector.broadcast %c0_i32_254 : i32 to vector<8x64xi32>
    %452 = arith.cmpi eq, %450, %451 : vector<8x64xi32>
    %c3_i32_255 = arith.constant 3 : i32
    %453 = vector.broadcast %c3_i32_255 : i32 to vector<8x64xi32>
    %454 = arith.cmpi eq, %450, %453 : vector<8x64xi32>
    %c4_i32_256 = arith.constant 4 : i32
    %455 = vector.broadcast %c4_i32_256 : i32 to vector<8x64xi32>
    %456 = arith.cmpi eq, %450, %455 : vector<8x64xi32>
    %c7_i32_257 = arith.constant 7 : i32
    %457 = vector.broadcast %c7_i32_257 : i32 to vector<8x64xi32>
    %458 = arith.cmpi eq, %450, %457 : vector<8x64xi32>
    %459 = arith.ori %452, %454 : vector<8x64xi1>
    %460 = arith.ori %459, %456 : vector<8x64xi1>
    %461 = arith.ori %460, %458 : vector<8x64xi1>
    %cst_258 = arith.constant 0.000000e+00 : f32
    %462 = vector.broadcast %cst_258 : f32 to vector<8x64xf32>
    %463 = arith.select %461, %462, %449 : vector<8x64xi1>, vector<8x64xf32>
    %464 = arith.truncf %463 : vector<8x64xf32> to vector<8x64xbf16>
    %c0_259 = arith.constant 0 : index
    %c0_260 = arith.constant 0 : index
    %c0_261 = arith.constant 0 : index
    %465 = vector.load %arg24[%c0_259, %c0_260, %c0_261] : memref<3x64x64xbf16, #tpu.memory_space<vmem>>, vector<1x64x64xbf16>
    %466 = vector.shape_cast %465 : vector<1x64x64xbf16> to vector<64x64xbf16>
    %cst_262 = arith.constant dense<0.000000e+00> : vector<8x64xf32>
    %467 = tpu.matmul %464, %466, %cst_262 {dimension_numbers = #tpu.dot_dimension_numbers<[1], [0], [0], [1], [0, 0, 1, 1], [], []>} : vector<8x64xbf16>, vector<64x64xbf16>, vector<8x64xf32> -> vector<8x64xf32>
    %c1_263 = arith.constant 1 : index
    %c0_264 = arith.constant 0 : index
    %c0_265 = arith.constant 0 : index
    %468 = vector.load %arg24[%c1_263, %c0_264, %c0_265] : memref<3x64x64xbf16, #tpu.memory_space<vmem>>, vector<1x64x64xbf16>
    %469 = vector.shape_cast %468 : vector<1x64x64xbf16> to vector<64x64xbf16>
    %cst_266 = arith.constant dense<0.000000e+00> : vector<8x64xf32>
    %470 = tpu.matmul %464, %469, %cst_266 {dimension_numbers = #tpu.dot_dimension_numbers<[1], [0], [0], [1], [0, 0, 1, 1], [], []>} : vector<8x64xbf16>, vector<64x64xbf16>, vector<8x64xf32> -> vector<8x64xf32>
    %c2_267 = arith.constant 2 : index
    %c0_268 = arith.constant 0 : index
    %c0_269 = arith.constant 0 : index
    %471 = vector.load %arg24[%c2_267, %c0_268, %c0_269] : memref<3x64x64xbf16, #tpu.memory_space<vmem>>, vector<1x64x64xbf16>
    %472 = vector.shape_cast %471 : vector<1x64x64xbf16> to vector<64x64xbf16>
    %cst_270 = arith.constant dense<0.000000e+00> : vector<8x64xf32>
    %473 = tpu.matmul %464, %472, %cst_270 {dimension_numbers = #tpu.dot_dimension_numbers<[1], [0], [0], [1], [0, 0, 1, 1], [], []>} : vector<8x64xbf16>, vector<64x64xbf16>, vector<8x64xf32> -> vector<8x64xf32>
    %cst_271 = arith.constant 0.000000e+00 : f32
    %474 = vector.broadcast %cst_271 : f32 to vector<1x64xf32>
    %475 = vector.extract_strided_slice %467 {offsets = [0, 0], sizes = [7, 64], strides = [1, 1]} : vector<8x64xf32> to vector<7x64xf32>
    %476 = tpu.concatenate %474, %475 in 0 : vector<1x64xf32>, vector<7x64xf32> -> vector<8x64xf32>
    %477 = arith.addf %470, %476 : vector<8x64xf32>
    %478 = vector.extract_strided_slice %473 {offsets = [1, 0], sizes = [7, 64], strides = [1, 1]} : vector<8x64xf32> to vector<7x64xf32>
    %479 = tpu.concatenate %478, %474 in 0 : vector<7x64xf32>, vector<1x64xf32> -> vector<8x64xf32>
    %480 = arith.addf %477, %479 : vector<8x64xf32>
    %c0_272 = arith.constant 0 : index
    %c0_273 = arith.constant 0 : index
    %481 = vector.load %arg25[%c0_272, %c0_273] : memref<1x64xf32, #tpu.memory_space<vmem>>, vector<1x64xf32>
    %482 = vector.broadcast %481 : vector<1x64xf32> to vector<8x64xf32>
    %483 = arith.addf %480, %482 : vector<8x64xf32>
    %cst_274 = arith.constant 0.000000e+00 : f32
    %484 = vector.broadcast %cst_274 : f32 to vector<8x64xf32>
    %485 = arith.maximumf %483, %484 : vector<8x64xf32>
    %486 = tpu.iota {dimensions = array<i32: 0>} : vector<8x64xi32>
    %c0_i32_275 = arith.constant 0 : i32
    %487 = vector.broadcast %c0_i32_275 : i32 to vector<8x64xi32>
    %488 = arith.cmpi eq, %486, %487 : vector<8x64xi32>
    %c3_i32_276 = arith.constant 3 : i32
    %489 = vector.broadcast %c3_i32_276 : i32 to vector<8x64xi32>
    %490 = arith.cmpi eq, %486, %489 : vector<8x64xi32>
    %c4_i32_277 = arith.constant 4 : i32
    %491 = vector.broadcast %c4_i32_277 : i32 to vector<8x64xi32>
    %492 = arith.cmpi eq, %486, %491 : vector<8x64xi32>
    %c7_i32_278 = arith.constant 7 : i32
    %493 = vector.broadcast %c7_i32_278 : i32 to vector<8x64xi32>
    %494 = arith.cmpi eq, %486, %493 : vector<8x64xi32>
    %495 = arith.ori %488, %490 : vector<8x64xi1>
    %496 = arith.ori %495, %492 : vector<8x64xi1>
    %497 = arith.ori %496, %494 : vector<8x64xi1>
    %cst_279 = arith.constant 0.000000e+00 : f32
    %498 = vector.broadcast %cst_279 : f32 to vector<8x64xf32>
    %499 = arith.select %497, %498, %485 : vector<8x64xi1>, vector<8x64xf32>
    %500 = arith.truncf %499 : vector<8x64xf32> to vector<8x64xbf16>
    %c0_280 = arith.constant 0 : index
    %c0_281 = arith.constant 0 : index
    %c0_282 = arith.constant 0 : index
    %501 = vector.load %arg26[%c0_280, %c0_281, %c0_282] : memref<3x64x64xbf16, #tpu.memory_space<vmem>>, vector<1x64x64xbf16>
    %502 = vector.shape_cast %501 : vector<1x64x64xbf16> to vector<64x64xbf16>
    %cst_283 = arith.constant dense<0.000000e+00> : vector<8x64xf32>
    %503 = tpu.matmul %500, %502, %cst_283 {dimension_numbers = #tpu.dot_dimension_numbers<[1], [0], [0], [1], [0, 0, 1, 1], [], []>} : vector<8x64xbf16>, vector<64x64xbf16>, vector<8x64xf32> -> vector<8x64xf32>
    %c1_284 = arith.constant 1 : index
    %c0_285 = arith.constant 0 : index
    %c0_286 = arith.constant 0 : index
    %504 = vector.load %arg26[%c1_284, %c0_285, %c0_286] : memref<3x64x64xbf16, #tpu.memory_space<vmem>>, vector<1x64x64xbf16>
    %505 = vector.shape_cast %504 : vector<1x64x64xbf16> to vector<64x64xbf16>
    %cst_287 = arith.constant dense<0.000000e+00> : vector<8x64xf32>
    %506 = tpu.matmul %500, %505, %cst_287 {dimension_numbers = #tpu.dot_dimension_numbers<[1], [0], [0], [1], [0, 0, 1, 1], [], []>} : vector<8x64xbf16>, vector<64x64xbf16>, vector<8x64xf32> -> vector<8x64xf32>
    %c2_288 = arith.constant 2 : index
    %c0_289 = arith.constant 0 : index
    %c0_290 = arith.constant 0 : index
    %507 = vector.load %arg26[%c2_288, %c0_289, %c0_290] : memref<3x64x64xbf16, #tpu.memory_space<vmem>>, vector<1x64x64xbf16>
    %508 = vector.shape_cast %507 : vector<1x64x64xbf16> to vector<64x64xbf16>
    %cst_291 = arith.constant dense<0.000000e+00> : vector<8x64xf32>
    %509 = tpu.matmul %500, %508, %cst_291 {dimension_numbers = #tpu.dot_dimension_numbers<[1], [0], [0], [1], [0, 0, 1, 1], [], []>} : vector<8x64xbf16>, vector<64x64xbf16>, vector<8x64xf32> -> vector<8x64xf32>
    %cst_292 = arith.constant 0.000000e+00 : f32
    %510 = vector.broadcast %cst_292 : f32 to vector<1x64xf32>
    %511 = vector.extract_strided_slice %503 {offsets = [0, 0], sizes = [7, 64], strides = [1, 1]} : vector<8x64xf32> to vector<7x64xf32>
    %512 = tpu.concatenate %510, %511 in 0 : vector<1x64xf32>, vector<7x64xf32> -> vector<8x64xf32>
    %513 = arith.addf %506, %512 : vector<8x64xf32>
    %514 = vector.extract_strided_slice %509 {offsets = [1, 0], sizes = [7, 64], strides = [1, 1]} : vector<8x64xf32> to vector<7x64xf32>
    %515 = tpu.concatenate %514, %510 in 0 : vector<7x64xf32>, vector<1x64xf32> -> vector<8x64xf32>
    %516 = arith.addf %513, %515 : vector<8x64xf32>
    %c0_293 = arith.constant 0 : index
    %c0_294 = arith.constant 0 : index
    %517 = vector.load %arg27[%c0_293, %c0_294] : memref<1x64xf32, #tpu.memory_space<vmem>>, vector<1x64xf32>
    %518 = vector.broadcast %517 : vector<1x64xf32> to vector<8x64xf32>
    %519 = arith.addf %516, %518 : vector<8x64xf32>
    %cst_295 = arith.constant 0.000000e+00 : f32
    %520 = vector.broadcast %cst_295 : f32 to vector<8x64xf32>
    %521 = arith.maximumf %519, %520 : vector<8x64xf32>
    %c0_296 = arith.constant 0 : index
    %c0_297 = arith.constant 0 : index
    %522 = vector.load %arg35[%c0_296, %c0_297] : memref<68x128xf32, #tpu.memory_space<vmem>>, vector<8x64xf32>
    tpu.vector_store %arg35[%c0_296, %c0_297], %521 {strides = array<i32>} : memref<68x128xf32, #tpu.memory_space<vmem>>, vector<8x64xf32>,
    %c1_298 = arith.constant 1 : index
    %c0_299 = arith.constant 0 : index
    %523 = tpu.strided_load %arg35[%c1_298, %c0_299] {strides = array<i32: 2, 1>} : memref<68x128xf32, #tpu.memory_space<vmem>>, vector<1x64xf32>
    %c2_300 = arith.constant 2 : index
    %c0_301 = arith.constant 0 : index
    %524 = tpu.strided_load %arg35[%c2_300, %c0_301] {strides = array<i32: 2, 1>} : memref<68x128xf32, #tpu.memory_space<vmem>>, vector<1x64xf32>
    %525 = arith.maximumf %523, %524 : vector<1x64xf32>
    %526 = vector.extract_strided_slice %525 {offsets = [0, 0], sizes = [1, 32], strides = [1, 1]} : vector<1x64xf32> to vector<1x32xf32>
    %527 = vector.extract_strided_slice %525 {offsets = [0, 32], sizes = [1, 32], strides = [1, 1]} : vector<1x64xf32> to vector<1x32xf32>
    %528 = arith.maximumf %526, %527 : vector<1x32xf32>
    %c5 = arith.constant 5 : index
    %c0_302 = arith.constant 0 : index
    %529 = tpu.strided_load %arg35[%c5, %c0_302] {strides = array<i32: 2, 1>} : memref<68x128xf32, #tpu.memory_space<vmem>>, vector<1x64xf32>
    %c6 = arith.constant 6 : index
    %c0_303 = arith.constant 0 : index
    %530 = tpu.strided_load %arg35[%c6, %c0_303] {strides = array<i32: 2, 1>} : memref<68x128xf32, #tpu.memory_space<vmem>>, vector<1x64xf32>
    %531 = arith.maximumf %529, %530 : vector<1x64xf32>
    %532 = vector.extract_strided_slice %531 {offsets = [0, 0], sizes = [1, 32], strides = [1, 1]} : vector<1x64xf32> to vector<1x32xf32>
    %533 = vector.extract_strided_slice %531 {offsets = [0, 32], sizes = [1, 32], strides = [1, 1]} : vector<1x64xf32> to vector<1x32xf32>
    %534 = arith.maximumf %532, %533 : vector<1x32xf32>
    %535 = tpu.concatenate %528, %534 in 0 : vector<1x32xf32>, vector<1x32xf32> -> vector<2x32xf32>
    %536 = arith.truncf %535 : vector<2x32xf32> to vector<2x32xbf16>
    %c0_304 = arith.constant 0 : index
    %c0_305 = arith.constant 0 : index
    %537 = vector.load %arg28[%c0_304, %c0_305] : memref<32x64xbf16, #tpu.memory_space<vmem>>, vector<32x64xbf16>
    %cst_306 = arith.constant dense<0.000000e+00> : vector<2x64xf32>
    %538 = tpu.matmul %536, %537, %cst_306 {dimension_numbers = #tpu.dot_dimension_numbers<[1], [0], [0], [1], [0, 0, 1, 1], [], []>} : vector<2x32xbf16>, vector<32x64xbf16>, vector<2x64xf32> -> vector<2x64xf32>
    %c0_307 = arith.constant 0 : index
    %c0_308 = arith.constant 0 : index
    %539 = vector.load %arg29[%c0_307, %c0_308] : memref<1x64xf32, #tpu.memory_space<vmem>>, vector<1x64xf32>
    %540 = vector.broadcast %539 : vector<1x64xf32> to vector<2x64xf32>
    %541 = arith.addf %538, %540 : vector<2x64xf32>
    %cst_309 = arith.constant 0.000000e+00 : f32
    %542 = vector.broadcast %cst_309 : f32 to vector<2x64xf32>
    %543 = arith.maximumf %541, %542 : vector<2x64xf32>
    %544 = arith.truncf %543 : vector<2x64xf32> to vector<2x64xbf16>
    %c0_310 = arith.constant 0 : index
    %c0_311 = arith.constant 0 : index
    %545 = vector.load %arg30[%c0_310, %c0_311] : memref<64x64xbf16, #tpu.memory_space<vmem>>, vector<64x64xbf16>
    %cst_312 = arith.constant dense<0.000000e+00> : vector<2x64xf32>
    %546 = tpu.matmul %544, %545, %cst_312 {dimension_numbers = #tpu.dot_dimension_numbers<[1], [0], [0], [1], [0, 0, 1, 1], [], []>} : vector<2x64xbf16>, vector<64x64xbf16>, vector<2x64xf32> -> vector<2x64xf32>
    %c0_313 = arith.constant 0 : index
    %c0_314 = arith.constant 0 : index
    %547 = vector.load %arg31[%c0_313, %c0_314] : memref<1x64xf32, #tpu.memory_space<vmem>>, vector<1x64xf32>
    %548 = vector.broadcast %547 : vector<1x64xf32> to vector<2x64xf32>
    %549 = arith.addf %546, %548 : vector<2x64xf32>
    %cst_315 = arith.constant 0.000000e+00 : f32
    %550 = vector.broadcast %cst_315 : f32 to vector<2x64xf32>
    %551 = arith.maximumf %549, %550 : vector<2x64xf32>
    %552 = arith.truncf %551 : vector<2x64xf32> to vector<2x64xbf16>
    %c0_316 = arith.constant 0 : index
    %c0_317 = arith.constant 0 : index
    %553 = vector.load %arg32[%c0_316, %c0_317] : memref<64x2xbf16, #tpu.memory_space<vmem>>, vector<64x2xbf16>
    %cst_318 = arith.constant dense<0.000000e+00> : vector<2x2xf32>
    %554 = tpu.matmul %552, %553, %cst_318 {dimension_numbers = #tpu.dot_dimension_numbers<[1], [0], [0], [1], [0, 0, 1, 1], [], []>} : vector<2x64xbf16>, vector<64x2xbf16>, vector<2x2xf32> -> vector<2x2xf32>
    %c0_319 = arith.constant 0 : index
    %c0_320 = arith.constant 0 : index
    %555 = vector.load %arg33[%c0_319, %c0_320] : memref<1x2xf32, #tpu.memory_space<vmem>>, vector<1x2xf32>
    %556 = vector.broadcast %555 : vector<1x2xf32> to vector<2x2xf32>
    %557 = arith.addf %554, %556 : vector<2x2xf32>
    %c0_321 = arith.constant 0 : index
    %c0_322 = arith.constant 0 : index
    %c0_323 = arith.constant 0 : index
    %558 = vector.load %arg34[%c0_321, %c0_322, %c0_323] : memref<1x2x2xf32, #tpu.memory_space<vmem>>, vector<1x2x2xf32>
    %559 = vector.shape_cast %558 : vector<1x2x2xf32> to vector<2x2xf32>
    %560 = vector.shape_cast %557 : vector<2x2xf32> to vector<1x2x2xf32>
    tpu.vector_store %arg34[%c0_321, %c0_322, %c0_323], %560 {strides = array<i32>} : memref<1x2x2xf32, #tpu.memory_space<vmem>>, vector<1x2x2xf32>,
    return
  }
  func.func @transform_0(%arg0: i32) -> (i32, i32, i32) {
    %c0_i32 = arith.constant 0 : i32
    %c0_i32_0 = arith.constant 0 : i32
    %c0_i32_1 = arith.constant 0 : i32
    return %arg0, %c0_i32, %c0_i32_0 : i32, i32, i32
  }
  func.func @transform_1(%arg0: i32) -> (i32, i32, i32) {
    %c0_i32 = arith.constant 0 : i32
    %c0_i32_0 = arith.constant 0 : i32
    %c0_i32_1 = arith.constant 0 : i32
    %c0_i32_2 = arith.constant 0 : i32
    return %c0_i32, %c0_i32_0, %c0_i32_1 : i32, i32, i32
  }
  func.func @transform_2(%arg0: i32) -> (i32, i32) {
    %c0_i32 = arith.constant 0 : i32
    %c0_i32_0 = arith.constant 0 : i32
    %c0_i32_1 = arith.constant 0 : i32
    return %c0_i32, %c0_i32_0 : i32, i32
  }
  func.func @transform_3(%arg0: i32) -> (i32, i32, i32) {
    %c0_i32 = arith.constant 0 : i32
    %c0_i32_0 = arith.constant 0 : i32
    %c0_i32_1 = arith.constant 0 : i32
    %c0_i32_2 = arith.constant 0 : i32
    return %c0_i32, %c0_i32_0, %c0_i32_1 : i32, i32, i32
  }
  func.func @transform_4(%arg0: i32) -> (i32, i32) {
    %c0_i32 = arith.constant 0 : i32
    %c0_i32_0 = arith.constant 0 : i32
    %c0_i32_1 = arith.constant 0 : i32
    return %c0_i32, %c0_i32_0 : i32, i32
  }
  func.func @transform_5(%arg0: i32) -> (i32, i32, i32) {
    %c0_i32 = arith.constant 0 : i32
    %c0_i32_0 = arith.constant 0 : i32
    %c0_i32_1 = arith.constant 0 : i32
    %c0_i32_2 = arith.constant 0 : i32
    return %c0_i32, %c0_i32_0, %c0_i32_1 : i32, i32, i32
  }
  func.func @transform_6(%arg0: i32) -> (i32, i32) {
    %c0_i32 = arith.constant 0 : i32
    %c0_i32_0 = arith.constant 0 : i32
    %c0_i32_1 = arith.constant 0 : i32
    return %c0_i32, %c0_i32_0 : i32, i32
  }
  func.func @transform_7(%arg0: i32) -> (i32, i32, i32) {
    %c0_i32 = arith.constant 0 : i32
    %c0_i32_0 = arith.constant 0 : i32
    %c0_i32_1 = arith.constant 0 : i32
    %c0_i32_2 = arith.constant 0 : i32
    return %c0_i32, %c0_i32_0, %c0_i32_1 : i32, i32, i32
  }
  func.func @transform_8(%arg0: i32) -> (i32, i32) {
    %c0_i32 = arith.constant 0 : i32
    %c0_i32_0 = arith.constant 0 : i32
    %c0_i32_1 = arith.constant 0 : i32
    return %c0_i32, %c0_i32_0 : i32, i32
  }
  func.func @transform_9(%arg0: i32) -> (i32, i32, i32) {
    %c0_i32 = arith.constant 0 : i32
    %c0_i32_0 = arith.constant 0 : i32
    %c0_i32_1 = arith.constant 0 : i32
    %c0_i32_2 = arith.constant 0 : i32
    return %c0_i32, %c0_i32_0, %c0_i32_1 : i32, i32, i32
  }
  func.func @transform_10(%arg0: i32) -> (i32, i32) {
    %c0_i32 = arith.constant 0 : i32
    %c0_i32_0 = arith.constant 0 : i32
    %c0_i32_1 = arith.constant 0 : i32
    return %c0_i32, %c0_i32_0 : i32, i32
  }
  func.func @transform_11(%arg0: i32) -> (i32, i32, i32) {
    %c0_i32 = arith.constant 0 : i32
    %c0_i32_0 = arith.constant 0 : i32
    %c0_i32_1 = arith.constant 0 : i32
    %c0_i32_2 = arith.constant 0 : i32
    return %c0_i32, %c0_i32_0, %c0_i32_1 : i32, i32, i32
  }
  func.func @transform_12(%arg0: i32) -> (i32, i32) {
    %c0_i32 = arith.constant 0 : i32
    %c0_i32_0 = arith.constant 0 : i32
    %c0_i32_1 = arith.constant 0 : i32
    return %c0_i32, %c0_i32_0 : i32, i32
  }
  func.func @transform_13(%arg0: i32) -> (i32, i32, i32) {
    %c0_i32 = arith.constant 0 : i32
    %c0_i32_0 = arith.constant 0 : i32
    %c0_i32_1 = arith.constant 0 : i32
    %c0_i32_2 = arith.constant 0 : i32
    return %c0_i32, %c0_i32_0, %c0_i32_1 : i32, i32, i32
  }
  func.func @transform_14(%arg0: i32) -> (i32, i32) {
    %c0_i32 = arith.constant 0 : i32
    %c0_i32_0 = arith.constant 0 : i32
    %c0_i32_1 = arith.constant 0 : i32
    return %c0_i32, %c0_i32_0 : i32, i32
  }
  func.func @transform_15(%arg0: i32) -> (i32, i32, i32) {
    %c0_i32 = arith.constant 0 : i32
    %c0_i32_0 = arith.constant 0 : i32
    %c0_i32_1 = arith.constant 0 : i32
    %c0_i32_2 = arith.constant 0 : i32
    return %c0_i32, %c0_i32_0, %c0_i32_1 : i32, i32, i32
  }
  func.func @transform_16(%arg0: i32) -> (i32, i32) {
    %c0_i32 = arith.constant 0 : i32
    %c0_i32_0 = arith.constant 0 : i32
    %c0_i32_1 = arith.constant 0 : i32
    return %c0_i32, %c0_i32_0 : i32, i32
  }
  func.func @transform_17(%arg0: i32) -> (i32, i32, i32) {
    %c0_i32 = arith.constant 0 : i32
    %c0_i32_0 = arith.constant 0 : i32
    %c0_i32_1 = arith.constant 0 : i32
    %c0_i32_2 = arith.constant 0 : i32
    return %c0_i32, %c0_i32_0, %c0_i32_1 : i32, i32, i32
  }
  func.func @transform_18(%arg0: i32) -> (i32, i32) {
    %c0_i32 = arith.constant 0 : i32
    %c0_i32_0 = arith.constant 0 : i32
    %c0_i32_1 = arith.constant 0 : i32
    return %c0_i32, %c0_i32_0 : i32, i32
  }
  func.func @transform_19(%arg0: i32) -> (i32, i32, i32) {
    %c0_i32 = arith.constant 0 : i32
    %c0_i32_0 = arith.constant 0 : i32
    %c0_i32_1 = arith.constant 0 : i32
    %c0_i32_2 = arith.constant 0 : i32
    return %c0_i32, %c0_i32_0, %c0_i32_1 : i32, i32, i32
  }
  func.func @transform_20(%arg0: i32) -> (i32, i32) {
    %c0_i32 = arith.constant 0 : i32
    %c0_i32_0 = arith.constant 0 : i32
    %c0_i32_1 = arith.constant 0 : i32
    return %c0_i32, %c0_i32_0 : i32, i32
  }
  func.func @transform_21(%arg0: i32) -> (i32, i32, i32) {
    %c0_i32 = arith.constant 0 : i32
    %c0_i32_0 = arith.constant 0 : i32
    %c0_i32_1 = arith.constant 0 : i32
    %c0_i32_2 = arith.constant 0 : i32
    return %c0_i32, %c0_i32_0, %c0_i32_1 : i32, i32, i32
  }
  func.func @transform_22(%arg0: i32) -> (i32, i32) {
    %c0_i32 = arith.constant 0 : i32
    %c0_i32_0 = arith.constant 0 : i32
    %c0_i32_1 = arith.constant 0 : i32
    return %c0_i32, %c0_i32_0 : i32, i32
  }
  func.func @transform_23(%arg0: i32) -> (i32, i32, i32) {
    %c0_i32 = arith.constant 0 : i32
    %c0_i32_0 = arith.constant 0 : i32
    %c0_i32_1 = arith.constant 0 : i32
    %c0_i32_2 = arith.constant 0 : i32
    return %c0_i32, %c0_i32_0, %c0_i32_1 : i32, i32, i32
  }
  func.func @transform_24(%arg0: i32) -> (i32, i32) {
    %c0_i32 = arith.constant 0 : i32
    %c0_i32_0 = arith.constant 0 : i32
    %c0_i32_1 = arith.constant 0 : i32
    return %c0_i32, %c0_i32_0 : i32, i32
  }
  func.func @transform_25(%arg0: i32) -> (i32, i32, i32) {
    %c0_i32 = arith.constant 0 : i32
    %c0_i32_0 = arith.constant 0 : i32
    %c0_i32_1 = arith.constant 0 : i32
    %c0_i32_2 = arith.constant 0 : i32
    return %c0_i32, %c0_i32_0, %c0_i32_1 : i32, i32, i32
  }
  func.func @transform_26(%arg0: i32) -> (i32, i32) {
    %c0_i32 = arith.constant 0 : i32
    %c0_i32_0 = arith.constant 0 : i32
    %c0_i32_1 = arith.constant 0 : i32
    return %c0_i32, %c0_i32_0 : i32, i32
  }
  func.func @transform_27(%arg0: i32) -> (i32, i32) {
    %c0_i32 = arith.constant 0 : i32
    %c0_i32_0 = arith.constant 0 : i32
    %c0_i32_1 = arith.constant 0 : i32
    return %c0_i32, %c0_i32_0 : i32, i32
  }
  func.func @transform_28(%arg0: i32) -> (i32, i32) {
    %c0_i32 = arith.constant 0 : i32
    %c0_i32_0 = arith.constant 0 : i32
    %c0_i32_1 = arith.constant 0 : i32
    return %c0_i32, %c0_i32_0 : i32, i32
  }
  func.func @transform_29(%arg0: i32) -> (i32, i32) {
    %c0_i32 = arith.constant 0 : i32
    %c0_i32_0 = arith.constant 0 : i32
    %c0_i32_1 = arith.constant 0 : i32
    return %c0_i32, %c0_i32_0 : i32, i32
  }
  func.func @transform_30(%arg0: i32) -> (i32, i32) {
    %c0_i32 = arith.constant 0 : i32
    %c0_i32_0 = arith.constant 0 : i32
    %c0_i32_1 = arith.constant 0 : i32
    return %c0_i32, %c0_i32_0 : i32, i32
  }
  func.func @transform_31(%arg0: i32) -> (i32, i32) {
    %c0_i32 = arith.constant 0 : i32
    %c0_i32_0 = arith.constant 0 : i32
    %c0_i32_1 = arith.constant 0 : i32
    return %c0_i32, %c0_i32_0 : i32, i32
  }
  func.func @transform_32(%arg0: i32) -> (i32, i32) {
    %c0_i32 = arith.constant 0 : i32
    %c0_i32_0 = arith.constant 0 : i32
    %c0_i32_1 = arith.constant 0 : i32
    return %c0_i32, %c0_i32_0 : i32, i32
  }
  func.func @transform_33(%arg0: i32) -> (i32, i32, i32) {
    %c0_i32 = arith.constant 0 : i32
    %c0_i32_0 = arith.constant 0 : i32
    %c0_i32_1 = arith.constant 0 : i32
    return %arg0, %c0_i32, %c0_i32_0 : i32, i32, i32
  }
}

</mosaic_0001>

<llo_original>
// kernel: forward.1
$region0: #{forward.1}
  #allocation0 [shape = 'u32[]', space=smem, size = 0x4, offset = 0x4, fixed_abs, tag = 'smem constant byte address 0x4 - core index']
  #allocation1 [shape = 'u32[144,128]{1,0:T(1,128)}', space=vmem, size = 0x12000, scoped, tag = 'internal scratch']
  #allocation2 [shape = 'f32[68,128]{1,0:T(8,128)}', space=vmem, size = 0x9000, scoped, tag = 'scratch operand']
  %s0 = inlined_call_operand.smem [shape: u32[34], index: -1, kind: input, shape index: {}]
  %s1 = sld [smem:[%s0]]
  %s2 = scalar_lea.smem %s0, 1
  %s3 = sld [smem:[%s2]]
  %s4 = scalar_lea.smem %s0, 2
  %s5 = sld [smem:[%s4]]
  %s6 = scalar_lea.smem %s0, 3
  %s7 = sld [smem:[%s6]]
  %s8 = scalar_lea.smem %s0, 4
  %s9 = sld [smem:[%s8]]
  %s10 = scalar_lea.smem %s0, 5
  %s11 = sld [smem:[%s10]]
  %s12 = scalar_lea.smem %s0, 6
  %s13 = sld [smem:[%s12]]
  %s14 = scalar_lea.smem %s0, 7
  %s15 = sld [smem:[%s14]]
  %s16 = scalar_lea.smem %s0, 8
  %s17 = sld [smem:[%s16]]
  %s18 = scalar_lea.smem %s0, 9
  %s19 = sld [smem:[%s18]]
  %s20 = scalar_lea.smem %s0, 10
  %s21 = sld [smem:[%s20]]
  %s22 = scalar_lea.smem %s0, 11
  %s23 = sld [smem:[%s22]]
  %s24 = scalar_lea.smem %s0, 12
  %s25 = sld [smem:[%s24]]
  %s26 = scalar_lea.smem %s0, 13
  %s27 = sld [smem:[%s26]]
  %s28 = scalar_lea.smem %s0, 14
  %s29 = sld [smem:[%s28]]
  %s30 = scalar_lea.smem %s0, 15
  %s31 = sld [smem:[%s30]]
  %s32 = scalar_lea.smem %s0, 16
  %s33 = sld [smem:[%s32]]
  %s34 = scalar_lea.smem %s0, 17
  %s35 = sld [smem:[%s34]]
  %s36 = scalar_lea.smem %s0, 18
  %s37 = sld [smem:[%s36]]
  %s38 = scalar_lea.smem %s0, 19
  %s39 = sld [smem:[%s38]]
  %s40 = scalar_lea.smem %s0, 20
  %s41 = sld [smem:[%s40]]
  %s42 = scalar_lea.smem %s0, 21
  %s43 = sld [smem:[%s42]]
  %s44 = scalar_lea.smem %s0, 22
  %s45 = sld [smem:[%s44]]
  %s46 = scalar_lea.smem %s0, 23
  %s47 = sld [smem:[%s46]]
  %s48 = scalar_lea.smem %s0, 24
  %s49 = sld [smem:[%s48]]
  %s50 = scalar_lea.smem %s0, 25
  %s51 = sld [smem:[%s50]]
  %s52 = scalar_lea.smem %s0, 26
  %s53 = sld [smem:[%s52]]
  %s54 = scalar_lea.smem %s0, 27
  %s55 = sld [smem:[%s54]]
  %s56 = scalar_lea.smem %s0, 28
  %s57 = sld [smem:[%s56]]
  %s58 = scalar_lea.smem %s0, 29
  %s59 = sld [smem:[%s58]]
  %s60 = scalar_lea.smem %s0, 30
  %s61 = sld [smem:[%s60]]
  %s62 = scalar_lea.smem %s0, 31
  %s63 = sld [smem:[%s62]]
  %s64 = scalar_lea.smem %s0, 32
  %s65 = sld [smem:[%s64]]
  %s66 = scalar_lea.smem %s0, 33
  %s67 = sld [smem:[%s66]]
  %s68 = sld [smem:[#allocation0]]
  $region165: #{forward.1} parent=0
    _
  %s70 = ssub.s32 1, %s68
  %s71 = scalar_select 0, %s70, %s68
  loop: start=0, step=1, limit=4
  $region2: #{forward.1} parent=0 // loop_pre_header
    _
  $region3: #{forward.1} parent=0 // loop_header
    %s73 = sphi 0, %s77
    %p74 = scmp.ge.s32.totalorder %s73, 4
    %s83 = sphi 0, %s85
    %s86 = sphi 0, %s83
    %s87 = sphi 0, %s86
    %s103 = sphi 0, %s87
    %s107 = sphi 0, %s107
    %s109 = sphi 0, %s107
    %s110 = sphi 0, %s109
    %s124 = sphi 0, %s110
    %s128 = sphi 0, %s128
    %s130 = sphi 0, %s128
    %s131 = sphi 0, %s130
    %s145 = sphi 0, %s131
    %s149 = sphi 0, %s149
    %s151 = sphi 0, %s149
    %s152 = sphi 0, %s151
    %s166 = sphi 0, %s152
    %s170 = sphi 0, %s170
    %s172 = sphi 0, %s170
    %s173 = sphi 0, %s172
    %s187 = sphi 0, %s173
    %s191 = sphi 0, %s191
    %s193 = sphi 0, %s191
    %s194 = sphi 0, %s193
    %s208 = sphi 0, %s194
    %s212 = sphi 0, %s212
    %s214 = sphi 0, %s212
    %s215 = sphi 0, %s214
    %s229 = sphi 0, %s215
    %s233 = sphi 0, %s233
    %s235 = sphi 0, %s233
    %s236 = sphi 0, %s235
    %s250 = sphi 0, %s236
    %s254 = sphi 0, %s254
    %s256 = sphi 0, %s254
    %s257 = sphi 0, %s256
    %s271 = sphi 0, %s257
    %s275 = sphi 0, %s275
    %s277 = sphi 0, %s275
    %s278 = sphi 0, %s277
    %s292 = sphi 0, %s278
    %s296 = sphi 0, %s296
    %s298 = sphi 0, %s296
    %s299 = sphi 0, %s298
    %s313 = sphi 0, %s299
    %s317 = sphi 0, %s317
    %s319 = sphi 0, %s317
    %s320 = sphi 0, %s319
    %s334 = sphi 0, %s320
    %s338 = sphi 0, %s338
    %s340 = sphi 0, %s338
    %s341 = sphi 0, %s340
    %s355 = sphi 0, %s341
    %s359 = sphi 0, %s359
    %s361 = sphi 0, %s359
    %s362 = sphi 0, %s361
    %s376 = sphi 0, %s362
    %s380 = sphi 0, %s380
    %s382 = sphi 0, %s380
    %s383 = sphi 0, %s382
    %s397 = sphi 0, %s383
    %s401 = sphi 0, %s401
    %s403 = sphi 0, %s401
    %s404 = sphi 0, %s403
    %s418 = sphi 0, %s404
    %s422 = sphi 0, %s422
    %s424 = sphi 0, %s422
    %s425 = sphi 0, %s424
    %s439 = sphi 0, %s425
    %s443 = sphi 0, %s443
    %s445 = sphi 0, %s443
    %s446 = sphi 0, %s445
    %s460 = sphi 0, %s446
    %s464 = sphi 0, %s464
    %s466 = sphi 0, %s464
    %s467 = sphi 0, %s466
    %s481 = sphi 0, %s467
    %s485 = sphi 0, %s485
    %s487 = sphi 0, %s485
    %s488 = sphi 0, %s487
    %s502 = sphi 0, %s488
    %s506 = sphi 0, %s506
    %s508 = sphi 0, %s506
    %s509 = sphi 0, %s508
    %s523 = sphi 0, %s509
    %s527 = sphi 0, %s527
    %s529 = sphi 0, %s527
    %s530 = sphi 0, %s529
    %s544 = sphi 0, %s530
    %s548 = sphi 0, %s548
    %s550 = sphi 0, %s548
    %s551 = sphi 0, %s550
    %s565 = sphi 0, %s551
    %s569 = sphi 0, %s569
    %s571 = sphi 0, %s569
    %s572 = sphi 0, %s571
    %s586 = sphi 0, %s572
    %s590 = sphi 0, %s590
    %s592 = sphi 0, %s590
    %s593 = sphi 0, %s592
    %s607 = sphi 0, %s593
    %s611 = sphi 0, %s611
    %s613 = sphi 0, %s611
    %s614 = sphi 0, %s613
    %s628 = sphi 0, %s614
    %s632 = sphi 0, %s632
    %s634 = sphi 0, %s632
    %s635 = sphi 0, %s634
    %s649 = sphi 0, %s635
    %s653 = sphi 0, %s653
    %s655 = sphi 0, %s653
    %s656 = sphi 0, %s655
    %s670 = sphi 0, %s656
    %s674 = sphi 0, %s674
    %s676 = sphi 0, %s674
    %s677 = sphi 0, %s676
    %s691 = sphi 0, %s677
    %s695 = sphi 0, %s695
    %s697 = sphi 0, %s695
    %s698 = sphi 0, %s697
    %s712 = sphi 0, %s698
    %s716 = sphi 0, %s716
    %s718 = sphi 0, %s716
    %s719 = sphi 0, %s718
    %s733 = sphi 0, %s719
    %s737 = sphi 0, %s737
    %s739 = sphi 0, %s737
    %s740 = sphi 0, %s739
    %s754 = sphi 0, %s740
    %s758 = sphi 0, %s758
    %s760 = sphi 0, %s758
    %s761 = sphi 0, %s760
    %s775 = sphi 0, %s761
    %s781 = sphi 0, %s783
    %s784 = sphi 0, %s781
    %s785 = sphi 0, %s784
    %s801 = sphi 0, %s785
  $region4: #{forward.1} parent=0 // loop_header_branch
    %76 = sbr.rel (%p74) target = $region8
  $region5: #{forward.1} parent=0 // loop_body
    %s78 = ssub.s32 %s73, 1
    %s79 = ssub.s32 %s73, 2
    %s80 = sadd.s32 %s73, 1
    %s81 = ssub.s32 %s73, %s80
    %p82 = scmp.eq.s32.totalorder %s81, 0
    %s84 = sadd.s32 %s83, 1
    %s85 = scalar_select %p82, %s83, %s84
    %p88 = pneg %p82
    %p89 = scmp.eq.s32.totalorder %s73, 1
    %p90 = por %p88, %p89
    %p91 = scmp.ne.s32.totalorder %s83, %s86
    %p92 = scmp.eq.s32.totalorder %s73, 0
    %p93 = por %p91, %p92
    %p94 = scmp.ne.s32.totalorder %s83, %s86
    %p95 = scmp.eq.s32.totalorder %s78, 1
    %p96 = por %p94, %p95
    %p97 = scmp.ne.s32.totalorder %s86, %s87
    %p98 = scmp.eq.s32.totalorder %s78, 0
    %p99 = por %p97, %p98
    %p100 = scmp.ne.s32.totalorder %s86, %s87
    %p101 = scmp.eq.s32.totalorder %s79, 1
    %p102 = por %p100, %p101
    %p104 = scmp.ne.s32.totalorder %s87, %s103
    %p105 = scmp.eq.s32.totalorder %s79, 0
    %p106 = por %p104, %p105
    %s108 = sadd.s32 %s107, 1
    %p111 = scmp.eq.s32.totalorder %s73, 1
    %p112 = scmp.ne.s32.totalorder %s107, %s109
    %p113 = scmp.eq.s32.totalorder %s73, 0
    %p114 = por %p112, %p113
    %p115 = scmp.ne.s32.totalorder %s107, %s109
    %p116 = scmp.eq.s32.totalorder %s78, 1
    %p117 = por %p115, %p116
    %p118 = scmp.ne.s32.totalorder %s109, %s110
    %p119 = scmp.eq.s32.totalorder %s78, 0
    %p120 = por %p118, %p119
    %p121 = scmp.ne.s32.totalorder %s109, %s110
    %p122 = scmp.eq.s32.totalorder %s79, 1
    %p123 = por %p121, %p122
    %p125 = scmp.ne.s32.totalorder %s110, %s124
    %p126 = scmp.eq.s32.totalorder %s79, 0
    %p127 = por %p125, %p126
    %s129 = sadd.s32 %s128, 1
    %p132 = scmp.eq.s32.totalorder %s73, 1
    %p133 = scmp.ne.s32.totalorder %s128, %s130
    %p134 = scmp.eq.s32.totalorder %s73, 0
    %p135 = por %p133, %p134
    %p136 = scmp.ne.s32.totalorder %s128, %s130
    %p137 = scmp.eq.s32.totalorder %s78, 1
    %p138 = por %p136, %p137
    %p139 = scmp.ne.s32.totalorder %s130, %s131
    %p140 = scmp.eq.s32.totalorder %s78, 0
    %p141 = por %p139, %p140
    %p142 = scmp.ne.s32.totalorder %s130, %s131
    %p143 = scmp.eq.s32.totalorder %s79, 1
    %p144 = por %p142, %p143
    %p146 = scmp.ne.s32.totalorder %s131, %s145
    %p147 = scmp.eq.s32.totalorder %s79, 0
    %p148 = por %p146, %p147
    %s150 = sadd.s32 %s149, 1
    %p153 = scmp.eq.s32.totalorder %s73, 1
    %p154 = scmp.ne.s32.totalorder %s149, %s151
    %p155 = scmp.eq.s32.totalorder %s73, 0
    %p156 = por %p154, %p155
    %p157 = scmp.ne.s32.totalorder %s149, %s151
    %p158 = scmp.eq.s32.totalorder %s78, 1
    %p159 = por %p157, %p158
    %p160 = scmp.ne.s32.totalorder %s151, %s152
    %p161 = scmp.eq.s32.totalorder %s78, 0
    %p162 = por %p160, %p161
    %p163 = scmp.ne.s32.totalorder %s151, %s152
    %p164 = scmp.eq.s32.totalorder %s79, 1
    %p165 = por %p163, %p164
    %p167 = scmp.ne.s32.totalorder %s152, %s166
    %p168 = scmp.eq.s32.totalorder %s79, 0
    %p169 = por %p167, %p168
    %s171 = sadd.s32 %s170, 1
    %p174 = scmp.eq.s32.totalorder %s73, 1
    %p175 = scmp.ne.s32.totalorder %s170, %s172
    %p176 = scmp.eq.s32.totalorder %s73, 0
    %p177 = por %p175, %p176
    %p178 = scmp.ne.s32.totalorder %s170, %s172
    %p179 = scmp.eq.s32.totalorder %s78, 1
    %p180 = por %p178, %p179
    %p181 = scmp.ne.s32.totalorder %s172, %s173
    %p182 = scmp.eq.s32.totalorder %s78, 0
    %p183 = por %p181, %p182
    %p184 = scmp.ne.s32.totalorder %s172, %s173
    %p185 = scmp.eq.s32.totalorder %s79, 1
    %p186 = por %p184, %p185
    %p188 = scmp.ne.s32.totalorder %s173, %s187
    %p189 = scmp.eq.s32.totalorder %s79, 0
    %p190 = por %p188, %p189
    %s192 = sadd.s32 %s191, 1
    %p195 = scmp.eq.s32.totalorder %s73, 1
    %p196 = scmp.ne.s32.totalorder %s191, %s193
    %p197 = scmp.eq.s32.totalorder %s73, 0
    %p198 = por %p196, %p197
    %p199 = scmp.ne.s32.totalorder %s191, %s193
    %p200 = scmp.eq.s32.totalorder %s78, 1
    %p201 = por %p199, %p200
    %p202 = scmp.ne.s32.totalorder %s193, %s194
    %p203 = scmp.eq.s32.totalorder %s78, 0
    %p204 = por %p202, %p203
    %p205 = scmp.ne.s32.totalorder %s193, %s194
    %p206 = scmp.eq.s32.totalorder %s79, 1
    %p207 = por %p205, %p206
    %p209 = scmp.ne.s32.totalorder %s194, %s208
    %p210 = scmp.eq.s32.totalorder %s79, 0
    %p211 = por %p209, %p210
    %s213 = sadd.s32 %s212, 1
    %p216 = scmp.eq.s32.totalorder %s73, 1
    %p217 = scmp.ne.s32.totalorder %s212, %s214
    %p218 = scmp.eq.s32.totalorder %s73, 0
    %p219 = por %p217, %p218
    %p220 = scmp.ne.s32.totalorder %s212, %s214
    %p221 = scmp.eq.s32.totalorder %s78, 1
    %p222 = por %p220, %p221
    %p223 = scmp.ne.s32.totalorder %s214, %s215
    %p224 = scmp.eq.s32.totalorder %s78, 0
    %p225 = por %p223, %p224
    %p226 = scmp.ne.s32.totalorder %s214, %s215
    %p227 = scmp.eq.s32.totalorder %s79, 1
    %p228 = por %p226, %p227
    %p230 = scmp.ne.s32.totalorder %s215, %s229
    %p231 = scmp.eq.s32.totalorder %s79, 0
    %p232 = por %p230, %p231
    %s234 = sadd.s32 %s233, 1
    %p237 = scmp.eq.s32.totalorder %s73, 1
    %p238 = scmp.ne.s32.totalorder %s233, %s235
    %p239 = scmp.eq.s32.totalorder %s73, 0
    %p240 = por %p238, %p239
    %p241 = scmp.ne.s32.totalorder %s233, %s235
    %p242 = scmp.eq.s32.totalorder %s78, 1
    %p243 = por %p241, %p242
    %p244 = scmp.ne.s32.totalorder %s235, %s236
    %p245 = scmp.eq.s32.totalorder %s78, 0
    %p246 = por %p244, %p245
    %p247 = scmp.ne.s32.totalorder %s235, %s236
    %p248 = scmp.eq.s32.totalorder %s79, 1
    %p249 = por %p247, %p248
    %p251 = scmp.ne.s32.totalorder %s236, %s250
    %p252 = scmp.eq.s32.totalorder %s79, 0
    %p253 = por %p251, %p252
    %s255 = sadd.s32 %s254, 1
    %p258 = scmp.eq.s32.totalorder %s73, 1
    %p259 = scmp.ne.s32.totalorder %s254, %s256
    %p260 = scmp.eq.s32.totalorder %s73, 0
    %p261 = por %p259, %p260
    %p262 = scmp.ne.s32.totalorder %s254, %s256
    %p263 = scmp.eq.s32.totalorder %s78, 1
    %p264 = por %p262, %p263
    %p265 = scmp.ne.s32.totalorder %s256, %s257
    %p266 = scmp.eq.s32.totalorder %s78, 0
    %p267 = por %p265, %p266
    %p268 = scmp.ne.s32.totalorder %s256, %s257
    %p269 = scmp.eq.s32.totalorder %s79, 1
    %p270 = por %p268, %p269
    %p272 = scmp.ne.s32.totalorder %s257, %s271
    %p273 = scmp.eq.s32.totalorder %s79, 0
    %p274 = por %p272, %p273
    %s276 = sadd.s32 %s275, 1
    %p279 = scmp.eq.s32.totalorder %s73, 1
    %p280 = scmp.ne.s32.totalorder %s275, %s277
    %p281 = scmp.eq.s32.totalorder %s73, 0
    %p282 = por %p280, %p281
    %p283 = scmp.ne.s32.totalorder %s275, %s277
    %p284 = scmp.eq.s32.totalorder %s78, 1
    %p285 = por %p283, %p284
    %p286 = scmp.ne.s32.totalorder %s277, %s278
    %p287 = scmp.eq.s32.totalorder %s78, 0
    %p288 = por %p286, %p287
    %p289 = scmp.ne.s32.totalorder %s277, %s278
    %p290 = scmp.eq.s32.totalorder %s79, 1
    %p291 = por %p289, %p290
    %p293 = scmp.ne.s32.totalorder %s278, %s292
    %p294 = scmp.eq.s32.totalorder %s79, 0
    %p295 = por %p293, %p294
    %s297 = sadd.s32 %s296, 1
    %p300 = scmp.eq.s32.totalorder %s73, 1
    %p301 = scmp.ne.s32.totalorder %s296, %s298
    %p302 = scmp.eq.s32.totalorder %s73, 0
    %p303 = por %p301, %p302
    %p304 = scmp.ne.s32.totalorder %s296, %s298
    %p305 = scmp.eq.s32.totalorder %s78, 1
    %p306 = por %p304, %p305
    %p307 = scmp.ne.s32.totalorder %s298, %s299
    %p308 = scmp.eq.s32.totalorder %s78, 0
    %p309 = por %p307, %p308
    %p310 = scmp.ne.s32.totalorder %s298, %s299
    %p311 = scmp.eq.s32.totalorder %s79, 1
    %p312 = por %p310, %p311
    %p314 = scmp.ne.s32.totalorder %s299, %s313
    %p315 = scmp.eq.s32.totalorder %s79, 0
    %p316 = por %p314, %p315
    %s318 = sadd.s32 %s317, 1
    %p321 = scmp.eq.s32.totalorder %s73, 1
    %p322 = scmp.ne.s32.totalorder %s317, %s319
    %p323 = scmp.eq.s32.totalorder %s73, 0
    %p324 = por %p322, %p323
    %p325 = scmp.ne.s32.totalorder %s317, %s319
    %p326 = scmp.eq.s32.totalorder %s78, 1
    %p327 = por %p325, %p326
    %p328 = scmp.ne.s32.totalorder %s319, %s320
    %p329 = scmp.eq.s32.totalorder %s78, 0
    %p330 = por %p328, %p329
    %p331 = scmp.ne.s32.totalorder %s319, %s320
    %p332 = scmp.eq.s32.totalorder %s79, 1
    %p333 = por %p331, %p332
    %p335 = scmp.ne.s32.totalorder %s320, %s334
    %p336 = scmp.eq.s32.totalorder %s79, 0
    %p337 = por %p335, %p336
    %s339 = sadd.s32 %s338, 1
    %p342 = scmp.eq.s32.totalorder %s73, 1
    %p343 = scmp.ne.s32.totalorder %s338, %s340
    %p344 = scmp.eq.s32.totalorder %s73, 0
    %p345 = por %p343, %p344
    %p346 = scmp.ne.s32.totalorder %s338, %s340
    %p347 = scmp.eq.s32.totalorder %s78, 1
    %p348 = por %p346, %p347
    %p349 = scmp.ne.s32.totalorder %s340, %s341
    %p350 = scmp.eq.s32.totalorder %s78, 0
    %p351 = por %p349, %p350
    %p352 = scmp.ne.s32.totalorder %s340, %s341
    %p353 = scmp.eq.s32.totalorder %s79, 1
    %p354 = por %p352, %p353
    %p356 = scmp.ne.s32.totalorder %s341, %s355
    %p357 = scmp.eq.s32.totalorder %s79, 0
    %p358 = por %p356, %p357
    %s360 = sadd.s32 %s359, 1
    %p363 = scmp.eq.s32.totalorder %s73, 1
    %p364 = scmp.ne.s32.totalorder %s359, %s361
    %p365 = scmp.eq.s32.totalorder %s73, 0
    %p366 = por %p364, %p365
    %p367 = scmp.ne.s32.totalorder %s359, %s361
    %p368 = scmp.eq.s32.totalorder %s78, 1
    %p369 = por %p367, %p368
    %p370 = scmp.ne.s32.totalorder %s361, %s362
    %p371 = scmp.eq.s32.totalorder %s78, 0
    %p372 = por %p370, %p371
    %p373 = scmp.ne.s32.totalorder %s361, %s362
    %p374 = scmp.eq.s32.totalorder %s79, 1
    %p375 = por %p373, %p374
    %p377 = scmp.ne.s32.totalorder %s362, %s376
    %p378 = scmp.eq.s32.totalorder %s79, 0
    %p379 = por %p377, %p378
    %s381 = sadd.s32 %s380, 1
    %p384 = scmp.eq.s32.totalorder %s73, 1
    %p385 = scmp.ne.s32.totalorder %s380, %s382
    %p386 = scmp.eq.s32.totalorder %s73, 0
    %p387 = por %p385, %p386
    %p388 = scmp.ne.s32.totalorder %s380, %s382
    %p389 = scmp.eq.s32.totalorder %s78, 1
    %p390 = por %p388, %p389
    %p391 = scmp.ne.s32.totalorder %s382, %s383
    %p392 = scmp.eq.s32.totalorder %s78, 0
    %p393 = por %p391, %p392
    %p394 = scmp.ne.s32.totalorder %s382, %s383
    %p395 = scmp.eq.s32.totalorder %s79, 1
    %p396 = por %p394, %p395
    %p398 = scmp.ne.s32.totalorder %s383, %s397
    %p399 = scmp.eq.s32.totalorder %s79, 0
    %p400 = por %p398, %p399
    %s402 = sadd.s32 %s401, 1
    %p405 = scmp.eq.s32.totalorder %s73, 1
    %p406 = scmp.ne.s32.totalorder %s401, %s403
    %p407 = scmp.eq.s32.totalorder %s73, 0
    %p408 = por %p406, %p407
    %p409 = scmp.ne.s32.totalorder %s401, %s403
    %p410 = scmp.eq.s32.totalorder %s78, 1
    %p411 = por %p409, %p410
    %p412 = scmp.ne.s32.totalorder %s403, %s404
    %p413 = scmp.eq.s32.totalorder %s78, 0
    %p414 = por %p412, %p413
    %p415 = scmp.ne.s32.totalorder %s403, %s404
    %p416 = scmp.eq.s32.totalorder %s79, 1
    %p417 = por %p415, %p416
    %p419 = scmp.ne.s32.totalorder %s404, %s418
    %p420 = scmp.eq.s32.totalorder %s79, 0
    %p421 = por %p419, %p420
    %s423 = sadd.s32 %s422, 1
    %p426 = scmp.eq.s32.totalorder %s73, 1
    %p427 = scmp.ne.s32.totalorder %s422, %s424
    %p428 = scmp.eq.s32.totalorder %s73, 0
    %p429 = por %p427, %p428
    %p430 = scmp.ne.s32.totalorder %s422, %s424
    %p431 = scmp.eq.s32.totalorder %s78, 1
    %p432 = por %p430, %p431
    %p433 = scmp.ne.s32.totalorder %s424, %s425
    %p434 = scmp.eq.s32.totalorder %s78, 0
    %p435 = por %p433, %p434
    %p436 = scmp.ne.s32.totalorder %s424, %s425
    %p437 = scmp.eq.s32.totalorder %s79, 1
    %p438 = por %p436, %p437
    %p440 = scmp.ne.s32.totalorder %s425, %s439
    %p441 = scmp.eq.s32.totalorder %s79, 0
    %p442 = por %p440, %p441
    %s444 = sadd.s32 %s443, 1
    %p447 = scmp.eq.s32.totalorder %s73, 1
    %p448 = scmp.ne.s32.totalorder %s443, %s445
    %p449 = scmp.eq.s32.totalorder %s73, 0
    %p450 = por %p448, %p449
    %p451 = scmp.ne.s32.totalorder %s443, %s445
    %p452 = scmp.eq.s32.totalorder %s78, 1
    %p453 = por %p451, %p452
    %p454 = scmp.ne.s32.totalorder %s445, %s446
    %p455 = scmp.eq.s32.totalorder %s78, 0
    %p456 = por %p454, %p455
    %p457 = scmp.ne.s32.totalorder %s445, %s446
    %p458 = scmp.eq.s32.totalorder %s79, 1
    %p459 = por %p457, %p458
    %p461 = scmp.ne.s32.totalorder %s446, %s460
    %p462 = scmp.eq.s32.totalorder %s79, 0
    %p463 = por %p461, %p462
    %s465 = sadd.s32 %s464, 1
    %p468 = scmp.eq.s32.totalorder %s73, 1
    %p469 = scmp.ne.s32.totalorder %s464, %s466
    %p470 = scmp.eq.s32.totalorder %s73, 0
    %p471 = por %p469, %p470
    %p472 = scmp.ne.s32.totalorder %s464, %s466
    %p473 = scmp.eq.s32.totalorder %s78, 1
    %p474 = por %p472, %p473
    %p475 = scmp.ne.s32.totalorder %s466, %s467
    %p476 = scmp.eq.s32.totalorder %s78, 0
    %p477 = por %p475, %p476
    %p478 = scmp.ne.s32.totalorder %s466, %s467
    %p479 = scmp.eq.s32.totalorder %s79, 1
    %p480 = por %p478, %p479
    %p482 = scmp.ne.s32.totalorder %s467, %s481
    %p483 = scmp.eq.s32.totalorder %s79, 0
    %p484 = por %p482, %p483
    %s486 = sadd.s32 %s485, 1
    %p489 = scmp.eq.s32.totalorder %s73, 1
    %p490 = scmp.ne.s32.totalorder %s485, %s487
    %p491 = scmp.eq.s32.totalorder %s73, 0
    %p492 = por %p490, %p491
    %p493 = scmp.ne.s32.totalorder %s485, %s487
    %p494 = scmp.eq.s32.totalorder %s78, 1
    %p495 = por %p493, %p494
    %p496 = scmp.ne.s32.totalorder %s487, %s488
    %p497 = scmp.eq.s32.totalorder %s78, 0
    %p498 = por %p496, %p497
    %p499 = scmp.ne.s32.totalorder %s487, %s488
    %p500 = scmp.eq.s32.totalorder %s79, 1
    %p501 = por %p499, %p500
    %p503 = scmp.ne.s32.totalorder %s488, %s502
    %p504 = scmp.eq.s32.totalorder %s79, 0
    %p505 = por %p503, %p504
    %s507 = sadd.s32 %s506, 1
    %p510 = scmp.eq.s32.totalorder %s73, 1
    %p511 = scmp.ne.s32.totalorder %s506, %s508
    %p512 = scmp.eq.s32.totalorder %s73, 0
    %p513 = por %p511, %p512
    %p514 = scmp.ne.s32.totalorder %s506, %s508
    %p515 = scmp.eq.s32.totalorder %s78, 1
    %p516 = por %p514, %p515
    %p517 = scmp.ne.s32.totalorder %s508, %s509
    %p518 = scmp.eq.s32.totalorder %s78, 0
    %p519 = por %p517, %p518
    %p520 = scmp.ne.s32.totalorder %s508, %s509
    %p521 = scmp.eq.s32.totalorder %s79, 1
    %p522 = por %p520, %p521
    %p524 = scmp.ne.s32.totalorder %s509, %s523
    %p525 = scmp.eq.s32.totalorder %s79, 0
    %p526 = por %p524, %p525
    %s528 = sadd.s32 %s527, 1
    %p531 = scmp.eq.s32.totalorder %s73, 1
    %p532 = scmp.ne.s32.totalorder %s527, %s529
    %p533 = scmp.eq.s32.totalorder %s73, 0
    %p534 = por %p532, %p533
    %p535 = scmp.ne.s32.totalorder %s527, %s529
    %p536 = scmp.eq.s32.totalorder %s78, 1
    %p537 = por %p535, %p536
    %p538 = scmp.ne.s32.totalorder %s529, %s530
    %p539 = scmp.eq.s32.totalorder %s78, 0
    %p540 = por %p538, %p539
    %p541 = scmp.ne.s32.totalorder %s529, %s530
    %p542 = scmp.eq.s32.totalorder %s79, 1
    %p543 = por %p541, %p542
    %p545 = scmp.ne.s32.totalorder %s530, %s544
    %p546 = scmp.eq.s32.totalorder %s79, 0
    %p547 = por %p545, %p546
    %s549 = sadd.s32 %s548, 1
    %p552 = scmp.eq.s32.totalorder %s73, 1
    %p553 = scmp.ne.s32.totalorder %s548, %s550
    %p554 = scmp.eq.s32.totalorder %s73, 0
    %p555 = por %p553, %p554
    %p556 = scmp.ne.s32.totalorder %s548, %s550
    %p557 = scmp.eq.s32.totalorder %s78, 1
    %p558 = por %p556, %p557
    %p559 = scmp.ne.s32.totalorder %s550, %s551
    %p560 = scmp.eq.s32.totalorder %s78, 0
    %p561 = por %p559, %p560
    %p562 = scmp.ne.s32.totalorder %s550, %s551
    %p563 = scmp.eq.s32.totalorder %s79, 1
    %p564 = por %p562, %p563
    %p566 = scmp.ne.s32.totalorder %s551, %s565
    %p567 = scmp.eq.s32.totalorder %s79, 0
    %p568 = por %p566, %p567
    %s570 = sadd.s32 %s569, 1
    %p573 = scmp.eq.s32.totalorder %s73, 1
    %p574 = scmp.ne.s32.totalorder %s569, %s571
    %p575 = scmp.eq.s32.totalorder %s73, 0
    %p576 = por %p574, %p575
    %p577 = scmp.ne.s32.totalorder %s569, %s571
    %p578 = scmp.eq.s32.totalorder %s78, 1
    %p579 = por %p577, %p578
    %p580 = scmp.ne.s32.totalorder %s571, %s572
    %p581 = scmp.eq.s32.totalorder %s78, 0
    %p582 = por %p580, %p581
    %p583 = scmp.ne.s32.totalorder %s571, %s572
    %p584 = scmp.eq.s32.totalorder %s79, 1
    %p585 = por %p583, %p584
    %p587 = scmp.ne.s32.totalorder %s572, %s586
    %p588 = scmp.eq.s32.totalorder %s79, 0
    %p589 = por %p587, %p588
    %s591 = sadd.s32 %s590, 1
    %p594 = scmp.eq.s32.totalorder %s73, 1
    %p595 = scmp.ne.s32.totalorder %s590, %s592
    %p596 = scmp.eq.s32.totalorder %s73, 0
    %p597 = por %p595, %p596
    %p598 = scmp.ne.s32.totalorder %s590, %s592
    %p599 = scmp.eq.s32.totalorder %s78, 1
    %p600 = por %p598, %p599
    %p601 = scmp.ne.s32.totalorder %s592, %s593
    %p602 = scmp.eq.s32.totalorder %s78, 0
    %p603 = por %p601, %p602
    %p604 = scmp.ne.s32.totalorder %s592, %s593
    %p605 = scmp.eq.s32.totalorder %s79, 1
    %p606 = por %p604, %p605
    %p608 = scmp.ne.s32.totalorder %s593, %s607
    %p609 = scmp.eq.s32.totalorder %s79, 0
    %p610 = por %p608, %p609
    %s612 = sadd.s32 %s611, 1
    %p615 = scmp.eq.s32.totalorder %s73, 1
    %p616 = scmp.ne.s32.totalorder %s611, %s613
    %p617 = scmp.eq.s32.totalorder %s73, 0
    %p618 = por %p616, %p617
    %p619 = scmp.ne.s32.totalorder %s611, %s613
    %p620 = scmp.eq.s32.totalorder %s78, 1
    %p621 = por %p619, %p620
    %p622 = scmp.ne.s32.totalorder %s613, %s614
    %p623 = scmp.eq.s32.totalorder %s78, 0
    %p624 = por %p622, %p623
    %p625 = scmp.ne.s32.totalorder %s613, %s614
    %p626 = scmp.eq.s32.totalorder %s79, 1
    %p627 = por %p625, %p626
    %p629 = scmp.ne.s32.totalorder %s614, %s628
    %p630 = scmp.eq.s32.totalorder %s79, 0
    %p631 = por %p629, %p630
    %s633 = sadd.s32 %s632, 1
    %p636 = scmp.eq.s32.totalorder %s73, 1
    %p637 = scmp.ne.s32.totalorder %s632, %s634
    %p638 = scmp.eq.s32.totalorder %s73, 0
    %p639 = por %p637, %p638
    %p640 = scmp.ne.s32.totalorder %s632, %s634
    %p641 = scmp.eq.s32.totalorder %s78, 1
    %p642 = por %p640, %p641
    %p643 = scmp.ne.s32.totalorder %s634, %s635
    %p644 = scmp.eq.s32.totalorder %s78, 0
    %p645 = por %p643, %p644
    %p646 = scmp.ne.s32.totalorder %s634, %s635
    %p647 = scmp.eq.s32.totalorder %s79, 1
    %p648 = por %p646, %p647
    %p650 = scmp.ne.s32.totalorder %s635, %s649
    %p651 = scmp.eq.s32.totalorder %s79, 0
    %p652 = por %p650, %p651
    %s654 = sadd.s32 %s653, 1
    %p657 = scmp.eq.s32.totalorder %s73, 1
    %p658 = scmp.ne.s32.totalorder %s653, %s655
    %p659 = scmp.eq.s32.totalorder %s73, 0
    %p660 = por %p658, %p659
    %p661 = scmp.ne.s32.totalorder %s653, %s655
    %p662 = scmp.eq.s32.totalorder %s78, 1
    %p663 = por %p661, %p662
    %p664 = scmp.ne.s32.totalorder %s655, %s656
    %p665 = scmp.eq.s32.totalorder %s78, 0
    %p666 = por %p664, %p665
    %p667 = scmp.ne.s32.totalorder %s655, %s656
    %p668 = scmp.eq.s32.totalorder %s79, 1
    %p669 = por %p667, %p668
    %p671 = scmp.ne.s32.totalorder %s656, %s670
    %p672 = scmp.eq.s32.totalorder %s79, 0
    %p673 = por %p671, %p672
    %s675 = sadd.s32 %s674, 1
    %p678 = scmp.eq.s32.totalorder %s73, 1
    %p679 = scmp.ne.s32.totalorder %s674, %s676
    %p680 = scmp.eq.s32.totalorder %s73, 0
    %p681 = por %p679, %p680
    %p682 = scmp.ne.s32.totalorder %s674, %s676
    %p683 = scmp.eq.s32.totalorder %s78, 1
    %p684 = por %p682, %p683
    %p685 = scmp.ne.s32.totalorder %s676, %s677
    %p686 = scmp.eq.s32.totalorder %s78, 0
    %p687 = por %p685, %p686
    %p688 = scmp.ne.s32.totalorder %s676, %s677
    %p689 = scmp.eq.s32.totalorder %s79, 1
    %p690 = por %p688, %p689
    %p692 = scmp.ne.s32.totalorder %s677, %s691
    %p693 = scmp.eq.s32.totalorder %s79, 0
    %p694 = por %p692, %p693
    %s696 = sadd.s32 %s695, 1
    %p699 = scmp.eq.s32.totalorder %s73, 1
    %p700 = scmp.ne.s32.totalorder %s695, %s697
    %p701 = scmp.eq.s32.totalorder %s73, 0
    %p702 = por %p700, %p701
    %p703 = scmp.ne.s32.totalorder %s695, %s697
    %p704 = scmp.eq.s32.totalorder %s78, 1
    %p705 = por %p703, %p704
    %p706 = scmp.ne.s32.totalorder %s697, %s698
    %p707 = scmp.eq.s32.totalorder %s78, 0
    %p708 = por %p706, %p707
    %p709 = scmp.ne.s32.totalorder %s697, %s698
    %p710 = scmp.eq.s32.totalorder %s79, 1
    %p711 = por %p709, %p710
    %p713 = scmp.ne.s32.totalorder %s698, %s712
    %p714 = scmp.eq.s32.totalorder %s79, 0
    %p715 = por %p713, %p714
    %s717 = sadd.s32 %s716, 1
    %p720 = scmp.eq.s32.totalorder %s73, 1
    %p721 = scmp.ne.s32.totalorder %s716, %s718
    %p722 = scmp.eq.s32.totalorder %s73, 0
    %p723 = por %p721, %p722
    %p724 = scmp.ne.s32.totalorder %s716, %s718
    %p725 = scmp.eq.s32.totalorder %s78, 1
    %p726 = por %p724, %p725
    %p727 = scmp.ne.s32.totalorder %s718, %s719
    %p728 = scmp.eq.s32.totalorder %s78, 0
    %p729 = por %p727, %p728
    %p730 = scmp.ne.s32.totalorder %s718, %s719
    %p731 = scmp.eq.s32.totalorder %s79, 1
    %p732 = por %p730, %p731
    %p734 = scmp.ne.s32.totalorder %s719, %s733
    %p735 = scmp.eq.s32.totalorder %s79, 0
    %p736 = por %p734, %p735
    %s738 = sadd.s32 %s737, 1
    %p741 = scmp.eq.s32.totalorder %s73, 1
    %p742 = scmp.ne.s32.totalorder %s737, %s739
    %p743 = scmp.eq.s32.totalorder %s73, 0
    %p744 = por %p742, %p743
    %p745 = scmp.ne.s32.totalorder %s737, %s739
    %p746 = scmp.eq.s32.totalorder %s78, 1
    %p747 = por %p745, %p746
    %p748 = scmp.ne.s32.totalorder %s739, %s740
    %p749 = scmp.eq.s32.totalorder %s78, 0
    %p750 = por %p748, %p749
    %p751 = scmp.ne.s32.totalorder %s739, %s740
    %p752 = scmp.eq.s32.totalorder %s79, 1
    %p753 = por %p751, %p752
    %p755 = scmp.ne.s32.totalorder %s740, %s754
    %p756 = scmp.eq.s32.totalorder %s79, 0
    %p757 = por %p755, %p756
    %s759 = sadd.s32 %s758, 1
    %p762 = scmp.eq.s32.totalorder %s73, 1
    %p763 = scmp.ne.s32.totalorder %s758, %s760
    %p764 = scmp.eq.s32.totalorder %s73, 0
    %p765 = por %p763, %p764
    %p766 = scmp.ne.s32.totalorder %s758, %s760
    %p767 = scmp.eq.s32.totalorder %s78, 1
    %p768 = por %p766, %p767
    %p769 = scmp.ne.s32.totalorder %s760, %s761
    %p770 = scmp.eq.s32.totalorder %s78, 0
    %p771 = por %p769, %p770
    %p772 = scmp.ne.s32.totalorder %s760, %s761
    %p773 = scmp.eq.s32.totalorder %s79, 1
    %p774 = por %p772, %p773
    %p776 = scmp.ne.s32.totalorder %s761, %s775
    %p777 = scmp.eq.s32.totalorder %s79, 0
    %p778 = por %p776, %p777
    %s779 = ssub.s32 %s73, %s80
    %p780 = scmp.eq.s32.totalorder %s779, 0
    %s782 = sadd.s32 %s781, 1
    %s783 = scalar_select %p780, %s781, %s782
    %p786 = pneg %p780
    %p787 = scmp.eq.s32.totalorder %s73, 1
    %p788 = por %p786, %p787
    %p789 = scmp.ne.s32.totalorder %s781, %s784
    %p790 = scmp.eq.s32.totalorder %s73, 0
    %p791 = por %p789, %p790
    %p792 = scmp.ne.s32.totalorder %s781, %s784
    %p793 = scmp.eq.s32.totalorder %s78, 1
    %p794 = por %p792, %p793
    %p795 = scmp.ne.s32.totalorder %s784, %s785
    %p796 = scmp.eq.s32.totalorder %s78, 0
    %p797 = por %p795, %p796
    %p798 = scmp.ne.s32.totalorder %s784, %s785
    %p799 = scmp.eq.s32.totalorder %s79, 1
    %p800 = por %p798, %p799
    %p802 = scmp.ne.s32.totalorder %s785, %s801
    %p803 = scmp.eq.s32.totalorder %s79, 0
    %p804 = por %p802, %p803
    %p805 = scmp.le.s32.totalorder 1, %s73
    %p806 = scmp.lt.s32.totalorder %s73, 3
    %p807 = pnand %p805, %p806
    %p808 = pneg %p807
    // Predicated region
    $region9: #{forward.1} parent=5 // pred_check
      _
    $region10: #{forward.1} parent=5 // pred_check_branch
      %810 = sbr.rel (%p807) target = $region12
    $region11: #{forward.1} parent=5 // pred_region
      %s811 = ssub.s32 %s73, 1
      // Predicated region
      $region13: #{forward.1} parent=11 // pred_check
        %p812 = pneg %p120
      $region14: #{forward.1} parent=11 // pred_check_branch
        %814 = sbr.rel (%p812) target = $region16
      $region15: #{forward.1} parent=11 // pred_region
        _
      $region16: #{forward.1} parent=11 // pred_fallthru
        _
      // Predicated region
      $region17: #{forward.1} parent=11 // pred_check
        %p815 = pneg %p141
      $region18: #{forward.1} parent=11 // pred_check_branch
        %817 = sbr.rel (%p815) target = $region20
      $region19: #{forward.1} parent=11 // pred_region
        _
      $region20: #{forward.1} parent=11 // pred_fallthru
        _
      // Predicated region
      $region21: #{forward.1} parent=11 // pred_check
        %p818 = pneg %p162
      $region22: #{forward.1} parent=11 // pred_check_branch
        %820 = sbr.rel (%p818) target = $region24
      $region23: #{forward.1} parent=11 // pred_region
        _
      $region24: #{forward.1} parent=11 // pred_fallthru
        _
      // Predicated region
      $region25: #{forward.1} parent=11 // pred_check
        %p821 = pneg %p183
      $region26: #{forward.1} parent=11 // pred_check_branch
        %823 = sbr.rel (%p821) target = $region28
      $region27: #{forward.1} parent=11 // pred_region
        _
      $region28: #{forward.1} parent=11 // pred_fallthru
        _
      // Predicated region
      $region29: #{forward.1} parent=11 // pred_check
        %p824 = pneg %p204
      $region30: #{forward.1} parent=11 // pred_check_branch
        %826 = sbr.rel (%p824) target = $region32
      $region31: #{forward.1} parent=11 // pred_region
        _
      $region32: #{forward.1} parent=11 // pred_fallthru
        _
      // Predicated region
      $region33: #{forward.1} parent=11 // pred_check
        %p827 = pneg %p225
      $region34: #{forward.1} parent=11 // pred_check_branch
        %829 = sbr.rel (%p827) target = $region36
      $region35: #{forward.1} parent=11 // pred_region
        _
      $region36: #{forward.1} parent=11 // pred_fallthru
        _
      // Predicated region
      $region37: #{forward.1} parent=11 // pred_check
        %p830 = pneg %p246
      $region38: #{forward.1} parent=11 // pred_check_branch
        %832 = sbr.rel (%p830) target = $region40
      $region39: #{forward.1} parent=11 // pred_region
        _
      $region40: #{forward.1} parent=11 // pred_fallthru
        _
      // Predicated region
      $region41: #{forward.1} parent=11 // pred_check
        %p833 = pneg %p267
      $region42: #{forward.1} parent=11 // pred_check_branch
        %835 = sbr.rel (%p833) target = $region44
      $region43: #{forward.1} parent=11 // pred_region
        _
      $region44: #{forward.1} parent=11 // pred_fallthru
        _
      // Predicated region
      $region45: #{forward.1} parent=11 // pred_check
        %p836 = pneg %p288
      $region46: #{forward.1} parent=11 // pred_check_branch
        %838 = sbr.rel (%p836) target = $region48
      $region47: #{forward.1} parent=11 // pred_region
        _
      $region48: #{forward.1} parent=11 // pred_fallthru
        _
      // Predicated region
      $region49: #{forward.1} parent=11 // pred_check
        %p839 = pneg %p309
      $region50: #{forward.1} parent=11 // pred_check_branch
        %841 = sbr.rel (%p839) target = $region52
      $region51: #{forward.1} parent=11 // pred_region
        _
      $region52: #{forward.1} parent=11 // pred_fallthru
        _
      // Predicated region
      $region53: #{forward.1} parent=11 // pred_check
        %p842 = pneg %p330
      $region54: #{forward.1} parent=11 // pred_check_branch
        %844 = sbr.rel (%p842) target = $region56
      $region55: #{forward.1} parent=11 // pred_region
        _
      $region56: #{forward.1} parent=11 // pred_fallthru
        _
      // Predicated region
      $region57: #{forward.1} parent=11 // pred_check
        %p845 = pneg %p351
      $region58: #{forward.1} parent=11 // pred_check_branch
        %847 = sbr.rel (%p845) target = $region60
      $region59: #{forward.1} parent=11 // pred_region
        _
      $region60: #{forward.1} parent=11 // pred_fallthru
        _
      // Predicated region
      $region61: #{forward.1} parent=11 // pred_check
        %p848 = pneg %p372
      $region62: #{forward.1} parent=11 // pred_check_branch
        %850 = sbr.rel (%p848) target = $region64
      $region63: #{forward.1} parent=11 // pred_region
        _
      $region64: #{forward.1} parent=11 // pred_fallthru
        _
      // Predicated region
      $region65: #{forward.1} parent=11 // pred_check
        %p851 = pneg %p393
      $region66: #{forward.1} parent=11 // pred_check_branch
        %853 = sbr.rel (%p851) target = $region68
      $region67: #{forward.1} parent=11 // pred_region
        _
      $region68: #{forward.1} parent=11 // pred_fallthru
        _
      // Predicated region
      $region69: #{forward.1} parent=11 // pred_check
        %p854 = pneg %p414
      $region70: #{forward.1} parent=11 // pred_check_branch
        %856 = sbr.rel (%p854) target = $region72
      $region71: #{forward.1} parent=11 // pred_region
        _
      $region72: #{forward.1} parent=11 // pred_fallthru
        _
      // Predicated region
      $region73: #{forward.1} parent=11 // pred_check
        %p857 = pneg %p435
      $region74: #{forward.1} parent=11 // pred_check_branch
        %859 = sbr.rel (%p857) target = $region76
      $region75: #{forward.1} parent=11 // pred_region
        _
      $region76: #{forward.1} parent=11 // pred_fallthru
        _
      // Predicated region
      $region77: #{forward.1} parent=11 // pred_check
        %p860 = pneg %p456
      $region78: #{forward.1} parent=11 // pred_check_branch
        %862 = sbr.rel (%p860) target = $region80
      $region79: #{forward.1} parent=11 // pred_region
        _
      $region80: #{forward.1} parent=11 // pred_fallthru
        _
      // Predicated region
      $region81: #{forward.1} parent=11 // pred_check
        %p863 = pneg %p477
      $region82: #{forward.1} parent=11 // pred_check_branch
        %865 = sbr.rel (%p863) target = $region84
      $region83: #{forward.1} parent=11 // pred_region
        _
      $region84: #{forward.1} parent=11 // pred_fallthru
        _
      // Predicated region
      $region85: #{forward.1} parent=11 // pred_check
        %p866 = pneg %p498
      $region86: #{forward.1} parent=11 // pred_check_branch
        %868 = sbr.rel (%p866) target = $region88
      $region87: #{forward.1} parent=11 // pred_region
        _
      $region88: #{forward.1} parent=11 // pred_fallthru
        _
      // Predicated region
      $region89: #{forward.1} parent=11 // pred_check
        %p869 = pneg %p519
      $region90: #{forward.1} parent=11 // pred_check_branch
        %871 = sbr.rel (%p869) target = $region92
      $region91: #{forward.1} parent=11 // pred_region
        _
      $region92: #{forward.1} parent=11 // pred_fallthru
        _
      // Predicated region
      $region93: #{forward.1} parent=11 // pred_check
        %p872 = pneg %p540
      $region94: #{forward.1} parent=11 // pred_check_branch
        %874 = sbr.rel (%p872) target = $region96
      $region95: #{forward.1} parent=11 // pred_region
        _
      $region96: #{forward.1} parent=11 // pred_fallthru
        _
      // Predicated region
      $region97: #{forward.1} parent=11 // pred_check
        %p875 = pneg %p561
      $region98: #{forward.1} parent=11 // pred_check_branch
        %877 = sbr.rel (%p875) target = $region100
      $region99: #{forward.1} parent=11 // pred_region
        _
      $region100: #{forward.1} parent=11 // pred_fallthru
        _
      // Predicated region
      $region101: #{forward.1} parent=11 // pred_check
        %p878 = pneg %p582
      $region102: #{forward.1} parent=11 // pred_check_branch
        %880 = sbr.rel (%p878) target = $region104
      $region103: #{forward.1} parent=11 // pred_region
        _
      $region104: #{forward.1} parent=11 // pred_fallthru
        _
      // Predicated region
      $region105: #{forward.1} parent=11 // pred_check
        %p881 = pneg %p603
      $region106: #{forward.1} parent=11 // pred_check_branch
        %883 = sbr.rel (%p881) target = $region108
      $region107: #{forward.1} parent=11 // pred_region
        _
      $region108: #{forward.1} parent=11 // pred_fallthru
        _
      // Predicated region
      $region109: #{forward.1} parent=11 // pred_check
        %p884 = pneg %p624
      $region110: #{forward.1} parent=11 // pred_check_branch
        %886 = sbr.rel (%p884) target = $region112
      $region111: #{forward.1} parent=11 // pred_region
        _
      $region112: #{forward.1} parent=11 // pred_fallthru
        _
      // Predicated region
      $region113: #{forward.1} parent=11 // pred_check
        %p887 = pneg %p645
      $region114: #{forward.1} parent=11 // pred_check_branch
        %889 = sbr.rel (%p887) target = $region116
      $region115: #{forward.1} parent=11 // pred_region
        _
      $region116: #{forward.1} parent=11 // pred_fallthru
        _
      // Predicated region
      $region117: #{forward.1} parent=11 // pred_check
        %p890 = pneg %p666
      $region118: #{forward.1} parent=11 // pred_check_branch
        %892 = sbr.rel (%p890) target = $region120
      $region119: #{forward.1} parent=11 // pred_region
        _
      $region120: #{forward.1} parent=11 // pred_fallthru
        _
      // Predicated region
      $region121: #{forward.1} parent=11 // pred_check
        %p893 = pneg %p687
      $region122: #{forward.1} parent=11 // pred_check_branch
        %895 = sbr.rel (%p893) target = $region124
      $region123: #{forward.1} parent=11 // pred_region
        _
      $region124: #{forward.1} parent=11 // pred_fallthru
        _
      // Predicated region
      $region125: #{forward.1} parent=11 // pred_check
        %p896 = pneg %p708
      $region126: #{forward.1} parent=11 // pred_check_branch
        %898 = sbr.rel (%p896) target = $region128
      $region127: #{forward.1} parent=11 // pred_region
        _
      $region128: #{forward.1} parent=11 // pred_fallthru
        _
      // Predicated region
      $region129: #{forward.1} parent=11 // pred_check
        %p899 = pneg %p729
      $region130: #{forward.1} parent=11 // pred_check_branch
        %901 = sbr.rel (%p899) target = $region132
      $region131: #{forward.1} parent=11 // pred_region
        _
      $region132: #{forward.1} parent=11 // pred_fallthru
        _
      // Predicated region
      $region133: #{forward.1} parent=11 // pred_check
        %p902 = pneg %p750
      $region134: #{forward.1} parent=11 // pred_check_branch
        %904 = sbr.rel (%p902) target = $region136
      $region135: #{forward.1} parent=11 // pred_region
        _
      $region136: #{forward.1} parent=11 // pred_fallthru
        _
      // Predicated region
      $region137: #{forward.1} parent=11 // pred_check
        %p905 = pneg %p771
      $region138: #{forward.1} parent=11 // pred_check_branch
        %907 = sbr.rel (%p905) target = $region140
      $region139: #{forward.1} parent=11 // pred_region
        _
      $region140: #{forward.1} parent=11 // pred_fallthru
        _
    $region12: #{forward.1} parent=5 // pred_fallthru
      _
    %p908 = scmp.lt.s32.totalorder %s73, 2
    // Predicated region
    $region141: #{forward.1} parent=5 // pred_check
      %p909 = pneg %p908
    $region142: #{forward.1} parent=5 // pred_check_branch
      %911 = sbr.rel (%p909) target = $region144
    $region143: #{forward.1} parent=5 // pred_region
      // Predicated region
      $region145: #{forward.1} parent=143 // pred_check
        %p912 = pneg %p93
      $region146: #{forward.1} parent=143 // pred_check_branch
        %914 = sbr.rel (%p912) target = $region148
      $region147: #{forward.1} parent=143 // pred_region
        %p915 = scmp.lt.s32.totalorder %s73, 1
        %s916 = scalar_select %p915, %s73, 1
        %s917 = smul.addr %s916, 9
        %s918 = smul.addr %s917, 8
        %s919 = scalar_lea.vmem %s1, %s918
      $region148: #{forward.1} parent=143 // pred_fallthru
        _
    $region144: #{forward.1} parent=5 // pred_fallthru
      _
    %p920 = scmp.le.s32.totalorder 1, %s73
    %p921 = scmp.lt.s32.totalorder %s73, 3
    %p922 = pnand %p920, %p921
    %p923 = pneg %p922
    // Predicated region
    $region149: #{forward.1} parent=5 // pred_check
      _
    $region150: #{forward.1} parent=5 // pred_check_branch
      %925 = sbr.rel (%p922) target = $region152
    $region151: #{forward.1} parent=5 // pred_region
      %s926 = ssub.s32 %s73, 1
      %p927 = scmp.lt.s32.totalorder %s78, 1
      %s928 = scalar_select %p927, %s78, 1
      %s929 = smul.addr %s928, 9
      %s930 = smul.addr %s929, 8
      %s931 = scalar_lea.vmem %s1, %s930
      %p932 = pneg %p99
      %p933 = pneg %p96
      %p934 = pneg %p120
      %p935 = pneg %p117
      %p936 = pneg %p141
      %p937 = pneg %p138
      %p938 = pneg %p162
      %p939 = pneg %p159
      %p940 = pneg %p183
      %p941 = pneg %p180
      %p942 = pneg %p204
      %p943 = pneg %p201
      %p944 = pneg %p225
      %p945 = pneg %p222
      %p946 = pneg %p246
      %p947 = pneg %p243
      %p948 = pneg %p267
      %p949 = pneg %p264
      %p950 = pneg %p288
      %p951 = pneg %p285
      %p952 = pneg %p309
      %p953 = pneg %p306
      %p954 = pneg %p330
      %p955 = pneg %p327
      %p956 = pneg %p351
      %p957 = pneg %p348
      %p958 = pneg %p372
      %p959 = pneg %p369
      %p960 = pneg %p393
      %p961 = pneg %p390
      %p962 = pneg %p414
      %p963 = pneg %p411
      %p964 = pneg %p435
      %p965 = pneg %p432
      %p966 = pneg %p456
      %p967 = pneg %p453
      %p968 = pneg %p477
      %p969 = pneg %p474
      %p970 = pneg %p498
      %p971 = pneg %p495
      %p972 = pneg %p519
      %p973 = pneg %p516
      %p974 = pneg %p540
      %p975 = pneg %p537
      %p976 = pneg %p561
      %p977 = pneg %p558
      %p978 = pneg %p582
      %p979 = pneg %p579
      %p980 = pneg %p603
      %p981 = pneg %p600
      %p982 = pneg %p624
      %p983 = pneg %p621
      %p984 = pneg %p645
      %p985 = pneg %p642
      %p986 = pneg %p666
      %p987 = pneg %p663
      %p988 = pneg %p687
      %p989 = pneg %p684
      %p990 = pneg %p708
      %p991 = pneg %p705
      %p992 = pneg %p729
      %p993 = pneg %p726
      %p994 = pneg %p750
      %p995 = pneg %p747
      %p996 = pneg %p771
      %p997 = pneg %p768
      %p998 = pneg %p797
      %p999 = pneg %p794
      %p1000 = scmp.lt.s32.totalorder %s78, 1
      %s1001 = scalar_select %p1000, %s78, 1
      %s1002 = smul.addr %s1001, 2
      %s1003 = scalar_lea.vmem %s67, %s1002
      %p1004 = scmp.lt.s32.totalorder %s78, 1
      %s1005 = scalar_select %p1004, %s78, 1
      %s1006 = smul.addr %s1005, 9
      %s1007 = smul.addr %s1006, 8
      %s1008 = scalar_lea.vmem %s1, %s1007
      %p1009 = scmp.lt.s32.totalorder %s78, 1
      %s1010 = scalar_select %p1009, %s78, 1
      %s1011 = smul.addr %s1010, 2
      %s1012 = scalar_lea.vmem %s67, %s1011
      %v1014 = vld [vmem:[%s1008] sm:$0xff]
      %v1015 = vld [vmem:[%s1008 + $0x8] sm:$0xff]
      %v1016 = vld [vmem:[%s1008 + $0x10] sm:$0xff]
      %v1017 = vld [vmem:[%s1008 + $0x18] sm:$0xff]
      %v1018 = vld [vmem:[%s1008 + $0x20] sm:$0xff]
      %v1019 = vld [vmem:[%s1008 + $0x28] sm:$0xff]
      %v1020 = vld [vmem:[%s1008 + $0x30] sm:$0xff]
      %v1021 = vld [vmem:[%s1008 + $0x38] sm:$0xff]
      %v1022 = vld [vmem:[%s1008 + $0x40] sm:$0xf]
      %v1023 = vlaneseq
      %v1024 = vshrl.u32 %v1023, 7
      %v1025 = vadd.s32 %v1024, 8
      %v1026 = vadd.s32 %v1024, 16
      %v1027 = vadd.s32 %v1024, 24
      %v1028 = vadd.s32 %v1024, 32
      %v1029 = vadd.s32 %v1024, 40
      %v1030 = vadd.s32 %v1024, 48
      %v1031 = vadd.s32 %v1024, 56
      %v1032 = vadd.s32 %v1024, 64
      %vm1033 = vcmp.eq.s32.totalorder %v1024, 0
      %vm1034 = vcmp.eq.s32.totalorder %v1025, 0
      %vm1035 = vcmp.eq.s32.totalorder %v1026, 0
      %vm1036 = vcmp.eq.s32.totalorder %v1027, 0
      %vm1037 = vcmp.eq.s32.totalorder %v1028, 0
      %vm1038 = vcmp.eq.s32.totalorder %v1029, 0
      %vm1039 = vcmp.eq.s32.totalorder %v1030, 0
      %vm1040 = vcmp.eq.s32.totalorder %v1031, 0
      %vm1041 = vcmp.eq.s32.totalorder %v1032, 0
      %vm1042 = vcmp.eq.s32.totalorder %v1024, 33
      %vm1043 = vcmp.eq.s32.totalorder %v1025, 33
      %vm1044 = vcmp.eq.s32.totalorder %v1026, 33
      %vm1045 = vcmp.eq.s32.totalorder %v1027, 33
      %vm1046 = vcmp.eq.s32.totalorder %v1028, 33
      %vm1047 = vcmp.eq.s32.totalorder %v1029, 33
      %vm1048 = vcmp.eq.s32.totalorder %v1030, 33
      %vm1049 = vcmp.eq.s32.totalorder %v1031, 33
      %vm1050 = vcmp.eq.s32.totalorder %v1032, 33
      %vm1051 = vcmp.eq.s32.totalorder %v1024, 34
      %vm1052 = vcmp.eq.s32.totalorder %v1025, 34
      %vm1053 = vcmp.eq.s32.totalorder %v1026, 34
      %vm1054 = vcmp.eq.s32.totalorder %v1027, 34
      %vm1055 = vcmp.eq.s32.totalorder %v1028, 34
      %vm1056 = vcmp.eq.s32.totalorder %v1029, 34
      %vm1057 = vcmp.eq.s32.totalorder %v1030, 34
      %vm1058 = vcmp.eq.s32.totalorder %v1031, 34
      %vm1059 = vcmp.eq.s32.totalorder %v1032, 34
      %vm1060 = vcmp.eq.s32.totalorder %v1024, 67
      %vm1061 = vcmp.eq.s32.totalorder %v1025, 67
      %vm1062 = vcmp.eq.s32.totalorder %v1026, 67
      %vm1063 = vcmp.eq.s32.totalorder %v1027, 67
      %vm1064 = vcmp.eq.s32.totalorder %v1028, 67
      %vm1065 = vcmp.eq.s32.totalorder %v1029, 67
      %vm1066 = vcmp.eq.s32.totalorder %v1030, 67
      %vm1067 = vcmp.eq.s32.totalorder %v1031, 67
      %vm1068 = vcmp.eq.s32.totalorder %v1032, 67
      %vm1069 = vmor %vm1033, %vm1042
      %vm1070 = vmor %vm1034, %vm1043
      %vm1071 = vmor %vm1035, %vm1044
      %vm1072 = vmor %vm1036, %vm1045
      %vm1073 = vmor %vm1037, %vm1046
      %vm1074 = vmor %vm1038, %vm1047
      %vm1075 = vmor %vm1039, %vm1048
      %vm1076 = vmor %vm1040, %vm1049
      %vm1077 = vmor %vm1041, %vm1050
      %vm1078 = vmor %vm1069, %vm1051
      %vm1079 = vmor %vm1070, %vm1052
      %vm1080 = vmor %vm1071, %vm1053
      %vm1081 = vmor %vm1072, %vm1054
      %vm1082 = vmor %vm1073, %vm1055
      %vm1083 = vmor %vm1074, %vm1056
      %vm1084 = vmor %vm1075, %vm1057
      %vm1085 = vmor %vm1076, %vm1058
      %vm1086 = vmor %vm1077, %vm1059
      %vm1087 = vmor %vm1078, %vm1060
      %vm1088 = vmor %vm1079, %vm1061
      %vm1089 = vmor %vm1080, %vm1062
      %vm1090 = vmor %vm1081, %vm1063
      %vm1091 = vmor %vm1082, %vm1064
      %vm1092 = vmor %vm1083, %vm1065
      %vm1093 = vmor %vm1084, %vm1066
      %vm1094 = vmor %vm1085, %vm1067
      %vm1095 = vmor %vm1086, %vm1068
      %v1096 = vsel %vm1087, 0.0, %v1014
      %v1097 = vsel %vm1088, 0.0, %v1015
      %v1098 = vsel %vm1089, 0.0, %v1016
      %v1099 = vsel %vm1090, 0.0, %v1017
      %v1100 = vsel %vm1091, 0.0, %v1018
      %v1101 = vsel %vm1092, 0.0, %v1019
      %v1102 = vsel %vm1093, 0.0, %v1020
      %v1103 = vsel %vm1094, 0.0, %v1021
      %v1104 = vsel %vm1095, 0.0, %v1022
      %v1105 = vpack.c.bf16 %v1097, %v1096
      %v1106 = vpack.c.bf16 %v1099, %v1098
      %v1107 = vpack.c.bf16 %v1101, %v1100
      %v1108 = vpack.c.bf16 %v1103, %v1102
      %v1109 = vpack.c.bf16 %v1104, %v1104
      %v1110 = vld [vmem:[%s3] sm:$0xf]
      %v1111 = vld [vmem:[%s3 + $0x4] sm:$0xf]
      %v1112 = vld [vmem:[%s3 + $0x8] sm:$0xf]
      %v1113 = vld [vmem:[%s3 + $0xc] sm:$0xf]
      %v1114 = vld [vmem:[%s3 + $0x10] sm:$0xf]
      %v1115 = vld [vmem:[%s3 + $0x14] sm:$0xf]
      %v1116 = vld [vmem:[%s3 + $0x18] sm:$0xf]
      %v1117 = vld [vmem:[%s3 + $0x1c] sm:$0xf]
      %v1118 = vld [vmem:[%s3 + $0x20] sm:$0xf]
      %v1119 = vld [vmem:[%s3 + $0x24] sm:$0xf]
      %v1120 = vld [vmem:[%s3 + $0x28] sm:$0xf]
      %v1121 = vld [vmem:[%s3 + $0x2c] sm:$0xf]
      %v1134 = vunpack.c.l.b16 %v1110
      %v1135 = vunpack.c.l.b16 %v1111
      %v1136 = vunpack.c.l.b16 %v1112
      %v1137 = vunpack.c.l.b16 %v1113
      %v1138 = vunpack.c.l.b16 %v1114
      %v1139 = vunpack.c.l.b16 %v1115
      %v1140 = vunpack.c.l.b16 %v1116
      %v1141 = vunpack.c.l.b16 %v1117
      %v1142 = vunpack.c.l.b16 %v1118
      %v1143 = vunpack.c.l.b16 %v1119
      %v1144 = vunpack.c.l.b16 %v1120
      %v1145 = vunpack.c.l.b16 %v1121
      %v1146 = vpack.c.b16 %v1135, %v1134
      %v1147 = vpack.c.b16 %v1137, %v1136
      %v1148 = vpack.c.b16 %v1139, %v1138
      %v1149 = vpack.c.b16 %v1141, %v1140
      %v1150 = vpack.c.b16 %v1143, %v1142
      %v1151 = vpack.c.b16 %v1145, %v1144
      %vm1158 = vcmask 785408
      %v1160 = vsel %vm1158, %v1105, 0
      %v1163 = vsel %vm1158, %v1106, 0
      %v1166 = vsel %vm1158, %v1107, 0
      %v1169 = vsel %vm1158, %v1108, 0
      %v1172 = vsel %vm1158, %v1109, 0
      %1174 = vmatprep.subr.bf16.mxu0 0
      %1175 = vmatpush1.bf16.msra.mxu0 %v1146
      %1176 = vmatprep.subr.bf16.mxu0 0
      %1177 = vmatpush1.bf16.msra.mxu0 %v1147
      %1178 = vmatprep.subr.bf16.mxu0 0
      %1179 = vmatpush1.bf16.msra.mxu0 %v1148
      %1180 = vmatprep.subr.bf16.mxu0 0
      %1181 = vmatpush1.bf16.msra.mxu0 %v1149
      %1182 = vmatprep.subr.bf16.mxu0 0
      %1183 = vmatpush1.bf16.msra.mxu0 %v1150
      %1184 = vmatprep.subr.bf16.mxu0 0
      %1185 = vmatpush1.bf16.msra.mxu0 %v1151
      %1186 = vmatprep.subr.bf16.mxu0 0
      %1187 = vmatpush1.bf16.msra.mxu0 0
      %1188 = vmatprep.subr.bf16.mxu0 0
      %1189 = vmatpush1.bf16.msra.mxu0 0
      %1190 = vmatprep.subr.bf16.mxu0 0
      %1191 = vmatpush1.bf16.msra.mxu0 0
      %1192 = vmatprep.subr.bf16.mxu0 0
      %1193 = vmatpush1.bf16.msra.mxu0 0
      %1194 = vmatprep.subr.bf16.mxu0 0
      %1195 = vmatpush1.bf16.msra.mxu0 0
      %1196 = vmatprep.subr.bf16.mxu0 0
      %1197 = vmatpush1.bf16.msra.mxu0 0
      %1198 = vmatprep.subr.bf16.mxu0 0
      %1199 = vmatpush1.bf16.msra.mxu0 0
      %1200 = vmatprep.subr.bf16.mxu0 0
      %1201 = vmatpush1.bf16.msra.mxu0 0
      %1202 = vmatprep.subr.bf16.mxu0 0
      %1203 = vmatpush1.bf16.msra.mxu0 0
      %1204 = vmatprep.subr.bf16.mxu0 0
      %1205 = vmatpush1.bf16.msra.mxu0 0
      %1206 = vmatprep.mubr.bf16.mxu0 0
      %1207 = vmatmul.mubr.bf16.gmra.mrb[0].mxu0 %v1160
      %v1208 = vpop.f32.mrb[0].mxu0
      %v1209 = vadd.f32 0.0, %v1208
      %v1210 = vpop.f32.mrb[0].mxu0
      %v1211 = vpop.f32.mrb[0].mxu0
      %v1212 = vadd.f32 0.0, %v1211
      %v1213 = vpop.f32.mrb[0].mxu0
      %1214 = vmatprep.mubr.bf16.mxu0 0
      %1215 = vmatmul.mubr.bf16.gmra.mrb[0].mxu0 %v1163
      %v1216 = vpop.f32.mrb[0].mxu0
      %v1217 = vadd.f32 0.0, %v1216
      %v1218 = vpop.f32.mrb[0].mxu0
      %v1219 = vpop.f32.mrb[0].mxu0
      %v1220 = vadd.f32 0.0, %v1219
      %v1221 = vpop.f32.mrb[0].mxu0
      %1222 = vmatprep.mubr.bf16.mxu0 0
      %1223 = vmatmul.mubr.bf16.gmra.mrb[0].mxu0 %v1166
      %v1224 = vpop.f32.mrb[0].mxu0
      %v1225 = vadd.f32 0.0, %v1224
      %v1226 = vpop.f32.mrb[0].mxu0
      %v1227 = vpop.f32.mrb[0].mxu0
      %v1228 = vadd.f32 0.0, %v1227
      %v1229 = vpop.f32.mrb[0].mxu0
      %1230 = vmatprep.mubr.bf16.mxu0 0
      %1231 = vmatmul.mubr.bf16.gmra.mrb[0].mxu0 %v1169
      %v1232 = vpop.f32.mrb[0].mxu0
      %v1233 = vadd.f32 0.0, %v1232
      %v1234 = vpop.f32.mrb[0].mxu0
      %v1235 = vpop.f32.mrb[0].mxu0
      %v1236 = vadd.f32 0.0, %v1235
      %v1237 = vpop.f32.mrb[0].mxu0
      %1238 = vmatprep.mubr.bf16.mxu0 0
      %1239 = vmatmul.mubr.bf16.gmra.mrb[0].mxu0 %v1172
      %v1240 = vpop.f32.mrb[0].mxu0
      %v1241 = vadd.f32 0.0, %v1240
      %v1242 = vpop.f32.mrb[0].mxu0
      %v1243 = vpop.f32.mrb[0].mxu0
      %v1244 = vpop.f32.mrb[0].mxu0
      %1245 = vdwg.mxu0
      %s1246 = scalar_lea.vmem %s3, 48
      %v1247 = vld [vmem:[%s1246] sm:$0xf]
      %v1248 = vld [vmem:[%s1246 + $0x4] sm:$0xf]
      %v1249 = vld [vmem:[%s1246 + $0x8] sm:$0xf]
      %v1250 = vld [vmem:[%s1246 + $0xc] sm:$0xf]
      %v1251 = vld [vmem:[%s1246 + $0x10] sm:$0xf]
      %v1252 = vld [vmem:[%s1246 + $0x14] sm:$0xf]
      %v1253 = vld [vmem:[%s1246 + $0x18] sm:$0xf]
      %v1254 = vld [vmem:[%s1246 + $0x1c] sm:$0xf]
      %v1255 = vld [vmem:[%s1246 + $0x20] sm:$0xf]
      %v1256 = vld [vmem:[%s1246 + $0x24] sm:$0xf]
      %v1257 = vld [vmem:[%s1246 + $0x28] sm:$0xf]
      %v1258 = vld [vmem:[%s1246 + $0x2c] sm:$0xf]
      %s1259 = scalar_lea.vmem %s3, 96
      %v1260 = vld [vmem:[%s1259] sm:$0xf]
      %v1261 = vld [vmem:[%s1259 + $0x4] sm:$0xf]
      %v1262 = vld [vmem:[%s1259 + $0x8] sm:$0xf]
      %v1263 = vld [vmem:[%s1259 + $0xc] sm:$0xf]
      %v1264 = vld [vmem:[%s1259 + $0x10] sm:$0xf]
      %v1265 = vld [vmem:[%s1259 + $0x14] sm:$0xf]
      %v1266 = vld [vmem:[%s1259 + $0x18] sm:$0xf]
      %v1267 = vld [vmem:[%s1259 + $0x1c] sm:$0xf]
      %v1268 = vld [vmem:[%s1259 + $0x20] sm:$0xf]
      %v1269 = vld [vmem:[%s1259 + $0x24] sm:$0xf]
      %v1270 = vld [vmem:[%s1259 + $0x28] sm:$0xf]
      %v1271 = vld [vmem:[%s1259 + $0x2c] sm:$0xf]
      %v1284 = vunpack.c.l.b16 %v1260
      %v1285 = vunpack.c.l.b16 %v1261
      %v1286 = vunpack.c.l.b16 %v1262
      %v1287 = vunpack.c.l.b16 %v1263
      %v1288 = vunpack.c.l.b16 %v1264
      %v1289 = vunpack.c.l.b16 %v1265
      %v1290 = vunpack.c.l.b16 %v1266
      %v1291 = vunpack.c.l.b16 %v1267
      %v1292 = vunpack.c.l.b16 %v1268
      %v1293 = vunpack.c.l.b16 %v1269
      %v1294 = vunpack.c.l.b16 %v1270
      %v1295 = vunpack.c.l.b16 %v1271
      %v1296 = vpack.c.b16 %v1285, %v1284
      %v1297 = vpack.c.b16 %v1287, %v1286
      %v1298 = vpack.c.b16 %v1289, %v1288
      %v1299 = vpack.c.b16 %v1291, %v1290
      %v1300 = vpack.c.b16 %v1293, %v1292
      %v1301 = vpack.c.b16 %v1295, %v1294
      %1308 = vmatprep.subr.bf16.mxu0 0
      %1309 = vmatpush1.bf16.msra.mxu0 %v1296
      %1310 = vmatprep.subr.bf16.mxu0 0
      %1311 = vmatpush1.bf16.msra.mxu0 %v1297
      %1312 = vmatprep.subr.bf16.mxu0 0
      %1313 = vmatpush1.bf16.msra.mxu0 %v1298
      %1314 = vmatprep.subr.bf16.mxu0 0
      %1315 = vmatpush1.bf16.msra.mxu0 %v1299
      %1316 = vmatprep.subr.bf16.mxu0 0
      %1317 = vmatpush1.bf16.msra.mxu0 %v1300
      %1318 = vmatprep.subr.bf16.mxu0 0
      %1319 = vmatpush1.bf16.msra.mxu0 %v1301
      %1320 = vmatprep.subr.bf16.mxu0 0
      %1321 = vmatpush1.bf16.msra.mxu0 0
      %1322 = vmatprep.subr.bf16.mxu0 0
      %1323 = vmatpush1.bf16.msra.mxu0 0
      %1324 = vmatprep.subr.bf16.mxu0 0
      %1325 = vmatpush1.bf16.msra.mxu0 0
      %1326 = vmatprep.subr.bf16.mxu0 0
      %1327 = vmatpush1.bf16.msra.mxu0 0
      %1328 = vmatprep.subr.bf16.mxu0 0
      %1329 = vmatpush1.bf16.msra.mxu0 0
      %1330 = vmatprep.subr.bf16.mxu0 0
      %1331 = vmatpush1.bf16.msra.mxu0 0
      %1332 = vmatprep.subr.bf16.mxu0 0
      %1333 = vmatpush1.bf16.msra.mxu0 0
      %1334 = vmatprep.subr.bf16.mxu0 0
      %1335 = vmatpush1.bf16.msra.mxu0 0
      %1336 = vmatprep.subr.bf16.mxu0 0
      %1337 = vmatpush1.bf16.msra.mxu0 0
      %1338 = vmatprep.subr.bf16.mxu0 0
      %1339 = vmatpush1.bf16.msra.mxu0 0
      %1340 = vmatprep.mubr.bf16.mxu0 0
      %1341 = vmatmul.mubr.bf16.gmra.mrb[0].mxu0 %v1160
      %v1342 = vpop.f32.mrb[0].mxu0
      %v1343 = vadd.f32 0.0, %v1342
      %v1344 = vpop.f32.mrb[0].mxu0
      %v1345 = vpop.f32.mrb[0].mxu0
      %v1346 = vadd.f32 0.0, %v1345
      %v1347 = vpop.f32.mrb[0].mxu0
      %1348 = vmatprep.mubr.bf16.mxu0 0
      %1349 = vmatmul.mubr.bf16.gmra.mrb[0].mxu0 %v1163
      %v1350 = vpop.f32.mrb[0].mxu0
      %v1351 = vadd.f32 0.0, %v1350
      %v1352 = vpop.f32.mrb[0].mxu0
      %v1353 = vpop.f32.mrb[0].mxu0
      %v1354 = vadd.f32 0.0, %v1353
      %v1355 = vpop.f32.mrb[0].mxu0
      %1356 = vmatprep.mubr.bf16.mxu0 0
      %1357 = vmatmul.mubr.bf16.gmra.mrb[0].mxu0 %v1166
      %v1358 = vpop.f32.mrb[0].mxu0
      %v1359 = vadd.f32 0.0, %v1358
      %v1360 = vpop.f32.mrb[0].mxu0
      %v1361 = vpop.f32.mrb[0].mxu0
      %v1362 = vadd.f32 0.0, %v1361
      %v1363 = vpop.f32.mrb[0].mxu0
      %1364 = vmatprep.mubr.bf16.mxu0 0
      %1365 = vmatmul.mubr.bf16.gmra.mrb[0].mxu0 %v1169
      %v1366 = vpop.f32.mrb[0].mxu0
      %v1367 = vadd.f32 0.0, %v1366
      %v1368 = vpop.f32.mrb[0].mxu0
      %v1369 = vpop.f32.mrb[0].mxu0
      %v1370 = vadd.f32 0.0, %v1369
      %v1371 = vpop.f32.mrb[0].mxu0
      %1372 = vmatprep.mubr.bf16.mxu0 0
      %1373 = vmatmul.mubr.bf16.gmra.mrb[0].mxu0 %v1172
      %v1374 = vpop.f32.mrb[0].mxu0
      %v1375 = vadd.f32 0.0, %v1374
      %v1376 = vpop.f32.mrb[0].mxu0
      %v1377 = vpop.f32.mrb[0].mxu0
      %v1378 = vpop.f32.mrb[0].mxu0
      %1379 = vdwg.mxu0
      %vm1389 = vcmask 1040384
      %v1390 = vrot.slane %v1209, 7
      %v1391 = vrot.slane %v1212, 7
      %v1392 = vsel %vm1389, %v1390, %v1391
      %v1393 = vrot.slane %v1217, 7
      %v1394 = vsel %vm1389, %v1391, %v1393
      %v1395 = vrot.slane %v1220, 7
      %v1396 = vsel %vm1389, %v1393, %v1395
      %v1397 = vrot.slane %v1225, 7
      %v1398 = vsel %vm1389, %v1395, %v1397
      %v1399 = vrot.slane %v1228, 7
      %v1400 = vsel %vm1389, %v1397, %v1399
      %v1401 = vrot.slane %v1233, 7
      %v1402 = vsel %vm1389, %v1399, %v1401
      %v1403 = vrot.slane %v1236, 7
      %v1404 = vsel %vm1389, %v1401, %v1403
      %v1405 = vrot.slane %v1241, 7
      %v1406 = vsel %vm1389, %v1403, %v1405
      %v1416 = vsel %vm1389, 0.0, %v1390
      %v1429 = vunpack.c.l.b16 %v1247
      %v1430 = vunpack.c.l.b16 %v1248
      %v1431 = vunpack.c.l.b16 %v1249
      %v1432 = vunpack.c.l.b16 %v1250
      %v1433 = vunpack.c.l.b16 %v1251
      %v1434 = vunpack.c.l.b16 %v1252
      %v1435 = vunpack.c.l.b16 %v1253
      %v1436 = vunpack.c.l.b16 %v1254
      %v1437 = vunpack.c.l.b16 %v1255
      %v1438 = vunpack.c.l.b16 %v1256
      %v1439 = vunpack.c.l.b16 %v1257
      %v1440 = vunpack.c.l.b16 %v1258
      %v1441 = vpack.c.b16 %v1430, %v1429
      %v1442 = vpack.c.b16 %v1432, %v1431
      %v1443 = vpack.c.b16 %v1434, %v1433
      %v1444 = vpack.c.b16 %v1436, %v1435
      %v1445 = vpack.c.b16 %v1438, %v1437
      %v1446 = vpack.c.b16 %v1440, %v1439
      %1453 = vmatprep.subr.bf16.mxu0 0
      %1454 = vmatpush1.bf16.msra.mxu0 %v1441
      %1455 = vmatprep.subr.bf16.mxu0 0
      %1456 = vmatpush1.bf16.msra.mxu0 %v1442
      %1457 = vmatprep.subr.bf16.mxu0 0
      %1458 = vmatpush1.bf16.msra.mxu0 %v1443
      %1459 = vmatprep.subr.bf16.mxu0 0
      %1460 = vmatpush1.bf16.msra.mxu0 %v1444
      %1461 = vmatprep.subr.bf16.mxu0 0
      %1462 = vmatpush1.bf16.msra.mxu0 %v1445
      %1463 = vmatprep.subr.bf16.mxu0 0
      %1464 = vmatpush1.bf16.msra.mxu0 %v1446
      %1465 = vmatprep.subr.bf16.mxu0 0
      %1466 = vmatpush1.bf16.msra.mxu0 0
      %1467 = vmatprep.subr.bf16.mxu0 0
      %1468 = vmatpush1.bf16.msra.mxu0 0
      %1469 = vmatprep.subr.bf16.mxu0 0
      %1470 = vmatpush1.bf16.msra.mxu0 0
      %1471 = vmatprep.subr.bf16.mxu0 0
      %1472 = vmatpush1.bf16.msra.mxu0 0
      %1473 = vmatprep.subr.bf16.mxu0 0
      %1474 = vmatpush1.bf16.msra.mxu0 0
      %1475 = vmatprep.subr.bf16.mxu0 0
      %1476 = vmatpush1.bf16.msra.mxu0 0
      %1477 = vmatprep.subr.bf16.mxu0 0
      %1478 = vmatpush1.bf16.msra.mxu0 0
      %1479 = vmatprep.subr.bf16.mxu0 0
      %1480 = vmatpush1.bf16.msra.mxu0 0
      %1481 = vmatprep.subr.bf16.mxu0 0
      %1482 = vmatpush1.bf16.msra.mxu0 0
      %1483 = vmatprep.subr.bf16.mxu0 0
      %1484 = vmatpush1.bf16.msra.mxu0 0
      %1485 = vmatprep.mubr.bf16.mxu0 0
      %1486 = vmatmul.mubr.bf16.gmra.mrb[0].mxu0 %v1160
      %v1487 = vpop.f32.mrb[0].mxu0
      %v1488 = vadd.f32 %v1416, %v1487
      %v1489 = vpop.f32.mrb[0].mxu0
      %v1490 = vpop.f32.mrb[0].mxu0
      %v1491 = vadd.f32 %v1392, %v1490
      %v1492 = vpop.f32.mrb[0].mxu0
      %1493 = vmatprep.mubr.bf16.mxu0 0
      %1494 = vmatmul.mubr.bf16.gmra.mrb[0].mxu0 %v1163
      %v1495 = vpop.f32.mrb[0].mxu0
      %v1496 = vadd.f32 %v1394, %v1495
      %v1497 = vpop.f32.mrb[0].mxu0
      %v1498 = vpop.f32.mrb[0].mxu0
      %v1499 = vadd.f32 %v1396, %v1498
      %v1500 = vpop.f32.mrb[0].mxu0
      %1501 = vmatprep.mubr.bf16.mxu0 0
      %1502 = vmatmul.mubr.bf16.gmra.mrb[0].mxu0 %v1166
      %v1503 = vpop.f32.mrb[0].mxu0
      %v1504 = vadd.f32 %v1398, %v1503
      %v1505 = vpop.f32.mrb[0].mxu0
      %v1506 = vpop.f32.mrb[0].mxu0
      %v1507 = vadd.f32 %v1400, %v1506
      %v1508 = vpop.f32.mrb[0].mxu0
      %1509 = vmatprep.mubr.bf16.mxu0 0
      %1510 = vmatmul.mubr.bf16.gmra.mrb[0].mxu0 %v1169
      %v1511 = vpop.f32.mrb[0].mxu0
      %v1512 = vadd.f32 %v1402, %v1511
      %v1513 = vpop.f32.mrb[0].mxu0
      %v1514 = vpop.f32.mrb[0].mxu0
      %v1515 = vadd.f32 %v1404, %v1514
      %v1516 = vpop.f32.mrb[0].mxu0
      %1517 = vmatprep.mubr.bf16.mxu0 0
      %1518 = vmatmul.mubr.bf16.gmra.mrb[0].mxu0 %v1172
      %v1519 = vpop.f32.mrb[0].mxu0
      %v1520 = vadd.f32 %v1406, %v1519
      %v1521 = vpop.f32.mrb[0].mxu0
      %v1522 = vpop.f32.mrb[0].mxu0
      %v1523 = vpop.f32.mrb[0].mxu0
      %1524 = vdwg.mxu0
      %vm1534 = vcmask 1046528
      %v1535 = vrot.slane %v1343, 1
      %v1536 = vrot.slane %v1346, 1
      %v1537 = vsel %vm1534, %v1535, %v1536
      %v1538 = vrot.slane %v1351, 1
      %v1539 = vsel %vm1534, %v1536, %v1538
      %v1540 = vrot.slane %v1354, 1
      %v1541 = vsel %vm1534, %v1538, %v1540
      %v1542 = vrot.slane %v1359, 1
      %v1543 = vsel %vm1534, %v1540, %v1542
      %v1544 = vrot.slane %v1362, 1
      %v1545 = vsel %vm1534, %v1542, %v1544
      %v1546 = vrot.slane %v1367, 1
      %v1547 = vsel %vm1534, %v1544, %v1546
      %v1548 = vrot.slane %v1370, 1
      %v1549 = vsel %vm1534, %v1546, %v1548
      %v1550 = vrot.slane %v1375, 1
      %v1551 = vsel %vm1534, %v1548, %v1550
      %vm1561 = vcmask 1042432
      %v1562 = vsel %vm1561, %v1550, 0.0
      %v1563 = vadd.f32 %v1488, %v1537
      %v1564 = vadd.f32 %v1491, %v1539
      %v1565 = vadd.f32 %v1496, %v1541
      %v1566 = vadd.f32 %v1499, %v1543
      %v1567 = vadd.f32 %v1504, %v1545
      %v1568 = vadd.f32 %v1507, %v1547
      %v1569 = vadd.f32 %v1512, %v1549
      %v1570 = vadd.f32 %v1515, %v1551
      %v1571 = vadd.f32 %v1520, %v1562
      %v1572 = vld [vmem:[%s5] sm:$0x1]
      %v1574 = vlaneseq
      %v1575 = vshrl.u32 %v1574, 7
      %v1576 = vsub.s32 0, %v1575
      %v1577 = vrot.slane %v1572, %v1576
      %v1579 = vadd.f32 %v1563, %v1577
      %v1580 = vadd.f32 %v1564, %v1577
      %v1581 = vadd.f32 %v1565, %v1577
      %v1582 = vadd.f32 %v1566, %v1577
      %v1583 = vadd.f32 %v1567, %v1577
      %v1584 = vadd.f32 %v1568, %v1577
      %v1585 = vadd.f32 %v1569, %v1577
      %v1586 = vadd.f32 %v1570, %v1577
      %v1587 = vadd.f32 %v1571, %v1577
      %v1588 = vmax.f32 %v1579, 0.0
      %v1589 = vmax.f32 %v1580, 0.0
      %v1590 = vmax.f32 %v1581, 0.0
      %v1591 = vmax.f32 %v1582, 0.0
      %v1592 = vmax.f32 %v1583, 0.0
      %v1593 = vmax.f32 %v1584, 0.0
      %v1594 = vmax.f32 %v1585, 0.0
      %v1595 = vmax.f32 %v1586, 0.0
      %v1596 = vmax.f32 %v1587, 0.0
      %v1597 = vsel %vm1087, 0.0, %v1588
      %v1598 = vsel %vm1088, 0.0, %v1589
      %v1599 = vsel %vm1089, 0.0, %v1590
      %v1600 = vsel %vm1090, 0.0, %v1591
      %v1601 = vsel %vm1091, 0.0, %v1592
      %v1602 = vsel %vm1092, 0.0, %v1593
      %v1603 = vsel %vm1093, 0.0, %v1594
      %v1604 = vsel %vm1094, 0.0, %v1595
      %v1605 = vsel %vm1095, 0.0, %v1596
      %v1606 = vpack.c.bf16 %v1598, %v1597
      %v1607 = vpack.c.bf16 %v1600, %v1599
      %v1608 = vpack.c.bf16 %v1602, %v1601
      %v1609 = vpack.c.bf16 %v1604, %v1603
      %v1610 = vpack.c.bf16 %v1605, %v1605
      %v1611 = vld [vmem:[%s7] sm:$0xf]
      %v1612 = vld [vmem:[%s7 + $0x4] sm:$0xf]
      %v1613 = vld [vmem:[%s7 + $0x8] sm:$0xf]
      %v1614 = vld [vmem:[%s7 + $0xc] sm:$0xf]
      %v1615 = vld [vmem:[%s7 + $0x10] sm:$0xf]
      %v1616 = vld [vmem:[%s7 + $0x14] sm:$0xf]
      %v1617 = vld [vmem:[%s7 + $0x18] sm:$0xf]
      %v1618 = vld [vmem:[%s7 + $0x1c] sm:$0xf]
      %v1619 = vld [vmem:[%s7 + $0x20] sm:$0xf]
      %v1620 = vld [vmem:[%s7 + $0x24] sm:$0xf]
      %v1621 = vld [vmem:[%s7 + $0x28] sm:$0xf]
      %v1622 = vld [vmem:[%s7 + $0x2c] sm:$0xf]
      %v1623 = vld [vmem:[%s7 + $0x30] sm:$0xf]
      %v1624 = vld [vmem:[%s7 + $0x34] sm:$0xf]
      %v1625 = vld [vmem:[%s7 + $0x38] sm:$0xf]
      %v1626 = vld [vmem:[%s7 + $0x3c] sm:$0xf]
      %v1643 = vunpack.c.l.b16 %v1611
      %v1644 = vunpack.c.l.b16 %v1612
      %v1645 = vunpack.c.l.b16 %v1613
      %v1646 = vunpack.c.l.b16 %v1614
      %v1647 = vunpack.c.l.b16 %v1615
      %v1648 = vunpack.c.l.b16 %v1616
      %v1649 = vunpack.c.l.b16 %v1617
      %v1650 = vunpack.c.l.b16 %v1618
      %v1651 = vunpack.c.l.b16 %v1619
      %v1652 = vunpack.c.l.b16 %v1620
      %v1653 = vunpack.c.l.b16 %v1621
      %v1654 = vunpack.c.l.b16 %v1622
      %v1655 = vunpack.c.l.b16 %v1623
      %v1656 = vunpack.c.l.b16 %v1624
      %v1657 = vunpack.c.l.b16 %v1625
      %v1658 = vunpack.c.l.b16 %v1626
      %v1659 = vpack.c.b16 %v1644, %v1643
      %v1660 = vpack.c.b16 %v1646, %v1645
      %v1661 = vpack.c.b16 %v1648, %v1647
      %v1662 = vpack.c.b16 %v1650, %v1649
      %v1663 = vpack.c.b16 %v1652, %v1651
      %v1664 = vpack.c.b16 %v1654, %v1653
      %v1665 = vpack.c.b16 %v1656, %v1655
      %v1666 = vpack.c.b16 %v1658, %v1657
      %1675 = vmatprep.subr.bf16.mxu0 0
      %1676 = vmatpush1.bf16.msra.mxu0 %v1659
      %1677 = vmatprep.subr.bf16.mxu0 0
      %1678 = vmatpush1.bf16.msra.mxu0 %v1660
      %1679 = vmatprep.subr.bf16.mxu0 0
      %1680 = vmatpush1.bf16.msra.mxu0 %v1661
      %1681 = vmatprep.subr.bf16.mxu0 0
      %1682 = vmatpush1.bf16.msra.mxu0 %v1662
      %1683 = vmatprep.subr.bf16.mxu0 0
      %1684 = vmatpush1.bf16.msra.mxu0 %v1663
      %1685 = vmatprep.subr.bf16.mxu0 0
      %1686 = vmatpush1.bf16.msra.mxu0 %v1664
      %1687 = vmatprep.subr.bf16.mxu0 0
      %1688 = vmatpush1.bf16.msra.mxu0 %v1665
      %1689 = vmatprep.subr.bf16.mxu0 0
      %1690 = vmatpush1.bf16.msra.mxu0 %v1666
      %1691 = vmatprep.subr.bf16.mxu0 0
      %1692 = vmatpush1.bf16.msra.mxu0 0
      %1693 = vmatprep.subr.bf16.mxu0 0
      %1694 = vmatpush1.bf16.msra.mxu0 0
      %1695 = vmatprep.subr.bf16.mxu0 0
      %1696 = vmatpush1.bf16.msra.mxu0 0
      %1697 = vmatprep.subr.bf16.mxu0 0
      %1698 = vmatpush1.bf16.msra.mxu0 0
      %1699 = vmatprep.subr.bf16.mxu0 0
      %1700 = vmatpush1.bf16.msra.mxu0 0
      %1701 = vmatprep.subr.bf16.mxu0 0
      %1702 = vmatpush1.bf16.msra.mxu0 0
      %1703 = vmatprep.subr.bf16.mxu0 0
      %1704 = vmatpush1.bf16.msra.mxu0 0
      %1705 = vmatprep.subr.bf16.mxu0 0
      %1706 = vmatpush1.bf16.msra.mxu0 0
      %1707 = vmatprep.mubr.bf16.mxu0 0
      %1708 = vmatmul.mubr.bf16.gmra.mrb[0].mxu0 %v1606
      %v1709 = vpop.f32.mrb[0].mxu0
      %v1710 = vadd.f32 0.0, %v1709
      %v1711 = vpop.f32.mrb[0].mxu0
      %v1712 = vpop.f32.mrb[0].mxu0
      %v1713 = vadd.f32 0.0, %v1712
      %v1714 = vpop.f32.mrb[0].mxu0
      %1715 = vmatprep.mubr.bf16.mxu0 0
      %1716 = vmatmul.mubr.bf16.gmra.mrb[0].mxu0 %v1607
      %v1717 = vpop.f32.mrb[0].mxu0
      %v1718 = vadd.f32 0.0, %v1717
      %v1719 = vpop.f32.mrb[0].mxu0
      %v1720 = vpop.f32.mrb[0].mxu0
      %v1721 = vadd.f32 0.0, %v1720
      %v1722 = vpop.f32.mrb[0].mxu0
      %1723 = vmatprep.mubr.bf16.mxu0 0
      %1724 = vmatmul.mubr.bf16.gmra.mrb[0].mxu0 %v1608
      %v1725 = vpop.f32.mrb[0].mxu0
      %v1726 = vadd.f32 0.0, %v1725
      %v1727 = vpop.f32.mrb[0].mxu0
      %v1728 = vpop.f32.mrb[0].mxu0
      %v1729 = vadd.f32 0.0, %v1728
      %v1730 = vpop.f32.mrb[0].mxu0
      %1731 = vmatprep.mubr.bf16.mxu0 0
      %1732 = vmatmul.mubr.bf16.gmra.mrb[0].mxu0 %v1609
      %v1733 = vpop.f32.mrb[0].mxu0
      %v1734 = vadd.f32 0.0, %v1733
      %v1735 = vpop.f32.mrb[0].mxu0
      %v1736 = vpop.f32.mrb[0].mxu0
      %v1737 = vadd.f32 0.0, %v1736
      %v1738 = vpop.f32.mrb[0].mxu0
      %1739 = vmatprep.mubr.bf16.mxu0 0
      %1740 = vmatmul.mubr.bf16.gmra.mrb[0].mxu0 %v1610
      %v1741 = vpop.f32.mrb[0].mxu0
      %v1742 = vadd.f32 0.0, %v1741
      %v1743 = vpop.f32.mrb[0].mxu0
      %v1744 = vpop.f32.mrb[0].mxu0
      %v1745 = vpop.f32.mrb[0].mxu0
      %1746 = vdwg.mxu0
      %s1747 = scalar_lea.vmem %s7, 64
      %v1748 = vld [vmem:[%s1747] sm:$0xf]
      %v1749 = vld [vmem:[%s1747 + $0x4] sm:$0xf]
      %v1750 = vld [vmem:[%s1747 + $0x8] sm:$0xf]
      %v1751 = vld [vmem:[%s1747 + $0xc] sm:$0xf]
      %v1752 = vld [vmem:[%s1747 + $0x10] sm:$0xf]
      %v1753 = vld [vmem:[%s1747 + $0x14] sm:$0xf]
      %v1754 = vld [vmem:[%s1747 + $0x18] sm:$0xf]
      %v1755 = vld [vmem:[%s1747 + $0x1c] sm:$0xf]
      %v1756 = vld [vmem:[%s1747 + $0x20] sm:$0xf]
      %v1757 = vld [vmem:[%s1747 + $0x24] sm:$0xf]
      %v1758 = vld [vmem:[%s1747 + $0x28] sm:$0xf]
      %v1759 = vld [vmem:[%s1747 + $0x2c] sm:$0xf]
      %v1760 = vld [vmem:[%s1747 + $0x30] sm:$0xf]
      %v1761 = vld [vmem:[%s1747 + $0x34] sm:$0xf]
      %v1762 = vld [vmem:[%s1747 + $0x38] sm:$0xf]
      %v1763 = vld [vmem:[%s1747 + $0x3c] sm:$0xf]
      %s1764 = scalar_lea.vmem %s7, 128
      %v1765 = vld [vmem:[%s1764] sm:$0xf]
      %v1766 = vld [vmem:[%s1764 + $0x4] sm:$0xf]
      %v1767 = vld [vmem:[%s1764 + $0x8] sm:$0xf]
      %v1768 = vld [vmem:[%s1764 + $0xc] sm:$0xf]
      %v1769 = vld [vmem:[%s1764 + $0x10] sm:$0xf]
      %v1770 = vld [vmem:[%s1764 + $0x14] sm:$0xf]
      %v1771 = vld [vmem:[%s1764 + $0x18] sm:$0xf]
      %v1772 = vld [vmem:[%s1764 + $0x1c] sm:$0xf]
      %v1773 = vld [vmem:[%s1764 + $0x20] sm:$0xf]
      %v1774 = vld [vmem:[%s1764 + $0x24] sm:$0xf]
      %v1775 = vld [vmem:[%s1764 + $0x28] sm:$0xf]
      %v1776 = vld [vmem:[%s1764 + $0x2c] sm:$0xf]
      %v1777 = vld [vmem:[%s1764 + $0x30] sm:$0xf]
      %v1778 = vld [vmem:[%s1764 + $0x34] sm:$0xf]
      %v1779 = vld [vmem:[%s1764 + $0x38] sm:$0xf]
      %v1780 = vld [vmem:[%s1764 + $0x3c] sm:$0xf]
      %v1797 = vunpack.c.l.b16 %v1765
      %v1798 = vunpack.c.l.b16 %v1766
      %v1799 = vunpack.c.l.b16 %v1767
      %v1800 = vunpack.c.l.b16 %v1768
      %v1801 = vunpack.c.l.b16 %v1769
      %v1802 = vunpack.c.l.b16 %v1770
      %v1803 = vunpack.c.l.b16 %v1771
      %v1804 = vunpack.c.l.b16 %v1772
      %v1805 = vunpack.c.l.b16 %v1773
      %v1806 = vunpack.c.l.b16 %v1774
      %v1807 = vunpack.c.l.b16 %v1775
      %v1808 = vunpack.c.l.b16 %v1776
      %v1809 = vunpack.c.l.b16 %v1777
      %v1810 = vunpack.c.l.b16 %v1778
      %v1811 = vunpack.c.l.b16 %v1779
      %v1812 = vunpack.c.l.b16 %v1780
      %v1813 = vpack.c.b16 %v1798, %v1797
      %v1814 = vpack.c.b16 %v1800, %v1799
      %v1815 = vpack.c.b16 %v1802, %v1801
      %v1816 = vpack.c.b16 %v1804, %v1803
      %v1817 = vpack.c.b16 %v1806, %v1805
      %v1818 = vpack.c.b16 %v1808, %v1807
      %v1819 = vpack.c.b16 %v1810, %v1809
      %v1820 = vpack.c.b16 %v1812, %v1811
      %1829 = vmatprep.subr.bf16.mxu0 0
      %1830 = vmatpush1.bf16.msra.mxu0 %v1813
      %1831 = vmatprep.subr.bf16.mxu0 0
      %1832 = vmatpush1.bf16.msra.mxu0 %v1814
      %1833 = vmatprep.subr.bf16.mxu0 0
      %1834 = vmatpush1.bf16.msra.mxu0 %v1815
      %1835 = vmatprep.subr.bf16.mxu0 0
      %1836 = vmatpush1.bf16.msra.mxu0 %v1816
      %1837 = vmatprep.subr.bf16.mxu0 0
      %1838 = vmatpush1.bf16.msra.mxu0 %v1817
      %1839 = vmatprep.subr.bf16.mxu0 0
      %1840 = vmatpush1.bf16.msra.mxu0 %v1818
      %1841 = vmatprep.subr.bf16.mxu0 0
      %1842 = vmatpush1.bf16.msra.mxu0 %v1819
      %1843 = vmatprep.subr.bf16.mxu0 0
      %1844 = vmatpush1.bf16.msra.mxu0 %v1820
      %1845 = vmatprep.subr.bf16.mxu0 0
      %1846 = vmatpush1.bf16.msra.mxu0 0
      %1847 = vmatprep.subr.bf16.mxu0 0
      %1848 = vmatpush1.bf16.msra.mxu0 0
      %1849 = vmatprep.subr.bf16.mxu0 0
      %1850 = vmatpush1.bf16.msra.mxu0 0
      %1851 = vmatprep.subr.bf16.mxu0 0
      %1852 = vmatpush1.bf16.msra.mxu0 0
      %1853 = vmatprep.subr.bf16.mxu0 0
      %1854 = vmatpush1.bf16.msra.mxu0 0
      %1855 = vmatprep.subr.bf16.mxu0 0
      %1856 = vmatpush1.bf16.msra.mxu0 0
      %1857 = vmatprep.subr.bf16.mxu0 0
      %1858 = vmatpush1.bf16.msra.mxu0 0
      %1859 = vmatprep.subr.bf16.mxu0 0
      %1860 = vmatpush1.bf16.msra.mxu0 0
      %1861 = vmatprep.mubr.bf16.mxu0 0
      %1862 = vmatmul.mubr.bf16.gmra.mrb[0].mxu0 %v1606
      %v1863 = vpop.f32.mrb[0].mxu0
      %v1864 = vadd.f32 0.0, %v1863
      %v1865 = vpop.f32.mrb[0].mxu0
      %v1866 = vpop.f32.mrb[0].mxu0
      %v1867 = vadd.f32 0.0, %v1866
      %v1868 = vpop.f32.mrb[0].mxu0
      %1869 = vmatprep.mubr.bf16.mxu0 0
      %1870 = vmatmul.mubr.bf16.gmra.mrb[0].mxu0 %v1607
      %v1871 = vpop.f32.mrb[0].mxu0
      %v1872 = vadd.f32 0.0, %v1871
      %v1873 = vpop.f32.mrb[0].mxu0
      %v1874 = vpop.f32.mrb[0].mxu0
      %v1875 = vadd.f32 0.0, %v1874
      %v1876 = vpop.f32.mrb[0].mxu0
      %1877 = vmatprep.mubr.bf16.mxu0 0
      %1878 = vmatmul.mubr.bf16.gmra.mrb[0].mxu0 %v1608
      %v1879 = vpop.f32.mrb[0].mxu0
      %v1880 = vadd.f32 0.0, %v1879
      %v1881 = vpop.f32.mrb[0].mxu0
      %v1882 = vpop.f32.mrb[0].mxu0
      %v1883 = vadd.f32 0.0, %v1882
      %v1884 = vpop.f32.mrb[0].mxu0
      %1885 = vmatprep.mubr.bf16.mxu0 0
      %1886 = vmatmul.mubr.bf16.gmra.mrb[0].mxu0 %v1609
      %v1887 = vpop.f32.mrb[0].mxu0
      %v1888 = vadd.f32 0.0, %v1887
      %v1889 = vpop.f32.mrb[0].mxu0
      %v1890 = vpop.f32.mrb[0].mxu0
      %v1891 = vadd.f32 0.0, %v1890
      %v1892 = vpop.f32.mrb[0].mxu0
      %1893 = vmatprep.mubr.bf16.mxu0 0
      %1894 = vmatmul.mubr.bf16.gmra.mrb[0].mxu0 %v1610
      %v1895 = vpop.f32.mrb[0].mxu0
      %v1896 = vadd.f32 0.0, %v1895
      %v1897 = vpop.f32.mrb[0].mxu0
      %v1898 = vpop.f32.mrb[0].mxu0
      %v1899 = vpop.f32.mrb[0].mxu0
      %1900 = vdwg.mxu0
      %v1910 = vrot.slane %v1710, 7
      %v1911 = vrot.slane %v1713, 7
      %v1912 = vsel %vm1389, %v1910, %v1911
      %v1913 = vrot.slane %v1718, 7
      %v1914 = vsel %vm1389, %v1911, %v1913
      %v1915 = vrot.slane %v1721, 7
      %v1916 = vsel %vm1389, %v1913, %v1915
      %v1917 = vrot.slane %v1726, 7
      %v1918 = vsel %vm1389, %v1915, %v1917
      %v1919 = vrot.slane %v1729, 7
      %v1920 = vsel %vm1389, %v1917, %v1919
      %v1921 = vrot.slane %v1734, 7
      %v1922 = vsel %vm1389, %v1919, %v1921
      %v1923 = vrot.slane %v1737, 7
      %v1924 = vsel %vm1389, %v1921, %v1923
      %v1925 = vrot.slane %v1742, 7
      %v1926 = vsel %vm1389, %v1923, %v1925
      %v1936 = vsel %vm1389, 0.0, %v1910
      %v1953 = vunpack.c.l.b16 %v1748
      %v1954 = vunpack.c.l.b16 %v1749
      %v1955 = vunpack.c.l.b16 %v1750
      %v1956 = vunpack.c.l.b16 %v1751
      %v1957 = vunpack.c.l.b16 %v1752
      %v1958 = vunpack.c.l.b16 %v1753
      %v1959 = vunpack.c.l.b16 %v1754
      %v1960 = vunpack.c.l.b16 %v1755
      %v1961 = vunpack.c.l.b16 %v1756
      %v1962 = vunpack.c.l.b16 %v1757
      %v1963 = vunpack.c.l.b16 %v1758
      %v1964 = vunpack.c.l.b16 %v1759
      %v1965 = vunpack.c.l.b16 %v1760
      %v1966 = vunpack.c.l.b16 %v1761
      %v1967 = vunpack.c.l.b16 %v1762
      %v1968 = vunpack.c.l.b16 %v1763
      %v1969 = vpack.c.b16 %v1954, %v1953
      %v1970 = vpack.c.b16 %v1956, %v1955
      %v1971 = vpack.c.b16 %v1958, %v1957
      %v1972 = vpack.c.b16 %v1960, %v1959
      %v1973 = vpack.c.b16 %v1962, %v1961
      %v1974 = vpack.c.b16 %v1964, %v1963
      %v1975 = vpack.c.b16 %v1966, %v1965
      %v1976 = vpack.c.b16 %v1968, %v1967
      %1985 = vmatprep.subr.bf16.mxu0 0
      %1986 = vmatpush1.bf16.msra.mxu0 %v1969
      %1987 = vmatprep.subr.bf16.mxu0 0
      %1988 = vmatpush1.bf16.msra.mxu0 %v1970
      %1989 = vmatprep.subr.bf16.mxu0 0
      %1990 = vmatpush1.bf16.msra.mxu0 %v1971
      %1991 = vmatprep.subr.bf16.mxu0 0
      %1992 = vmatpush1.bf16.msra.mxu0 %v1972
      %1993 = vmatprep.subr.bf16.mxu0 0
      %1994 = vmatpush1.bf16.msra.mxu0 %v1973
      %1995 = vmatprep.subr.bf16.mxu0 0
      %1996 = vmatpush1.bf16.msra.mxu0 %v1974
      %1997 = vmatprep.subr.bf16.mxu0 0
      %1998 = vmatpush1.bf16.msra.mxu0 %v1975
      %1999 = vmatprep.subr.bf16.mxu0 0
      %2000 = vmatpush1.bf16.msra.mxu0 %v1976
      %2001 = vmatprep.subr.bf16.mxu0 0
      %2002 = vmatpush1.bf16.msra.mxu0 0
      %2003 = vmatprep.subr.bf16.mxu0 0
      %2004 = vmatpush1.bf16.msra.mxu0 0
      %2005 = vmatprep.subr.bf16.mxu0 0
      %2006 = vmatpush1.bf16.msra.mxu0 0
      %2007 = vmatprep.subr.bf16.mxu0 0
      %2008 = vmatpush1.bf16.msra.mxu0 0
      %2009 = vmatprep.subr.bf16.mxu0 0
      %2010 = vmatpush1.bf16.msra.mxu0 0
      %2011 = vmatprep.subr.bf16.mxu0 0
      %2012 = vmatpush1.bf16.msra.mxu0 0
      %2013 = vmatprep.subr.bf16.mxu0 0
      %2014 = vmatpush1.bf16.msra.mxu0 0
      %2015 = vmatprep.subr.bf16.mxu0 0
      %2016 = vmatpush1.bf16.msra.mxu0 0
      %2017 = vmatprep.mubr.bf16.mxu0 0
      %2018 = vmatmul.mubr.bf16.gmra.mrb[0].mxu0 %v1606
      %v2019 = vpop.f32.mrb[0].mxu0
      %v2020 = vadd.f32 %v1936, %v2019
      %v2021 = vpop.f32.mrb[0].mxu0
      %v2022 = vpop.f32.mrb[0].mxu0
      %v2023 = vadd.f32 %v1912, %v2022
      %v2024 = vpop.f32.mrb[0].mxu0
      %2025 = vmatprep.mubr.bf16.mxu0 0
      %2026 = vmatmul.mubr.bf16.gmra.mrb[0].mxu0 %v1607
      %v2027 = vpop.f32.mrb[0].mxu0
      %v2028 = vadd.f32 %v1914, %v2027
      %v2029 = vpop.f32.mrb[0].mxu0
      %v2030 = vpop.f32.mrb[0].mxu0
      %v2031 = vadd.f32 %v1916, %v2030
      %v2032 = vpop.f32.mrb[0].mxu0
      %2033 = vmatprep.mubr.bf16.mxu0 0
      %2034 = vmatmul.mubr.bf16.gmra.mrb[0].mxu0 %v1608
      %v2035 = vpop.f32.mrb[0].mxu0
      %v2036 = vadd.f32 %v1918, %v2035
      %v2037 = vpop.f32.mrb[0].mxu0
      %v2038 = vpop.f32.mrb[0].mxu0
      %v2039 = vadd.f32 %v1920, %v2038
      %v2040 = vpop.f32.mrb[0].mxu0
      %2041 = vmatprep.mubr.bf16.mxu0 0
      %2042 = vmatmul.mubr.bf16.gmra.mrb[0].mxu0 %v1609
      %v2043 = vpop.f32.mrb[0].mxu0
      %v2044 = vadd.f32 %v1922, %v2043
      %v2045 = vpop.f32.mrb[0].mxu0
      %v2046 = vpop.f32.mrb[0].mxu0
      %v2047 = vadd.f32 %v1924, %v2046
      %v2048 = vpop.f32.mrb[0].mxu0
      %2049 = vmatprep.mubr.bf16.mxu0 0
      %2050 = vmatmul.mubr.bf16.gmra.mrb[0].mxu0 %v1610
      %v2051 = vpop.f32.mrb[0].mxu0
      %v2052 = vadd.f32 %v1926, %v2051
      %v2053 = vpop.f32.mrb[0].mxu0
      %v2054 = vpop.f32.mrb[0].mxu0
      %v2055 = vpop.f32.mrb[0].mxu0
      %2056 = vdwg.mxu0
      %v2066 = vrot.slane %v1864, 1
      %v2067 = vrot.slane %v1867, 1
      %v2068 = vsel %vm1534, %v2066, %v2067
      %v2069 = vrot.slane %v1872, 1
      %v2070 = vsel %vm1534, %v2067, %v2069
      %v2071 = vrot.slane %v1875, 1
      %v2072 = vsel %vm1534, %v2069, %v2071
      %v2073 = vrot.slane %v1880, 1
      %v2074 = vsel %vm1534, %v2071, %v2073
      %v2075 = vrot.slane %v1883, 1
      %v2076 = vsel %vm1534, %v2073, %v2075
      %v2077 = vrot.slane %v1888, 1
      %v2078 = vsel %vm1534, %v2075, %v2077
      %v2079 = vrot.slane %v1891, 1
      %v2080 = vsel %vm1534, %v2077, %v2079
      %v2081 = vrot.slane %v1896, 1
      %v2082 = vsel %vm1534, %v2079, %v2081
      %v2092 = vsel %vm1561, %v2081, 0.0
      %v2093 = vadd.f32 %v2020, %v2068
      %v2094 = vadd.f32 %v2023, %v2070
      %v2095 = vadd.f32 %v2028, %v2072
      %v2096 = vadd.f32 %v2031, %v2074
      %v2097 = vadd.f32 %v2036, %v2076
      %v2098 = vadd.f32 %v2039, %v2078
      %v2099 = vadd.f32 %v2044, %v2080
      %v2100 = vadd.f32 %v2047, %v2082
      %v2101 = vadd.f32 %v2052, %v2092
      %v2102 = vld [vmem:[%s9] sm:$0x1]
      %v2104 = vlaneseq
      %v2105 = vshrl.u32 %v2104, 7
      %v2106 = vsub.s32 0, %v2105
      %v2107 = vrot.slane %v2102, %v2106
      %v2109 = vadd.f32 %v2093, %v2107
      %v2110 = vadd.f32 %v2094, %v2107
      %v2111 = vadd.f32 %v2095, %v2107
      %v2112 = vadd.f32 %v2096, %v2107
      %v2113 = vadd.f32 %v2097, %v2107
      %v2114 = vadd.f32 %v2098, %v2107
      %v2115 = vadd.f32 %v2099, %v2107
      %v2116 = vadd.f32 %v2100, %v2107
      %v2117 = vadd.f32 %v2101, %v2107
      %v2118 = vmax.f32 %v2109, 0.0
      %v2119 = vmax.f32 %v2110, 0.0
      %v2120 = vmax.f32 %v2111, 0.0
      %v2121 = vmax.f32 %v2112, 0.0
      %v2122 = vmax.f32 %v2113, 0.0
      %v2123 = vmax.f32 %v2114, 0.0
      %v2124 = vmax.f32 %v2115, 0.0
      %v2125 = vmax.f32 %v2116, 0.0
      %v2126 = vmax.f32 %v2117, 0.0
      %2127 = vst [vmem:[#allocation2] sm:$0xff] %v2118
      %2128 = vst [vmem:[#allocation2 + $0x8] sm:$0xff] %v2119
      %2129 = vst [vmem:[#allocation2 + $0x10] sm:$0xff] %v2120
      %2130 = vst [vmem:[#allocation2 + $0x18] sm:$0xff] %v2121
      %2131 = vst [vmem:[#allocation2 + $0x20] sm:$0xff] %v2122
      %2132 = vst [vmem:[#allocation2 + $0x28] sm:$0xff] %v2123
      %2133 = vst [vmem:[#allocation2 + $0x30] sm:$0xff] %v2124
      %2134 = vst [vmem:[#allocation2 + $0x38] sm:$0xff] %v2125
      %2135 = vst [vmem:[#allocation2 + $0x40] sm:$0xf] %v2126
      %s2136 = scalar_lea.vmem [#allocation2], 1
      %v2137 = vld [vmem:[%s2136] ss:$2 sm:$0xff]
      %s2138 = scalar_lea.vmem [#allocation2], 17
      %v2139 = vld [vmem:[%s2138] ss:$2 sm:$0xff]
      %s2140 = scalar_lea.vmem [#allocation2], 2
      %v2141 = vld [vmem:[%s2140] ss:$2 sm:$0xff]
      %s2142 = scalar_lea.vmem [#allocation2], 18
      %v2143 = vld [vmem:[%s2142] ss:$2 sm:$0xff]
      %v2144 = vmax.f32 %v2137, %v2141
      %v2145 = vmax.f32 %v2139, %v2143
      %2146 = vrot.lane.b32.xlu0 %v2144, 124
      %v2147 = vpop.permute.xlu0 %2146
      %2148 = vrot.lane.b32.xlu0 %v2145, 124
      %v2149 = vpop.permute.xlu0 %2148
      %v2150 = vmax.f32 %v2144, %v2147
      %v2151 = vmax.f32 %v2145, %v2149
      %s2152 = scalar_lea.vmem [#allocation2], 35
      %v2153 = vld [vmem:[%s2152] ss:$2 sm:$0xff]
      %s2154 = scalar_lea.vmem [#allocation2], 51
      %v2155 = vld [vmem:[%s2154] ss:$2 sm:$0xff]
      %s2156 = scalar_lea.vmem [#allocation2], 36
      %v2157 = vld [vmem:[%s2156] ss:$2 sm:$0xff]
      %s2158 = scalar_lea.vmem [#allocation2], 52
      %v2159 = vld [vmem:[%s2158] ss:$2 sm:$0xff]
      %v2160 = vmax.f32 %v2153, %v2157
      %v2161 = vmax.f32 %v2155, %v2159
      %2162 = vrot.lane.b32.xlu0 %v2160, 124
      %v2163 = vpop.permute.xlu0 %2162
      %2164 = vrot.lane.b32.xlu0 %v2161, 124
      %v2165 = vpop.permute.xlu0 %2164
      %v2166 = vmax.f32 %v2160, %v2163
      %v2167 = vmax.f32 %v2161, %v2165
      %v2170 = vrot.slane %v2150, 7
      %v2171 = vrot.slane %v2151, 7
      %v2172 = vsel %vm1389, %v2170, %v2171
      %v2178 = vrot.slane %v2166, 5
      %v2179 = vrot.slane %v2167, 5
      %v2180 = vsel %vm1561, %v2178, %v2179
      %v2184 = vsel %vm1389, 0.0, %v2170
      %v2185 = vsel %vm1389, %v2171, 0.0
      %vm2186 = vcmask 1041408
      %v2187 = vsel %vm2186, %v2185, 0.0
      %v2188 = vsel %vm1561, %v2187, %v2178
      %v2189 = vsel %vm1561, %v2179, 0.0
      %vm2190 = vcmp.eq.s32.totalorder %v1024, 17
      %vm2191 = vcmp.eq.s32.totalorder %v1025, 17
      %vm2192 = vcmp.eq.s32.totalorder %v1026, 17
      %vm2193 = vcmp.eq.s32.totalorder %v1027, 17
      %vm2194 = vcmp.eq.s32.totalorder %v1028, 17
      %vm2195 = vcmp.eq.s32.totalorder %v1024, 18
      %vm2196 = vcmp.eq.s32.totalorder %v1025, 18
      %vm2197 = vcmp.eq.s32.totalorder %v1026, 18
      %vm2198 = vcmp.eq.s32.totalorder %v1027, 18
      %vm2199 = vcmp.eq.s32.totalorder %v1028, 18
      %vm2200 = vcmp.eq.s32.totalorder %v1024, 35
      %vm2201 = vcmp.eq.s32.totalorder %v1025, 35
      %vm2202 = vcmp.eq.s32.totalorder %v1026, 35
      %vm2203 = vcmp.eq.s32.totalorder %v1027, 35
      %vm2204 = vcmp.eq.s32.totalorder %v1028, 35
      %vm2205 = vmor %vm1033, %vm2190
      %vm2206 = vmor %vm1034, %vm2191
      %vm2207 = vmor %vm1035, %vm2192
      %vm2208 = vmor %vm1036, %vm2193
      %vm2209 = vmor %vm1037, %vm2194
      %vm2210 = vmor %vm2205, %vm2195
      %vm2211 = vmor %vm2206, %vm2196
      %vm2212 = vmor %vm2207, %vm2197
      %vm2213 = vmor %vm2208, %vm2198
      %vm2214 = vmor %vm2209, %vm2199
      %vm2215 = vmor %vm2210, %vm2200
      %vm2216 = vmor %vm2211, %vm2201
      %vm2217 = vmor %vm2212, %vm2202
      %vm2218 = vmor %vm2213, %vm2203
      %vm2219 = vmor %vm2214, %vm2204
      %v2220 = vsel %vm2215, 0.0, %v2184
      %v2221 = vsel %vm2216, 0.0, %v2172
      %v2222 = vsel %vm2217, 0.0, %v2188
      %v2223 = vsel %vm2218, 0.0, %v2180
      %v2224 = vsel %vm2219, 0.0, %v2189
      %v2225 = vpack.c.bf16 %v2221, %v2220
      %v2226 = vpack.c.bf16 %v2223, %v2222
      %v2227 = vpack.c.bf16 %v2224, %v2224
      %v2228 = vld [vmem:[%s11] sm:$0xf]
      %v2229 = vld [vmem:[%s11 + $0x4] sm:$0xf]
      %v2230 = vld [vmem:[%s11 + $0x8] sm:$0xf]
      %v2231 = vld [vmem:[%s11 + $0xc] sm:$0xf]
      %v2232 = vld [vmem:[%s11 + $0x10] sm:$0xf]
      %v2233 = vld [vmem:[%s11 + $0x14] sm:$0xf]
      %v2234 = vld [vmem:[%s11 + $0x18] sm:$0xf]
      %v2235 = vld [vmem:[%s11 + $0x1c] sm:$0xf]
      %v2236 = vld [vmem:[%s11 + $0x20] sm:$0xf]
      %v2237 = vld [vmem:[%s11 + $0x24] sm:$0xf]
      %v2238 = vld [vmem:[%s11 + $0x28] sm:$0xf]
      %v2239 = vld [vmem:[%s11 + $0x2c] sm:$0xf]
      %v2240 = vld [vmem:[%s11 + $0x30] sm:$0xf]
      %v2241 = vld [vmem:[%s11 + $0x34] sm:$0xf]
      %v2242 = vld [vmem:[%s11 + $0x38] sm:$0xf]
      %v2243 = vld [vmem:[%s11 + $0x3c] sm:$0xf]
      %v2260 = vunpack.c.l.b16 %v2228
      %v2261 = vunpack.c.l.b16 %v2229
      %v2262 = vunpack.c.l.b16 %v2230
      %v2263 = vunpack.c.l.b16 %v2231
      %v2264 = vunpack.c.l.b16 %v2232
      %v2265 = vunpack.c.l.b16 %v2233
      %v2266 = vunpack.c.l.b16 %v2234
      %v2267 = vunpack.c.l.b16 %v2235
      %v2268 = vunpack.c.l.b16 %v2236
      %v2269 = vunpack.c.l.b16 %v2237
      %v2270 = vunpack.c.l.b16 %v2238
      %v2271 = vunpack.c.l.b16 %v2239
      %v2272 = vunpack.c.l.b16 %v2240
      %v2273 = vunpack.c.l.b16 %v2241
      %v2274 = vunpack.c.l.b16 %v2242
      %v2275 = vunpack.c.l.b16 %v2243
      %v2276 = vpack.c.b16 %v2261, %v2260
      %v2277 = vpack.c.b16 %v2263, %v2262
      %v2278 = vpack.c.b16 %v2265, %v2264
      %v2279 = vpack.c.b16 %v2267, %v2266
      %v2280 = vpack.c.b16 %v2269, %v2268
      %v2281 = vpack.c.b16 %v2271, %v2270
      %v2282 = vpack.c.b16 %v2273, %v2272
      %v2283 = vpack.c.b16 %v2275, %v2274
      %2292 = vmatprep.subr.bf16.mxu0 0
      %2293 = vmatpush1.bf16.msra.mxu0 %v2276
      %2294 = vmatprep.subr.bf16.mxu0 0
      %2295 = vmatpush1.bf16.msra.mxu0 %v2277
      %2296 = vmatprep.subr.bf16.mxu0 0
      %2297 = vmatpush1.bf16.msra.mxu0 %v2278
      %2298 = vmatprep.subr.bf16.mxu0 0
      %2299 = vmatpush1.bf16.msra.mxu0 %v2279
      %2300 = vmatprep.subr.bf16.mxu0 0
      %2301 = vmatpush1.bf16.msra.mxu0 %v2280
      %2302 = vmatprep.subr.bf16.mxu0 0
      %2303 = vmatpush1.bf16.msra.mxu0 %v2281
      %2304 = vmatprep.subr.bf16.mxu0 0
      %2305 = vmatpush1.bf16.msra.mxu0 %v2282
      %2306 = vmatprep.subr.bf16.mxu0 0
      %2307 = vmatpush1.bf16.msra.mxu0 %v2283
      %2308 = vmatprep.subr.bf16.mxu0 0
      %2309 = vmatpush1.bf16.msra.mxu0 0
      %2310 = vmatprep.subr.bf16.mxu0 0
      %2311 = vmatpush1.bf16.msra.mxu0 0
      %2312 = vmatprep.subr.bf16.mxu0 0
      %2313 = vmatpush1.bf16.msra.mxu0 0
      %2314 = vmatprep.subr.bf16.mxu0 0
      %2315 = vmatpush1.bf16.msra.mxu0 0
      %2316 = vmatprep.subr.bf16.mxu0 0
      %2317 = vmatpush1.bf16.msra.mxu0 0
      %2318 = vmatprep.subr.bf16.mxu0 0
      %2319 = vmatpush1.bf16.msra.mxu0 0
      %2320 = vmatprep.subr.bf16.mxu0 0
      %2321 = vmatpush1.bf16.msra.mxu0 0
      %2322 = vmatprep.subr.bf16.mxu0 0
      %2323 = vmatpush1.bf16.msra.mxu0 0
      %2324 = vmatprep.mubr.bf16.mxu0 0
      %2325 = vmatmul.mubr.bf16.gmra.mrb[0].mxu0 %v2225
      %v2326 = vpop.f32.mrb[0].mxu0
      %v2327 = vadd.f32 0.0, %v2326
      %v2328 = vpop.f32.mrb[0].mxu0
      %v2329 = vpop.f32.mrb[0].mxu0
      %v2330 = vadd.f32 0.0, %v2329
      %v2331 = vpop.f32.mrb[0].mxu0
      %2332 = vmatprep.mubr.bf16.mxu0 0
      %2333 = vmatmul.mubr.bf16.gmra.mrb[0].mxu0 %v2226
      %v2334 = vpop.f32.mrb[0].mxu0
      %v2335 = vadd.f32 0.0, %v2334
      %v2336 = vpop.f32.mrb[0].mxu0
      %v2337 = vpop.f32.mrb[0].mxu0
      %v2338 = vadd.f32 0.0, %v2337
      %v2339 = vpop.f32.mrb[0].mxu0
      %2340 = vmatprep.mubr.bf16.mxu0 0
      %2341 = vmatmul.mubr.bf16.gmra.mrb[0].mxu0 %v2227
      %v2342 = vpop.f32.mrb[0].mxu0
      %v2343 = vadd.f32 0.0, %v2342
      %v2344 = vpop.f32.mrb[0].mxu0
      %v2345 = vpop.f32.mrb[0].mxu0
      %v2346 = vpop.f32.mrb[0].mxu0
      %2347 = vdwg.mxu0
      %s2348 = scalar_lea.vmem %s11, 64
      %v2349 = vld [vmem:[%s2348] sm:$0xf]
      %v2350 = vld [vmem:[%s2348 + $0x4] sm:$0xf]
      %v2351 = vld [vmem:[%s2348 + $0x8] sm:$0xf]
      %v2352 = vld [vmem:[%s2348 + $0xc] sm:$0xf]
      %v2353 = vld [vmem:[%s2348 + $0x10] sm:$0xf]
      %v2354 = vld [vmem:[%s2348 + $0x14] sm:$0xf]
      %v2355 = vld [vmem:[%s2348 + $0x18] sm:$0xf]
      %v2356 = vld [vmem:[%s2348 + $0x1c] sm:$0xf]
      %v2357 = vld [vmem:[%s2348 + $0x20] sm:$0xf]
      %v2358 = vld [vmem:[%s2348 + $0x24] sm:$0xf]
      %v2359 = vld [vmem:[%s2348 + $0x28] sm:$0xf]
      %v2360 = vld [vmem:[%s2348 + $0x2c] sm:$0xf]
      %v2361 = vld [vmem:[%s2348 + $0x30] sm:$0xf]
      %v2362 = vld [vmem:[%s2348 + $0x34] sm:$0xf]
      %v2363 = vld [vmem:[%s2348 + $0x38] sm:$0xf]
      %v2364 = vld [vmem:[%s2348 + $0x3c] sm:$0xf]
      %s2365 = scalar_lea.vmem %s11, 128
      %v2366 = vld [vmem:[%s2365] sm:$0xf]
      %v2367 = vld [vmem:[%s2365 + $0x4] sm:$0xf]
      %v2368 = vld [vmem:[%s2365 + $0x8] sm:$0xf]
      %v2369 = vld [vmem:[%s2365 + $0xc] sm:$0xf]
      %v2370 = vld [vmem:[%s2365 + $0x10] sm:$0xf]
      %v2371 = vld [vmem:[%s2365 + $0x14] sm:$0xf]
      %v2372 = vld [vmem:[%s2365 + $0x18] sm:$0xf]
      %v2373 = vld [vmem:[%s2365 + $0x1c] sm:$0xf]
      %v2374 = vld [vmem:[%s2365 + $0x20] sm:$0xf]
      %v2375 = vld [vmem:[%s2365 + $0x24] sm:$0xf]
      %v2376 = vld [vmem:[%s2365 + $0x28] sm:$0xf]
      %v2377 = vld [vmem:[%s2365 + $0x2c] sm:$0xf]
      %v2378 = vld [vmem:[%s2365 + $0x30] sm:$0xf]
      %v2379 = vld [vmem:[%s2365 + $0x34] sm:$0xf]
      %v2380 = vld [vmem:[%s2365 + $0x38] sm:$0xf]
      %v2381 = vld [vmem:[%s2365 + $0x3c] sm:$0xf]
      %v2398 = vunpack.c.l.b16 %v2366
      %v2399 = vunpack.c.l.b16 %v2367
      %v2400 = vunpack.c.l.b16 %v2368
      %v2401 = vunpack.c.l.b16 %v2369
      %v2402 = vunpack.c.l.b16 %v2370
      %v2403 = vunpack.c.l.b16 %v2371
      %v2404 = vunpack.c.l.b16 %v2372
      %v2405 = vunpack.c.l.b16 %v2373
      %v2406 = vunpack.c.l.b16 %v2374
      %v2407 = vunpack.c.l.b16 %v2375
      %v2408 = vunpack.c.l.b16 %v2376
      %v2409 = vunpack.c.l.b16 %v2377
      %v2410 = vunpack.c.l.b16 %v2378
      %v2411 = vunpack.c.l.b16 %v2379
      %v2412 = vunpack.c.l.b16 %v2380
      %v2413 = vunpack.c.l.b16 %v2381
      %v2414 = vpack.c.b16 %v2399, %v2398
      %v2415 = vpack.c.b16 %v2401, %v2400
      %v2416 = vpack.c.b16 %v2403, %v2402
      %v2417 = vpack.c.b16 %v2405, %v2404
      %v2418 = vpack.c.b16 %v2407, %v2406
      %v2419 = vpack.c.b16 %v2409, %v2408
      %v2420 = vpack.c.b16 %v2411, %v2410
      %v2421 = vpack.c.b16 %v2413, %v2412
      %2430 = vmatprep.subr.bf16.mxu0 0
      %2431 = vmatpush1.bf16.msra.mxu0 %v2414
      %2432 = vmatprep.subr.bf16.mxu0 0
      %2433 = vmatpush1.bf16.msra.mxu0 %v2415
      %2434 = vmatprep.subr.bf16.mxu0 0
      %2435 = vmatpush1.bf16.msra.mxu0 %v2416
      %2436 = vmatprep.subr.bf16.mxu0 0
      %2437 = vmatpush1.bf16.msra.mxu0 %v2417
      %2438 = vmatprep.subr.bf16.mxu0 0
      %2439 = vmatpush1.bf16.msra.mxu0 %v2418
      %2440 = vmatprep.subr.bf16.mxu0 0
      %2441 = vmatpush1.bf16.msra.mxu0 %v2419
      %2442 = vmatprep.subr.bf16.mxu0 0
      %2443 = vmatpush1.bf16.msra.mxu0 %v2420
      %2444 = vmatprep.subr.bf16.mxu0 0
      %2445 = vmatpush1.bf16.msra.mxu0 %v2421
      %2446 = vmatprep.subr.bf16.mxu0 0
      %2447 = vmatpush1.bf16.msra.mxu0 0
      %2448 = vmatprep.subr.bf16.mxu0 0
      %2449 = vmatpush1.bf16.msra.mxu0 0
      %2450 = vmatprep.subr.bf16.mxu0 0
      %2451 = vmatpush1.bf16.msra.mxu0 0
      %2452 = vmatprep.subr.bf16.mxu0 0
      %2453 = vmatpush1.bf16.msra.mxu0 0
      %2454 = vmatprep.subr.bf16.mxu0 0
      %2455 = vmatpush1.bf16.msra.mxu0 0
      %2456 = vmatprep.subr.bf16.mxu0 0
      %2457 = vmatpush1.bf16.msra.mxu0 0
      %2458 = vmatprep.subr.bf16.mxu0 0
      %2459 = vmatpush1.bf16.msra.mxu0 0
      %2460 = vmatprep.subr.bf16.mxu0 0
      %2461 = vmatpush1.bf16.msra.mxu0 0
      %2462 = vmatprep.mubr.bf16.mxu0 0
      %2463 = vmatmul.mubr.bf16.gmra.mrb[0].mxu0 %v2225
      %v2464 = vpop.f32.mrb[0].mxu0
      %v2465 = vadd.f32 0.0, %v2464
      %v2466 = vpop.f32.mrb[0].mxu0
      %v2467 = vpop.f32.mrb[0].mxu0
      %v2468 = vadd.f32 0.0, %v2467
      %v2469 = vpop.f32.mrb[0].mxu0
      %2470 = vmatprep.mubr.bf16.mxu0 0
      %2471 = vmatmul.mubr.bf16.gmra.mrb[0].mxu0 %v2226
      %v2472 = vpop.f32.mrb[0].mxu0
      %v2473 = vadd.f32 0.0, %v2472
      %v2474 = vpop.f32.mrb[0].mxu0
      %v2475 = vpop.f32.mrb[0].mxu0
      %v2476 = vadd.f32 0.0, %v2475
      %v2477 = vpop.f32.mrb[0].mxu0
      %2478 = vmatprep.mubr.bf16.mxu0 0
      %2479 = vmatmul.mubr.bf16.gmra.mrb[0].mxu0 %v2227
      %v2480 = vpop.f32.mrb[0].mxu0
      %v2481 = vadd.f32 0.0, %v2480
      %v2482 = vpop.f32.mrb[0].mxu0
      %v2483 = vpop.f32.mrb[0].mxu0
      %v2484 = vpop.f32.mrb[0].mxu0
      %2485 = vdwg.mxu0
      %v2491 = vrot.slane %v2327, 7
      %v2492 = vrot.slane %v2330, 7
      %v2493 = vsel %vm1389, %v2491, %v2492
      %v2494 = vrot.slane %v2335, 7
      %v2495 = vsel %vm1389, %v2492, %v2494
      %v2496 = vrot.slane %v2338, 7
      %v2497 = vsel %vm1389, %v2494, %v2496
      %v2498 = vrot.slane %v2343, 7
      %v2499 = vsel %vm1389, %v2496, %v2498
      %v2505 = vsel %vm1389, 0.0, %v2491
      %v2522 = vunpack.c.l.b16 %v2349
      %v2523 = vunpack.c.l.b16 %v2350
      %v2524 = vunpack.c.l.b16 %v2351
      %v2525 = vunpack.c.l.b16 %v2352
      %v2526 = vunpack.c.l.b16 %v2353
      %v2527 = vunpack.c.l.b16 %v2354
      %v2528 = vunpack.c.l.b16 %v2355
      %v2529 = vunpack.c.l.b16 %v2356
      %v2530 = vunpack.c.l.b16 %v2357
      %v2531 = vunpack.c.l.b16 %v2358
      %v2532 = vunpack.c.l.b16 %v2359
      %v2533 = vunpack.c.l.b16 %v2360
      %v2534 = vunpack.c.l.b16 %v2361
      %v2535 = vunpack.c.l.b16 %v2362
      %v2536 = vunpack.c.l.b16 %v2363
      %v2537 = vunpack.c.l.b16 %v2364
      %v2538 = vpack.c.b16 %v2523, %v2522
      %v2539 = vpack.c.b16 %v2525, %v2524
      %v2540 = vpack.c.b16 %v2527, %v2526
      %v2541 = vpack.c.b16 %v2529, %v2528
      %v2542 = vpack.c.b16 %v2531, %v2530
      %v2543 = vpack.c.b16 %v2533, %v2532
      %v2544 = vpack.c.b16 %v2535, %v2534
      %v2545 = vpack.c.b16 %v2537, %v2536
      %2554 = vmatprep.subr.bf16.mxu0 0
      %2555 = vmatpush1.bf16.msra.mxu0 %v2538
      %2556 = vmatprep.subr.bf16.mxu0 0
      %2557 = vmatpush1.bf16.msra.mxu0 %v2539
      %2558 = vmatprep.subr.bf16.mxu0 0
      %2559 = vmatpush1.bf16.msra.mxu0 %v2540
      %2560 = vmatprep.subr.bf16.mxu0 0
      %2561 = vmatpush1.bf16.msra.mxu0 %v2541
      %2562 = vmatprep.subr.bf16.mxu0 0
      %2563 = vmatpush1.bf16.msra.mxu0 %v2542
      %2564 = vmatprep.subr.bf16.mxu0 0
      %2565 = vmatpush1.bf16.msra.mxu0 %v2543
      %2566 = vmatprep.subr.bf16.mxu0 0
      %2567 = vmatpush1.bf16.msra.mxu0 %v2544
      %2568 = vmatprep.subr.bf16.mxu0 0
      %2569 = vmatpush1.bf16.msra.mxu0 %v2545
      %2570 = vmatprep.subr.bf16.mxu0 0
      %2571 = vmatpush1.bf16.msra.mxu0 0
      %2572 = vmatprep.subr.bf16.mxu0 0
      %2573 = vmatpush1.bf16.msra.mxu0 0
      %2574 = vmatprep.subr.bf16.mxu0 0
      %2575 = vmatpush1.bf16.msra.mxu0 0
      %2576 = vmatprep.subr.bf16.mxu0 0
      %2577 = vmatpush1.bf16.msra.mxu0 0
      %2578 = vmatprep.subr.bf16.mxu0 0
      %2579 = vmatpush1.bf16.msra.mxu0 0
      %2580 = vmatprep.subr.bf16.mxu0 0
      %2581 = vmatpush1.bf16.msra.mxu0 0
      %2582 = vmatprep.subr.bf16.mxu0 0
      %2583 = vmatpush1.bf16.msra.mxu0 0
      %2584 = vmatprep.subr.bf16.mxu0 0
      %2585 = vmatpush1.bf16.msra.mxu0 0
      %2586 = vmatprep.mubr.bf16.mxu0 0
      %2587 = vmatmul.mubr.bf16.gmra.mrb[0].mxu0 %v2225
      %v2588 = vpop.f32.mrb[0].mxu0
      %v2589 = vadd.f32 %v2505, %v2588
      %v2590 = vpop.f32.mrb[0].mxu0
      %v2591 = vpop.f32.mrb[0].mxu0
      %v2592 = vadd.f32 %v2493, %v2591
      %v2593 = vpop.f32.mrb[0].mxu0
      %2594 = vmatprep.mubr.bf16.mxu0 0
      %2595 = vmatmul.mubr.bf16.gmra.mrb[0].mxu0 %v2226
      %v2596 = vpop.f32.mrb[0].mxu0
      %v2597 = vadd.f32 %v2495, %v2596
      %v2598 = vpop.f32.mrb[0].mxu0
      %v2599 = vpop.f32.mrb[0].mxu0
      %v2600 = vadd.f32 %v2497, %v2599
      %v2601 = vpop.f32.mrb[0].mxu0
      %2602 = vmatprep.mubr.bf16.mxu0 0
      %2603 = vmatmul.mubr.bf16.gmra.mrb[0].mxu0 %v2227
      %v2604 = vpop.f32.mrb[0].mxu0
      %v2605 = vadd.f32 %v2499, %v2604
      %v2606 = vpop.f32.mrb[0].mxu0
      %v2607 = vpop.f32.mrb[0].mxu0
      %v2608 = vpop.f32.mrb[0].mxu0
      %2609 = vdwg.mxu0
      %v2615 = vrot.slane %v2465, 1
      %v2616 = vrot.slane %v2468, 1
      %v2617 = vsel %vm1534, %v2615, %v2616
      %v2618 = vrot.slane %v2473, 1
      %v2619 = vsel %vm1534, %v2616, %v2618
      %v2620 = vrot.slane %v2476, 1
      %v2621 = vsel %vm1534, %v2618, %v2620
      %v2622 = vrot.slane %v2481, 1
      %v2623 = vsel %vm1534, %v2620, %v2622
      %v2629 = vsel %vm1561, %v2622, 0.0
      %v2630 = vadd.f32 %v2589, %v2617
      %v2631 = vadd.f32 %v2592, %v2619
      %v2632 = vadd.f32 %v2597, %v2621
      %v2633 = vadd.f32 %v2600, %v2623
      %v2634 = vadd.f32 %v2605, %v2629
      %v2635 = vld [vmem:[%s13] sm:$0x1]
      %v2637 = vlaneseq
      %v2638 = vshrl.u32 %v2637, 7
      %v2639 = vsub.s32 0, %v2638
      %v2640 = vrot.slane %v2635, %v2639
      %v2642 = vadd.f32 %v2630, %v2640
      %v2643 = vadd.f32 %v2631, %v2640
      %v2644 = vadd.f32 %v2632, %v2640
      %v2645 = vadd.f32 %v2633, %v2640
      %v2646 = vadd.f32 %v2634, %v2640
      %v2647 = vmax.f32 %v2642, 0.0
      %v2648 = vmax.f32 %v2643, 0.0
      %v2649 = vmax.f32 %v2644, 0.0
      %v2650 = vmax.f32 %v2645, 0.0
      %v2651 = vmax.f32 %v2646, 0.0
      %v2652 = vsel %vm2215, 0.0, %v2647
      %v2653 = vsel %vm2216, 0.0, %v2648
      %v2654 = vsel %vm2217, 0.0, %v2649
      %v2655 = vsel %vm2218, 0.0, %v2650
      %v2656 = vsel %vm2219, 0.0, %v2651
      %v2657 = vpack.c.bf16 %v2653, %v2652
      %v2658 = vpack.c.bf16 %v2655, %v2654
      %v2659 = vpack.c.bf16 %v2656, %v2656
      %v2660 = vld [vmem:[%s15] sm:$0xf]
      %v2661 = vld [vmem:[%s15 + $0x4] sm:$0xf]
      %v2662 = vld [vmem:[%s15 + $0x8] sm:$0xf]
      %v2663 = vld [vmem:[%s15 + $0xc] sm:$0xf]
      %v2664 = vld [vmem:[%s15 + $0x10] sm:$0xf]
      %v2665 = vld [vmem:[%s15 + $0x14] sm:$0xf]
      %v2666 = vld [vmem:[%s15 + $0x18] sm:$0xf]
      %v2667 = vld [vmem:[%s15 + $0x1c] sm:$0xf]
      %v2668 = vld [vmem:[%s15 + $0x20] sm:$0xf]
      %v2669 = vld [vmem:[%s15 + $0x24] sm:$0xf]
      %v2670 = vld [vmem:[%s15 + $0x28] sm:$0xf]
      %v2671 = vld [vmem:[%s15 + $0x2c] sm:$0xf]
      %v2672 = vld [vmem:[%s15 + $0x30] sm:$0xf]
      %v2673 = vld [vmem:[%s15 + $0x34] sm:$0xf]
      %v2674 = vld [vmem:[%s15 + $0x38] sm:$0xf]
      %v2675 = vld [vmem:[%s15 + $0x3c] sm:$0xf]
      %v2692 = vunpack.c.l.b16 %v2660
      %v2693 = vunpack.c.l.b16 %v2661
      %v2694 = vunpack.c.l.b16 %v2662
      %v2695 = vunpack.c.l.b16 %v2663
      %v2696 = vunpack.c.l.b16 %v2664
      %v2697 = vunpack.c.l.b16 %v2665
      %v2698 = vunpack.c.l.b16 %v2666
      %v2699 = vunpack.c.l.b16 %v2667
      %v2700 = vunpack.c.l.b16 %v2668
      %v2701 = vunpack.c.l.b16 %v2669
      %v2702 = vunpack.c.l.b16 %v2670
      %v2703 = vunpack.c.l.b16 %v2671
      %v2704 = vunpack.c.l.b16 %v2672
      %v2705 = vunpack.c.l.b16 %v2673
      %v2706 = vunpack.c.l.b16 %v2674
      %v2707 = vunpack.c.l.b16 %v2675
      %v2708 = vpack.c.b16 %v2693, %v2692
      %v2709 = vpack.c.b16 %v2695, %v2694
      %v2710 = vpack.c.b16 %v2697, %v2696
      %v2711 = vpack.c.b16 %v2699, %v2698
      %v2712 = vpack.c.b16 %v2701, %v2700
      %v2713 = vpack.c.b16 %v2703, %v2702
      %v2714 = vpack.c.b16 %v2705, %v2704
      %v2715 = vpack.c.b16 %v2707, %v2706
      %2724 = vmatprep.subr.bf16.mxu0 0
      %2725 = vmatpush1.bf16.msra.mxu0 %v2708
      %2726 = vmatprep.subr.bf16.mxu0 0
      %2727 = vmatpush1.bf16.msra.mxu0 %v2709
      %2728 = vmatprep.subr.bf16.mxu0 0
      %2729 = vmatpush1.bf16.msra.mxu0 %v2710
      %2730 = vmatprep.subr.bf16.mxu0 0
      %2731 = vmatpush1.bf16.msra.mxu0 %v2711
      %2732 = vmatprep.subr.bf16.mxu0 0
      %2733 = vmatpush1.bf16.msra.mxu0 %v2712
      %2734 = vmatprep.subr.bf16.mxu0 0
      %2735 = vmatpush1.bf16.msra.mxu0 %v2713
      %2736 = vmatprep.subr.bf16.mxu0 0
      %2737 = vmatpush1.bf16.msra.mxu0 %v2714
      %2738 = vmatprep.subr.bf16.mxu0 0
      %2739 = vmatpush1.bf16.msra.mxu0 %v2715
      %2740 = vmatprep.subr.bf16.mxu0 0
      %2741 = vmatpush1.bf16.msra.mxu0 0
      %2742 = vmatprep.subr.bf16.mxu0 0
      %2743 = vmatpush1.bf16.msra.mxu0 0
      %2744 = vmatprep.subr.bf16.mxu0 0
      %2745 = vmatpush1.bf16.msra.mxu0 0
      %2746 = vmatprep.subr.bf16.mxu0 0
      %2747 = vmatpush1.bf16.msra.mxu0 0
      %2748 = vmatprep.subr.bf16.mxu0 0
      %2749 = vmatpush1.bf16.msra.mxu0 0
      %2750 = vmatprep.subr.bf16.mxu0 0
      %2751 = vmatpush1.bf16.msra.mxu0 0
      %2752 = vmatprep.subr.bf16.mxu0 0
      %2753 = vmatpush1.bf16.msra.mxu0 0
      %2754 = vmatprep.subr.bf16.mxu0 0
      %2755 = vmatpush1.bf16.msra.mxu0 0
      %2756 = vmatprep.mubr.bf16.mxu0 0
      %2757 = vmatmul.mubr.bf16.gmra.mrb[0].mxu0 %v2657
      %v2758 = vpop.f32.mrb[0].mxu0
      %v2759 = vadd.f32 0.0, %v2758
      %v2760 = vpop.f32.mrb[0].mxu0
      %v2761 = vpop.f32.mrb[0].mxu0
      %v2762 = vadd.f32 0.0, %v2761
      %v2763 = vpop.f32.mrb[0].mxu0
      %2764 = vmatprep.mubr.bf16.mxu0 0
      %2765 = vmatmul.mubr.bf16.gmra.mrb[0].mxu0 %v2658
      %v2766 = vpop.f32.mrb[0].mxu0
      %v2767 = vadd.f32 0.0, %v2766
      %v2768 = vpop.f32.mrb[0].mxu0
      %v2769 = vpop.f32.mrb[0].mxu0
      %v2770 = vadd.f32 0.0, %v2769
      %v2771 = vpop.f32.mrb[0].mxu0
      %2772 = vmatprep.mubr.bf16.mxu0 0
      %2773 = vmatmul.mubr.bf16.gmra.mrb[0].mxu0 %v2659
      %v2774 = vpop.f32.mrb[0].mxu0
      %v2775 = vadd.f32 0.0, %v2774
      %v2776 = vpop.f32.mrb[0].mxu0
      %v2777 = vpop.f32.mrb[0].mxu0
      %v2778 = vpop.f32.mrb[0].mxu0
      %2779 = vdwg.mxu0
      %s2780 = scalar_lea.vmem %s15, 64
      %v2781 = vld [vmem:[%s2780] sm:$0xf]
      %v2782 = vld [vmem:[%s2780 + $0x4] sm:$0xf]
      %v2783 = vld [vmem:[%s2780 + $0x8] sm:$0xf]
      %v2784 = vld [vmem:[%s2780 + $0xc] sm:$0xf]
      %v2785 = vld [vmem:[%s2780 + $0x10] sm:$0xf]
      %v2786 = vld [vmem:[%s2780 + $0x14] sm:$0xf]
      %v2787 = vld [vmem:[%s2780 + $0x18] sm:$0xf]
      %v2788 = vld [vmem:[%s2780 + $0x1c] sm:$0xf]
      %v2789 = vld [vmem:[%s2780 + $0x20] sm:$0xf]
      %v2790 = vld [vmem:[%s2780 + $0x24] sm:$0xf]
      %v2791 = vld [vmem:[%s2780 + $0x28] sm:$0xf]
      %v2792 = vld [vmem:[%s2780 + $0x2c] sm:$0xf]
      %v2793 = vld [vmem:[%s2780 + $0x30] sm:$0xf]
      %v2794 = vld [vmem:[%s2780 + $0x34] sm:$0xf]
      %v2795 = vld [vmem:[%s2780 + $0x38] sm:$0xf]
      %v2796 = vld [vmem:[%s2780 + $0x3c] sm:$0xf]
      %s2797 = scalar_lea.vmem %s15, 128
      %v2798 = vld [vmem:[%s2797] sm:$0xf]
      %v2799 = vld [vmem:[%s2797 + $0x4] sm:$0xf]
      %v2800 = vld [vmem:[%s2797 + $0x8] sm:$0xf]
      %v2801 = vld [vmem:[%s2797 + $0xc] sm:$0xf]
      %v2802 = vld [vmem:[%s2797 + $0x10] sm:$0xf]
      %v2803 = vld [vmem:[%s2797 + $0x14] sm:$0xf]
      %v2804 = vld [vmem:[%s2797 + $0x18] sm:$0xf]
      %v2805 = vld [vmem:[%s2797 + $0x1c] sm:$0xf]
      %v2806 = vld [vmem:[%s2797 + $0x20] sm:$0xf]
      %v2807 = vld [vmem:[%s2797 + $0x24] sm:$0xf]
      %v2808 = vld [vmem:[%s2797 + $0x28] sm:$0xf]
      %v2809 = vld [vmem:[%s2797 + $0x2c] sm:$0xf]
      %v2810 = vld [vmem:[%s2797 + $0x30] sm:$0xf]
      %v2811 = vld [vmem:[%s2797 + $0x34] sm:$0xf]
      %v2812 = vld [vmem:[%s2797 + $0x38] sm:$0xf]
      %v2813 = vld [vmem:[%s2797 + $0x3c] sm:$0xf]
      %v2830 = vunpack.c.l.b16 %v2798
      %v2831 = vunpack.c.l.b16 %v2799
      %v2832 = vunpack.c.l.b16 %v2800
      %v2833 = vunpack.c.l.b16 %v2801
      %v2834 = vunpack.c.l.b16 %v2802
      %v2835 = vunpack.c.l.b16 %v2803
      %v2836 = vunpack.c.l.b16 %v2804
      %v2837 = vunpack.c.l.b16 %v2805
      %v2838 = vunpack.c.l.b16 %v2806
      %v2839 = vunpack.c.l.b16 %v2807
      %v2840 = vunpack.c.l.b16 %v2808
      %v2841 = vunpack.c.l.b16 %v2809
      %v2842 = vunpack.c.l.b16 %v2810
      %v2843 = vunpack.c.l.b16 %v2811
      %v2844 = vunpack.c.l.b16 %v2812
      %v2845 = vunpack.c.l.b16 %v2813
      %v2846 = vpack.c.b16 %v2831, %v2830
      %v2847 = vpack.c.b16 %v2833, %v2832
      %v2848 = vpack.c.b16 %v2835, %v2834
      %v2849 = vpack.c.b16 %v2837, %v2836
      %v2850 = vpack.c.b16 %v2839, %v2838
      %v2851 = vpack.c.b16 %v2841, %v2840
      %v2852 = vpack.c.b16 %v2843, %v2842
      %v2853 = vpack.c.b16 %v2845, %v2844
      %2862 = vmatprep.subr.bf16.mxu0 0
      %2863 = vmatpush1.bf16.msra.mxu0 %v2846
      %2864 = vmatprep.subr.bf16.mxu0 0
      %2865 = vmatpush1.bf16.msra.mxu0 %v2847
      %2866 = vmatprep.subr.bf16.mxu0 0
      %2867 = vmatpush1.bf16.msra.mxu0 %v2848
      %2868 = vmatprep.subr.bf16.mxu0 0
      %2869 = vmatpush1.bf16.msra.mxu0 %v2849
      %2870 = vmatprep.subr.bf16.mxu0 0
      %2871 = vmatpush1.bf16.msra.mxu0 %v2850
      %2872 = vmatprep.subr.bf16.mxu0 0
      %2873 = vmatpush1.bf16.msra.mxu0 %v2851
      %2874 = vmatprep.subr.bf16.mxu0 0
      %2875 = vmatpush1.bf16.msra.mxu0 %v2852
      %2876 = vmatprep.subr.bf16.mxu0 0
      %2877 = vmatpush1.bf16.msra.mxu0 %v2853
      %2878 = vmatprep.subr.bf16.mxu0 0
      %2879 = vmatpush1.bf16.msra.mxu0 0
      %2880 = vmatprep.subr.bf16.mxu0 0
      %2881 = vmatpush1.bf16.msra.mxu0 0
      %2882 = vmatprep.subr.bf16.mxu0 0
      %2883 = vmatpush1.bf16.msra.mxu0 0
      %2884 = vmatprep.subr.bf16.mxu0 0
      %2885 = vmatpush1.bf16.msra.mxu0 0
      %2886 = vmatprep.subr.bf16.mxu0 0
      %2887 = vmatpush1.bf16.msra.mxu0 0
      %2888 = vmatprep.subr.bf16.mxu0 0
      %2889 = vmatpush1.bf16.msra.mxu0 0
      %2890 = vmatprep.subr.bf16.mxu0 0
      %2891 = vmatpush1.bf16.msra.mxu0 0
      %2892 = vmatprep.subr.bf16.mxu0 0
      %2893 = vmatpush1.bf16.msra.mxu0 0
      %2894 = vmatprep.mubr.bf16.mxu0 0
      %2895 = vmatmul.mubr.bf16.gmra.mrb[0].mxu0 %v2657
      %v2896 = vpop.f32.mrb[0].mxu0
      %v2897 = vadd.f32 0.0, %v2896
      %v2898 = vpop.f32.mrb[0].mxu0
      %v2899 = vpop.f32.mrb[0].mxu0
      %v2900 = vadd.f32 0.0, %v2899
      %v2901 = vpop.f32.mrb[0].mxu0
      %2902 = vmatprep.mubr.bf16.mxu0 0
      %2903 = vmatmul.mubr.bf16.gmra.mrb[0].mxu0 %v2658
      %v2904 = vpop.f32.mrb[0].mxu0
      %v2905 = vadd.f32 0.0, %v2904
      %v2906 = vpop.f32.mrb[0].mxu0
      %v2907 = vpop.f32.mrb[0].mxu0
      %v2908 = vadd.f32 0.0, %v2907
      %v2909 = vpop.f32.mrb[0].mxu0
      %2910 = vmatprep.mubr.bf16.mxu0 0
      %2911 = vmatmul.mubr.bf16.gmra.mrb[0].mxu0 %v2659
      %v2912 = vpop.f32.mrb[0].mxu0
      %v2913 = vadd.f32 0.0, %v2912
      %v2914 = vpop.f32.mrb[0].mxu0
      %v2915 = vpop.f32.mrb[0].mxu0
      %v2916 = vpop.f32.mrb[0].mxu0
      %2917 = vdwg.mxu0
      %v2923 = vrot.slane %v2759, 7
      %v2924 = vrot.slane %v2762, 7
      %v2925 = vsel %vm1389, %v2923, %v2924
      %v2926 = vrot.slane %v2767, 7
      %v2927 = vsel %vm1389, %v2924, %v2926
      %v2928 = vrot.slane %v2770, 7
      %v2929 = vsel %vm1389, %v2926, %v2928
      %v2930 = vrot.slane %v2775, 7
      %v2931 = vsel %vm1389, %v2928, %v2930
      %v2937 = vsel %vm1389, 0.0, %v2923
      %v2954 = vunpack.c.l.b16 %v2781
      %v2955 = vunpack.c.l.b16 %v2782
      %v2956 = vunpack.c.l.b16 %v2783
      %v2957 = vunpack.c.l.b16 %v2784
      %v2958 = vunpack.c.l.b16 %v2785
      %v2959 = vunpack.c.l.b16 %v2786
      %v2960 = vunpack.c.l.b16 %v2787
      %v2961 = vunpack.c.l.b16 %v2788
      %v2962 = vunpack.c.l.b16 %v2789
      %v2963 = vunpack.c.l.b16 %v2790
      %v2964 = vunpack.c.l.b16 %v2791
      %v2965 = vunpack.c.l.b16 %v2792
      %v2966 = vunpack.c.l.b16 %v2793
      %v2967 = vunpack.c.l.b16 %v2794
      %v2968 = vunpack.c.l.b16 %v2795
      %v2969 = vunpack.c.l.b16 %v2796
      %v2970 = vpack.c.b16 %v2955, %v2954
      %v2971 = vpack.c.b16 %v2957, %v2956
      %v2972 = vpack.c.b16 %v2959, %v2958
      %v2973 = vpack.c.b16 %v2961, %v2960
      %v2974 = vpack.c.b16 %v2963, %v2962
      %v2975 = vpack.c.b16 %v2965, %v2964
      %v2976 = vpack.c.b16 %v2967, %v2966
      %v2977 = vpack.c.b16 %v2969, %v2968
      %2986 = vmatprep.subr.bf16.mxu0 0
      %2987 = vmatpush1.bf16.msra.mxu0 %v2970
      %2988 = vmatprep.subr.bf16.mxu0 0
      %2989 = vmatpush1.bf16.msra.mxu0 %v2971
      %2990 = vmatprep.subr.bf16.mxu0 0
      %2991 = vmatpush1.bf16.msra.mxu0 %v2972
      %2992 = vmatprep.subr.bf16.mxu0 0
      %2993 = vmatpush1.bf16.msra.mxu0 %v2973
      %2994 = vmatprep.subr.bf16.mxu0 0
      %2995 = vmatpush1.bf16.msra.mxu0 %v2974
      %2996 = vmatprep.subr.bf16.mxu0 0
      %2997 = vmatpush1.bf16.msra.mxu0 %v2975
      %2998 = vmatprep.subr.bf16.mxu0 0
      %2999 = vmatpush1.bf16.msra.mxu0 %v2976
      %3000 = vmatprep.subr.bf16.mxu0 0
      %3001 = vmatpush1.bf16.msra.mxu0 %v2977
      %3002 = vmatprep.subr.bf16.mxu0 0
      %3003 = vmatpush1.bf16.msra.mxu0 0
      %3004 = vmatprep.subr.bf16.mxu0 0
      %3005 = vmatpush1.bf16.msra.mxu0 0
      %3006 = vmatprep.subr.bf16.mxu0 0
      %3007 = vmatpush1.bf16.msra.mxu0 0
      %3008 = vmatprep.subr.bf16.mxu0 0
      %3009 = vmatpush1.bf16.msra.mxu0 0
      %3010 = vmatprep.subr.bf16.mxu0 0
      %3011 = vmatpush1.bf16.msra.mxu0 0
      %3012 = vmatprep.subr.bf16.mxu0 0
      %3013 = vmatpush1.bf16.msra.mxu0 0
      %3014 = vmatprep.subr.bf16.mxu0 0
      %3015 = vmatpush1.bf16.msra.mxu0 0
      %3016 = vmatprep.subr.bf16.mxu0 0
      %3017 = vmatpush1.bf16.msra.mxu0 0
      %3018 = vmatprep.mubr.bf16.mxu0 0
      %3019 = vmatmul.mubr.bf16.gmra.mrb[0].mxu0 %v2657
      %v3020 = vpop.f32.mrb[0].mxu0
      %v3021 = vadd.f32 %v2937, %v3020
      %v3022 = vpop.f32.mrb[0].mxu0
      %v3023 = vpop.f32.mrb[0].mxu0
      %v3024 = vadd.f32 %v2925, %v3023
      %v3025 = vpop.f32.mrb[0].mxu0
      %3026 = vmatprep.mubr.bf16.mxu0 0
      %3027 = vmatmul.mubr.bf16.gmra.mrb[0].mxu0 %v2658
      %v3028 = vpop.f32.mrb[0].mxu0
      %v3029 = vadd.f32 %v2927, %v3028
      %v3030 = vpop.f32.mrb[0].mxu0
      %v3031 = vpop.f32.mrb[0].mxu0
      %v3032 = vadd.f32 %v2929, %v3031
      %v3033 = vpop.f32.mrb[0].mxu0
      %3034 = vmatprep.mubr.bf16.mxu0 0
      %3035 = vmatmul.mubr.bf16.gmra.mrb[0].mxu0 %v2659
      %v3036 = vpop.f32.mrb[0].mxu0
      %v3037 = vadd.f32 %v2931, %v3036
      %v3038 = vpop.f32.mrb[0].mxu0
      %v3039 = vpop.f32.mrb[0].mxu0
      %v3040 = vpop.f32.mrb[0].mxu0
      %3041 = vdwg.mxu0
      %v3047 = vrot.slane %v2897, 1
      %v3048 = vrot.slane %v2900, 1
      %v3049 = vsel %vm1534, %v3047, %v3048
      %v3050 = vrot.slane %v2905, 1
      %v3051 = vsel %vm1534, %v3048, %v3050
      %v3052 = vrot.slane %v2908, 1
      %v3053 = vsel %vm1534, %v3050, %v3052
      %v3054 = vrot.slane %v2913, 1
      %v3055 = vsel %vm1534, %v3052, %v3054
      %v3061 = vsel %vm1561, %v3054, 0.0
      %v3062 = vadd.f32 %v3021, %v3049
      %v3063 = vadd.f32 %v3024, %v3051
      %v3064 = vadd.f32 %v3029, %v3053
      %v3065 = vadd.f32 %v3032, %v3055
      %v3066 = vadd.f32 %v3037, %v3061
      %v3067 = vld [vmem:[%s17] sm:$0x1]
      %v3069 = vlaneseq
      %v3070 = vshrl.u32 %v3069, 7
      %v3071 = vsub.s32 0, %v3070
      %v3072 = vrot.slane %v3067, %v3071
      %v3074 = vadd.f32 %v3062, %v3072
      %v3075 = vadd.f32 %v3063, %v3072
      %v3076 = vadd.f32 %v3064, %v3072
      %v3077 = vadd.f32 %v3065, %v3072
      %v3078 = vadd.f32 %v3066, %v3072
      %v3079 = vmax.f32 %v3074, 0.0
      %v3080 = vmax.f32 %v3075, 0.0
      %v3081 = vmax.f32 %v3076, 0.0
      %v3082 = vmax.f32 %v3077, 0.0
      %v3083 = vmax.f32 %v3078, 0.0
      %3084 = vst [vmem:[#allocation2] sm:$0xff] %v3079
      %3085 = vst [vmem:[#allocation2 + $0x8] sm:$0xff] %v3080
      %3086 = vst [vmem:[#allocation2 + $0x10] sm:$0xff] %v3081
      %3087 = vst [vmem:[#allocation2 + $0x18] sm:$0xff] %v3082
      %3088 = vst [vmem:[#allocation2 + $0x20] sm:$0xf] %v3083
      %v3089 = vld [vmem:[%s2136] ss:$2 sm:$0xff]
      %v3090 = vld [vmem:[%s2140] ss:$2 sm:$0xff]
      %v3091 = vmax.f32 %v3089, %v3090
      %3092 = vrot.lane.b32.xlu0 %v3091, 120
      %v3093 = vpop.permute.xlu0 %3092
      %v3094 = vmax.f32 %v3091, %v3093
      %s3095 = scalar_lea.vmem [#allocation2], 19
      %v3096 = vld [vmem:[%s3095] ss:$2 sm:$0xff]
      %s3097 = scalar_lea.vmem [#allocation2], 20
      %v3098 = vld [vmem:[%s3097] ss:$2 sm:$0xff]
      %v3099 = vmax.f32 %v3096, %v3098
      %3100 = vrot.lane.b32.xlu0 %v3099, 120
      %v3101 = vpop.permute.xlu0 %3100
      %v3102 = vmax.f32 %v3099, %v3101
      %v3104 = vrot.slane %v3094, 7
      %v3107 = vrot.slane %v3102, 5
      %v3109 = vsel %vm1389, 0.0, %v3104
      %v3110 = vsel %vm1389, %v3104, 0.0
      %v3111 = vsel %vm2186, %v3110, 0.0
      %v3112 = vsel %vm1561, %v3111, %v3107
      %v3113 = vsel %vm1561, %v3107, 0.0
      %vm3114 = vcmp.eq.s32.totalorder %v1024, 9
      %vm3115 = vcmp.eq.s32.totalorder %v1025, 9
      %vm3116 = vcmp.eq.s32.totalorder %v1026, 9
      %vm3117 = vcmp.eq.s32.totalorder %v1024, 10
      %vm3118 = vcmp.eq.s32.totalorder %v1025, 10
      %vm3119 = vcmp.eq.s32.totalorder %v1026, 10
      %vm3120 = vcmp.eq.s32.totalorder %v1024, 19
      %vm3121 = vcmp.eq.s32.totalorder %v1025, 19
      %vm3122 = vcmp.eq.s32.totalorder %v1026, 19
      %vm3123 = vmor %vm1033, %vm3114
      %vm3124 = vmor %vm1034, %vm3115
      %vm3125 = vmor %vm1035, %vm3116
      %vm3126 = vmor %vm3123, %vm3117
      %vm3127 = vmor %vm3124, %vm3118
      %vm3128 = vmor %vm3125, %vm3119
      %vm3129 = vmor %vm3126, %vm3120
      %vm3130 = vmor %vm3127, %vm3121
      %vm3131 = vmor %vm3128, %vm3122
      %v3132 = vsel %vm3129, 0.0, %v3109
      %v3133 = vsel %vm3130, 0.0, %v3112
      %v3134 = vsel %vm3131, 0.0, %v3113
      %v3135 = vpack.c.bf16 %v3133, %v3132
      %v3136 = vpack.c.bf16 %v3134, %v3134
      %v3137 = vld [vmem:[%s19] sm:$0xf]
      %v3138 = vld [vmem:[%s19 + $0x4] sm:$0xf]
      %v3139 = vld [vmem:[%s19 + $0x8] sm:$0xf]
      %v3140 = vld [vmem:[%s19 + $0xc] sm:$0xf]
      %v3141 = vld [vmem:[%s19 + $0x10] sm:$0xf]
      %v3142 = vld [vmem:[%s19 + $0x14] sm:$0xf]
      %v3143 = vld [vmem:[%s19 + $0x18] sm:$0xf]
      %v3144 = vld [vmem:[%s19 + $0x1c] sm:$0xf]
      %v3145 = vld [vmem:[%s19 + $0x20] sm:$0xf]
      %v3146 = vld [vmem:[%s19 + $0x24] sm:$0xf]
      %v3147 = vld [vmem:[%s19 + $0x28] sm:$0xf]
      %v3148 = vld [vmem:[%s19 + $0x2c] sm:$0xf]
      %v3149 = vld [vmem:[%s19 + $0x30] sm:$0xf]
      %v3150 = vld [vmem:[%s19 + $0x34] sm:$0xf]
      %v3151 = vld [vmem:[%s19 + $0x38] sm:$0xf]
      %v3152 = vld [vmem:[%s19 + $0x3c] sm:$0xf]
      %v3169 = vunpack.c.l.b16 %v3137
      %v3170 = vunpack.c.l.b16 %v3138
      %v3171 = vunpack.c.l.b16 %v3139
      %v3172 = vunpack.c.l.b16 %v3140
      %v3173 = vunpack.c.l.b16 %v3141
      %v3174 = vunpack.c.l.b16 %v3142
      %v3175 = vunpack.c.l.b16 %v3143
      %v3176 = vunpack.c.l.b16 %v3144
      %v3177 = vunpack.c.l.b16 %v3145
      %v3178 = vunpack.c.l.b16 %v3146
      %v3179 = vunpack.c.l.b16 %v3147
      %v3180 = vunpack.c.l.b16 %v3148
      %v3181 = vunpack.c.l.b16 %v3149
      %v3182 = vunpack.c.l.b16 %v3150
      %v3183 = vunpack.c.l.b16 %v3151
      %v3184 = vunpack.c.l.b16 %v3152
      %v3185 = vpack.c.b16 %v3170, %v3169
      %v3186 = vpack.c.b16 %v3172, %v3171
      %v3187 = vpack.c.b16 %v3174, %v3173
      %v3188 = vpack.c.b16 %v3176, %v3175
      %v3189 = vpack.c.b16 %v3178, %v3177
      %v3190 = vpack.c.b16 %v3180, %v3179
      %v3191 = vpack.c.b16 %v3182, %v3181
      %v3192 = vpack.c.b16 %v3184, %v3183
      %3201 = vmatprep.subr.bf16.mxu0 0
      %3202 = vmatpush1.bf16.msra.mxu0 %v3185
      %3203 = vmatprep.subr.bf16.mxu0 0
      %3204 = vmatpush1.bf16.msra.mxu0 %v3186
      %3205 = vmatprep.subr.bf16.mxu0 0
      %3206 = vmatpush1.bf16.msra.mxu0 %v3187
      %3207 = vmatprep.subr.bf16.mxu0 0
      %3208 = vmatpush1.bf16.msra.mxu0 %v3188
      %3209 = vmatprep.subr.bf16.mxu0 0
      %3210 = vmatpush1.bf16.msra.mxu0 %v3189
      %3211 = vmatprep.subr.bf16.mxu0 0
      %3212 = vmatpush1.bf16.msra.mxu0 %v3190
      %3213 = vmatprep.subr.bf16.mxu0 0
      %3214 = vmatpush1.bf16.msra.mxu0 %v3191
      %3215 = vmatprep.subr.bf16.mxu0 0
      %3216 = vmatpush1.bf16.msra.mxu0 %v3192
      %3217 = vmatprep.subr.bf16.mxu0 0
      %3218 = vmatpush1.bf16.msra.mxu0 0
      %3219 = vmatprep.subr.bf16.mxu0 0
      %3220 = vmatpush1.bf16.msra.mxu0 0
      %3221 = vmatprep.subr.bf16.mxu0 0
      %3222 = vmatpush1.bf16.msra.mxu0 0
      %3223 = vmatprep.subr.bf16.mxu0 0
      %3224 = vmatpush1.bf16.msra.mxu0 0
      %3225 = vmatprep.subr.bf16.mxu0 0
      %3226 = vmatpush1.bf16.msra.mxu0 0
      %3227 = vmatprep.subr.bf16.mxu0 0
      %3228 = vmatpush1.bf16.msra.mxu0 0
      %3229 = vmatprep.subr.bf16.mxu0 0
      %3230 = vmatpush1.bf16.msra.mxu0 0
      %3231 = vmatprep.subr.bf16.mxu0 0
      %3232 = vmatpush1.bf16.msra.mxu0 0
      %3233 = vmatprep.mubr.bf16.mxu0 0
      %3234 = vmatmul.mubr.bf16.gmra.mrb[0].mxu0 %v3135
      %v3235 = vpop.f32.mrb[0].mxu0
      %v3236 = vadd.f32 0.0, %v3235
      %v3237 = vpop.f32.mrb[0].mxu0
      %v3238 = vpop.f32.mrb[0].mxu0
      %v3239 = vadd.f32 0.0, %v3238
      %v3240 = vpop.f32.mrb[0].mxu0
      %3241 = vmatprep.mubr.bf16.mxu0 0
      %3242 = vmatmul.mubr.bf16.gmra.mrb[0].mxu0 %v3136
      %v3243 = vpop.f32.mrb[0].mxu0
      %v3244 = vadd.f32 0.0, %v3243
      %v3245 = vpop.f32.mrb[0].mxu0
      %v3246 = vpop.f32.mrb[0].mxu0
      %v3247 = vpop.f32.mrb[0].mxu0
      %3248 = vdwg.mxu0
      %s3249 = scalar_lea.vmem %s19, 64
      %v3250 = vld [vmem:[%s3249] sm:$0xf]
      %v3251 = vld [vmem:[%s3249 + $0x4] sm:$0xf]
      %v3252 = vld [vmem:[%s3249 + $0x8] sm:$0xf]
      %v3253 = vld [vmem:[%s3249 + $0xc] sm:$0xf]
      %v3254 = vld [vmem:[%s3249 + $0x10] sm:$0xf]
      %v3255 = vld [vmem:[%s3249 + $0x14] sm:$0xf]
      %v3256 = vld [vmem:[%s3249 + $0x18] sm:$0xf]
      %v3257 = vld [vmem:[%s3249 + $0x1c] sm:$0xf]
      %v3258 = vld [vmem:[%s3249 + $0x20] sm:$0xf]
      %v3259 = vld [vmem:[%s3249 + $0x24] sm:$0xf]
      %v3260 = vld [vmem:[%s3249 + $0x28] sm:$0xf]
      %v3261 = vld [vmem:[%s3249 + $0x2c] sm:$0xf]
      %v3262 = vld [vmem:[%s3249 + $0x30] sm:$0xf]
      %v3263 = vld [vmem:[%s3249 + $0x34] sm:$0xf]
      %v3264 = vld [vmem:[%s3249 + $0x38] sm:$0xf]
      %v3265 = vld [vmem:[%s3249 + $0x3c] sm:$0xf]
      %s3266 = scalar_lea.vmem %s19, 128
      %v3267 = vld [vmem:[%s3266] sm:$0xf]
      %v3268 = vld [vmem:[%s3266 + $0x4] sm:$0xf]
      %v3269 = vld [vmem:[%s3266 + $0x8] sm:$0xf]
      %v3270 = vld [vmem:[%s3266 + $0xc] sm:$0xf]
      %v3271 = vld [vmem:[%s3266 + $0x10] sm:$0xf]
      %v3272 = vld [vmem:[%s3266 + $0x14] sm:$0xf]
      %v3273 = vld [vmem:[%s3266 + $0x18] sm:$0xf]
      %v3274 = vld [vmem:[%s3266 + $0x1c] sm:$0xf]
      %v3275 = vld [vmem:[%s3266 + $0x20] sm:$0xf]
      %v3276 = vld [vmem:[%s3266 + $0x24] sm:$0xf]
      %v3277 = vld [vmem:[%s3266 + $0x28] sm:$0xf]
      %v3278 = vld [vmem:[%s3266 + $0x2c] sm:$0xf]
      %v3279 = vld [vmem:[%s3266 + $0x30] sm:$0xf]
      %v3280 = vld [vmem:[%s3266 + $0x34] sm:$0xf]
      %v3281 = vld [vmem:[%s3266 + $0x38] sm:$0xf]
      %v3282 = vld [vmem:[%s3266 + $0x3c] sm:$0xf]
      %v3299 = vunpack.c.l.b16 %v3267
      %v3300 = vunpack.c.l.b16 %v3268
      %v3301 = vunpack.c.l.b16 %v3269
      %v3302 = vunpack.c.l.b16 %v3270
      %v3303 = vunpack.c.l.b16 %v3271
      %v3304 = vunpack.c.l.b16 %v3272
      %v3305 = vunpack.c.l.b16 %v3273
      %v3306 = vunpack.c.l.b16 %v3274
      %v3307 = vunpack.c.l.b16 %v3275
      %v3308 = vunpack.c.l.b16 %v3276
      %v3309 = vunpack.c.l.b16 %v3277
      %v3310 = vunpack.c.l.b16 %v3278
      %v3311 = vunpack.c.l.b16 %v3279
      %v3312 = vunpack.c.l.b16 %v3280
      %v3313 = vunpack.c.l.b16 %v3281
      %v3314 = vunpack.c.l.b16 %v3282
      %v3315 = vpack.c.b16 %v3300, %v3299
      %v3316 = vpack.c.b16 %v3302, %v3301
      %v3317 = vpack.c.b16 %v3304, %v3303
      %v3318 = vpack.c.b16 %v3306, %v3305
      %v3319 = vpack.c.b16 %v3308, %v3307
      %v3320 = vpack.c.b16 %v3310, %v3309
      %v3321 = vpack.c.b16 %v3312, %v3311
      %v3322 = vpack.c.b16 %v3314, %v3313
      %3331 = vmatprep.subr.bf16.mxu0 0
      %3332 = vmatpush1.bf16.msra.mxu0 %v3315
      %3333 = vmatprep.subr.bf16.mxu0 0
      %3334 = vmatpush1.bf16.msra.mxu0 %v3316
      %3335 = vmatprep.subr.bf16.mxu0 0
      %3336 = vmatpush1.bf16.msra.mxu0 %v3317
      %3337 = vmatprep.subr.bf16.mxu0 0
      %3338 = vmatpush1.bf16.msra.mxu0 %v3318
      %3339 = vmatprep.subr.bf16.mxu0 0
      %3340 = vmatpush1.bf16.msra.mxu0 %v3319
      %3341 = vmatprep.subr.bf16.mxu0 0
      %3342 = vmatpush1.bf16.msra.mxu0 %v3320
      %3343 = vmatprep.subr.bf16.mxu0 0
      %3344 = vmatpush1.bf16.msra.mxu0 %v3321
      %3345 = vmatprep.subr.bf16.mxu0 0
      %3346 = vmatpush1.bf16.msra.mxu0 %v3322
      %3347 = vmatprep.subr.bf16.mxu0 0
      %3348 = vmatpush1.bf16.msra.mxu0 0
      %3349 = vmatprep.subr.bf16.mxu0 0
      %3350 = vmatpush1.bf16.msra.mxu0 0
      %3351 = vmatprep.subr.bf16.mxu0 0
      %3352 = vmatpush1.bf16.msra.mxu0 0
      %3353 = vmatprep.subr.bf16.mxu0 0
      %3354 = vmatpush1.bf16.msra.mxu0 0
      %3355 = vmatprep.subr.bf16.mxu0 0
      %3356 = vmatpush1.bf16.msra.mxu0 0
      %3357 = vmatprep.subr.bf16.mxu0 0
      %3358 = vmatpush1.bf16.msra.mxu0 0
      %3359 = vmatprep.subr.bf16.mxu0 0
      %3360 = vmatpush1.bf16.msra.mxu0 0
      %3361 = vmatprep.subr.bf16.mxu0 0
      %3362 = vmatpush1.bf16.msra.mxu0 0
      %3363 = vmatprep.mubr.bf16.mxu0 0
      %3364 = vmatmul.mubr.bf16.gmra.mrb[0].mxu0 %v3135
      %v3365 = vpop.f32.mrb[0].mxu0
      %v3366 = vadd.f32 0.0, %v3365
      %v3367 = vpop.f32.mrb[0].mxu0
      %v3368 = vpop.f32.mrb[0].mxu0
      %v3369 = vadd.f32 0.0, %v3368
      %v3370 = vpop.f32.mrb[0].mxu0
      %3371 = vmatprep.mubr.bf16.mxu0 0
      %3372 = vmatmul.mubr.bf16.gmra.mrb[0].mxu0 %v3136
      %v3373 = vpop.f32.mrb[0].mxu0
      %v3374 = vadd.f32 0.0, %v3373
      %v3375 = vpop.f32.mrb[0].mxu0
      %v3376 = vpop.f32.mrb[0].mxu0
      %v3377 = vpop.f32.mrb[0].mxu0
      %3378 = vdwg.mxu0
      %v3382 = vrot.slane %v3236, 7
      %v3383 = vrot.slane %v3239, 7
      %v3384 = vsel %vm1389, %v3382, %v3383
      %v3385 = vrot.slane %v3244, 7
      %v3386 = vsel %vm1389, %v3383, %v3385
      %v3390 = vsel %vm1389, 0.0, %v3382
      %v3407 = vunpack.c.l.b16 %v3250
      %v3408 = vunpack.c.l.b16 %v3251
      %v3409 = vunpack.c.l.b16 %v3252
      %v3410 = vunpack.c.l.b16 %v3253
      %v3411 = vunpack.c.l.b16 %v3254
      %v3412 = vunpack.c.l.b16 %v3255
      %v3413 = vunpack.c.l.b16 %v3256
      %v3414 = vunpack.c.l.b16 %v3257
      %v3415 = vunpack.c.l.b16 %v3258
      %v3416 = vunpack.c.l.b16 %v3259
      %v3417 = vunpack.c.l.b16 %v3260
      %v3418 = vunpack.c.l.b16 %v3261
      %v3419 = vunpack.c.l.b16 %v3262
      %v3420 = vunpack.c.l.b16 %v3263
      %v3421 = vunpack.c.l.b16 %v3264
      %v3422 = vunpack.c.l.b16 %v3265
      %v3423 = vpack.c.b16 %v3408, %v3407
      %v3424 = vpack.c.b16 %v3410, %v3409
      %v3425 = vpack.c.b16 %v3412, %v3411
      %v3426 = vpack.c.b16 %v3414, %v3413
      %v3427 = vpack.c.b16 %v3416, %v3415
      %v3428 = vpack.c.b16 %v3418, %v3417
      %v3429 = vpack.c.b16 %v3420, %v3419
      %v3430 = vpack.c.b16 %v3422, %v3421
      %3439 = vmatprep.subr.bf16.mxu0 0
      %3440 = vmatpush1.bf16.msra.mxu0 %v3423
      %3441 = vmatprep.subr.bf16.mxu0 0
      %3442 = vmatpush1.bf16.msra.mxu0 %v3424
      %3443 = vmatprep.subr.bf16.mxu0 0
      %3444 = vmatpush1.bf16.msra.mxu0 %v3425
      %3445 = vmatprep.subr.bf16.mxu0 0
      %3446 = vmatpush1.bf16.msra.mxu0 %v3426
      %3447 = vmatprep.subr.bf16.mxu0 0
      %3448 = vmatpush1.bf16.msra.mxu0 %v3427
      %3449 = vmatprep.subr.bf16.mxu0 0
      %3450 = vmatpush1.bf16.msra.mxu0 %v3428
      %3451 = vmatprep.subr.bf16.mxu0 0
      %3452 = vmatpush1.bf16.msra.mxu0 %v3429
      %3453 = vmatprep.subr.bf16.mxu0 0
      %3454 = vmatpush1.bf16.msra.mxu0 %v3430
      %3455 = vmatprep.subr.bf16.mxu0 0
      %3456 = vmatpush1.bf16.msra.mxu0 0
      %3457 = vmatprep.subr.bf16.mxu0 0
      %3458 = vmatpush1.bf16.msra.mxu0 0
      %3459 = vmatprep.subr.bf16.mxu0 0
      %3460 = vmatpush1.bf16.msra.mxu0 0
      %3461 = vmatprep.subr.bf16.mxu0 0
      %3462 = vmatpush1.bf16.msra.mxu0 0
      %3463 = vmatprep.subr.bf16.mxu0 0
      %3464 = vmatpush1.bf16.msra.mxu0 0
      %3465 = vmatprep.subr.bf16.mxu0 0
      %3466 = vmatpush1.bf16.msra.mxu0 0
      %3467 = vmatprep.subr.bf16.mxu0 0
      %3468 = vmatpush1.bf16.msra.mxu0 0
      %3469 = vmatprep.subr.bf16.mxu0 0
      %3470 = vmatpush1.bf16.msra.mxu0 0
      %3471 = vmatprep.mubr.bf16.mxu0 0
      %3472 = vmatmul.mubr.bf16.gmra.mrb[0].mxu0 %v3135
      %v3473 = vpop.f32.mrb[0].mxu0
      %v3474 = vadd.f32 %v3390, %v3473
      %v3475 = vpop.f32.mrb[0].mxu0
      %v3476 = vpop.f32.mrb[0].mxu0
      %v3477 = vadd.f32 %v3384, %v3476
      %v3478 = vpop.f32.mrb[0].mxu0
      %3479 = vmatprep.mubr.bf16.mxu0 0
      %3480 = vmatmul.mubr.bf16.gmra.mrb[0].mxu0 %v3136
      %v3481 = vpop.f32.mrb[0].mxu0
      %v3482 = vadd.f32 %v3386, %v3481
      %v3483 = vpop.f32.mrb[0].mxu0
      %v3484 = vpop.f32.mrb[0].mxu0
      %v3485 = vpop.f32.mrb[0].mxu0
      %3486 = vdwg.mxu0
      %v3490 = vrot.slane %v3366, 1
      %v3491 = vrot.slane %v3369, 1
      %v3492 = vsel %vm1534, %v3490, %v3491
      %v3493 = vrot.slane %v3374, 1
      %v3494 = vsel %vm1534, %v3491, %v3493
      %v3498 = vsel %vm1561, %v3493, 0.0
      %v3499 = vadd.f32 %v3474, %v3492
      %v3500 = vadd.f32 %v3477, %v3494
      %v3501 = vadd.f32 %v3482, %v3498
      %v3502 = vld [vmem:[%s21] sm:$0x1]
      %v3504 = vlaneseq
      %v3505 = vshrl.u32 %v3504, 7
      %v3506 = vsub.s32 0, %v3505
      %v3507 = vrot.slane %v3502, %v3506
      %v3509 = vadd.f32 %v3499, %v3507
      %v3510 = vadd.f32 %v3500, %v3507
      %v3511 = vadd.f32 %v3501, %v3507
      %v3512 = vmax.f32 %v3509, 0.0
      %v3513 = vmax.f32 %v3510, 0.0
      %v3514 = vmax.f32 %v3511, 0.0
      %v3515 = vsel %vm3129, 0.0, %v3512
      %v3516 = vsel %vm3130, 0.0, %v3513
      %v3517 = vsel %vm3131, 0.0, %v3514
      %v3518 = vpack.c.bf16 %v3516, %v3515
      %v3519 = vpack.c.bf16 %v3517, %v3517
      %v3520 = vld [vmem:[%s23] sm:$0xf]
      %v3521 = vld [vmem:[%s23 + $0x4] sm:$0xf]
      %v3522 = vld [vmem:[%s23 + $0x8] sm:$0xf]
      %v3523 = vld [vmem:[%s23 + $0xc] sm:$0xf]
      %v3524 = vld [vmem:[%s23 + $0x10] sm:$0xf]
      %v3525 = vld [vmem:[%s23 + $0x14] sm:$0xf]
      %v3526 = vld [vmem:[%s23 + $0x18] sm:$0xf]
      %v3527 = vld [vmem:[%s23 + $0x1c] sm:$0xf]
      %v3528 = vld [vmem:[%s23 + $0x20] sm:$0xf]
      %v3529 = vld [vmem:[%s23 + $0x24] sm:$0xf]
      %v3530 = vld [vmem:[%s23 + $0x28] sm:$0xf]
      %v3531 = vld [vmem:[%s23 + $0x2c] sm:$0xf]
      %v3532 = vld [vmem:[%s23 + $0x30] sm:$0xf]
      %v3533 = vld [vmem:[%s23 + $0x34] sm:$0xf]
      %v3534 = vld [vmem:[%s23 + $0x38] sm:$0xf]
      %v3535 = vld [vmem:[%s23 + $0x3c] sm:$0xf]
      %v3552 = vunpack.c.l.b16 %v3520
      %v3553 = vunpack.c.l.b16 %v3521
      %v3554 = vunpack.c.l.b16 %v3522
      %v3555 = vunpack.c.l.b16 %v3523
      %v3556 = vunpack.c.l.b16 %v3524
      %v3557 = vunpack.c.l.b16 %v3525
      %v3558 = vunpack.c.l.b16 %v3526
      %v3559 = vunpack.c.l.b16 %v3527
      %v3560 = vunpack.c.l.b16 %v3528
      %v3561 = vunpack.c.l.b16 %v3529
      %v3562 = vunpack.c.l.b16 %v3530
      %v3563 = vunpack.c.l.b16 %v3531
      %v3564 = vunpack.c.l.b16 %v3532
      %v3565 = vunpack.c.l.b16 %v3533
      %v3566 = vunpack.c.l.b16 %v3534
      %v3567 = vunpack.c.l.b16 %v3535
      %v3568 = vpack.c.b16 %v3553, %v3552
      %v3569 = vpack.c.b16 %v3555, %v3554
      %v3570 = vpack.c.b16 %v3557, %v3556
      %v3571 = vpack.c.b16 %v3559, %v3558
      %v3572 = vpack.c.b16 %v3561, %v3560
      %v3573 = vpack.c.b16 %v3563, %v3562
      %v3574 = vpack.c.b16 %v3565, %v3564
      %v3575 = vpack.c.b16 %v3567, %v3566
      %3584 = vmatprep.subr.bf16.mxu0 0
      %3585 = vmatpush1.bf16.msra.mxu0 %v3568
      %3586 = vmatprep.subr.bf16.mxu0 0
      %3587 = vmatpush1.bf16.msra.mxu0 %v3569
      %3588 = vmatprep.subr.bf16.mxu0 0
      %3589 = vmatpush1.bf16.msra.mxu0 %v3570
      %3590 = vmatprep.subr.bf16.mxu0 0
      %3591 = vmatpush1.bf16.msra.mxu0 %v3571
      %3592 = vmatprep.subr.bf16.mxu0 0
      %3593 = vmatpush1.bf16.msra.mxu0 %v3572
      %3594 = vmatprep.subr.bf16.mxu0 0
      %3595 = vmatpush1.bf16.msra.mxu0 %v3573
      %3596 = vmatprep.subr.bf16.mxu0 0
      %3597 = vmatpush1.bf16.msra.mxu0 %v3574
      %3598 = vmatprep.subr.bf16.mxu0 0
      %3599 = vmatpush1.bf16.msra.mxu0 %v3575
      %3600 = vmatprep.subr.bf16.mxu0 0
      %3601 = vmatpush1.bf16.msra.mxu0 0
      %3602 = vmatprep.subr.bf16.mxu0 0
      %3603 = vmatpush1.bf16.msra.mxu0 0
      %3604 = vmatprep.subr.bf16.mxu0 0
      %3605 = vmatpush1.bf16.msra.mxu0 0
      %3606 = vmatprep.subr.bf16.mxu0 0
      %3607 = vmatpush1.bf16.msra.mxu0 0
      %3608 = vmatprep.subr.bf16.mxu0 0
      %3609 = vmatpush1.bf16.msra.mxu0 0
      %3610 = vmatprep.subr.bf16.mxu0 0
      %3611 = vmatpush1.bf16.msra.mxu0 0
      %3612 = vmatprep.subr.bf16.mxu0 0
      %3613 = vmatpush1.bf16.msra.mxu0 0
      %3614 = vmatprep.subr.bf16.mxu0 0
      %3615 = vmatpush1.bf16.msra.mxu0 0
      %3616 = vmatprep.mubr.bf16.mxu0 0
      %3617 = vmatmul.mubr.bf16.gmra.mrb[0].mxu0 %v3518
      %v3618 = vpop.f32.mrb[0].mxu0
      %v3619 = vadd.f32 0.0, %v3618
      %v3620 = vpop.f32.mrb[0].mxu0
      %v3621 = vpop.f32.mrb[0].mxu0
      %v3622 = vadd.f32 0.0, %v3621
      %v3623 = vpop.f32.mrb[0].mxu0
      %3624 = vmatprep.mubr.bf16.mxu0 0
      %3625 = vmatmul.mubr.bf16.gmra.mrb[0].mxu0 %v3519
      %v3626 = vpop.f32.mrb[0].mxu0
      %v3627 = vadd.f32 0.0, %v3626
      %v3628 = vpop.f32.mrb[0].mxu0
      %v3629 = vpop.f32.mrb[0].mxu0
      %v3630 = vpop.f32.mrb[0].mxu0
      %3631 = vdwg.mxu0
      %s3632 = scalar_lea.vmem %s23, 64
      %v3633 = vld [vmem:[%s3632] sm:$0xf]
      %v3634 = vld [vmem:[%s3632 + $0x4] sm:$0xf]
      %v3635 = vld [vmem:[%s3632 + $0x8] sm:$0xf]
      %v3636 = vld [vmem:[%s3632 + $0xc] sm:$0xf]
      %v3637 = vld [vmem:[%s3632 + $0x10] sm:$0xf]
      %v3638 = vld [vmem:[%s3632 + $0x14] sm:$0xf]
      %v3639 = vld [vmem:[%s3632 + $0x18] sm:$0xf]
      %v3640 = vld [vmem:[%s3632 + $0x1c] sm:$0xf]
      %v3641 = vld [vmem:[%s3632 + $0x20] sm:$0xf]
      %v3642 = vld [vmem:[%s3632 + $0x24] sm:$0xf]
      %v3643 = vld [vmem:[%s3632 + $0x28] sm:$0xf]
      %v3644 = vld [vmem:[%s3632 + $0x2c] sm:$0xf]
      %v3645 = vld [vmem:[%s3632 + $0x30] sm:$0xf]
      %v3646 = vld [vmem:[%s3632 + $0x34] sm:$0xf]
      %v3647 = vld [vmem:[%s3632 + $0x38] sm:$0xf]
      %v3648 = vld [vmem:[%s3632 + $0x3c] sm:$0xf]
      %s3649 = scalar_lea.vmem %s23, 128
      %v3650 = vld [vmem:[%s3649] sm:$0xf]
      %v3651 = vld [vmem:[%s3649 + $0x4] sm:$0xf]
      %v3652 = vld [vmem:[%s3649 + $0x8] sm:$0xf]
      %v3653 = vld [vmem:[%s3649 + $0xc] sm:$0xf]
      %v3654 = vld [vmem:[%s3649 + $0x10] sm:$0xf]
      %v3655 = vld [vmem:[%s3649 + $0x14] sm:$0xf]
      %v3656 = vld [vmem:[%s3649 + $0x18] sm:$0xf]
      %v3657 = vld [vmem:[%s3649 + $0x1c] sm:$0xf]
      %v3658 = vld [vmem:[%s3649 + $0x20] sm:$0xf]
      %v3659 = vld [vmem:[%s3649 + $0x24] sm:$0xf]
      %v3660 = vld [vmem:[%s3649 + $0x28] sm:$0xf]
      %v3661 = vld [vmem:[%s3649 + $0x2c] sm:$0xf]
      %v3662 = vld [vmem:[%s3649 + $0x30] sm:$0xf]
      %v3663 = vld [vmem:[%s3649 + $0x34] sm:$0xf]
      %v3664 = vld [vmem:[%s3649 + $0x38] sm:$0xf]
      %v3665 = vld [vmem:[%s3649 + $0x3c] sm:$0xf]
      %v3682 = vunpack.c.l.b16 %v3650
      %v3683 = vunpack.c.l.b16 %v3651
      %v3684 = vunpack.c.l.b16 %v3652
      %v3685 = vunpack.c.l.b16 %v3653
      %v3686 = vunpack.c.l.b16 %v3654
      %v3687 = vunpack.c.l.b16 %v3655
      %v3688 = vunpack.c.l.b16 %v3656
      %v3689 = vunpack.c.l.b16 %v3657
      %v3690 = vunpack.c.l.b16 %v3658
      %v3691 = vunpack.c.l.b16 %v3659
      %v3692 = vunpack.c.l.b16 %v3660
      %v3693 = vunpack.c.l.b16 %v3661
      %v3694 = vunpack.c.l.b16 %v3662
      %v3695 = vunpack.c.l.b16 %v3663
      %v3696 = vunpack.c.l.b16 %v3664
      %v3697 = vunpack.c.l.b16 %v3665
      %v3698 = vpack.c.b16 %v3683, %v3682
      %v3699 = vpack.c.b16 %v3685, %v3684
      %v3700 = vpack.c.b16 %v3687, %v3686
      %v3701 = vpack.c.b16 %v3689, %v3688
      %v3702 = vpack.c.b16 %v3691, %v3690
      %v3703 = vpack.c.b16 %v3693, %v3692
      %v3704 = vpack.c.b16 %v3695, %v3694
      %v3705 = vpack.c.b16 %v3697, %v3696
      %3714 = vmatprep.subr.bf16.mxu0 0
      %3715 = vmatpush1.bf16.msra.mxu0 %v3698
      %3716 = vmatprep.subr.bf16.mxu0 0
      %3717 = vmatpush1.bf16.msra.mxu0 %v3699
      %3718 = vmatprep.subr.bf16.mxu0 0
      %3719 = vmatpush1.bf16.msra.mxu0 %v3700
      %3720 = vmatprep.subr.bf16.mxu0 0
      %3721 = vmatpush1.bf16.msra.mxu0 %v3701
      %3722 = vmatprep.subr.bf16.mxu0 0
      %3723 = vmatpush1.bf16.msra.mxu0 %v3702
      %3724 = vmatprep.subr.bf16.mxu0 0
      %3725 = vmatpush1.bf16.msra.mxu0 %v3703
      %3726 = vmatprep.subr.bf16.mxu0 0
      %3727 = vmatpush1.bf16.msra.mxu0 %v3704
      %3728 = vmatprep.subr.bf16.mxu0 0
      %3729 = vmatpush1.bf16.msra.mxu0 %v3705
      %3730 = vmatprep.subr.bf16.mxu0 0
      %3731 = vmatpush1.bf16.msra.mxu0 0
      %3732 = vmatprep.subr.bf16.mxu0 0
      %3733 = vmatpush1.bf16.msra.mxu0 0
      %3734 = vmatprep.subr.bf16.mxu0 0
      %3735 = vmatpush1.bf16.msra.mxu0 0
      %3736 = vmatprep.subr.bf16.mxu0 0
      %3737 = vmatpush1.bf16.msra.mxu0 0
      %3738 = vmatprep.subr.bf16.mxu0 0
      %3739 = vmatpush1.bf16.msra.mxu0 0
      %3740 = vmatprep.subr.bf16.mxu0 0
      %3741 = vmatpush1.bf16.msra.mxu0 0
      %3742 = vmatprep.subr.bf16.mxu0 0
      %3743 = vmatpush1.bf16.msra.mxu0 0
      %3744 = vmatprep.subr.bf16.mxu0 0
      %3745 = vmatpush1.bf16.msra.mxu0 0
      %3746 = vmatprep.mubr.bf16.mxu0 0
      %3747 = vmatmul.mubr.bf16.gmra.mrb[0].mxu0 %v3518
      %v3748 = vpop.f32.mrb[0].mxu0
      %v3749 = vadd.f32 0.0, %v3748
      %v3750 = vpop.f32.mrb[0].mxu0
      %v3751 = vpop.f32.mrb[0].mxu0
      %v3752 = vadd.f32 0.0, %v3751
      %v3753 = vpop.f32.mrb[0].mxu0
      %3754 = vmatprep.mubr.bf16.mxu0 0
      %3755 = vmatmul.mubr.bf16.gmra.mrb[0].mxu0 %v3519
      %v3756 = vpop.f32.mrb[0].mxu0
      %v3757 = vadd.f32 0.0, %v3756
      %v3758 = vpop.f32.mrb[0].mxu0
      %v3759 = vpop.f32.mrb[0].mxu0
      %v3760 = vpop.f32.mrb[0].mxu0
      %3761 = vdwg.mxu0
      %v3765 = vrot.slane %v3619, 7
      %v3766 = vrot.slane %v3622, 7
      %v3767 = vsel %vm1389, %v3765, %v3766
      %v3768 = vrot.slane %v3627, 7
      %v3769 = vsel %vm1389, %v3766, %v3768
      %v3773 = vsel %vm1389, 0.0, %v3765
      %v3790 = vunpack.c.l.b16 %v3633
      %v3791 = vunpack.c.l.b16 %v3634
      %v3792 = vunpack.c.l.b16 %v3635
      %v3793 = vunpack.c.l.b16 %v3636
      %v3794 = vunpack.c.l.b16 %v3637
      %v3795 = vunpack.c.l.b16 %v3638
      %v3796 = vunpack.c.l.b16 %v3639
      %v3797 = vunpack.c.l.b16 %v3640
      %v3798 = vunpack.c.l.b16 %v3641
      %v3799 = vunpack.c.l.b16 %v3642
      %v3800 = vunpack.c.l.b16 %v3643
      %v3801 = vunpack.c.l.b16 %v3644
      %v3802 = vunpack.c.l.b16 %v3645
      %v3803 = vunpack.c.l.b16 %v3646
      %v3804 = vunpack.c.l.b16 %v3647
      %v3805 = vunpack.c.l.b16 %v3648
      %v3806 = vpack.c.b16 %v3791, %v3790
      %v3807 = vpack.c.b16 %v3793, %v3792
      %v3808 = vpack.c.b16 %v3795, %v3794
      %v3809 = vpack.c.b16 %v3797, %v3796
      %v3810 = vpack.c.b16 %v3799, %v3798
      %v3811 = vpack.c.b16 %v3801, %v3800
      %v3812 = vpack.c.b16 %v3803, %v3802
      %v3813 = vpack.c.b16 %v3805, %v3804
      %3822 = vmatprep.subr.bf16.mxu0 0
      %3823 = vmatpush1.bf16.msra.mxu0 %v3806
      %3824 = vmatprep.subr.bf16.mxu0 0
      %3825 = vmatpush1.bf16.msra.mxu0 %v3807
      %3826 = vmatprep.subr.bf16.mxu0 0
      %3827 = vmatpush1.bf16.msra.mxu0 %v3808
      %3828 = vmatprep.subr.bf16.mxu0 0
      %3829 = vmatpush1.bf16.msra.mxu0 %v3809
      %3830 = vmatprep.subr.bf16.mxu0 0
      %3831 = vmatpush1.bf16.msra.mxu0 %v3810
      %3832 = vmatprep.subr.bf16.mxu0 0
      %3833 = vmatpush1.bf16.msra.mxu0 %v3811
      %3834 = vmatprep.subr.bf16.mxu0 0
      %3835 = vmatpush1.bf16.msra.mxu0 %v3812
      %3836 = vmatprep.subr.bf16.mxu0 0
      %3837 = vmatpush1.bf16.msra.mxu0 %v3813
      %3838 = vmatprep.subr.bf16.mxu0 0
      %3839 = vmatpush1.bf16.msra.mxu0 0
      %3840 = vmatprep.subr.bf16.mxu0 0
      %3841 = vmatpush1.bf16.msra.mxu0 0
      %3842 = vmatprep.subr.bf16.mxu0 0
      %3843 = vmatpush1.bf16.msra.mxu0 0
      %3844 = vmatprep.subr.bf16.mxu0 0
      %3845 = vmatpush1.bf16.msra.mxu0 0
      %3846 = vmatprep.subr.bf16.mxu0 0
      %3847 = vmatpush1.bf16.msra.mxu0 0
      %3848 = vmatprep.subr.bf16.mxu0 0
      %3849 = vmatpush1.bf16.msra.mxu0 0
      %3850 = vmatprep.subr.bf16.mxu0 0
      %3851 = vmatpush1.bf16.msra.mxu0 0
      %3852 = vmatprep.subr.bf16.mxu0 0
      %3853 = vmatpush1.bf16.msra.mxu0 0
      %3854 = vmatprep.mubr.bf16.mxu0 0
      %3855 = vmatmul.mubr.bf16.gmra.mrb[0].mxu0 %v3518
      %v3856 = vpop.f32.mrb[0].mxu0
      %v3857 = vadd.f32 %v3773, %v3856
      %v3858 = vpop.f32.mrb[0].mxu0
      %v3859 = vpop.f32.mrb[0].mxu0
      %v3860 = vadd.f32 %v3767, %v3859
      %v3861 = vpop.f32.mrb[0].mxu0
      %3862 = vmatprep.mubr.bf16.mxu0 0
      %3863 = vmatmul.mubr.bf16.gmra.mrb[0].mxu0 %v3519
      %v3864 = vpop.f32.mrb[0].mxu0
      %v3865 = vadd.f32 %v3769, %v3864
      %v3866 = vpop.f32.mrb[0].mxu0
      %v3867 = vpop.f32.mrb[0].mxu0
      %v3868 = vpop.f32.mrb[0].mxu0
      %3869 = vdwg.mxu0
      %v3873 = vrot.slane %v3749, 1
      %v3874 = vrot.slane %v3752, 1
      %v3875 = vsel %vm1534, %v3873, %v3874
      %v3876 = vrot.slane %v3757, 1
      %v3877 = vsel %vm1534, %v3874, %v3876
      %v3881 = vsel %vm1561, %v3876, 0.0
      %v3882 = vadd.f32 %v3857, %v3875
      %v3883 = vadd.f32 %v3860, %v3877
      %v3884 = vadd.f32 %v3865, %v3881
      %v3885 = vld [vmem:[%s25] sm:$0x1]
      %v3887 = vlaneseq
      %v3888 = vshrl.u32 %v3887, 7
      %v3889 = vsub.s32 0, %v3888
      %v3890 = vrot.slane %v3885, %v3889
      %v3892 = vadd.f32 %v3882, %v3890
      %v3893 = vadd.f32 %v3883, %v3890
      %v3894 = vadd.f32 %v3884, %v3890
      %v3895 = vmax.f32 %v3892, 0.0
      %v3896 = vmax.f32 %v3893, 0.0
      %v3897 = vmax.f32 %v3894, 0.0
      %v3898 = vsel %vm3129, 0.0, %v3895
      %v3899 = vsel %vm3130, 0.0, %v3896
      %v3900 = vsel %vm3131, 0.0, %v3897
      %v3901 = vpack.c.bf16 %v3899, %v3898
      %v3902 = vpack.c.bf16 %v3900, %v3900
      %v3903 = vld [vmem:[%s27] sm:$0xf]
      %v3904 = vld [vmem:[%s27 + $0x4] sm:$0xf]
      %v3905 = vld [vmem:[%s27 + $0x8] sm:$0xf]
      %v3906 = vld [vmem:[%s27 + $0xc] sm:$0xf]
      %v3907 = vld [vmem:[%s27 + $0x10] sm:$0xf]
      %v3908 = vld [vmem:[%s27 + $0x14] sm:$0xf]
      %v3909 = vld [vmem:[%s27 + $0x18] sm:$0xf]
      %v3910 = vld [vmem:[%s27 + $0x1c] sm:$0xf]
      %v3911 = vld [vmem:[%s27 + $0x20] sm:$0xf]
      %v3912 = vld [vmem:[%s27 + $0x24] sm:$0xf]
      %v3913 = vld [vmem:[%s27 + $0x28] sm:$0xf]
      %v3914 = vld [vmem:[%s27 + $0x2c] sm:$0xf]
      %v3915 = vld [vmem:[%s27 + $0x30] sm:$0xf]
      %v3916 = vld [vmem:[%s27 + $0x34] sm:$0xf]
      %v3917 = vld [vmem:[%s27 + $0x38] sm:$0xf]
      %v3918 = vld [vmem:[%s27 + $0x3c] sm:$0xf]
      %v3935 = vunpack.c.l.b16 %v3903
      %v3936 = vunpack.c.l.b16 %v3904
      %v3937 = vunpack.c.l.b16 %v3905
      %v3938 = vunpack.c.l.b16 %v3906
      %v3939 = vunpack.c.l.b16 %v3907
      %v3940 = vunpack.c.l.b16 %v3908
      %v3941 = vunpack.c.l.b16 %v3909
      %v3942 = vunpack.c.l.b16 %v3910
      %v3943 = vunpack.c.l.b16 %v3911
      %v3944 = vunpack.c.l.b16 %v3912
      %v3945 = vunpack.c.l.b16 %v3913
      %v3946 = vunpack.c.l.b16 %v3914
      %v3947 = vunpack.c.l.b16 %v3915
      %v3948 = vunpack.c.l.b16 %v3916
      %v3949 = vunpack.c.l.b16 %v3917
      %v3950 = vunpack.c.l.b16 %v3918
      %v3951 = vpack.c.b16 %v3936, %v3935
      %v3952 = vpack.c.b16 %v3938, %v3937
      %v3953 = vpack.c.b16 %v3940, %v3939
      %v3954 = vpack.c.b16 %v3942, %v3941
      %v3955 = vpack.c.b16 %v3944, %v3943
      %v3956 = vpack.c.b16 %v3946, %v3945
      %v3957 = vpack.c.b16 %v3948, %v3947
      %v3958 = vpack.c.b16 %v3950, %v3949
      %3967 = vmatprep.subr.bf16.mxu0 0
      %3968 = vmatpush1.bf16.msra.mxu0 %v3951
      %3969 = vmatprep.subr.bf16.mxu0 0
      %3970 = vmatpush1.bf16.msra.mxu0 %v3952
      %3971 = vmatprep.subr.bf16.mxu0 0
      %3972 = vmatpush1.bf16.msra.mxu0 %v3953
      %3973 = vmatprep.subr.bf16.mxu0 0
      %3974 = vmatpush1.bf16.msra.mxu0 %v3954
      %3975 = vmatprep.subr.bf16.mxu0 0
      %3976 = vmatpush1.bf16.msra.mxu0 %v3955
      %3977 = vmatprep.subr.bf16.mxu0 0
      %3978 = vmatpush1.bf16.msra.mxu0 %v3956
      %3979 = vmatprep.subr.bf16.mxu0 0
      %3980 = vmatpush1.bf16.msra.mxu0 %v3957
      %3981 = vmatprep.subr.bf16.mxu0 0
      %3982 = vmatpush1.bf16.msra.mxu0 %v3958
      %3983 = vmatprep.subr.bf16.mxu0 0
      %3984 = vmatpush1.bf16.msra.mxu0 0
      %3985 = vmatprep.subr.bf16.mxu0 0
      %3986 = vmatpush1.bf16.msra.mxu0 0
      %3987 = vmatprep.subr.bf16.mxu0 0
      %3988 = vmatpush1.bf16.msra.mxu0 0
      %3989 = vmatprep.subr.bf16.mxu0 0
      %3990 = vmatpush1.bf16.msra.mxu0 0
      %3991 = vmatprep.subr.bf16.mxu0 0
      %3992 = vmatpush1.bf16.msra.mxu0 0
      %3993 = vmatprep.subr.bf16.mxu0 0
      %3994 = vmatpush1.bf16.msra.mxu0 0
      %3995 = vmatprep.subr.bf16.mxu0 0
      %3996 = vmatpush1.bf16.msra.mxu0 0
      %3997 = vmatprep.subr.bf16.mxu0 0
      %3998 = vmatpush1.bf16.msra.mxu0 0
      %3999 = vmatprep.mubr.bf16.mxu0 0
      %4000 = vmatmul.mubr.bf16.gmra.mrb[0].mxu0 %v3901
      %v4001 = vpop.f32.mrb[0].mxu0
      %v4002 = vadd.f32 0.0, %v4001
      %v4003 = vpop.f32.mrb[0].mxu0
      %v4004 = vpop.f32.mrb[0].mxu0
      %v4005 = vadd.f32 0.0, %v4004
      %v4006 = vpop.f32.mrb[0].mxu0
      %4007 = vmatprep.mubr.bf16.mxu0 0
      %4008 = vmatmul.mubr.bf16.gmra.mrb[0].mxu0 %v3902
      %v4009 = vpop.f32.mrb[0].mxu0
      %v4010 = vadd.f32 0.0, %v4009
      %v4011 = vpop.f32.mrb[0].mxu0
      %v4012 = vpop.f32.mrb[0].mxu0
      %v4013 = vpop.f32.mrb[0].mxu0
      %4014 = vdwg.mxu0
      %s4015 = scalar_lea.vmem %s27, 64
      %v4016 = vld [vmem:[%s4015] sm:$0xf]
      %v4017 = vld [vmem:[%s4015 + $0x4] sm:$0xf]
      %v4018 = vld [vmem:[%s4015 + $0x8] sm:$0xf]
      %v4019 = vld [vmem:[%s4015 + $0xc] sm:$0xf]
      %v4020 = vld [vmem:[%s4015 + $0x10] sm:$0xf]
      %v4021 = vld [vmem:[%s4015 + $0x14] sm:$0xf]
      %v4022 = vld [vmem:[%s4015 + $0x18] sm:$0xf]
      %v4023 = vld [vmem:[%s4015 + $0x1c] sm:$0xf]
      %v4024 = vld [vmem:[%s4015 + $0x20] sm:$0xf]
      %v4025 = vld [vmem:[%s4015 + $0x24] sm:$0xf]
      %v4026 = vld [vmem:[%s4015 + $0x28] sm:$0xf]
      %v4027 = vld [vmem:[%s4015 + $0x2c] sm:$0xf]
      %v4028 = vld [vmem:[%s4015 + $0x30] sm:$0xf]
      %v4029 = vld [vmem:[%s4015 + $0x34] sm:$0xf]
      %v4030 = vld [vmem:[%s4015 + $0x38] sm:$0xf]
      %v4031 = vld [vmem:[%s4015 + $0x3c] sm:$0xf]
      %s4032 = scalar_lea.vmem %s27, 128
      %v4033 = vld [vmem:[%s4032] sm:$0xf]
      %v4034 = vld [vmem:[%s4032 + $0x4] sm:$0xf]
      %v4035 = vld [vmem:[%s4032 + $0x8] sm:$0xf]
      %v4036 = vld [vmem:[%s4032 + $0xc] sm:$0xf]
      %v4037 = vld [vmem:[%s4032 + $0x10] sm:$0xf]
      %v4038 = vld [vmem:[%s4032 + $0x14] sm:$0xf]
      %v4039 = vld [vmem:[%s4032 + $0x18] sm:$0xf]
      %v4040 = vld [vmem:[%s4032 + $0x1c] sm:$0xf]
      %v4041 = vld [vmem:[%s4032 + $0x20] sm:$0xf]
      %v4042 = vld [vmem:[%s4032 + $0x24] sm:$0xf]
      %v4043 = vld [vmem:[%s4032 + $0x28] sm:$0xf]
      %v4044 = vld [vmem:[%s4032 + $0x2c] sm:$0xf]
      %v4045 = vld [vmem:[%s4032 + $0x30] sm:$0xf]
      %v4046 = vld [vmem:[%s4032 + $0x34] sm:$0xf]
      %v4047 = vld [vmem:[%s4032 + $0x38] sm:$0xf]
      %v4048 = vld [vmem:[%s4032 + $0x3c] sm:$0xf]
      %v4065 = vunpack.c.l.b16 %v4033
      %v4066 = vunpack.c.l.b16 %v4034
      %v4067 = vunpack.c.l.b16 %v4035
      %v4068 = vunpack.c.l.b16 %v4036
      %v4069 = vunpack.c.l.b16 %v4037
      %v4070 = vunpack.c.l.b16 %v4038
      %v4071 = vunpack.c.l.b16 %v4039
      %v4072 = vunpack.c.l.b16 %v4040
      %v4073 = vunpack.c.l.b16 %v4041
      %v4074 = vunpack.c.l.b16 %v4042
      %v4075 = vunpack.c.l.b16 %v4043
      %v4076 = vunpack.c.l.b16 %v4044
      %v4077 = vunpack.c.l.b16 %v4045
      %v4078 = vunpack.c.l.b16 %v4046
      %v4079 = vunpack.c.l.b16 %v4047
      %v4080 = vunpack.c.l.b16 %v4048
      %v4081 = vpack.c.b16 %v4066, %v4065
      %v4082 = vpack.c.b16 %v4068, %v4067
      %v4083 = vpack.c.b16 %v4070, %v4069
      %v4084 = vpack.c.b16 %v4072, %v4071
      %v4085 = vpack.c.b16 %v4074, %v4073
      %v4086 = vpack.c.b16 %v4076, %v4075
      %v4087 = vpack.c.b16 %v4078, %v4077
      %v4088 = vpack.c.b16 %v4080, %v4079
      %4097 = vmatprep.subr.bf16.mxu0 0
      %4098 = vmatpush1.bf16.msra.mxu0 %v4081
      %4099 = vmatprep.subr.bf16.mxu0 0
      %4100 = vmatpush1.bf16.msra.mxu0 %v4082
      %4101 = vmatprep.subr.bf16.mxu0 0
      %4102 = vmatpush1.bf16.msra.mxu0 %v4083
      %4103 = vmatprep.subr.bf16.mxu0 0
      %4104 = vmatpush1.bf16.msra.mxu0 %v4084
      %4105 = vmatprep.subr.bf16.mxu0 0
      %4106 = vmatpush1.bf16.msra.mxu0 %v4085
      %4107 = vmatprep.subr.bf16.mxu0 0
      %4108 = vmatpush1.bf16.msra.mxu0 %v4086
      %4109 = vmatprep.subr.bf16.mxu0 0
      %4110 = vmatpush1.bf16.msra.mxu0 %v4087
      %4111 = vmatprep.subr.bf16.mxu0 0
      %4112 = vmatpush1.bf16.msra.mxu0 %v4088
      %4113 = vmatprep.subr.bf16.mxu0 0
      %4114 = vmatpush1.bf16.msra.mxu0 0
      %4115 = vmatprep.subr.bf16.mxu0 0
      %4116 = vmatpush1.bf16.msra.mxu0 0
      %4117 = vmatprep.subr.bf16.mxu0 0
      %4118 = vmatpush1.bf16.msra.mxu0 0
      %4119 = vmatprep.subr.bf16.mxu0 0
      %4120 = vmatpush1.bf16.msra.mxu0 0
      %4121 = vmatprep.subr.bf16.mxu0 0
      %4122 = vmatpush1.bf16.msra.mxu0 0
      %4123 = vmatprep.subr.bf16.mxu0 0
      %4124 = vmatpush1.bf16.msra.mxu0 0
      %4125 = vmatprep.subr.bf16.mxu0 0
      %4126 = vmatpush1.bf16.msra.mxu0 0
      %4127 = vmatprep.subr.bf16.mxu0 0
      %4128 = vmatpush1.bf16.msra.mxu0 0
      %4129 = vmatprep.mubr.bf16.mxu0 0
      %4130 = vmatmul.mubr.bf16.gmra.mrb[0].mxu0 %v3901
      %v4131 = vpop.f32.mrb[0].mxu0
      %v4132 = vadd.f32 0.0, %v4131
      %v4133 = vpop.f32.mrb[0].mxu0
      %v4134 = vpop.f32.mrb[0].mxu0
      %v4135 = vadd.f32 0.0, %v4134
      %v4136 = vpop.f32.mrb[0].mxu0
      %4137 = vmatprep.mubr.bf16.mxu0 0
      %4138 = vmatmul.mubr.bf16.gmra.mrb[0].mxu0 %v3902
      %v4139 = vpop.f32.mrb[0].mxu0
      %v4140 = vadd.f32 0.0, %v4139
      %v4141 = vpop.f32.mrb[0].mxu0
      %v4142 = vpop.f32.mrb[0].mxu0
      %v4143 = vpop.f32.mrb[0].mxu0
      %4144 = vdwg.mxu0
      %v4148 = vrot.slane %v4002, 7
      %v4149 = vrot.slane %v4005, 7
      %v4150 = vsel %vm1389, %v4148, %v4149
      %v4151 = vrot.slane %v4010, 7
      %v4152 = vsel %vm1389, %v4149, %v4151
      %v4156 = vsel %vm1389, 0.0, %v4148
      %v4173 = vunpack.c.l.b16 %v4016
      %v4174 = vunpack.c.l.b16 %v4017
      %v4175 = vunpack.c.l.b16 %v4018
      %v4176 = vunpack.c.l.b16 %v4019
      %v4177 = vunpack.c.l.b16 %v4020
      %v4178 = vunpack.c.l.b16 %v4021
      %v4179 = vunpack.c.l.b16 %v4022
      %v4180 = vunpack.c.l.b16 %v4023
      %v4181 = vunpack.c.l.b16 %v4024
      %v4182 = vunpack.c.l.b16 %v4025
      %v4183 = vunpack.c.l.b16 %v4026
      %v4184 = vunpack.c.l.b16 %v4027
      %v4185 = vunpack.c.l.b16 %v4028
      %v4186 = vunpack.c.l.b16 %v4029
      %v4187 = vunpack.c.l.b16 %v4030
      %v4188 = vunpack.c.l.b16 %v4031
      %v4189 = vpack.c.b16 %v4174, %v4173
      %v4190 = vpack.c.b16 %v4176, %v4175
      %v4191 = vpack.c.b16 %v4178, %v4177
      %v4192 = vpack.c.b16 %v4180, %v4179
      %v4193 = vpack.c.b16 %v4182, %v4181
      %v4194 = vpack.c.b16 %v4184, %v4183
      %v4195 = vpack.c.b16 %v4186, %v4185
      %v4196 = vpack.c.b16 %v4188, %v4187
      %4205 = vmatprep.subr.bf16.mxu0 0
      %4206 = vmatpush1.bf16.msra.mxu0 %v4189
      %4207 = vmatprep.subr.bf16.mxu0 0
      %4208 = vmatpush1.bf16.msra.mxu0 %v4190
      %4209 = vmatprep.subr.bf16.mxu0 0
      %4210 = vmatpush1.bf16.msra.mxu0 %v4191
      %4211 = vmatprep.subr.bf16.mxu0 0
      %4212 = vmatpush1.bf16.msra.mxu0 %v4192
      %4213 = vmatprep.subr.bf16.mxu0 0
      %4214 = vmatpush1.bf16.msra.mxu0 %v4193
      %4215 = vmatprep.subr.bf16.mxu0 0
      %4216 = vmatpush1.bf16.msra.mxu0 %v4194
      %4217 = vmatprep.subr.bf16.mxu0 0
      %4218 = vmatpush1.bf16.msra.mxu0 %v4195
      %4219 = vmatprep.subr.bf16.mxu0 0
      %4220 = vmatpush1.bf16.msra.mxu0 %v4196
      %4221 = vmatprep.subr.bf16.mxu0 0
      %4222 = vmatpush1.bf16.msra.mxu0 0
      %4223 = vmatprep.subr.bf16.mxu0 0
      %4224 = vmatpush1.bf16.msra.mxu0 0
      %4225 = vmatprep.subr.bf16.mxu0 0
      %4226 = vmatpush1.bf16.msra.mxu0 0
      %4227 = vmatprep.subr.bf16.mxu0 0
      %4228 = vmatpush1.bf16.msra.mxu0 0
      %4229 = vmatprep.subr.bf16.mxu0 0
      %4230 = vmatpush1.bf16.msra.mxu0 0
      %4231 = vmatprep.subr.bf16.mxu0 0
      %4232 = vmatpush1.bf16.msra.mxu0 0
      %4233 = vmatprep.subr.bf16.mxu0 0
      %4234 = vmatpush1.bf16.msra.mxu0 0
      %4235 = vmatprep.subr.bf16.mxu0 0
      %4236 = vmatpush1.bf16.msra.mxu0 0
      %4237 = vmatprep.mubr.bf16.mxu0 0
      %4238 = vmatmul.mubr.bf16.gmra.mrb[0].mxu0 %v3901
      %v4239 = vpop.f32.mrb[0].mxu0
      %v4240 = vadd.f32 %v4156, %v4239
      %v4241 = vpop.f32.mrb[0].mxu0
      %v4242 = vpop.f32.mrb[0].mxu0
      %v4243 = vadd.f32 %v4150, %v4242
      %v4244 = vpop.f32.mrb[0].mxu0
      %4245 = vmatprep.mubr.bf16.mxu0 0
      %4246 = vmatmul.mubr.bf16.gmra.mrb[0].mxu0 %v3902
      %v4247 = vpop.f32.mrb[0].mxu0
      %v4248 = vadd.f32 %v4152, %v4247
      %v4249 = vpop.f32.mrb[0].mxu0
      %v4250 = vpop.f32.mrb[0].mxu0
      %v4251 = vpop.f32.mrb[0].mxu0
      %4252 = vdwg.mxu0
      %v4256 = vrot.slane %v4132, 1
      %v4257 = vrot.slane %v4135, 1
      %v4258 = vsel %vm1534, %v4256, %v4257
      %v4259 = vrot.slane %v4140, 1
      %v4260 = vsel %vm1534, %v4257, %v4259
      %v4264 = vsel %vm1561, %v4259, 0.0
      %v4265 = vadd.f32 %v4240, %v4258
      %v4266 = vadd.f32 %v4243, %v4260
      %v4267 = vadd.f32 %v4248, %v4264
      %v4268 = vld [vmem:[%s29] sm:$0x1]
      %v4270 = vlaneseq
      %v4271 = vshrl.u32 %v4270, 7
      %v4272 = vsub.s32 0, %v4271
      %v4273 = vrot.slane %v4268, %v4272
      %v4275 = vadd.f32 %v4265, %v4273
      %v4276 = vadd.f32 %v4266, %v4273
      %v4277 = vadd.f32 %v4267, %v4273
      %v4278 = vmax.f32 %v4275, 0.0
      %v4279 = vmax.f32 %v4276, 0.0
      %v4280 = vmax.f32 %v4277, 0.0
      %4281 = vst [vmem:[#allocation2] sm:$0xff] %v4278
      %4282 = vst [vmem:[#allocation2 + $0x8] sm:$0xff] %v4279
      %4283 = vst [vmem:[#allocation2 + $0x10] sm:$0xf] %v4280
      %v4284 = vld [vmem:[%s2136] ss:$2 sm:$0xf]
      %v4285 = vld [vmem:[%s2140] ss:$2 sm:$0xf]
      %v4286 = vmax.f32 %v4284, %v4285
      %4287 = vrot.lane.b32.xlu0 %v4286, 112
      %v4288 = vpop.permute.xlu0 %4287
      %v4289 = vmax.f32 %v4286, %v4288
      %s4290 = scalar_lea.vmem [#allocation2], 11
      %v4291 = vld [vmem:[%s4290] ss:$2 sm:$0xf]
      %s4292 = scalar_lea.vmem [#allocation2], 12
      %v4293 = vld [vmem:[%s4292] ss:$2 sm:$0xf]
      %v4294 = vmax.f32 %v4291, %v4293
      %4295 = vrot.lane.b32.xlu0 %v4294, 112
      %v4296 = vpop.permute.xlu0 %4295
      %v4297 = vmax.f32 %v4294, %v4296
      %v4299 = vrot.slane %v4289, 7
      %v4302 = vrot.slane %v4297, 1
      %v4304 = vsel %vm1389, 0.0, %v4299
      %vm4305 = vcmask 1044480
      %v4306 = vsel %vm4305, %v4304, 0.0
      %vm4307 = vcmask 1045504
      %v4308 = vsel %vm4307, %v4306, 0.0
      %v4309 = vsel %vm1534, %v4308, %v4302
      %v4310 = vsel %vm1561, %v4302, 0.0
      %vm4311 = vcmp.eq.s32.totalorder %v1024, 5
      %vm4312 = vcmp.eq.s32.totalorder %v1025, 5
      %vm4313 = vcmp.eq.s32.totalorder %v1024, 6
      %vm4314 = vcmp.eq.s32.totalorder %v1025, 6
      %vm4315 = vcmp.eq.s32.totalorder %v1024, 11
      %vm4316 = vcmp.eq.s32.totalorder %v1025, 11
      %vm4317 = vmor %vm1033, %vm4311
      %vm4318 = vmor %vm1034, %vm4312
      %vm4319 = vmor %vm4317, %vm4313
      %vm4320 = vmor %vm4318, %vm4314
      %vm4321 = vmor %vm4319, %vm4315
      %vm4322 = vmor %vm4320, %vm4316
      %v4323 = vsel %vm4321, 0.0, %v4309
      %v4324 = vsel %vm4322, 0.0, %v4310
      %v4325 = vpack.c.bf16 %v4324, %v4323
      %v4326 = vld [vmem:[%s31] sm:$0xf]
      %v4327 = vld [vmem:[%s31 + $0x4] sm:$0xf]
      %v4328 = vld [vmem:[%s31 + $0x8] sm:$0xf]
      %v4329 = vld [vmem:[%s31 + $0xc] sm:$0xf]
      %v4330 = vld [vmem:[%s31 + $0x10] sm:$0xf]
      %v4331 = vld [vmem:[%s31 + $0x14] sm:$0xf]
      %v4332 = vld [vmem:[%s31 + $0x18] sm:$0xf]
      %v4333 = vld [vmem:[%s31 + $0x1c] sm:$0xf]
      %v4334 = vld [vmem:[%s31 + $0x20] sm:$0xf]
      %v4335 = vld [vmem:[%s31 + $0x24] sm:$0xf]
      %v4336 = vld [vmem:[%s31 + $0x28] sm:$0xf]
      %v4337 = vld [vmem:[%s31 + $0x2c] sm:$0xf]
      %v4338 = vld [vmem:[%s31 + $0x30] sm:$0xf]
      %v4339 = vld [vmem:[%s31 + $0x34] sm:$0xf]
      %v4340 = vld [vmem:[%s31 + $0x38] sm:$0xf]
      %v4341 = vld [vmem:[%s31 + $0x3c] sm:$0xf]
      %v4358 = vunpack.c.l.b16 %v4326
      %v4359 = vunpack.c.l.b16 %v4327
      %v4360 = vunpack.c.l.b16 %v4328
      %v4361 = vunpack.c.l.b16 %v4329
      %v4362 = vunpack.c.l.b16 %v4330
      %v4363 = vunpack.c.l.b16 %v4331
      %v4364 = vunpack.c.l.b16 %v4332
      %v4365 = vunpack.c.l.b16 %v4333
      %v4366 = vunpack.c.l.b16 %v4334
      %v4367 = vunpack.c.l.b16 %v4335
      %v4368 = vunpack.c.l.b16 %v4336
      %v4369 = vunpack.c.l.b16 %v4337
      %v4370 = vunpack.c.l.b16 %v4338
      %v4371 = vunpack.c.l.b16 %v4339
      %v4372 = vunpack.c.l.b16 %v4340
      %v4373 = vunpack.c.l.b16 %v4341
      %v4374 = vpack.c.b16 %v4359, %v4358
      %v4375 = vpack.c.b16 %v4361, %v4360
      %v4376 = vpack.c.b16 %v4363, %v4362
      %v4377 = vpack.c.b16 %v4365, %v4364
      %v4378 = vpack.c.b16 %v4367, %v4366
      %v4379 = vpack.c.b16 %v4369, %v4368
      %v4380 = vpack.c.b16 %v4371, %v4370
      %v4381 = vpack.c.b16 %v4373, %v4372
      %4390 = vmatprep.subr.bf16.mxu0 0
      %4391 = vmatpush1.bf16.msra.mxu0 %v4374
      %4392 = vmatprep.subr.bf16.mxu0 0
      %4393 = vmatpush1.bf16.msra.mxu0 %v4375
      %4394 = vmatprep.subr.bf16.mxu0 0
      %4395 = vmatpush1.bf16.msra.mxu0 %v4376
      %4396 = vmatprep.subr.bf16.mxu0 0
      %4397 = vmatpush1.bf16.msra.mxu0 %v4377
      %4398 = vmatprep.subr.bf16.mxu0 0
      %4399 = vmatpush1.bf16.msra.mxu0 %v4378
      %4400 = vmatprep.subr.bf16.mxu0 0
      %4401 = vmatpush1.bf16.msra.mxu0 %v4379
      %4402 = vmatprep.subr.bf16.mxu0 0
      %4403 = vmatpush1.bf16.msra.mxu0 %v4380
      %4404 = vmatprep.subr.bf16.mxu0 0
      %4405 = vmatpush1.bf16.msra.mxu0 %v4381
      %4406 = vmatprep.subr.bf16.mxu0 0
      %4407 = vmatpush1.bf16.msra.mxu0 0
      %4408 = vmatprep.subr.bf16.mxu0 0
      %4409 = vmatpush1.bf16.msra.mxu0 0
      %4410 = vmatprep.subr.bf16.mxu0 0
      %4411 = vmatpush1.bf16.msra.mxu0 0
      %4412 = vmatprep.subr.bf16.mxu0 0
      %4413 = vmatpush1.bf16.msra.mxu0 0
      %4414 = vmatprep.subr.bf16.mxu0 0
      %4415 = vmatpush1.bf16.msra.mxu0 0
      %4416 = vmatprep.subr.bf16.mxu0 0
      %4417 = vmatpush1.bf16.msra.mxu0 0
      %4418 = vmatprep.subr.bf16.mxu0 0
      %4419 = vmatpush1.bf16.msra.mxu0 0
      %4420 = vmatprep.subr.bf16.mxu0 0
      %4421 = vmatpush1.bf16.msra.mxu0 0
      %4422 = vmatprep.mubr.bf16.mxu0 0
      %4423 = vmatmul.mubr.bf16.gmra.mrb[0].mxu0 %v4325
      %v4424 = vpop.f32.mrb[0].mxu0
      %v4425 = vadd.f32 0.0, %v4424
      %v4426 = vpop.f32.mrb[0].mxu0
      %v4427 = vpop.f32.mrb[0].mxu0
      %v4428 = vadd.f32 0.0, %v4427
      %v4429 = vpop.f32.mrb[0].mxu0
      %4430 = vdwg.mxu0
      %s4431 = scalar_lea.vmem %s31, 64
      %v4432 = vld [vmem:[%s4431] sm:$0xf]
      %v4433 = vld [vmem:[%s4431 + $0x4] sm:$0xf]
      %v4434 = vld [vmem:[%s4431 + $0x8] sm:$0xf]
      %v4435 = vld [vmem:[%s4431 + $0xc] sm:$0xf]
      %v4436 = vld [vmem:[%s4431 + $0x10] sm:$0xf]
      %v4437 = vld [vmem:[%s4431 + $0x14] sm:$0xf]
      %v4438 = vld [vmem:[%s4431 + $0x18] sm:$0xf]
      %v4439 = vld [vmem:[%s4431 + $0x1c] sm:$0xf]
      %v4440 = vld [vmem:[%s4431 + $0x20] sm:$0xf]
      %v4441 = vld [vmem:[%s4431 + $0x24] sm:$0xf]
      %v4442 = vld [vmem:[%s4431 + $0x28] sm:$0xf]
      %v4443 = vld [vmem:[%s4431 + $0x2c] sm:$0xf]
      %v4444 = vld [vmem:[%s4431 + $0x30] sm:$0xf]
      %v4445 = vld [vmem:[%s4431 + $0x34] sm:$0xf]
      %v4446 = vld [vmem:[%s4431 + $0x38] sm:$0xf]
      %v4447 = vld [vmem:[%s4431 + $0x3c] sm:$0xf]
      %s4448 = scalar_lea.vmem %s31, 128
      %v4449 = vld [vmem:[%s4448] sm:$0xf]
      %v4450 = vld [vmem:[%s4448 + $0x4] sm:$0xf]
      %v4451 = vld [vmem:[%s4448 + $0x8] sm:$0xf]
      %v4452 = vld [vmem:[%s4448 + $0xc] sm:$0xf]
      %v4453 = vld [vmem:[%s4448 + $0x10] sm:$0xf]
      %v4454 = vld [vmem:[%s4448 + $0x14] sm:$0xf]
      %v4455 = vld [vmem:[%s4448 + $0x18] sm:$0xf]
      %v4456 = vld [vmem:[%s4448 + $0x1c] sm:$0xf]
      %v4457 = vld [vmem:[%s4448 + $0x20] sm:$0xf]
      %v4458 = vld [vmem:[%s4448 + $0x24] sm:$0xf]
      %v4459 = vld [vmem:[%s4448 + $0x28] sm:$0xf]
      %v4460 = vld [vmem:[%s4448 + $0x2c] sm:$0xf]
      %v4461 = vld [vmem:[%s4448 + $0x30] sm:$0xf]
      %v4462 = vld [vmem:[%s4448 + $0x34] sm:$0xf]
      %v4463 = vld [vmem:[%s4448 + $0x38] sm:$0xf]
      %v4464 = vld [vmem:[%s4448 + $0x3c] sm:$0xf]
      %v4481 = vunpack.c.l.b16 %v4449
      %v4482 = vunpack.c.l.b16 %v4450
      %v4483 = vunpack.c.l.b16 %v4451
      %v4484 = vunpack.c.l.b16 %v4452
      %v4485 = vunpack.c.l.b16 %v4453
      %v4486 = vunpack.c.l.b16 %v4454
      %v4487 = vunpack.c.l.b16 %v4455
      %v4488 = vunpack.c.l.b16 %v4456
      %v4489 = vunpack.c.l.b16 %v4457
      %v4490 = vunpack.c.l.b16 %v4458
      %v4491 = vunpack.c.l.b16 %v4459
      %v4492 = vunpack.c.l.b16 %v4460
      %v4493 = vunpack.c.l.b16 %v4461
      %v4494 = vunpack.c.l.b16 %v4462
      %v4495 = vunpack.c.l.b16 %v4463
      %v4496 = vunpack.c.l.b16 %v4464
      %v4497 = vpack.c.b16 %v4482, %v4481
      %v4498 = vpack.c.b16 %v4484, %v4483
      %v4499 = vpack.c.b16 %v4486, %v4485
      %v4500 = vpack.c.b16 %v4488, %v4487
      %v4501 = vpack.c.b16 %v4490, %v4489
      %v4502 = vpack.c.b16 %v4492, %v4491
      %v4503 = vpack.c.b16 %v4494, %v4493
      %v4504 = vpack.c.b16 %v4496, %v4495
      %4513 = vmatprep.subr.bf16.mxu0 0
      %4514 = vmatpush1.bf16.msra.mxu0 %v4497
      %4515 = vmatprep.subr.bf16.mxu0 0
      %4516 = vmatpush1.bf16.msra.mxu0 %v4498
      %4517 = vmatprep.subr.bf16.mxu0 0
      %4518 = vmatpush1.bf16.msra.mxu0 %v4499
      %4519 = vmatprep.subr.bf16.mxu0 0
      %4520 = vmatpush1.bf16.msra.mxu0 %v4500
      %4521 = vmatprep.subr.bf16.mxu0 0
      %4522 = vmatpush1.bf16.msra.mxu0 %v4501
      %4523 = vmatprep.subr.bf16.mxu0 0
      %4524 = vmatpush1.bf16.msra.mxu0 %v4502
      %4525 = vmatprep.subr.bf16.mxu0 0
      %4526 = vmatpush1.bf16.msra.mxu0 %v4503
      %4527 = vmatprep.subr.bf16.mxu0 0
      %4528 = vmatpush1.bf16.msra.mxu0 %v4504
      %4529 = vmatprep.subr.bf16.mxu0 0
      %4530 = vmatpush1.bf16.msra.mxu0 0
      %4531 = vmatprep.subr.bf16.mxu0 0
      %4532 = vmatpush1.bf16.msra.mxu0 0
      %4533 = vmatprep.subr.bf16.mxu0 0
      %4534 = vmatpush1.bf16.msra.mxu0 0
      %4535 = vmatprep.subr.bf16.mxu0 0
      %4536 = vmatpush1.bf16.msra.mxu0 0
      %4537 = vmatprep.subr.bf16.mxu0 0
      %4538 = vmatpush1.bf16.msra.mxu0 0
      %4539 = vmatprep.subr.bf16.mxu0 0
      %4540 = vmatpush1.bf16.msra.mxu0 0
      %4541 = vmatprep.subr.bf16.mxu0 0
      %4542 = vmatpush1.bf16.msra.mxu0 0
      %4543 = vmatprep.subr.bf16.mxu0 0
      %4544 = vmatpush1.bf16.msra.mxu0 0
      %4545 = vmatprep.mubr.bf16.mxu0 0
      %4546 = vmatmul.mubr.bf16.gmra.mrb[0].mxu0 %v4325
      %v4547 = vpop.f32.mrb[0].mxu0
      %v4548 = vadd.f32 0.0, %v4547
      %v4549 = vpop.f32.mrb[0].mxu0
      %v4550 = vpop.f32.mrb[0].mxu0
      %v4551 = vadd.f32 0.0, %v4550
      %v4552 = vpop.f32.mrb[0].mxu0
      %4553 = vdwg.mxu0
      %v4556 = vrot.slane %v4425, 7
      %v4557 = vrot.slane %v4428, 7
      %v4558 = vsel %vm1389, %v4556, %v4557
      %v4561 = vsel %vm1389, 0.0, %v4556
      %v4578 = vunpack.c.l.b16 %v4432
      %v4579 = vunpack.c.l.b16 %v4433
      %v4580 = vunpack.c.l.b16 %v4434
      %v4581 = vunpack.c.l.b16 %v4435
      %v4582 = vunpack.c.l.b16 %v4436
      %v4583 = vunpack.c.l.b16 %v4437
      %v4584 = vunpack.c.l.b16 %v4438
      %v4585 = vunpack.c.l.b16 %v4439
      %v4586 = vunpack.c.l.b16 %v4440
      %v4587 = vunpack.c.l.b16 %v4441
      %v4588 = vunpack.c.l.b16 %v4442
      %v4589 = vunpack.c.l.b16 %v4443
      %v4590 = vunpack.c.l.b16 %v4444
      %v4591 = vunpack.c.l.b16 %v4445
      %v4592 = vunpack.c.l.b16 %v4446
      %v4593 = vunpack.c.l.b16 %v4447
      %v4594 = vpack.c.b16 %v4579, %v4578
      %v4595 = vpack.c.b16 %v4581, %v4580
      %v4596 = vpack.c.b16 %v4583, %v4582
      %v4597 = vpack.c.b16 %v4585, %v4584
      %v4598 = vpack.c.b16 %v4587, %v4586
      %v4599 = vpack.c.b16 %v4589, %v4588
      %v4600 = vpack.c.b16 %v4591, %v4590
      %v4601 = vpack.c.b16 %v4593, %v4592
      %4610 = vmatprep.subr.bf16.mxu0 0
      %4611 = vmatpush1.bf16.msra.mxu0 %v4594
      %4612 = vmatprep.subr.bf16.mxu0 0
      %4613 = vmatpush1.bf16.msra.mxu0 %v4595
      %4614 = vmatprep.subr.bf16.mxu0 0
      %4615 = vmatpush1.bf16.msra.mxu0 %v4596
      %4616 = vmatprep.subr.bf16.mxu0 0
      %4617 = vmatpush1.bf16.msra.mxu0 %v4597
      %4618 = vmatprep.subr.bf16.mxu0 0
      %4619 = vmatpush1.bf16.msra.mxu0 %v4598
      %4620 = vmatprep.subr.bf16.mxu0 0
      %4621 = vmatpush1.bf16.msra.mxu0 %v4599
      %4622 = vmatprep.subr.bf16.mxu0 0
      %4623 = vmatpush1.bf16.msra.mxu0 %v4600
      %4624 = vmatprep.subr.bf16.mxu0 0
      %4625 = vmatpush1.bf16.msra.mxu0 %v4601
      %4626 = vmatprep.subr.bf16.mxu0 0
      %4627 = vmatpush1.bf16.msra.mxu0 0
      %4628 = vmatprep.subr.bf16.mxu0 0
      %4629 = vmatpush1.bf16.msra.mxu0 0
      %4630 = vmatprep.subr.bf16.mxu0 0
      %4631 = vmatpush1.bf16.msra.mxu0 0
      %4632 = vmatprep.subr.bf16.mxu0 0
      %4633 = vmatpush1.bf16.msra.mxu0 0
      %4634 = vmatprep.subr.bf16.mxu0 0
      %4635 = vmatpush1.bf16.msra.mxu0 0
      %4636 = vmatprep.subr.bf16.mxu0 0
      %4637 = vmatpush1.bf16.msra.mxu0 0
      %4638 = vmatprep.subr.bf16.mxu0 0
      %4639 = vmatpush1.bf16.msra.mxu0 0
      %4640 = vmatprep.subr.bf16.mxu0 0
      %4641 = vmatpush1.bf16.msra.mxu0 0
      %4642 = vmatprep.mubr.bf16.mxu0 0
      %4643 = vmatmul.mubr.bf16.gmra.mrb[0].mxu0 %v4325
      %v4644 = vpop.f32.mrb[0].mxu0
      %v4645 = vadd.f32 %v4561, %v4644
      %v4646 = vpop.f32.mrb[0].mxu0
      %v4647 = vpop.f32.mrb[0].mxu0
      %v4648 = vadd.f32 %v4558, %v4647
      %v4649 = vpop.f32.mrb[0].mxu0
      %4650 = vdwg.mxu0
      %v4653 = vrot.slane %v4548, 1
      %v4654 = vrot.slane %v4551, 1
      %v4655 = vsel %vm1534, %v4653, %v4654
      %v4658 = vsel %vm1561, %v4654, 0.0
      %v4659 = vadd.f32 %v4645, %v4655
      %v4660 = vadd.f32 %v4648, %v4658
      %v4661 = vld [vmem:[%s33] sm:$0x1]
      %v4663 = vlaneseq
      %v4664 = vshrl.u32 %v4663, 7
      %v4665 = vsub.s32 0, %v4664
      %v4666 = vrot.slane %v4661, %v4665
      %v4668 = vadd.f32 %v4659, %v4666
      %v4669 = vadd.f32 %v4660, %v4666
      %v4670 = vmax.f32 %v4668, 0.0
      %v4671 = vmax.f32 %v4669, 0.0
      %v4672 = vsel %vm4321, 0.0, %v4670
      %v4673 = vsel %vm4322, 0.0, %v4671
      %v4674 = vpack.c.bf16 %v4673, %v4672
      %v4675 = vld [vmem:[%s35] sm:$0xf]
      %v4676 = vld [vmem:[%s35 + $0x4] sm:$0xf]
      %v4677 = vld [vmem:[%s35 + $0x8] sm:$0xf]
      %v4678 = vld [vmem:[%s35 + $0xc] sm:$0xf]
      %v4679 = vld [vmem:[%s35 + $0x10] sm:$0xf]
      %v4680 = vld [vmem:[%s35 + $0x14] sm:$0xf]
      %v4681 = vld [vmem:[%s35 + $0x18] sm:$0xf]
      %v4682 = vld [vmem:[%s35 + $0x1c] sm:$0xf]
      %v4683 = vld [vmem:[%s35 + $0x20] sm:$0xf]
      %v4684 = vld [vmem:[%s35 + $0x24] sm:$0xf]
      %v4685 = vld [vmem:[%s35 + $0x28] sm:$0xf]
      %v4686 = vld [vmem:[%s35 + $0x2c] sm:$0xf]
      %v4687 = vld [vmem:[%s35 + $0x30] sm:$0xf]
      %v4688 = vld [vmem:[%s35 + $0x34] sm:$0xf]
      %v4689 = vld [vmem:[%s35 + $0x38] sm:$0xf]
      %v4690 = vld [vmem:[%s35 + $0x3c] sm:$0xf]
      %v4707 = vunpack.c.l.b16 %v4675
      %v4708 = vunpack.c.l.b16 %v4676
      %v4709 = vunpack.c.l.b16 %v4677
      %v4710 = vunpack.c.l.b16 %v4678
      %v4711 = vunpack.c.l.b16 %v4679
      %v4712 = vunpack.c.l.b16 %v4680
      %v4713 = vunpack.c.l.b16 %v4681
      %v4714 = vunpack.c.l.b16 %v4682
      %v4715 = vunpack.c.l.b16 %v4683
      %v4716 = vunpack.c.l.b16 %v4684
      %v4717 = vunpack.c.l.b16 %v4685
      %v4718 = vunpack.c.l.b16 %v4686
      %v4719 = vunpack.c.l.b16 %v4687
      %v4720 = vunpack.c.l.b16 %v4688
      %v4721 = vunpack.c.l.b16 %v4689
      %v4722 = vunpack.c.l.b16 %v4690
      %v4723 = vpack.c.b16 %v4708, %v4707
      %v4724 = vpack.c.b16 %v4710, %v4709
      %v4725 = vpack.c.b16 %v4712, %v4711
      %v4726 = vpack.c.b16 %v4714, %v4713
      %v4727 = vpack.c.b16 %v4716, %v4715
      %v4728 = vpack.c.b16 %v4718, %v4717
      %v4729 = vpack.c.b16 %v4720, %v4719
      %v4730 = vpack.c.b16 %v4722, %v4721
      %4739 = vmatprep.subr.bf16.mxu0 0
      %4740 = vmatpush1.bf16.msra.mxu0 %v4723
      %4741 = vmatprep.subr.bf16.mxu0 0
      %4742 = vmatpush1.bf16.msra.mxu0 %v4724
      %4743 = vmatprep.subr.bf16.mxu0 0
      %4744 = vmatpush1.bf16.msra.mxu0 %v4725
      %4745 = vmatprep.subr.bf16.mxu0 0
      %4746 = vmatpush1.bf16.msra.mxu0 %v4726
      %4747 = vmatprep.subr.bf16.mxu0 0
      %4748 = vmatpush1.bf16.msra.mxu0 %v4727
      %4749 = vmatprep.subr.bf16.mxu0 0
      %4750 = vmatpush1.bf16.msra.mxu0 %v4728
      %4751 = vmatprep.subr.bf16.mxu0 0
      %4752 = vmatpush1.bf16.msra.mxu0 %v4729
      %4753 = vmatprep.subr.bf16.mxu0 0
      %4754 = vmatpush1.bf16.msra.mxu0 %v4730
      %4755 = vmatprep.subr.bf16.mxu0 0
      %4756 = vmatpush1.bf16.msra.mxu0 0
      %4757 = vmatprep.subr.bf16.mxu0 0
      %4758 = vmatpush1.bf16.msra.mxu0 0
      %4759 = vmatprep.subr.bf16.mxu0 0
      %4760 = vmatpush1.bf16.msra.mxu0 0
      %4761 = vmatprep.subr.bf16.mxu0 0
      %4762 = vmatpush1.bf16.msra.mxu0 0
      %4763 = vmatprep.subr.bf16.mxu0 0
      %4764 = vmatpush1.bf16.msra.mxu0 0
      %4765 = vmatprep.subr.bf16.mxu0 0
      %4766 = vmatpush1.bf16.msra.mxu0 0
      %4767 = vmatprep.subr.bf16.mxu0 0
      %4768 = vmatpush1.bf16.msra.mxu0 0
      %4769 = vmatprep.subr.bf16.mxu0 0
      %4770 = vmatpush1.bf16.msra.mxu0 0
      %4771 = vmatprep.mubr.bf16.mxu0 0
      %4772 = vmatmul.mubr.bf16.gmra.mrb[0].mxu0 %v4674
      %v4773 = vpop.f32.mrb[0].mxu0
      %v4774 = vadd.f32 0.0, %v4773
      %v4775 = vpop.f32.mrb[0].mxu0
      %v4776 = vpop.f32.mrb[0].mxu0
      %v4777 = vadd.f32 0.0, %v4776
      %v4778 = vpop.f32.mrb[0].mxu0
      %4779 = vdwg.mxu0
      %s4780 = scalar_lea.vmem %s35, 64
      %v4781 = vld [vmem:[%s4780] sm:$0xf]
      %v4782 = vld [vmem:[%s4780 + $0x4] sm:$0xf]
      %v4783 = vld [vmem:[%s4780 + $0x8] sm:$0xf]
      %v4784 = vld [vmem:[%s4780 + $0xc] sm:$0xf]
      %v4785 = vld [vmem:[%s4780 + $0x10] sm:$0xf]
      %v4786 = vld [vmem:[%s4780 + $0x14] sm:$0xf]
      %v4787 = vld [vmem:[%s4780 + $0x18] sm:$0xf]
      %v4788 = vld [vmem:[%s4780 + $0x1c] sm:$0xf]
      %v4789 = vld [vmem:[%s4780 + $0x20] sm:$0xf]
      %v4790 = vld [vmem:[%s4780 + $0x24] sm:$0xf]
      %v4791 = vld [vmem:[%s4780 + $0x28] sm:$0xf]
      %v4792 = vld [vmem:[%s4780 + $0x2c] sm:$0xf]
      %v4793 = vld [vmem:[%s4780 + $0x30] sm:$0xf]
      %v4794 = vld [vmem:[%s4780 + $0x34] sm:$0xf]
      %v4795 = vld [vmem:[%s4780 + $0x38] sm:$0xf]
      %v4796 = vld [vmem:[%s4780 + $0x3c] sm:$0xf]
      %s4797 = scalar_lea.vmem %s35, 128
      %v4798 = vld [vmem:[%s4797] sm:$0xf]
      %v4799 = vld [vmem:[%s4797 + $0x4] sm:$0xf]
      %v4800 = vld [vmem:[%s4797 + $0x8] sm:$0xf]
      %v4801 = vld [vmem:[%s4797 + $0xc] sm:$0xf]
      %v4802 = vld [vmem:[%s4797 + $0x10] sm:$0xf]
      %v4803 = vld [vmem:[%s4797 + $0x14] sm:$0xf]
      %v4804 = vld [vmem:[%s4797 + $0x18] sm:$0xf]
      %v4805 = vld [vmem:[%s4797 + $0x1c] sm:$0xf]
      %v4806 = vld [vmem:[%s4797 + $0x20] sm:$0xf]
      %v4807 = vld [vmem:[%s4797 + $0x24] sm:$0xf]
      %v4808 = vld [vmem:[%s4797 + $0x28] sm:$0xf]
      %v4809 = vld [vmem:[%s4797 + $0x2c] sm:$0xf]
      %v4810 = vld [vmem:[%s4797 + $0x30] sm:$0xf]
      %v4811 = vld [vmem:[%s4797 + $0x34] sm:$0xf]
      %v4812 = vld [vmem:[%s4797 + $0x38] sm:$0xf]
      %v4813 = vld [vmem:[%s4797 + $0x3c] sm:$0xf]
      %v4830 = vunpack.c.l.b16 %v4798
      %v4831 = vunpack.c.l.b16 %v4799
      %v4832 = vunpack.c.l.b16 %v4800
      %v4833 = vunpack.c.l.b16 %v4801
      %v4834 = vunpack.c.l.b16 %v4802
      %v4835 = vunpack.c.l.b16 %v4803
      %v4836 = vunpack.c.l.b16 %v4804
      %v4837 = vunpack.c.l.b16 %v4805
      %v4838 = vunpack.c.l.b16 %v4806
      %v4839 = vunpack.c.l.b16 %v4807
      %v4840 = vunpack.c.l.b16 %v4808
      %v4841 = vunpack.c.l.b16 %v4809
      %v4842 = vunpack.c.l.b16 %v4810
      %v4843 = vunpack.c.l.b16 %v4811
      %v4844 = vunpack.c.l.b16 %v4812
      %v4845 = vunpack.c.l.b16 %v4813
      %v4846 = vpack.c.b16 %v4831, %v4830
      %v4847 = vpack.c.b16 %v4833, %v4832
      %v4848 = vpack.c.b16 %v4835, %v4834
      %v4849 = vpack.c.b16 %v4837, %v4836
      %v4850 = vpack.c.b16 %v4839, %v4838
      %v4851 = vpack.c.b16 %v4841, %v4840
      %v4852 = vpack.c.b16 %v4843, %v4842
      %v4853 = vpack.c.b16 %v4845, %v4844
      %4862 = vmatprep.subr.bf16.mxu0 0
      %4863 = vmatpush1.bf16.msra.mxu0 %v4846
      %4864 = vmatprep.subr.bf16.mxu0 0
      %4865 = vmatpush1.bf16.msra.mxu0 %v4847
      %4866 = vmatprep.subr.bf16.mxu0 0
      %4867 = vmatpush1.bf16.msra.mxu0 %v4848
      %4868 = vmatprep.subr.bf16.mxu0 0
      %4869 = vmatpush1.bf16.msra.mxu0 %v4849
      %4870 = vmatprep.subr.bf16.mxu0 0
      %4871 = vmatpush1.bf16.msra.mxu0 %v4850
      %4872 = vmatprep.subr.bf16.mxu0 0
      %4873 = vmatpush1.bf16.msra.mxu0 %v4851
      %4874 = vmatprep.subr.bf16.mxu0 0
      %4875 = vmatpush1.bf16.msra.mxu0 %v4852
      %4876 = vmatprep.subr.bf16.mxu0 0
      %4877 = vmatpush1.bf16.msra.mxu0 %v4853
      %4878 = vmatprep.subr.bf16.mxu0 0
      %4879 = vmatpush1.bf16.msra.mxu0 0
      %4880 = vmatprep.subr.bf16.mxu0 0
      %4881 = vmatpush1.bf16.msra.mxu0 0
      %4882 = vmatprep.subr.bf16.mxu0 0
      %4883 = vmatpush1.bf16.msra.mxu0 0
      %4884 = vmatprep.subr.bf16.mxu0 0
      %4885 = vmatpush1.bf16.msra.mxu0 0
      %4886 = vmatprep.subr.bf16.mxu0 0
      %4887 = vmatpush1.bf16.msra.mxu0 0
      %4888 = vmatprep.subr.bf16.mxu0 0
      %4889 = vmatpush1.bf16.msra.mxu0 0
      %4890 = vmatprep.subr.bf16.mxu0 0
      %4891 = vmatpush1.bf16.msra.mxu0 0
      %4892 = vmatprep.subr.bf16.mxu0 0
      %4893 = vmatpush1.bf16.msra.mxu0 0
      %4894 = vmatprep.mubr.bf16.mxu0 0
      %4895 = vmatmul.mubr.bf16.gmra.mrb[0].mxu0 %v4674
      %v4896 = vpop.f32.mrb[0].mxu0
      %v4897 = vadd.f32 0.0, %v4896
      %v4898 = vpop.f32.mrb[0].mxu0
      %v4899 = vpop.f32.mrb[0].mxu0
      %v4900 = vadd.f32 0.0, %v4899
      %v4901 = vpop.f32.mrb[0].mxu0
      %4902 = vdwg.mxu0
      %v4905 = vrot.slane %v4774, 7
      %v4906 = vrot.slane %v4777, 7
      %v4907 = vsel %vm1389, %v4905, %v4906
      %v4910 = vsel %vm1389, 0.0, %v4905
      %v4927 = vunpack.c.l.b16 %v4781
      %v4928 = vunpack.c.l.b16 %v4782
      %v4929 = vunpack.c.l.b16 %v4783
      %v4930 = vunpack.c.l.b16 %v4784
      %v4931 = vunpack.c.l.b16 %v4785
      %v4932 = vunpack.c.l.b16 %v4786
      %v4933 = vunpack.c.l.b16 %v4787
      %v4934 = vunpack.c.l.b16 %v4788
      %v4935 = vunpack.c.l.b16 %v4789
      %v4936 = vunpack.c.l.b16 %v4790
      %v4937 = vunpack.c.l.b16 %v4791
      %v4938 = vunpack.c.l.b16 %v4792
      %v4939 = vunpack.c.l.b16 %v4793
      %v4940 = vunpack.c.l.b16 %v4794
      %v4941 = vunpack.c.l.b16 %v4795
      %v4942 = vunpack.c.l.b16 %v4796
      %v4943 = vpack.c.b16 %v4928, %v4927
      %v4944 = vpack.c.b16 %v4930, %v4929
      %v4945 = vpack.c.b16 %v4932, %v4931
      %v4946 = vpack.c.b16 %v4934, %v4933
      %v4947 = vpack.c.b16 %v4936, %v4935
      %v4948 = vpack.c.b16 %v4938, %v4937
      %v4949 = vpack.c.b16 %v4940, %v4939
      %v4950 = vpack.c.b16 %v4942, %v4941
      %4959 = vmatprep.subr.bf16.mxu0 0
      %4960 = vmatpush1.bf16.msra.mxu0 %v4943
      %4961 = vmatprep.subr.bf16.mxu0 0
      %4962 = vmatpush1.bf16.msra.mxu0 %v4944
      %4963 = vmatprep.subr.bf16.mxu0 0
      %4964 = vmatpush1.bf16.msra.mxu0 %v4945
      %4965 = vmatprep.subr.bf16.mxu0 0
      %4966 = vmatpush1.bf16.msra.mxu0 %v4946
      %4967 = vmatprep.subr.bf16.mxu0 0
      %4968 = vmatpush1.bf16.msra.mxu0 %v4947
      %4969 = vmatprep.subr.bf16.mxu0 0
      %4970 = vmatpush1.bf16.msra.mxu0 %v4948
      %4971 = vmatprep.subr.bf16.mxu0 0
      %4972 = vmatpush1.bf16.msra.mxu0 %v4949
      %4973 = vmatprep.subr.bf16.mxu0 0
      %4974 = vmatpush1.bf16.msra.mxu0 %v4950
      %4975 = vmatprep.subr.bf16.mxu0 0
      %4976 = vmatpush1.bf16.msra.mxu0 0
      %4977 = vmatprep.subr.bf16.mxu0 0
      %4978 = vmatpush1.bf16.msra.mxu0 0
      %4979 = vmatprep.subr.bf16.mxu0 0
      %4980 = vmatpush1.bf16.msra.mxu0 0
      %4981 = vmatprep.subr.bf16.mxu0 0
      %4982 = vmatpush1.bf16.msra.mxu0 0
      %4983 = vmatprep.subr.bf16.mxu0 0
      %4984 = vmatpush1.bf16.msra.mxu0 0
      %4985 = vmatprep.subr.bf16.mxu0 0
      %4986 = vmatpush1.bf16.msra.mxu0 0
      %4987 = vmatprep.subr.bf16.mxu0 0
      %4988 = vmatpush1.bf16.msra.mxu0 0
      %4989 = vmatprep.subr.bf16.mxu0 0
      %4990 = vmatpush1.bf16.msra.mxu0 0
      %4991 = vmatprep.mubr.bf16.mxu0 0
      %4992 = vmatmul.mubr.bf16.gmra.mrb[0].mxu0 %v4674
      %v4993 = vpop.f32.mrb[0].mxu0
      %v4994 = vadd.f32 %v4910, %v4993
      %v4995 = vpop.f32.mrb[0].mxu0
      %v4996 = vpop.f32.mrb[0].mxu0
      %v4997 = vadd.f32 %v4907, %v4996
      %v4998 = vpop.f32.mrb[0].mxu0
      %4999 = vdwg.mxu0
      %v5002 = vrot.slane %v4897, 1
      %v5003 = vrot.slane %v4900, 1
      %v5004 = vsel %vm1534, %v5002, %v5003
      %v5007 = vsel %vm1561, %v5003, 0.0
      %v5008 = vadd.f32 %v4994, %v5004
      %v5009 = vadd.f32 %v4997, %v5007
      %v5010 = vld [vmem:[%s37] sm:$0x1]
      %v5012 = vlaneseq
      %v5013 = vshrl.u32 %v5012, 7
      %v5014 = vsub.s32 0, %v5013
      %v5015 = vrot.slane %v5010, %v5014
      %v5017 = vadd.f32 %v5008, %v5015
      %v5018 = vadd.f32 %v5009, %v5015
      %v5019 = vmax.f32 %v5017, 0.0
      %v5020 = vmax.f32 %v5018, 0.0
      %v5021 = vsel %vm4321, 0.0, %v5019
      %v5022 = vsel %vm4322, 0.0, %v5020
      %v5023 = vpack.c.bf16 %v5022, %v5021
      %v5024 = vld [vmem:[%s39] sm:$0xf]
      %v5025 = vld [vmem:[%s39 + $0x4] sm:$0xf]
      %v5026 = vld [vmem:[%s39 + $0x8] sm:$0xf]
      %v5027 = vld [vmem:[%s39 + $0xc] sm:$0xf]
      %v5028 = vld [vmem:[%s39 + $0x10] sm:$0xf]
      %v5029 = vld [vmem:[%s39 + $0x14] sm:$0xf]
      %v5030 = vld [vmem:[%s39 + $0x18] sm:$0xf]
      %v5031 = vld [vmem:[%s39 + $0x1c] sm:$0xf]
      %v5032 = vld [vmem:[%s39 + $0x20] sm:$0xf]
      %v5033 = vld [vmem:[%s39 + $0x24] sm:$0xf]
      %v5034 = vld [vmem:[%s39 + $0x28] sm:$0xf]
      %v5035 = vld [vmem:[%s39 + $0x2c] sm:$0xf]
      %v5036 = vld [vmem:[%s39 + $0x30] sm:$0xf]
      %v5037 = vld [vmem:[%s39 + $0x34] sm:$0xf]
      %v5038 = vld [vmem:[%s39 + $0x38] sm:$0xf]
      %v5039 = vld [vmem:[%s39 + $0x3c] sm:$0xf]
      %v5056 = vunpack.c.l.b16 %v5024
      %v5057 = vunpack.c.l.b16 %v5025
      %v5058 = vunpack.c.l.b16 %v5026
      %v5059 = vunpack.c.l.b16 %v5027
      %v5060 = vunpack.c.l.b16 %v5028
      %v5061 = vunpack.c.l.b16 %v5029
      %v5062 = vunpack.c.l.b16 %v5030
      %v5063 = vunpack.c.l.b16 %v5031
      %v5064 = vunpack.c.l.b16 %v5032
      %v5065 = vunpack.c.l.b16 %v5033
      %v5066 = vunpack.c.l.b16 %v5034
      %v5067 = vunpack.c.l.b16 %v5035
      %v5068 = vunpack.c.l.b16 %v5036
      %v5069 = vunpack.c.l.b16 %v5037
      %v5070 = vunpack.c.l.b16 %v5038
      %v5071 = vunpack.c.l.b16 %v5039
      %v5072 = vpack.c.b16 %v5057, %v5056
      %v5073 = vpack.c.b16 %v5059, %v5058
      %v5074 = vpack.c.b16 %v5061, %v5060
      %v5075 = vpack.c.b16 %v5063, %v5062
      %v5076 = vpack.c.b16 %v5065, %v5064
      %v5077 = vpack.c.b16 %v5067, %v5066
      %v5078 = vpack.c.b16 %v5069, %v5068
      %v5079 = vpack.c.b16 %v5071, %v5070
      %5088 = vmatprep.subr.bf16.mxu0 0
      %5089 = vmatpush1.bf16.msra.mxu0 %v5072
      %5090 = vmatprep.subr.bf16.mxu0 0
      %5091 = vmatpush1.bf16.msra.mxu0 %v5073
      %5092 = vmatprep.subr.bf16.mxu0 0
      %5093 = vmatpush1.bf16.msra.mxu0 %v5074
      %5094 = vmatprep.subr.bf16.mxu0 0
      %5095 = vmatpush1.bf16.msra.mxu0 %v5075
      %5096 = vmatprep.subr.bf16.mxu0 0
      %5097 = vmatpush1.bf16.msra.mxu0 %v5076
      %5098 = vmatprep.subr.bf16.mxu0 0
      %5099 = vmatpush1.bf16.msra.mxu0 %v5077
      %5100 = vmatprep.subr.bf16.mxu0 0
      %5101 = vmatpush1.bf16.msra.mxu0 %v5078
      %5102 = vmatprep.subr.bf16.mxu0 0
      %5103 = vmatpush1.bf16.msra.mxu0 %v5079
      %5104 = vmatprep.subr.bf16.mxu0 0
      %5105 = vmatpush1.bf16.msra.mxu0 0
      %5106 = vmatprep.subr.bf16.mxu0 0
      %5107 = vmatpush1.bf16.msra.mxu0 0
      %5108 = vmatprep.subr.bf16.mxu0 0
      %5109 = vmatpush1.bf16.msra.mxu0 0
      %5110 = vmatprep.subr.bf16.mxu0 0
      %5111 = vmatpush1.bf16.msra.mxu0 0
      %5112 = vmatprep.subr.bf16.mxu0 0
      %5113 = vmatpush1.bf16.msra.mxu0 0
      %5114 = vmatprep.subr.bf16.mxu0 0
      %5115 = vmatpush1.bf16.msra.mxu0 0
      %5116 = vmatprep.subr.bf16.mxu0 0
      %5117 = vmatpush1.bf16.msra.mxu0 0
      %5118 = vmatprep.subr.bf16.mxu0 0
      %5119 = vmatpush1.bf16.msra.mxu0 0
      %5120 = vmatprep.mubr.bf16.mxu0 0
      %5121 = vmatmul.mubr.bf16.gmra.mrb[0].mxu0 %v5023
      %v5122 = vpop.f32.mrb[0].mxu0
      %v5123 = vadd.f32 0.0, %v5122
      %v5124 = vpop.f32.mrb[0].mxu0
      %v5125 = vpop.f32.mrb[0].mxu0
      %v5126 = vadd.f32 0.0, %v5125
      %v5127 = vpop.f32.mrb[0].mxu0
      %5128 = vdwg.mxu0
      %s5129 = scalar_lea.vmem %s39, 64
      %v5130 = vld [vmem:[%s5129] sm:$0xf]
      %v5131 = vld [vmem:[%s5129 + $0x4] sm:$0xf]
      %v5132 = vld [vmem:[%s5129 + $0x8] sm:$0xf]
      %v5133 = vld [vmem:[%s5129 + $0xc] sm:$0xf]
      %v5134 = vld [vmem:[%s5129 + $0x10] sm:$0xf]
      %v5135 = vld [vmem:[%s5129 + $0x14] sm:$0xf]
      %v5136 = vld [vmem:[%s5129 + $0x18] sm:$0xf]
      %v5137 = vld [vmem:[%s5129 + $0x1c] sm:$0xf]
      %v5138 = vld [vmem:[%s5129 + $0x20] sm:$0xf]
      %v5139 = vld [vmem:[%s5129 + $0x24] sm:$0xf]
      %v5140 = vld [vmem:[%s5129 + $0x28] sm:$0xf]
      %v5141 = vld [vmem:[%s5129 + $0x2c] sm:$0xf]
      %v5142 = vld [vmem:[%s5129 + $0x30] sm:$0xf]
      %v5143 = vld [vmem:[%s5129 + $0x34] sm:$0xf]
      %v5144 = vld [vmem:[%s5129 + $0x38] sm:$0xf]
      %v5145 = vld [vmem:[%s5129 + $0x3c] sm:$0xf]
      %s5146 = scalar_lea.vmem %s39, 128
      %v5147 = vld [vmem:[%s5146] sm:$0xf]
      %v5148 = vld [vmem:[%s5146 + $0x4] sm:$0xf]
      %v5149 = vld [vmem:[%s5146 + $0x8] sm:$0xf]
      %v5150 = vld [vmem:[%s5146 + $0xc] sm:$0xf]
      %v5151 = vld [vmem:[%s5146 + $0x10] sm:$0xf]
      %v5152 = vld [vmem:[%s5146 + $0x14] sm:$0xf]
      %v5153 = vld [vmem:[%s5146 + $0x18] sm:$0xf]
      %v5154 = vld [vmem:[%s5146 + $0x1c] sm:$0xf]
      %v5155 = vld [vmem:[%s5146 + $0x20] sm:$0xf]
      %v5156 = vld [vmem:[%s5146 + $0x24] sm:$0xf]
      %v5157 = vld [vmem:[%s5146 + $0x28] sm:$0xf]
      %v5158 = vld [vmem:[%s5146 + $0x2c] sm:$0xf]
      %v5159 = vld [vmem:[%s5146 + $0x30] sm:$0xf]
      %v5160 = vld [vmem:[%s5146 + $0x34] sm:$0xf]
      %v5161 = vld [vmem:[%s5146 + $0x38] sm:$0xf]
      %v5162 = vld [vmem:[%s5146 + $0x3c] sm:$0xf]
      %v5179 = vunpack.c.l.b16 %v5147
      %v5180 = vunpack.c.l.b16 %v5148
      %v5181 = vunpack.c.l.b16 %v5149
      %v5182 = vunpack.c.l.b16 %v5150
      %v5183 = vunpack.c.l.b16 %v5151
      %v5184 = vunpack.c.l.b16 %v5152
      %v5185 = vunpack.c.l.b16 %v5153
      %v5186 = vunpack.c.l.b16 %v5154
      %v5187 = vunpack.c.l.b16 %v5155
      %v5188 = vunpack.c.l.b16 %v5156
      %v5189 = vunpack.c.l.b16 %v5157
      %v5190 = vunpack.c.l.b16 %v5158
      %v5191 = vunpack.c.l.b16 %v5159
      %v5192 = vunpack.c.l.b16 %v5160
      %v5193 = vunpack.c.l.b16 %v5161
      %v5194 = vunpack.c.l.b16 %v5162
      %v5195 = vpack.c.b16 %v5180, %v5179
      %v5196 = vpack.c.b16 %v5182, %v5181
      %v5197 = vpack.c.b16 %v5184, %v5183
      %v5198 = vpack.c.b16 %v5186, %v5185
      %v5199 = vpack.c.b16 %v5188, %v5187
      %v5200 = vpack.c.b16 %v5190, %v5189
      %v5201 = vpack.c.b16 %v5192, %v5191
      %v5202 = vpack.c.b16 %v5194, %v5193
      %5211 = vmatprep.subr.bf16.mxu0 0
      %5212 = vmatpush1.bf16.msra.mxu0 %v5195
      %5213 = vmatprep.subr.bf16.mxu0 0
      %5214 = vmatpush1.bf16.msra.mxu0 %v5196
      %5215 = vmatprep.subr.bf16.mxu0 0
      %5216 = vmatpush1.bf16.msra.mxu0 %v5197
      %5217 = vmatprep.subr.bf16.mxu0 0
      %5218 = vmatpush1.bf16.msra.mxu0 %v5198
      %5219 = vmatprep.subr.bf16.mxu0 0
      %5220 = vmatpush1.bf16.msra.mxu0 %v5199
      %5221 = vmatprep.subr.bf16.mxu0 0
      %5222 = vmatpush1.bf16.msra.mxu0 %v5200
      %5223 = vmatprep.subr.bf16.mxu0 0
      %5224 = vmatpush1.bf16.msra.mxu0 %v5201
      %5225 = vmatprep.subr.bf16.mxu0 0
      %5226 = vmatpush1.bf16.msra.mxu0 %v5202
      %5227 = vmatprep.subr.bf16.mxu0 0
      %5228 = vmatpush1.bf16.msra.mxu0 0
      %5229 = vmatprep.subr.bf16.mxu0 0
      %5230 = vmatpush1.bf16.msra.mxu0 0
      %5231 = vmatprep.subr.bf16.mxu0 0
      %5232 = vmatpush1.bf16.msra.mxu0 0
      %5233 = vmatprep.subr.bf16.mxu0 0
      %5234 = vmatpush1.bf16.msra.mxu0 0
      %5235 = vmatprep.subr.bf16.mxu0 0
      %5236 = vmatpush1.bf16.msra.mxu0 0
      %5237 = vmatprep.subr.bf16.mxu0 0
      %5238 = vmatpush1.bf16.msra.mxu0 0
      %5239 = vmatprep.subr.bf16.mxu0 0
      %5240 = vmatpush1.bf16.msra.mxu0 0
      %5241 = vmatprep.subr.bf16.mxu0 0
      %5242 = vmatpush1.bf16.msra.mxu0 0
      %5243 = vmatprep.mubr.bf16.mxu0 0
      %5244 = vmatmul.mubr.bf16.gmra.mrb[0].mxu0 %v5023
      %v5245 = vpop.f32.mrb[0].mxu0
      %v5246 = vadd.f32 0.0, %v5245
      %v5247 = vpop.f32.mrb[0].mxu0
      %v5248 = vpop.f32.mrb[0].mxu0
      %v5249 = vadd.f32 0.0, %v5248
      %v5250 = vpop.f32.mrb[0].mxu0
      %5251 = vdwg.mxu0
      %v5254 = vrot.slane %v5123, 7
      %v5255 = vrot.slane %v5126, 7
      %v5256 = vsel %vm1389, %v5254, %v5255
      %v5259 = vsel %vm1389, 0.0, %v5254
      %v5276 = vunpack.c.l.b16 %v5130
      %v5277 = vunpack.c.l.b16 %v5131
      %v5278 = vunpack.c.l.b16 %v5132
      %v5279 = vunpack.c.l.b16 %v5133
      %v5280 = vunpack.c.l.b16 %v5134
      %v5281 = vunpack.c.l.b16 %v5135
      %v5282 = vunpack.c.l.b16 %v5136
      %v5283 = vunpack.c.l.b16 %v5137
      %v5284 = vunpack.c.l.b16 %v5138
      %v5285 = vunpack.c.l.b16 %v5139
      %v5286 = vunpack.c.l.b16 %v5140
      %v5287 = vunpack.c.l.b16 %v5141
      %v5288 = vunpack.c.l.b16 %v5142
      %v5289 = vunpack.c.l.b16 %v5143
      %v5290 = vunpack.c.l.b16 %v5144
      %v5291 = vunpack.c.l.b16 %v5145
      %v5292 = vpack.c.b16 %v5277, %v5276
      %v5293 = vpack.c.b16 %v5279, %v5278
      %v5294 = vpack.c.b16 %v5281, %v5280
      %v5295 = vpack.c.b16 %v5283, %v5282
      %v5296 = vpack.c.b16 %v5285, %v5284
      %v5297 = vpack.c.b16 %v5287, %v5286
      %v5298 = vpack.c.b16 %v5289, %v5288
      %v5299 = vpack.c.b16 %v5291, %v5290
      %5308 = vmatprep.subr.bf16.mxu0 0
      %5309 = vmatpush1.bf16.msra.mxu0 %v5292
      %5310 = vmatprep.subr.bf16.mxu0 0
      %5311 = vmatpush1.bf16.msra.mxu0 %v5293
      %5312 = vmatprep.subr.bf16.mxu0 0
      %5313 = vmatpush1.bf16.msra.mxu0 %v5294
      %5314 = vmatprep.subr.bf16.mxu0 0
      %5315 = vmatpush1.bf16.msra.mxu0 %v5295
      %5316 = vmatprep.subr.bf16.mxu0 0
      %5317 = vmatpush1.bf16.msra.mxu0 %v5296
      %5318 = vmatprep.subr.bf16.mxu0 0
      %5319 = vmatpush1.bf16.msra.mxu0 %v5297
      %5320 = vmatprep.subr.bf16.mxu0 0
      %5321 = vmatpush1.bf16.msra.mxu0 %v5298
      %5322 = vmatprep.subr.bf16.mxu0 0
      %5323 = vmatpush1.bf16.msra.mxu0 %v5299
      %5324 = vmatprep.subr.bf16.mxu0 0
      %5325 = vmatpush1.bf16.msra.mxu0 0
      %5326 = vmatprep.subr.bf16.mxu0 0
      %5327 = vmatpush1.bf16.msra.mxu0 0
      %5328 = vmatprep.subr.bf16.mxu0 0
      %5329 = vmatpush1.bf16.msra.mxu0 0
      %5330 = vmatprep.subr.bf16.mxu0 0
      %5331 = vmatpush1.bf16.msra.mxu0 0
      %5332 = vmatprep.subr.bf16.mxu0 0
      %5333 = vmatpush1.bf16.msra.mxu0 0
      %5334 = vmatprep.subr.bf16.mxu0 0
      %5335 = vmatpush1.bf16.msra.mxu0 0
      %5336 = vmatprep.subr.bf16.mxu0 0
      %5337 = vmatpush1.bf16.msra.mxu0 0
      %5338 = vmatprep.subr.bf16.mxu0 0
      %5339 = vmatpush1.bf16.msra.mxu0 0
      %5340 = vmatprep.mubr.bf16.mxu0 0
      %5341 = vmatmul.mubr.bf16.gmra.mrb[0].mxu0 %v5023
      %v5342 = vpop.f32.mrb[0].mxu0
      %v5343 = vadd.f32 %v5259, %v5342
      %v5344 = vpop.f32.mrb[0].mxu0
      %v5345 = vpop.f32.mrb[0].mxu0
      %v5346 = vadd.f32 %v5256, %v5345
      %v5347 = vpop.f32.mrb[0].mxu0
      %5348 = vdwg.mxu0
      %v5351 = vrot.slane %v5246, 1
      %v5352 = vrot.slane %v5249, 1
      %v5353 = vsel %vm1534, %v5351, %v5352
      %v5356 = vsel %vm1561, %v5352, 0.0
      %v5357 = vadd.f32 %v5343, %v5353
      %v5358 = vadd.f32 %v5346, %v5356
      %v5359 = vld [vmem:[%s41] sm:$0x1]
      %v5361 = vlaneseq
      %v5362 = vshrl.u32 %v5361, 7
      %v5363 = vsub.s32 0, %v5362
      %v5364 = vrot.slane %v5359, %v5363
      %v5366 = vadd.f32 %v5357, %v5364
      %v5367 = vadd.f32 %v5358, %v5364
      %v5368 = vmax.f32 %v5366, 0.0
      %v5369 = vmax.f32 %v5367, 0.0
      %5370 = vst [vmem:[#allocation2] sm:$0xff] %v5368
      %5371 = vst [vmem:[#allocation2 + $0x8] sm:$0xf] %v5369
      %v5372 = vld [vmem:[%s2136] ss:$2 sm:$0x3]
      %v5373 = vld [vmem:[%s2140] ss:$2 sm:$0x3]
      %v5374 = vmax.f32 %v5372, %v5373
      %5375 = vrot.lane.b32.xlu0 %v5374, 96
      %v5376 = vpop.permute.xlu0 %5375
      %v5377 = vmax.f32 %v5374, %v5376
      %s5378 = scalar_lea.vmem [#allocation2], 7
      %v5379 = vld [vmem:[%s5378] ss:$2 sm:$0x3]
      %s5380 = scalar_lea.vmem [#allocation2], 8
      %v5381 = vld [vmem:[%s5380] ss:$2 sm:$0x3]
      %v5382 = vmax.f32 %v5379, %v5381
      %5383 = vrot.lane.b32.xlu0 %v5382, 96
      %v5384 = vpop.permute.xlu0 %5383
      %v5385 = vmax.f32 %v5382, %v5384
      %v5387 = vrot.slane %v5377, 7
      %v5390 = vrot.slane %v5385, 3
      %v5392 = vsel %vm1389, 0.0, %v5387
      %v5393 = vsel %vm1561, %v5392, 0.0
      %vm5394 = vcmask 1043456
      %v5395 = vsel %vm5394, %v5393, 0.0
      %v5396 = vsel %vm4305, %v5395, %v5390
      %v5397 = vsel %vm1534, %v5396, 0.0
      %vm5398 = vcmp.eq.s32.totalorder %v1024, 3
      %vm5399 = vcmp.eq.s32.totalorder %v1024, 4
      %vm5400 = vcmp.eq.s32.totalorder %v1024, 7
      %vm5401 = vmor %vm1033, %vm5398
      %vm5402 = vmor %vm5401, %vm5399
      %vm5403 = vmor %vm5402, %vm5400
      %v5404 = vsel %vm5403, 0.0, %v5397
      %v5405 = vpack.c.bf16 %v5404, %v5404
      %v5406 = vld [vmem:[%s43] sm:$0xf]
      %v5407 = vld [vmem:[%s43 + $0x4] sm:$0xf]
      %v5408 = vld [vmem:[%s43 + $0x8] sm:$0xf]
      %v5409 = vld [vmem:[%s43 + $0xc] sm:$0xf]
      %v5410 = vld [vmem:[%s43 + $0x10] sm:$0xf]
      %v5411 = vld [vmem:[%s43 + $0x14] sm:$0xf]
      %v5412 = vld [vmem:[%s43 + $0x18] sm:$0xf]
      %v5413 = vld [vmem:[%s43 + $0x1c] sm:$0xf]
      %v5414 = vld [vmem:[%s43 + $0x20] sm:$0xf]
      %v5415 = vld [vmem:[%s43 + $0x24] sm:$0xf]
      %v5416 = vld [vmem:[%s43 + $0x28] sm:$0xf]
      %v5417 = vld [vmem:[%s43 + $0x2c] sm:$0xf]
      %v5418 = vld [vmem:[%s43 + $0x30] sm:$0xf]
      %v5419 = vld [vmem:[%s43 + $0x34] sm:$0xf]
      %v5420 = vld [vmem:[%s43 + $0x38] sm:$0xf]
      %v5421 = vld [vmem:[%s43 + $0x3c] sm:$0xf]
      %v5438 = vunpack.c.l.b16 %v5406
      %v5439 = vunpack.c.l.b16 %v5407
      %v5440 = vunpack.c.l.b16 %v5408
      %v5441 = vunpack.c.l.b16 %v5409
      %v5442 = vunpack.c.l.b16 %v5410
      %v5443 = vunpack.c.l.b16 %v5411
      %v5444 = vunpack.c.l.b16 %v5412
      %v5445 = vunpack.c.l.b16 %v5413
      %v5446 = vunpack.c.l.b16 %v5414
      %v5447 = vunpack.c.l.b16 %v5415
      %v5448 = vunpack.c.l.b16 %v5416
      %v5449 = vunpack.c.l.b16 %v5417
      %v5450 = vunpack.c.l.b16 %v5418
      %v5451 = vunpack.c.l.b16 %v5419
      %v5452 = vunpack.c.l.b16 %v5420
      %v5453 = vunpack.c.l.b16 %v5421
      %v5454 = vpack.c.b16 %v5439, %v5438
      %v5455 = vpack.c.b16 %v5441, %v5440
      %v5456 = vpack.c.b16 %v5443, %v5442
      %v5457 = vpack.c.b16 %v5445, %v5444
      %v5458 = vpack.c.b16 %v5447, %v5446
      %v5459 = vpack.c.b16 %v5449, %v5448
      %v5460 = vpack.c.b16 %v5451, %v5450
      %v5461 = vpack.c.b16 %v5453, %v5452
      %5470 = vmatprep.subr.bf16.mxu0 0
      %5471 = vmatpush1.bf16.msra.mxu0 %v5454
      %5472 = vmatprep.subr.bf16.mxu0 0
      %5473 = vmatpush1.bf16.msra.mxu0 %v5455
      %5474 = vmatprep.subr.bf16.mxu0 0
      %5475 = vmatpush1.bf16.msra.mxu0 %v5456
      %5476 = vmatprep.subr.bf16.mxu0 0
      %5477 = vmatpush1.bf16.msra.mxu0 %v5457
      %5478 = vmatprep.subr.bf16.mxu0 0
      %5479 = vmatpush1.bf16.msra.mxu0 %v5458
      %5480 = vmatprep.subr.bf16.mxu0 0
      %5481 = vmatpush1.bf16.msra.mxu0 %v5459
      %5482 = vmatprep.subr.bf16.mxu0 0
      %5483 = vmatpush1.bf16.msra.mxu0 %v5460
      %5484 = vmatprep.subr.bf16.mxu0 0
      %5485 = vmatpush1.bf16.msra.mxu0 %v5461
      %5486 = vmatprep.subr.bf16.mxu0 0
      %5487 = vmatpush1.bf16.msra.mxu0 0
      %5488 = vmatprep.subr.bf16.mxu0 0
      %5489 = vmatpush1.bf16.msra.mxu0 0
      %5490 = vmatprep.subr.bf16.mxu0 0
      %5491 = vmatpush1.bf16.msra.mxu0 0
      %5492 = vmatprep.subr.bf16.mxu0 0
      %5493 = vmatpush1.bf16.msra.mxu0 0
      %5494 = vmatprep.subr.bf16.mxu0 0
      %5495 = vmatpush1.bf16.msra.mxu0 0
      %5496 = vmatprep.subr.bf16.mxu0 0
      %5497 = vmatpush1.bf16.msra.mxu0 0
      %5498 = vmatprep.subr.bf16.mxu0 0
      %5499 = vmatpush1.bf16.msra.mxu0 0
      %5500 = vmatprep.subr.bf16.mxu0 0
      %5501 = vmatpush1.bf16.msra.mxu0 0
      %5502 = vmatprep.mubr.bf16.mxu0 0
      %5503 = vmatmul.mubr.bf16.gmra.mrb[0].mxu0 %v5405
      %v5504 = vpop.f32.mrb[0].mxu0
      %v5505 = vadd.f32 0.0, %v5504
      %v5506 = vpop.f32.mrb[0].mxu0
      %v5507 = vpop.f32.mrb[0].mxu0
      %v5508 = vpop.f32.mrb[0].mxu0
      %5509 = vdwg.mxu0
      %s5510 = scalar_lea.vmem %s43, 64
      %v5511 = vld [vmem:[%s5510] sm:$0xf]
      %v5512 = vld [vmem:[%s5510 + $0x4] sm:$0xf]
      %v5513 = vld [vmem:[%s5510 + $0x8] sm:$0xf]
      %v5514 = vld [vmem:[%s5510 + $0xc] sm:$0xf]
      %v5515 = vld [vmem:[%s5510 + $0x10] sm:$0xf]
      %v5516 = vld [vmem:[%s5510 + $0x14] sm:$0xf]
      %v5517 = vld [vmem:[%s5510 + $0x18] sm:$0xf]
      %v5518 = vld [vmem:[%s5510 + $0x1c] sm:$0xf]
      %v5519 = vld [vmem:[%s5510 + $0x20] sm:$0xf]
      %v5520 = vld [vmem:[%s5510 + $0x24] sm:$0xf]
      %v5521 = vld [vmem:[%s5510 + $0x28] sm:$0xf]
      %v5522 = vld [vmem:[%s5510 + $0x2c] sm:$0xf]
      %v5523 = vld [vmem:[%s5510 + $0x30] sm:$0xf]
      %v5524 = vld [vmem:[%s5510 + $0x34] sm:$0xf]
      %v5525 = vld [vmem:[%s5510 + $0x38] sm:$0xf]
      %v5526 = vld [vmem:[%s5510 + $0x3c] sm:$0xf]
      %s5527 = scalar_lea.vmem %s43, 128
      %v5528 = vld [vmem:[%s5527] sm:$0xf]
      %v5529 = vld [vmem:[%s5527 + $0x4] sm:$0xf]
      %v5530 = vld [vmem:[%s5527 + $0x8] sm:$0xf]
      %v5531 = vld [vmem:[%s5527 + $0xc] sm:$0xf]
      %v5532 = vld [vmem:[%s5527 + $0x10] sm:$0xf]
      %v5533 = vld [vmem:[%s5527 + $0x14] sm:$0xf]
      %v5534 = vld [vmem:[%s5527 + $0x18] sm:$0xf]
      %v5535 = vld [vmem:[%s5527 + $0x1c] sm:$0xf]
      %v5536 = vld [vmem:[%s5527 + $0x20] sm:$0xf]
      %v5537 = vld [vmem:[%s5527 + $0x24] sm:$0xf]
      %v5538 = vld [vmem:[%s5527 + $0x28] sm:$0xf]
      %v5539 = vld [vmem:[%s5527 + $0x2c] sm:$0xf]
      %v5540 = vld [vmem:[%s5527 + $0x30] sm:$0xf]
      %v5541 = vld [vmem:[%s5527 + $0x34] sm:$0xf]
      %v5542 = vld [vmem:[%s5527 + $0x38] sm:$0xf]
      %v5543 = vld [vmem:[%s5527 + $0x3c] sm:$0xf]
      %v5560 = vunpack.c.l.b16 %v5528
      %v5561 = vunpack.c.l.b16 %v5529
      %v5562 = vunpack.c.l.b16 %v5530
      %v5563 = vunpack.c.l.b16 %v5531
      %v5564 = vunpack.c.l.b16 %v5532
      %v5565 = vunpack.c.l.b16 %v5533
      %v5566 = vunpack.c.l.b16 %v5534
      %v5567 = vunpack.c.l.b16 %v5535
      %v5568 = vunpack.c.l.b16 %v5536
      %v5569 = vunpack.c.l.b16 %v5537
      %v5570 = vunpack.c.l.b16 %v5538
      %v5571 = vunpack.c.l.b16 %v5539
      %v5572 = vunpack.c.l.b16 %v5540
      %v5573 = vunpack.c.l.b16 %v5541
      %v5574 = vunpack.c.l.b16 %v5542
      %v5575 = vunpack.c.l.b16 %v5543
      %v5576 = vpack.c.b16 %v5561, %v5560
      %v5577 = vpack.c.b16 %v5563, %v5562
      %v5578 = vpack.c.b16 %v5565, %v5564
      %v5579 = vpack.c.b16 %v5567, %v5566
      %v5580 = vpack.c.b16 %v5569, %v5568
      %v5581 = vpack.c.b16 %v5571, %v5570
      %v5582 = vpack.c.b16 %v5573, %v5572
      %v5583 = vpack.c.b16 %v5575, %v5574
      %5592 = vmatprep.subr.bf16.mxu0 0
      %5593 = vmatpush1.bf16.msra.mxu0 %v5576
      %5594 = vmatprep.subr.bf16.mxu0 0
      %5595 = vmatpush1.bf16.msra.mxu0 %v5577
      %5596 = vmatprep.subr.bf16.mxu0 0
      %5597 = vmatpush1.bf16.msra.mxu0 %v5578
      %5598 = vmatprep.subr.bf16.mxu0 0
      %5599 = vmatpush1.bf16.msra.mxu0 %v5579
      %5600 = vmatprep.subr.bf16.mxu0 0
      %5601 = vmatpush1.bf16.msra.mxu0 %v5580
      %5602 = vmatprep.subr.bf16.mxu0 0
      %5603 = vmatpush1.bf16.msra.mxu0 %v5581
      %5604 = vmatprep.subr.bf16.mxu0 0
      %5605 = vmatpush1.bf16.msra.mxu0 %v5582
      %5606 = vmatprep.subr.bf16.mxu0 0
      %5607 = vmatpush1.bf16.msra.mxu0 %v5583
      %5608 = vmatprep.subr.bf16.mxu0 0
      %5609 = vmatpush1.bf16.msra.mxu0 0
      %5610 = vmatprep.subr.bf16.mxu0 0
      %5611 = vmatpush1.bf16.msra.mxu0 0
      %5612 = vmatprep.subr.bf16.mxu0 0
      %5613 = vmatpush1.bf16.msra.mxu0 0
      %5614 = vmatprep.subr.bf16.mxu0 0
      %5615 = vmatpush1.bf16.msra.mxu0 0
      %5616 = vmatprep.subr.bf16.mxu0 0
      %5617 = vmatpush1.bf16.msra.mxu0 0
      %5618 = vmatprep.subr.bf16.mxu0 0
      %5619 = vmatpush1.bf16.msra.mxu0 0
      %5620 = vmatprep.subr.bf16.mxu0 0
      %5621 = vmatpush1.bf16.msra.mxu0 0
      %5622 = vmatprep.subr.bf16.mxu0 0
      %5623 = vmatpush1.bf16.msra.mxu0 0
      %5624 = vmatprep.mubr.bf16.mxu0 0
      %5625 = vmatmul.mubr.bf16.gmra.mrb[0].mxu0 %v5405
      %v5626 = vpop.f32.mrb[0].mxu0
      %v5627 = vadd.f32 0.0, %v5626
      %v5628 = vpop.f32.mrb[0].mxu0
      %v5629 = vpop.f32.mrb[0].mxu0
      %v5630 = vpop.f32.mrb[0].mxu0
      %5631 = vdwg.mxu0
      %v5633 = vrot.slane %v5505, 7
      %v5635 = vsel %vm1389, 0.0, %v5633
      %v5652 = vunpack.c.l.b16 %v5511
      %v5653 = vunpack.c.l.b16 %v5512
      %v5654 = vunpack.c.l.b16 %v5513
      %v5655 = vunpack.c.l.b16 %v5514
      %v5656 = vunpack.c.l.b16 %v5515
      %v5657 = vunpack.c.l.b16 %v5516
      %v5658 = vunpack.c.l.b16 %v5517
      %v5659 = vunpack.c.l.b16 %v5518
      %v5660 = vunpack.c.l.b16 %v5519
      %v5661 = vunpack.c.l.b16 %v5520
      %v5662 = vunpack.c.l.b16 %v5521
      %v5663 = vunpack.c.l.b16 %v5522
      %v5664 = vunpack.c.l.b16 %v5523
      %v5665 = vunpack.c.l.b16 %v5524
      %v5666 = vunpack.c.l.b16 %v5525
      %v5667 = vunpack.c.l.b16 %v5526
      %v5668 = vpack.c.b16 %v5653, %v5652
      %v5669 = vpack.c.b16 %v5655, %v5654
      %v5670 = vpack.c.b16 %v5657, %v5656
      %v5671 = vpack.c.b16 %v5659, %v5658
      %v5672 = vpack.c.b16 %v5661, %v5660
      %v5673 = vpack.c.b16 %v5663, %v5662
      %v5674 = vpack.c.b16 %v5665, %v5664
      %v5675 = vpack.c.b16 %v5667, %v5666
      %5684 = vmatprep.subr.bf16.mxu0 0
      %5685 = vmatpush1.bf16.msra.mxu0 %v5668
      %5686 = vmatprep.subr.bf16.mxu0 0
      %5687 = vmatpush1.bf16.msra.mxu0 %v5669
      %5688 = vmatprep.subr.bf16.mxu0 0
      %5689 = vmatpush1.bf16.msra.mxu0 %v5670
      %5690 = vmatprep.subr.bf16.mxu0 0
      %5691 = vmatpush1.bf16.msra.mxu0 %v5671
      %5692 = vmatprep.subr.bf16.mxu0 0
      %5693 = vmatpush1.bf16.msra.mxu0 %v5672
      %5694 = vmatprep.subr.bf16.mxu0 0
      %5695 = vmatpush1.bf16.msra.mxu0 %v5673
      %5696 = vmatprep.subr.bf16.mxu0 0
      %5697 = vmatpush1.bf16.msra.mxu0 %v5674
      %5698 = vmatprep.subr.bf16.mxu0 0
      %5699 = vmatpush1.bf16.msra.mxu0 %v5675
      %5700 = vmatprep.subr.bf16.mxu0 0
      %5701 = vmatpush1.bf16.msra.mxu0 0
      %5702 = vmatprep.subr.bf16.mxu0 0
      %5703 = vmatpush1.bf16.msra.mxu0 0
      %5704 = vmatprep.subr.bf16.mxu0 0
      %5705 = vmatpush1.bf16.msra.mxu0 0
      %5706 = vmatprep.subr.bf16.mxu0 0
      %5707 = vmatpush1.bf16.msra.mxu0 0
      %5708 = vmatprep.subr.bf16.mxu0 0
      %5709 = vmatpush1.bf16.msra.mxu0 0
      %5710 = vmatprep.subr.bf16.mxu0 0
      %5711 = vmatpush1.bf16.msra.mxu0 0
      %5712 = vmatprep.subr.bf16.mxu0 0
      %5713 = vmatpush1.bf16.msra.mxu0 0
      %5714 = vmatprep.subr.bf16.mxu0 0
      %5715 = vmatpush1.bf16.msra.mxu0 0
      %5716 = vmatprep.mubr.bf16.mxu0 0
      %5717 = vmatmul.mubr.bf16.gmra.mrb[0].mxu0 %v5405
      %v5718 = vpop.f32.mrb[0].mxu0
      %v5719 = vadd.f32 %v5635, %v5718
      %v5720 = vpop.f32.mrb[0].mxu0
      %v5721 = vpop.f32.mrb[0].mxu0
      %v5722 = vpop.f32.mrb[0].mxu0
      %5723 = vdwg.mxu0
      %v5725 = vrot.slane %v5627, 1
      %v5727 = vsel %vm1534, %v5725, 0.0
      %v5728 = vadd.f32 %v5719, %v5727
      %v5729 = vld [vmem:[%s45] sm:$0x1]
      %v5731 = vlaneseq
      %v5732 = vshrl.u32 %v5731, 7
      %v5733 = vsub.s32 0, %v5732
      %v5734 = vrot.slane %v5729, %v5733
      %v5736 = vadd.f32 %v5728, %v5734
      %v5737 = vmax.f32 %v5736, 0.0
      %v5738 = vsel %vm5403, 0.0, %v5737
      %v5739 = vpack.c.bf16 %v5738, %v5738
      %v5740 = vld [vmem:[%s47] sm:$0xf]
      %v5741 = vld [vmem:[%s47 + $0x4] sm:$0xf]
      %v5742 = vld [vmem:[%s47 + $0x8] sm:$0xf]
      %v5743 = vld [vmem:[%s47 + $0xc] sm:$0xf]
      %v5744 = vld [vmem:[%s47 + $0x10] sm:$0xf]
      %v5745 = vld [vmem:[%s47 + $0x14] sm:$0xf]
      %v5746 = vld [vmem:[%s47 + $0x18] sm:$0xf]
      %v5747 = vld [vmem:[%s47 + $0x1c] sm:$0xf]
      %v5756 = vunpack.c.l.b16 %v5740
      %v5757 = vunpack.c.l.b16 %v5741
      %v5758 = vunpack.c.l.b16 %v5742
      %v5759 = vunpack.c.l.b16 %v5743
      %v5760 = vunpack.c.l.b16 %v5744
      %v5761 = vunpack.c.l.b16 %v5745
      %v5762 = vunpack.c.l.b16 %v5746
      %v5763 = vunpack.c.l.b16 %v5747
      %v5764 = vpack.c.b16 %v5757, %v5756
      %v5765 = vpack.c.b16 %v5759, %v5758
      %v5766 = vpack.c.b16 %v5761, %v5760
      %v5767 = vpack.c.b16 %v5763, %v5762
      %vm5772 = vcmask 523264
      %v5774 = vsel %vm5772, %v5739, 0
      %5776 = vmatprep.subr.bf16.mxu0 0
      %5777 = vmatpush1.bf16.msra.mxu0 %v5764
      %5778 = vmatprep.subr.bf16.mxu0 0
      %5779 = vmatpush1.bf16.msra.mxu0 %v5765
      %5780 = vmatprep.subr.bf16.mxu0 0
      %5781 = vmatpush1.bf16.msra.mxu0 %v5766
      %5782 = vmatprep.subr.bf16.mxu0 0
      %5783 = vmatpush1.bf16.msra.mxu0 %v5767
      %5784 = vmatprep.subr.bf16.mxu0 0
      %5785 = vmatpush1.bf16.msra.mxu0 0
      %5786 = vmatprep.subr.bf16.mxu0 0
      %5787 = vmatpush1.bf16.msra.mxu0 0
      %5788 = vmatprep.subr.bf16.mxu0 0
      %5789 = vmatpush1.bf16.msra.mxu0 0
      %5790 = vmatprep.subr.bf16.mxu0 0
      %5791 = vmatpush1.bf16.msra.mxu0 0
      %5792 = vmatprep.subr.bf16.mxu0 0
      %5793 = vmatpush1.bf16.msra.mxu0 0
      %5794 = vmatprep.subr.bf16.mxu0 0
      %5795 = vmatpush1.bf16.msra.mxu0 0
      %5796 = vmatprep.subr.bf16.mxu0 0
      %5797 = vmatpush1.bf16.msra.mxu0 0
      %5798 = vmatprep.subr.bf16.mxu0 0
      %5799 = vmatpush1.bf16.msra.mxu0 0
      %5800 = vmatprep.subr.bf16.mxu0 0
      %5801 = vmatpush1.bf16.msra.mxu0 0
      %5802 = vmatprep.subr.bf16.mxu0 0
      %5803 = vmatpush1.bf16.msra.mxu0 0
      %5804 = vmatprep.subr.bf16.mxu0 0
      %5805 = vmatpush1.bf16.msra.mxu0 0
      %5806 = vmatprep.subr.bf16.mxu0 0
      %5807 = vmatpush1.bf16.msra.mxu0 0
      %5808 = vmatprep.mubr.bf16.mxu0 0
      %5809 = vmatmul.mubr.bf16.gmra.mrb[0].mxu0 %v5774
      %v5810 = vpop.f32.mrb[0].mxu0
      %v5811 = vadd.f32 0.0, %v5810
      %v5812 = vpop.f32.mrb[0].mxu0
      %v5813 = vpop.f32.mrb[0].mxu0
      %v5814 = vpop.f32.mrb[0].mxu0
      %5815 = vdwg.mxu0
      %s5816 = scalar_lea.vmem %s47, 32
      %v5817 = vld [vmem:[%s5816] sm:$0xf]
      %v5818 = vld [vmem:[%s5816 + $0x4] sm:$0xf]
      %v5819 = vld [vmem:[%s5816 + $0x8] sm:$0xf]
      %v5820 = vld [vmem:[%s5816 + $0xc] sm:$0xf]
      %v5821 = vld [vmem:[%s5816 + $0x10] sm:$0xf]
      %v5822 = vld [vmem:[%s5816 + $0x14] sm:$0xf]
      %v5823 = vld [vmem:[%s5816 + $0x18] sm:$0xf]
      %v5824 = vld [vmem:[%s5816 + $0x1c] sm:$0xf]
      %s5825 = scalar_lea.vmem %s47, 64
      %v5826 = vld [vmem:[%s5825] sm:$0xf]
      %v5827 = vld [vmem:[%s5825 + $0x4] sm:$0xf]
      %v5828 = vld [vmem:[%s5825 + $0x8] sm:$0xf]
      %v5829 = vld [vmem:[%s5825 + $0xc] sm:$0xf]
      %v5830 = vld [vmem:[%s5825 + $0x10] sm:$0xf]
      %v5831 = vld [vmem:[%s5825 + $0x14] sm:$0xf]
      %v5832 = vld [vmem:[%s5825 + $0x18] sm:$0xf]
      %v5833 = vld [vmem:[%s5825 + $0x1c] sm:$0xf]
      %v5842 = vunpack.c.l.b16 %v5826
      %v5843 = vunpack.c.l.b16 %v5827
      %v5844 = vunpack.c.l.b16 %v5828
      %v5845 = vunpack.c.l.b16 %v5829
      %v5846 = vunpack.c.l.b16 %v5830
      %v5847 = vunpack.c.l.b16 %v5831
      %v5848 = vunpack.c.l.b16 %v5832
      %v5849 = vunpack.c.l.b16 %v5833
      %v5850 = vpack.c.b16 %v5843, %v5842
      %v5851 = vpack.c.b16 %v5845, %v5844
      %v5852 = vpack.c.b16 %v5847, %v5846
      %v5853 = vpack.c.b16 %v5849, %v5848
      %5858 = vmatprep.subr.bf16.mxu0 0
      %5859 = vmatpush1.bf16.msra.mxu0 %v5850
      %5860 = vmatprep.subr.bf16.mxu0 0
      %5861 = vmatpush1.bf16.msra.mxu0 %v5851
      %5862 = vmatprep.subr.bf16.mxu0 0
      %5863 = vmatpush1.bf16.msra.mxu0 %v5852
      %5864 = vmatprep.subr.bf16.mxu0 0
      %5865 = vmatpush1.bf16.msra.mxu0 %v5853
      %5866 = vmatprep.subr.bf16.mxu0 0
      %5867 = vmatpush1.bf16.msra.mxu0 0
      %5868 = vmatprep.subr.bf16.mxu0 0
      %5869 = vmatpush1.bf16.msra.mxu0 0
      %5870 = vmatprep.subr.bf16.mxu0 0
      %5871 = vmatpush1.bf16.msra.mxu0 0
      %5872 = vmatprep.subr.bf16.mxu0 0
      %5873 = vmatpush1.bf16.msra.mxu0 0
      %5874 = vmatprep.subr.bf16.mxu0 0
      %5875 = vmatpush1.bf16.msra.mxu0 0
      %5876 = vmatprep.subr.bf16.mxu0 0
      %5877 = vmatpush1.bf16.msra.mxu0 0
      %5878 = vmatprep.subr.bf16.mxu0 0
      %5879 = vmatpush1.bf16.msra.mxu0 0
      %5880 = vmatprep.subr.bf16.mxu0 0
      %5881 = vmatpush1.bf16.msra.mxu0 0
      %5882 = vmatprep.subr.bf16.mxu0 0
      %5883 = vmatpush1.bf16.msra.mxu0 0
      %5884 = vmatprep.subr.bf16.mxu0 0
      %5885 = vmatpush1.bf16.msra.mxu0 0
      %5886 = vmatprep.subr.bf16.mxu0 0
      %5887 = vmatpush1.bf16.msra.mxu0 0
      %5888 = vmatprep.subr.bf16.mxu0 0
      %5889 = vmatpush1.bf16.msra.mxu0 0
      %5890 = vmatprep.mubr.bf16.mxu0 0
      %5891 = vmatmul.mubr.bf16.gmra.mrb[0].mxu0 %v5774
      %v5892 = vpop.f32.mrb[0].mxu0
      %v5893 = vadd.f32 0.0, %v5892
      %v5894 = vpop.f32.mrb[0].mxu0
      %v5895 = vpop.f32.mrb[0].mxu0
      %v5896 = vpop.f32.mrb[0].mxu0
      %5897 = vdwg.mxu0
      %v5899 = vrot.slane %v5811, 7
      %v5901 = vsel %vm1389, 0.0, %v5899
      %v5910 = vunpack.c.l.b16 %v5817
      %v5911 = vunpack.c.l.b16 %v5818
      %v5912 = vunpack.c.l.b16 %v5819
      %v5913 = vunpack.c.l.b16 %v5820
      %v5914 = vunpack.c.l.b16 %v5821
      %v5915 = vunpack.c.l.b16 %v5822
      %v5916 = vunpack.c.l.b16 %v5823
      %v5917 = vunpack.c.l.b16 %v5824
      %v5918 = vpack.c.b16 %v5911, %v5910
      %v5919 = vpack.c.b16 %v5913, %v5912
      %v5920 = vpack.c.b16 %v5915, %v5914
      %v5921 = vpack.c.b16 %v5917, %v5916
      %5926 = vmatprep.subr.bf16.mxu0 0
      %5927 = vmatpush1.bf16.msra.mxu0 %v5918
      %5928 = vmatprep.subr.bf16.mxu0 0
      %5929 = vmatpush1.bf16.msra.mxu0 %v5919
      %5930 = vmatprep.subr.bf16.mxu0 0
      %5931 = vmatpush1.bf16.msra.mxu0 %v5920
      %5932 = vmatprep.subr.bf16.mxu0 0
      %5933 = vmatpush1.bf16.msra.mxu0 %v5921
      %5934 = vmatprep.subr.bf16.mxu0 0
      %5935 = vmatpush1.bf16.msra.mxu0 0
      %5936 = vmatprep.subr.bf16.mxu0 0
      %5937 = vmatpush1.bf16.msra.mxu0 0
      %5938 = vmatprep.subr.bf16.mxu0 0
      %5939 = vmatpush1.bf16.msra.mxu0 0
      %5940 = vmatprep.subr.bf16.mxu0 0
      %5941 = vmatpush1.bf16.msra.mxu0 0
      %5942 = vmatprep.subr.bf16.mxu0 0
      %5943 = vmatpush1.bf16.msra.mxu0 0
      %5944 = vmatprep.subr.bf16.mxu0 0
      %5945 = vmatpush1.bf16.msra.mxu0 0
      %5946 = vmatprep.subr.bf16.mxu0 0
      %5947 = vmatpush1.bf16.msra.mxu0 0
      %5948 = vmatprep.subr.bf16.mxu0 0
      %5949 = vmatpush1.bf16.msra.mxu0 0
      %5950 = vmatprep.subr.bf16.mxu0 0
      %5951 = vmatpush1.bf16.msra.mxu0 0
      %5952 = vmatprep.subr.bf16.mxu0 0
      %5953 = vmatpush1.bf16.msra.mxu0 0
      %5954 = vmatprep.subr.bf16.mxu0 0
      %5955 = vmatpush1.bf16.msra.mxu0 0
      %5956 = vmatprep.subr.bf16.mxu0 0
      %5957 = vmatpush1.bf16.msra.mxu0 0
      %5958 = vmatprep.mubr.bf16.mxu0 0
      %5959 = vmatmul.mubr.bf16.gmra.mrb[0].mxu0 %v5774
      %v5960 = vpop.f32.mrb[0].mxu0
      %v5961 = vadd.f32 %v5901, %v5960
      %v5962 = vpop.f32.mrb[0].mxu0
      %v5963 = vpop.f32.mrb[0].mxu0
      %v5964 = vpop.f32.mrb[0].mxu0
      %5965 = vdwg.mxu0
      %v5967 = vrot.slane %v5893, 1
      %v5969 = vsel %vm1534, %v5967, 0.0
      %v5970 = vadd.f32 %v5961, %v5969
      %v5971 = vld [vmem:[%s49] sm:$0x1]
      %v5973 = vlaneseq
      %v5974 = vshrl.u32 %v5973, 7
      %v5975 = vsub.s32 0, %v5974
      %v5976 = vrot.slane %v5971, %v5975
      %v5978 = vadd.f32 %v5970, %v5976
      %v5979 = vmax.f32 %v5978, 0.0
      %v5980 = vsel %vm5403, 0.0, %v5979
      %v5981 = vpack.c.bf16 %v5980, %v5980
      %v5982 = vld [vmem:[%s51] sm:$0xf]
      %v5983 = vld [vmem:[%s51 + $0x4] sm:$0xf]
      %v5984 = vld [vmem:[%s51 + $0x8] sm:$0xf]
      %v5985 = vld [vmem:[%s51 + $0xc] sm:$0xf]
      %v5986 = vld [vmem:[%s51 + $0x10] sm:$0xf]
      %v5987 = vld [vmem:[%s51 + $0x14] sm:$0xf]
      %v5988 = vld [vmem:[%s51 + $0x18] sm:$0xf]
      %v5989 = vld [vmem:[%s51 + $0x1c] sm:$0xf]
      %v5998 = vunpack.c.l.b16 %v5982
      %v5999 = vunpack.c.l.b16 %v5983
      %v6000 = vunpack.c.l.b16 %v5984
      %v6001 = vunpack.c.l.b16 %v5985
      %v6002 = vunpack.c.l.b16 %v5986
      %v6003 = vunpack.c.l.b16 %v5987
      %v6004 = vunpack.c.l.b16 %v5988
      %v6005 = vunpack.c.l.b16 %v5989
      %v6006 = vpack.c.b16 %v5999, %v5998
      %v6007 = vpack.c.b16 %v6001, %v6000
      %v6008 = vpack.c.b16 %v6003, %v6002
      %v6009 = vpack.c.b16 %v6005, %v6004
      %v6015 = vsel %vm5772, %v5981, 0
      %6017 = vmatprep.subr.bf16.mxu0 0
      %6018 = vmatpush1.bf16.msra.mxu0 %v6006
      %6019 = vmatprep.subr.bf16.mxu0 0
      %6020 = vmatpush1.bf16.msra.mxu0 %v6007
      %6021 = vmatprep.subr.bf16.mxu0 0
      %6022 = vmatpush1.bf16.msra.mxu0 %v6008
      %6023 = vmatprep.subr.bf16.mxu0 0
      %6024 = vmatpush1.bf16.msra.mxu0 %v6009
      %6025 = vmatprep.subr.bf16.mxu0 0
      %6026 = vmatpush1.bf16.msra.mxu0 0
      %6027 = vmatprep.subr.bf16.mxu0 0
      %6028 = vmatpush1.bf16.msra.mxu0 0
      %6029 = vmatprep.subr.bf16.mxu0 0
      %6030 = vmatpush1.bf16.msra.mxu0 0
      %6031 = vmatprep.subr.bf16.mxu0 0
      %6032 = vmatpush1.bf16.msra.mxu0 0
      %6033 = vmatprep.subr.bf16.mxu0 0
      %6034 = vmatpush1.bf16.msra.mxu0 0
      %6035 = vmatprep.subr.bf16.mxu0 0
      %6036 = vmatpush1.bf16.msra.mxu0 0
      %6037 = vmatprep.subr.bf16.mxu0 0
      %6038 = vmatpush1.bf16.msra.mxu0 0
      %6039 = vmatprep.subr.bf16.mxu0 0
      %6040 = vmatpush1.bf16.msra.mxu0 0
      %6041 = vmatprep.subr.bf16.mxu0 0
      %6042 = vmatpush1.bf16.msra.mxu0 0
      %6043 = vmatprep.subr.bf16.mxu0 0
      %6044 = vmatpush1.bf16.msra.mxu0 0
      %6045 = vmatprep.subr.bf16.mxu0 0
      %6046 = vmatpush1.bf16.msra.mxu0 0
      %6047 = vmatprep.subr.bf16.mxu0 0
      %6048 = vmatpush1.bf16.msra.mxu0 0
      %6049 = vmatprep.mubr.bf16.mxu0 0
      %6050 = vmatmul.mubr.bf16.gmra.mrb[0].mxu0 %v6015
      %v6051 = vpop.f32.mrb[0].mxu0
      %v6052 = vadd.f32 0.0, %v6051
      %v6053 = vpop.f32.mrb[0].mxu0
      %v6054 = vpop.f32.mrb[0].mxu0
      %v6055 = vpop.f32.mrb[0].mxu0
      %6056 = vdwg.mxu0
      %s6057 = scalar_lea.vmem %s51, 32
      %v6058 = vld [vmem:[%s6057] sm:$0xf]
      %v6059 = vld [vmem:[%s6057 + $0x4] sm:$0xf]
      %v6060 = vld [vmem:[%s6057 + $0x8] sm:$0xf]
      %v6061 = vld [vmem:[%s6057 + $0xc] sm:$0xf]
      %v6062 = vld [vmem:[%s6057 + $0x10] sm:$0xf]
      %v6063 = vld [vmem:[%s6057 + $0x14] sm:$0xf]
      %v6064 = vld [vmem:[%s6057 + $0x18] sm:$0xf]
      %v6065 = vld [vmem:[%s6057 + $0x1c] sm:$0xf]
      %s6066 = scalar_lea.vmem %s51, 64
      %v6067 = vld [vmem:[%s6066] sm:$0xf]
      %v6068 = vld [vmem:[%s6066 + $0x4] sm:$0xf]
      %v6069 = vld [vmem:[%s6066 + $0x8] sm:$0xf]
      %v6070 = vld [vmem:[%s6066 + $0xc] sm:$0xf]
      %v6071 = vld [vmem:[%s6066 + $0x10] sm:$0xf]
      %v6072 = vld [vmem:[%s6066 + $0x14] sm:$0xf]
      %v6073 = vld [vmem:[%s6066 + $0x18] sm:$0xf]
      %v6074 = vld [vmem:[%s6066 + $0x1c] sm:$0xf]
      %v6083 = vunpack.c.l.b16 %v6067
      %v6084 = vunpack.c.l.b16 %v6068
      %v6085 = vunpack.c.l.b16 %v6069
      %v6086 = vunpack.c.l.b16 %v6070
      %v6087 = vunpack.c.l.b16 %v6071
      %v6088 = vunpack.c.l.b16 %v6072
      %v6089 = vunpack.c.l.b16 %v6073
      %v6090 = vunpack.c.l.b16 %v6074
      %v6091 = vpack.c.b16 %v6084, %v6083
      %v6092 = vpack.c.b16 %v6086, %v6085
      %v6093 = vpack.c.b16 %v6088, %v6087
      %v6094 = vpack.c.b16 %v6090, %v6089
      %6099 = vmatprep.subr.bf16.mxu0 0
      %6100 = vmatpush1.bf16.msra.mxu0 %v6091
      %6101 = vmatprep.subr.bf16.mxu0 0
      %6102 = vmatpush1.bf16.msra.mxu0 %v6092
      %6103 = vmatprep.subr.bf16.mxu0 0
      %6104 = vmatpush1.bf16.msra.mxu0 %v6093
      %6105 = vmatprep.subr.bf16.mxu0 0
      %6106 = vmatpush1.bf16.msra.mxu0 %v6094
      %6107 = vmatprep.subr.bf16.mxu0 0
      %6108 = vmatpush1.bf16.msra.mxu0 0
      %6109 = vmatprep.subr.bf16.mxu0 0
      %6110 = vmatpush1.bf16.msra.mxu0 0
      %6111 = vmatprep.subr.bf16.mxu0 0
      %6112 = vmatpush1.bf16.msra.mxu0 0
      %6113 = vmatprep.subr.bf16.mxu0 0
      %6114 = vmatpush1.bf16.msra.mxu0 0
      %6115 = vmatprep.subr.bf16.mxu0 0
      %6116 = vmatpush1.bf16.msra.mxu0 0
      %6117 = vmatprep.subr.bf16.mxu0 0
      %6118 = vmatpush1.bf16.msra.mxu0 0
      %6119 = vmatprep.subr.bf16.mxu0 0
      %6120 = vmatpush1.bf16.msra.mxu0 0
      %6121 = vmatprep.subr.bf16.mxu0 0
      %6122 = vmatpush1.bf16.msra.mxu0 0
      %6123 = vmatprep.subr.bf16.mxu0 0
      %6124 = vmatpush1.bf16.msra.mxu0 0
      %6125 = vmatprep.subr.bf16.mxu0 0
      %6126 = vmatpush1.bf16.msra.mxu0 0
      %6127 = vmatprep.subr.bf16.mxu0 0
      %6128 = vmatpush1.bf16.msra.mxu0 0
      %6129 = vmatprep.subr.bf16.mxu0 0
      %6130 = vmatpush1.bf16.msra.mxu0 0
      %6131 = vmatprep.mubr.bf16.mxu0 0
      %6132 = vmatmul.mubr.bf16.gmra.mrb[0].mxu0 %v6015
      %v6133 = vpop.f32.mrb[0].mxu0
      %v6134 = vadd.f32 0.0, %v6133
      %v6135 = vpop.f32.mrb[0].mxu0
      %v6136 = vpop.f32.mrb[0].mxu0
      %v6137 = vpop.f32.mrb[0].mxu0
      %6138 = vdwg.mxu0
      %v6140 = vrot.slane %v6052, 7
      %v6142 = vsel %vm1389, 0.0, %v6140
      %v6151 = vunpack.c.l.b16 %v6058
      %v6152 = vunpack.c.l.b16 %v6059
      %v6153 = vunpack.c.l.b16 %v6060
      %v6154 = vunpack.c.l.b16 %v6061
      %v6155 = vunpack.c.l.b16 %v6062
      %v6156 = vunpack.c.l.b16 %v6063
      %v6157 = vunpack.c.l.b16 %v6064
      %v6158 = vunpack.c.l.b16 %v6065
      %v6159 = vpack.c.b16 %v6152, %v6151
      %v6160 = vpack.c.b16 %v6154, %v6153
      %v6161 = vpack.c.b16 %v6156, %v6155
      %v6162 = vpack.c.b16 %v6158, %v6157
      %6167 = vmatprep.subr.bf16.mxu0 0
      %6168 = vmatpush1.bf16.msra.mxu0 %v6159
      %6169 = vmatprep.subr.bf16.mxu0 0
      %6170 = vmatpush1.bf16.msra.mxu0 %v6160
      %6171 = vmatprep.subr.bf16.mxu0 0
      %6172 = vmatpush1.bf16.msra.mxu0 %v6161
      %6173 = vmatprep.subr.bf16.mxu0 0
      %6174 = vmatpush1.bf16.msra.mxu0 %v6162
      %6175 = vmatprep.subr.bf16.mxu0 0
      %6176 = vmatpush1.bf16.msra.mxu0 0
      %6177 = vmatprep.subr.bf16.mxu0 0
      %6178 = vmatpush1.bf16.msra.mxu0 0
      %6179 = vmatprep.subr.bf16.mxu0 0
      %6180 = vmatpush1.bf16.msra.mxu0 0
      %6181 = vmatprep.subr.bf16.mxu0 0
      %6182 = vmatpush1.bf16.msra.mxu0 0
      %6183 = vmatprep.subr.bf16.mxu0 0
      %6184 = vmatpush1.bf16.msra.mxu0 0
      %6185 = vmatprep.subr.bf16.mxu0 0
      %6186 = vmatpush1.bf16.msra.mxu0 0
      %6187 = vmatprep.subr.bf16.mxu0 0
      %6188 = vmatpush1.bf16.msra.mxu0 0
      %6189 = vmatprep.subr.bf16.mxu0 0
      %6190 = vmatpush1.bf16.msra.mxu0 0
      %6191 = vmatprep.subr.bf16.mxu0 0
      %6192 = vmatpush1.bf16.msra.mxu0 0
      %6193 = vmatprep.subr.bf16.mxu0 0
      %6194 = vmatpush1.bf16.msra.mxu0 0
      %6195 = vmatprep.subr.bf16.mxu0 0
      %6196 = vmatpush1.bf16.msra.mxu0 0
      %6197 = vmatprep.subr.bf16.mxu0 0
      %6198 = vmatpush1.bf16.msra.mxu0 0
      %6199 = vmatprep.mubr.bf16.mxu0 0
      %6200 = vmatmul.mubr.bf16.gmra.mrb[0].mxu0 %v6015
      %v6201 = vpop.f32.mrb[0].mxu0
      %v6202 = vadd.f32 %v6142, %v6201
      %v6203 = vpop.f32.mrb[0].mxu0
      %v6204 = vpop.f32.mrb[0].mxu0
      %v6205 = vpop.f32.mrb[0].mxu0
      %6206 = vdwg.mxu0
      %v6208 = vrot.slane %v6134, 1
      %v6210 = vsel %vm1534, %v6208, 0.0
      %v6211 = vadd.f32 %v6202, %v6210
      %v6212 = vld [vmem:[%s53] sm:$0x1]
      %v6214 = vlaneseq
      %v6215 = vshrl.u32 %v6214, 7
      %v6216 = vsub.s32 0, %v6215
      %v6217 = vrot.slane %v6212, %v6216
      %v6219 = vadd.f32 %v6211, %v6217
      %v6220 = vmax.f32 %v6219, 0.0
      %6221 = vst.msk [vmem:[#allocation2] sm:$0xff] %vm5772, %v6220
      %v6222 = vld [vmem:[%s2136] ss:$2 sm:$0x1]
      %v6223 = vld [vmem:[%s2140] ss:$2 sm:$0x1]
      %v6224 = vmax.f32 %v6222, %v6223
      %6226 = vrot.lane.b32.xlu0 %v6224, 96
      %v6227 = vpop.permute.xlu0 %6226
      %v6229 = vmax.f32 %v6224, %v6227
      %s6230 = scalar_lea.vmem [#allocation2], 5
      %v6231 = vld [vmem:[%s6230] ss:$2 sm:$0x1]
      %s6232 = scalar_lea.vmem [#allocation2], 6
      %v6233 = vld [vmem:[%s6232] ss:$2 sm:$0x1]
      %v6234 = vmax.f32 %v6231, %v6233
      %6236 = vrot.lane.b32.xlu0 %v6234, 96
      %v6237 = vpop.permute.xlu0 %6236
      %v6239 = vmax.f32 %v6234, %v6237
      %v6241 = vrot.slane %v6239, 7
      %v6243 = vsel %vm1389, %v6229, %v6241
      %v6244 = vpack.c.bf16 %v6243, %v6243
      %v6245 = vld [vmem:[%s55] sm:$0xf]
      %v6246 = vld [vmem:[%s55 + $0x4] sm:$0xf]
      %v6247 = vld [vmem:[%s55 + $0x8] sm:$0xf]
      %v6248 = vld [vmem:[%s55 + $0xc] sm:$0xf]
      %v6249 = vld [vmem:[%s57] sm:$0x1]
      %v6251 = vlaneseq
      %v6252 = vshrl.u32 %v6251, 7
      %v6253 = vsub.s32 0, %v6252
      %v6254 = vrot.slane %v6249, %v6253
      %v6260 = vunpack.c.l.b16 %v6245
      %v6261 = vunpack.c.l.b16 %v6246
      %v6262 = vunpack.c.l.b16 %v6247
      %v6263 = vunpack.c.l.b16 %v6248
      %v6264 = vpack.c.b16 %v6261, %v6260
      %v6265 = vpack.c.b16 %v6263, %v6262
      %vm6268 = vcmask 261120
      %v6270 = vsel %vm6268, %v6244, 0
      %6272 = vmatprep.subr.bf16.mxu0 0
      %6273 = vmatpush1.bf16.msra.mxu0 %v6264
      %6274 = vmatprep.subr.bf16.mxu0 0
      %6275 = vmatpush1.bf16.msra.mxu0 %v6265
      %6276 = vmatprep.subr.bf16.mxu0 0
      %6277 = vmatpush1.bf16.msra.mxu0 0
      %6278 = vmatprep.subr.bf16.mxu0 0
      %6279 = vmatpush1.bf16.msra.mxu0 0
      %6280 = vmatprep.subr.bf16.mxu0 0
      %6281 = vmatpush1.bf16.msra.mxu0 0
      %6282 = vmatprep.subr.bf16.mxu0 0
      %6283 = vmatpush1.bf16.msra.mxu0 0
      %6284 = vmatprep.subr.bf16.mxu0 0
      %6285 = vmatpush1.bf16.msra.mxu0 0
      %6286 = vmatprep.subr.bf16.mxu0 0
      %6287 = vmatpush1.bf16.msra.mxu0 0
      %6288 = vmatprep.subr.bf16.mxu0 0
      %6289 = vmatpush1.bf16.msra.mxu0 0
      %6290 = vmatprep.subr.bf16.mxu0 0
      %6291 = vmatpush1.bf16.msra.mxu0 0
      %6292 = vmatprep.subr.bf16.mxu0 0
      %6293 = vmatpush1.bf16.msra.mxu0 0
      %6294 = vmatprep.subr.bf16.mxu0 0
      %6295 = vmatpush1.bf16.msra.mxu0 0
      %6296 = vmatprep.subr.bf16.mxu0 0
      %6297 = vmatpush1.bf16.msra.mxu0 0
      %6298 = vmatprep.subr.bf16.mxu0 0
      %6299 = vmatpush1.bf16.msra.mxu0 0
      %6300 = vmatprep.subr.bf16.mxu0 0
      %6301 = vmatpush1.bf16.msra.mxu0 0
      %6302 = vmatprep.subr.bf16.mxu0 0
      %6303 = vmatpush1.bf16.msra.mxu0 0
      %6304 = vmatprep.mubr.bf16.mxu0 0
      %6305 = vmatmul.mubr.bf16.gmra.mrb[0].mxu0 %v6270
      %v6306 = vpop.f32.mrb[0].mxu0
      %v6307 = vadd.f32 %v6254, %v6306
      %v6308 = vpop.f32.mrb[0].mxu0
      %v6309 = vpop.f32.mrb[0].mxu0
      %v6310 = vpop.f32.mrb[0].mxu0
      %6311 = vdwg.mxu0
      %v6312 = vmax.f32 %v6307, 0.0
      %v6313 = vpack.c.bf16 %v6312, %v6312
      %v6314 = vld [vmem:[%s59] sm:$0xf]
      %v6315 = vld [vmem:[%s59 + $0x4] sm:$0xf]
      %v6316 = vld [vmem:[%s59 + $0x8] sm:$0xf]
      %v6317 = vld [vmem:[%s59 + $0xc] sm:$0xf]
      %v6318 = vld [vmem:[%s59 + $0x10] sm:$0xf]
      %v6319 = vld [vmem:[%s59 + $0x14] sm:$0xf]
      %v6320 = vld [vmem:[%s59 + $0x18] sm:$0xf]
      %v6321 = vld [vmem:[%s59 + $0x1c] sm:$0xf]
      %v6322 = vld [vmem:[%s61] sm:$0x1]
      %v6324 = vlaneseq
      %v6325 = vshrl.u32 %v6324, 7
      %v6326 = vsub.s32 0, %v6325
      %v6327 = vrot.slane %v6322, %v6326
      %v6337 = vunpack.c.l.b16 %v6314
      %v6338 = vunpack.c.l.b16 %v6315
      %v6339 = vunpack.c.l.b16 %v6316
      %v6340 = vunpack.c.l.b16 %v6317
      %v6341 = vunpack.c.l.b16 %v6318
      %v6342 = vunpack.c.l.b16 %v6319
      %v6343 = vunpack.c.l.b16 %v6320
      %v6344 = vunpack.c.l.b16 %v6321
      %v6345 = vpack.c.b16 %v6338, %v6337
      %v6346 = vpack.c.b16 %v6340, %v6339
      %v6347 = vpack.c.b16 %v6342, %v6341
      %v6348 = vpack.c.b16 %v6344, %v6343
      %v6354 = vsel %vm5772, %v6313, 0
      %6356 = vmatprep.subr.bf16.mxu0 0
      %6357 = vmatpush1.bf16.msra.mxu0 %v6345
      %6358 = vmatprep.subr.bf16.mxu0 0
      %6359 = vmatpush1.bf16.msra.mxu0 %v6346
      %6360 = vmatprep.subr.bf16.mxu0 0
      %6361 = vmatpush1.bf16.msra.mxu0 %v6347
      %6362 = vmatprep.subr.bf16.mxu0 0
      %6363 = vmatpush1.bf16.msra.mxu0 %v6348
      %6364 = vmatprep.subr.bf16.mxu0 0
      %6365 = vmatpush1.bf16.msra.mxu0 0
      %6366 = vmatprep.subr.bf16.mxu0 0
      %6367 = vmatpush1.bf16.msra.mxu0 0
      %6368 = vmatprep.subr.bf16.mxu0 0
      %6369 = vmatpush1.bf16.msra.mxu0 0
      %6370 = vmatprep.subr.bf16.mxu0 0
      %6371 = vmatpush1.bf16.msra.mxu0 0
      %6372 = vmatprep.subr.bf16.mxu0 0
      %6373 = vmatpush1.bf16.msra.mxu0 0
      %6374 = vmatprep.subr.bf16.mxu0 0
      %6375 = vmatpush1.bf16.msra.mxu0 0
      %6376 = vmatprep.subr.bf16.mxu0 0
      %6377 = vmatpush1.bf16.msra.mxu0 0
      %6378 = vmatprep.subr.bf16.mxu0 0
      %6379 = vmatpush1.bf16.msra.mxu0 0
      %6380 = vmatprep.subr.bf16.mxu0 0
      %6381 = vmatpush1.bf16.msra.mxu0 0
      %6382 = vmatprep.subr.bf16.mxu0 0
      %6383 = vmatpush1.bf16.msra.mxu0 0
      %6384 = vmatprep.subr.bf16.mxu0 0
      %6385 = vmatpush1.bf16.msra.mxu0 0
      %6386 = vmatprep.subr.bf16.mxu0 0
      %6387 = vmatpush1.bf16.msra.mxu0 0
      %6388 = vmatprep.mubr.bf16.mxu0 0
      %6389 = vmatmul.mubr.bf16.gmra.mrb[0].mxu0 %v6354
      %v6390 = vpop.f32.mrb[0].mxu0
      %v6391 = vadd.f32 %v6327, %v6390
      %v6392 = vpop.f32.mrb[0].mxu0
      %v6393 = vpop.f32.mrb[0].mxu0
      %v6394 = vpop.f32.mrb[0].mxu0
      %6395 = vdwg.mxu0
      %v6396 = vmax.f32 %v6391, 0.0
      %v6397 = vpack.c.bf16 %v6396, %v6396
      %v6398 = vld [vmem:[%s63] sm:$0xf]
      %v6399 = vld [vmem:[%s63 + $0x4] sm:$0xf]
      %v6400 = vld [vmem:[%s63 + $0x8] sm:$0xf]
      %v6401 = vld [vmem:[%s63 + $0xc] sm:$0xf]
      %v6402 = vld [vmem:[%s63 + $0x10] sm:$0xf]
      %v6403 = vld [vmem:[%s63 + $0x14] sm:$0xf]
      %v6404 = vld [vmem:[%s63 + $0x18] sm:$0xf]
      %v6405 = vld [vmem:[%s63 + $0x1c] sm:$0xf]
      %v6406 = vld [vmem:[%s65] sm:$0x1]
      %v6408 = vlaneseq
      %v6409 = vshrl.u32 %v6408, 7
      %v6410 = vsub.s32 0, %v6409
      %v6411 = vrot.slane %v6406, %v6410
      %v6421 = vunpack.c.l.b16 %v6398
      %v6422 = vunpack.c.l.b16 %v6399
      %v6423 = vunpack.c.l.b16 %v6400
      %v6424 = vunpack.c.l.b16 %v6401
      %v6425 = vunpack.c.l.b16 %v6402
      %v6426 = vunpack.c.l.b16 %v6403
      %v6427 = vunpack.c.l.b16 %v6404
      %v6428 = vunpack.c.l.b16 %v6405
      %v6429 = vpack.c.b16 %v6422, %v6421
      %v6430 = vpack.c.b16 %v6424, %v6423
      %v6431 = vpack.c.b16 %v6426, %v6425
      %v6432 = vpack.c.b16 %v6428, %v6427
      %v6438 = vsel %vm5772, %v6397, 0
      %6440 = vmatprep.subr.bf16.mxu0 0
      %6441 = vmatpush1.bf16.msra.mxu0 %v6429
      %6442 = vmatprep.subr.bf16.mxu0 0
      %6443 = vmatpush1.bf16.msra.mxu0 %v6430
      %6444 = vmatprep.subr.bf16.mxu0 0
      %6445 = vmatpush1.bf16.msra.mxu0 %v6431
      %6446 = vmatprep.subr.bf16.mxu0 0
      %6447 = vmatpush1.bf16.msra.mxu0 %v6432
      %6448 = vmatprep.subr.bf16.mxu0 0
      %6449 = vmatpush1.bf16.msra.mxu0 0
      %6450 = vmatprep.subr.bf16.mxu0 0
      %6451 = vmatpush1.bf16.msra.mxu0 0
      %6452 = vmatprep.subr.bf16.mxu0 0
      %6453 = vmatpush1.bf16.msra.mxu0 0
      %6454 = vmatprep.subr.bf16.mxu0 0
      %6455 = vmatpush1.bf16.msra.mxu0 0
      %6456 = vmatprep.subr.bf16.mxu0 0
      %6457 = vmatpush1.bf16.msra.mxu0 0
      %6458 = vmatprep.subr.bf16.mxu0 0
      %6459 = vmatpush1.bf16.msra.mxu0 0
      %6460 = vmatprep.subr.bf16.mxu0 0
      %6461 = vmatpush1.bf16.msra.mxu0 0
      %6462 = vmatprep.subr.bf16.mxu0 0
      %6463 = vmatpush1.bf16.msra.mxu0 0
      %6464 = vmatprep.subr.bf16.mxu0 0
      %6465 = vmatpush1.bf16.msra.mxu0 0
      %6466 = vmatprep.subr.bf16.mxu0 0
      %6467 = vmatpush1.bf16.msra.mxu0 0
      %6468 = vmatprep.subr.bf16.mxu0 0
      %6469 = vmatpush1.bf16.msra.mxu0 0
      %6470 = vmatprep.subr.bf16.mxu0 0
      %6471 = vmatpush1.bf16.msra.mxu0 0
      %6472 = vmatprep.mubr.bf16.mxu0 0
      %6473 = vmatmul.mubr.bf16.gmra.mrb[0].mxu0 %v6438
      %v6474 = vpop.f32.mrb[0].mxu0
      %v6475 = vadd.f32 %v6411, %v6474
      %v6476 = vpop.f32.mrb[0].mxu0
      %v6477 = vpop.f32.mrb[0].mxu0
      %v6478 = vpop.f32.mrb[0].mxu0
      %6479 = vdwg.mxu0
      %vm6480 = vcmask 9216
      %6481 = vst.msk [vmem:[%s1012] sm:$0x3] %vm6480, %v6475
      %p6482 = scmp.lt.s32.totalorder %s78, 1
      %s6483 = scalar_select %p6482, %s78, 1
      %s6484 = smul.addr %s6483, 2
      %s6485 = scalar_lea.vmem %s67, %s6484
      // Predicated region
      $region153: #{forward.1} parent=151 // pred_check
        %p6486 = pneg %p794
      $region154: #{forward.1} parent=151 // pred_check_branch
        %6488 = sbr.rel (%p6486) target = $region156
      $region155: #{forward.1} parent=151 // pred_region
        _
      $region156: #{forward.1} parent=151 // pred_fallthru
        _
    $region152: #{forward.1} parent=5 // pred_fallthru
      _
    %p6489 = scmp.le.s32.totalorder 2, %s73
    // Predicated region
    $region157: #{forward.1} parent=5 // pred_check
      %p6490 = pneg %p6489
    $region158: #{forward.1} parent=5 // pred_check_branch
      %6492 = sbr.rel (%p6490) target = $region160
    $region159: #{forward.1} parent=5 // pred_region
      %s6493 = ssub.s32 %s73, 2
      // Predicated region
      $region161: #{forward.1} parent=159 // pred_check
        %p6494 = pneg %p800
      $region162: #{forward.1} parent=159 // pred_check_branch
        %6496 = sbr.rel (%p6494) target = $region164
      $region163: #{forward.1} parent=159 // pred_region
        %p6497 = scmp.lt.s32.totalorder %s79, 1
        %s6498 = scalar_select %p6497, %s79, 1
        %s6499 = smul.addr %s6498, 2
        %s6500 = scalar_lea.vmem %s67, %s6499
      $region164: #{forward.1} parent=159 // pred_fallthru
        _
    $region160: #{forward.1} parent=5 // pred_fallthru
      _
  $region6: #{forward.1} parent=0 // loop_footer
    %s77 = sadd.s32 1, %s73
  $region7: #{forward.1} parent=0 // loop_footer_branch
    %72 = sbr.rel target = $region3
  $region8: #{forward.1} parent=0 // loop_exit
    _

</llo_original>
